<compile_context>
chip_gen: v7x
topology: tpu7x:2x2x1
jax: 0.10.0
libtpu: 0.0.40
codegen_flags: <defaults>
</compile_context>

<pallas_src>
import functools

import jax
import jax.numpy as jnp
from jax.experimental import pallas as pl
from jax.experimental.pallas import tpu as pltpu

EPS = 1e-5  # nn.LayerNorm default eps


def _make_self_attn_kernel(n_heads: int):
    def kernel(x_ref, ln_w_ref, ln_b_ref, wqkv_ref, bqkv_ref, wo_ref, bo_ref, o_ref):
        x = x_ref[0]                                  # (S, C) f32
        s_len, c = x.shape
        d = c // n_heads

        # ---- LayerNorm over the channel (lane) dim, f32 on VPU/XLU ----
        mu = jnp.mean(x, axis=-1, keepdims=True)
        xc = x - mu
        var = jnp.mean(xc * xc, axis=-1, keepdims=True)
        zn = xc * jax.lax.rsqrt(var + EPS) * ln_w_ref[...] + ln_b_ref[...]   # (S, C)

        # ---- fused QKV: one lane-dense, weight-stationary GEMM (S,C)@(C,3C) ----
        qkv = jnp.dot(zn.astype(jnp.bfloat16), wqkv_ref[...],
                      preferred_element_type=jnp.float32)      # (S, 3C) f32
        qkv = (qkv + bqkv_ref[...]).astype(jnp.bfloat16)       # f32 bias add, then bf16
        # (query scale 1/sqrt(D) is pre-folded into wqkv/bqkv q-columns in the wrapper)

        # ---- per-head attention (H small, unrolled); heads live one at a time ----
        ctx_heads = []
        for h in range(n_heads):
            qh = qkv[:, h * d:(h + 1) * d]                     # (S, D) bf16
            kh = qkv[:, c + h * d: c + (h + 1) * d]            # (S, D) bf16
            vh = qkv[:, 2 * c + h * d: 2 * c + (h + 1) * d]    # (S, D) bf16

            s = jax.lax.dot_general(
                qh, kh, dimension_numbers=(((1,), (1,)), ((), ())),
                preferred_element_type=jnp.float32)            # (S, S) f32
            m = jnp.max(s, axis=-1, keepdims=True)
            p = jnp.exp(s - m)                                 # f32 exp (v5e-safe)
            denom = jnp.sum(p, axis=-1, keepdims=True)         # (S, 1)

            ctx = jax.lax.dot_general(
                p.astype(jnp.bfloat16), vh,
                dimension_numbers=(((1,), (0,)), ((), ())),
                preferred_element_type=jnp.float32)            # (S, D) f32
            # deferred softmax normalisation: scale (S,D) instead of (S,S)
            ctx = ctx * pl.reciprocal(denom, approx=True)
            ctx_heads.append(ctx.astype(jnp.bfloat16))

        # ---- assemble heads lane-dense, then one (S,C)@(C,C) output GEMM ----
        ctx_all = jnp.concatenate(ctx_heads, axis=-1)          # (S, C) bf16
        attn_out = jnp.dot(ctx_all, wo_ref[...],
                           preferred_element_type=jnp.float32) + bo_ref[...]   # (S, C)

        # ---- residual add + lane-dense store (C multiple of 128) ----
        o_ref[0] = (x + attn_out).astype(o_ref.dtype)

    return kernel


def _vmem_limit_bytes(s_len: int, c: int) -> int:
    """Rough VMEM footprint estimate (derived from S, C) with 2x headroom."""
    est = (
        2 * 2 * s_len * c * 4          # x in + out blocks, double-buffered, f32
        + s_len * 3 * c * (4 + 2)      # qkv f32 accumulation + bf16 copy
        + 2 * s_len * s_len * 4        # one head's scores + exp (f32)
        + s_len * c * (2 + 4)          # concatenated ctx (bf16) + projected out (f32)
        + 4 * c * c * 2 * 2            # wqkv + wo bf16, double-buffered
    )
    return max(16 << 20, min(int(est * 2), 96 << 20))


def self_attention_pallas(x_nchw, params, n_heads: int):
    """x_nchw: (B, C, H, W) float32.  Returns (B, C, H, W)."""
    b, c, h, w = x_nchw.shape
    s_len = h * w
    d = c // n_heads
    scale = d ** -0.5

    # glue: NCHW -> (B, S, C)
    x_seq = jnp.transpose(x_nchw.reshape(b, c, s_len), (0, 2, 1))

    # Fused QKV weight (C, 3C) bf16 with the query scale folded into the q-columns.
    # Head h of q/k/v lives in columns [block*C + h*D : block*C + (h+1)*D].
    wqkv = jnp.concatenate([params["wq"] * scale, params["wk"], params["wv"]],
                           axis=1).astype(jnp.bfloat16)                       # (C, 3C)
    bqkv = jnp.concatenate([params["bq"] * scale, params["bk"], params["bv"]]
                           ).reshape(1, 3 * c)                                # f32 (1, 3C)
    wo = params["wo"].astype(jnp.bfloat16)                                    # (C, C)

    vec = lambda v: v.reshape(1, c)
    args = (x_seq, vec(params["ln_w"]), vec(params["ln_b"]), wqkv, bqkv, wo,
            vec(params["bo"]))

    seq_spec = pl.BlockSpec((1, s_len, c), lambda i: (i, 0, 0))
    vec_spec = pl.BlockSpec((1, c), lambda i: (0, 0))

    out_seq = pl.pallas_call(
        _make_self_attn_kernel(n_heads),
        out_shape=jax.ShapeDtypeStruct((b, s_len, c), x_nchw.dtype),
        grid_spec=pltpu.PrefetchScalarGridSpec(
            num_scalar_prefetch=0,
            grid=(b,),
            in_specs=[seq_spec, vec_spec, vec_spec,
                      pl.BlockSpec((c, 3 * c), lambda i: (0, 0)),
                      pl.BlockSpec((1, 3 * c), lambda i: (0, 0)),
                      pl.BlockSpec((c, c), lambda i: (0, 0)),
                      vec_spec],
            out_specs=seq_spec,
        ),
        # Block i of x_seq is fully loaded before output block i is written -> safe alias.
        input_output_aliases={0: 0},
        compiler_params=pltpu.CompilerParams(
            dimension_semantics=("parallel",),        # v7x: one batch per TensorCore
            vmem_limit_bytes=_vmem_limit_bytes(s_len, c),
        ),
    )(*args)

    # glue: (B, S, C) -> NCHW
    return jnp.transpose(out_seq, (0, 2, 1)).reshape(b, c, h, w)


def ref_forward(x_nchw, params, n_heads: int):
    """Pure-JAX f32 reference reproducing the PyTorch forward pass."""
    b, c, h, w = x_nchw.shape
    s_len = h * w
    d = c // n_heads
    z = jnp.transpose(x_nchw.reshape(b, c, s_len), (0, 2, 1))          # (B, S, C)
    mu = z.mean(-1, keepdims=True)
    var = ((z - mu) ** 2).mean(-1, keepdims=True)
    zn = (z - mu) / jnp.sqrt(var + EPS) * params["ln_w"] + params["ln_b"]
    q = zn @ params["wq"] + params["bq"]
    k = zn @ params["wk"] + params["bk"]
    v = zn @ params["wv"] + params["bv"]
    qh = q.reshape(b, s_len, n_heads, d).transpose(0, 2, 1, 3)
    kh = k.reshape(b, s_len, n_heads, d).transpose(0, 2, 1, 3)
    vh = v.reshape(b, s_len, n_heads, d).transpose(0, 2, 1, 3)
    s = jnp.einsum("bhqd,bhkd->bhqk", qh, kh) / jnp.sqrt(jnp.float32(d))
    p = jax.nn.softmax(s, axis=-1)
    o = jnp.einsum("bhqk,bhkd->bhqd", p, vh)
    o = o.transpose(0, 2, 1, 3).reshape(b, s_len, c)
    o = o @ params["wo"] + params["bo"]
    out = z + o
    return jnp.transpose(out, (0, 2, 1)).reshape(b, c, h, w)


def make_params(key, channels: int):
    """Deterministic parameter init matching PyTorch MultiheadAttention shapes.

    PyTorch:  in_proj_weight (3C, C), in_proj_bias (3C,), out_proj (C, C) + (C,)
    Projection weights are pre-transposed so that y = x @ W.
    """
    c = channels
    ks = jax.random.split(key, 6)
    in_proj_w = jax.random.normal(ks[0], (3 * c, c), jnp.float32) * (1.0 / jnp.sqrt(c))
    in_proj_b = jax.random.normal(ks[1], (3 * c,), jnp.float32) * 0.02
    out_w = jax.random.normal(ks[2], (c, c), jnp.float32) * (1.0 / jnp.sqrt(c))
    out_b = jax.random.normal(ks[3], (c,), jnp.float32) * 0.02
    ln_w = 1.0 + 0.1 * jax.random.normal(ks[4], (c,), jnp.float32)
    ln_b = 0.1 * jax.random.normal(ks[5], (c,), jnp.float32)
    return {
        "ln_w": ln_w, "ln_b": ln_b,
        "wq": in_proj_w[0 * c:1 * c].T, "wk": in_proj_w[1 * c:2 * c].T, "wv": in_proj_w[2 * c:3 * c].T,
        "bq": in_proj_b[0 * c:1 * c], "bk": in_proj_b[1 * c:2 * c], "bv": in_proj_b[2 * c:3 * c],
        "wo": out_w.T, "bo": out_b,
    }


if __name__ == "__main__":
    # C=128 (divisible by n_heads=8) keeps every block's last dim a multiple of 128 lanes.
    B, C, H, W = 2, 128, 16, 16
    N_HEADS = 8

    key = jax.random.PRNGKey(0)
    kx, kp = jax.random.split(key)
    x = jax.random.normal(kx, (B, C, H, W), jnp.float32)
    params = make_params(kp, C)

    fn = jax.jit(functools.partial(self_attention_pallas, n_heads=N_HEADS))
    out = jax.block_until_ready(fn(x, params))

    ref = ref_forward(x, params, N_HEADS)
    assert out.shape == (B, C, H, W), out.shape
    # bf16 MXU operands (f32 accumulation) + approx EUP reciprocal vs pure-f32 reference:
    # observed error ~1e-2; tolerance tightened from 1e-1 to 5e-2 per review.
    err = float(jnp.max(jnp.abs(out - ref)))
    assert err < 5e-2, err
    print("KERNEL_OK")
</pallas_src>

<mosaic_0001>
module attributes {stable_mosaic.version = 11 : i64} {
  func.func @kernel(%arg0: i32, %arg1: memref<1x256x128xf32, #tpu.memory_space<vmem>>, %arg2: memref<1x128xf32, #tpu.memory_space<vmem>>, %arg3: memref<1x128xf32, #tpu.memory_space<vmem>>, %arg4: memref<128x384xbf16, #tpu.memory_space<vmem>>, %arg5: memref<1x384xf32, #tpu.memory_space<vmem>>, %arg6: memref<128x128xbf16, #tpu.memory_space<vmem>>, %arg7: memref<1x128xf32, #tpu.memory_space<vmem>>, %arg8: memref<1x256x128xf32, #tpu.memory_space<vmem>>) attributes {dimension_semantics = [#tpu.dimension_semantics<parallel>], iteration_bounds = array<i64: 2>, scalar_prefetch = 0 : i64, scratch_operands = 0 : i64, tpu.core_type = #tpu.core_type<tc>, window_params = [{transform_indices = @transform_0, window_bounds = array<i64: 1, 256, 128>}, {pipeline_mode = #tpu.pipeline_mode<synchronous>, transform_indices = @transform_1, window_bounds = array<i64: 1, 128>}, {pipeline_mode = #tpu.pipeline_mode<synchronous>, transform_indices = @transform_2, window_bounds = array<i64: 1, 128>}, {pipeline_mode = #tpu.pipeline_mode<synchronous>, transform_indices = @transform_3, window_bounds = array<i64: 128, 384>}, {pipeline_mode = #tpu.pipeline_mode<synchronous>, transform_indices = @transform_4, window_bounds = array<i64: 1, 384>}, {pipeline_mode = #tpu.pipeline_mode<synchronous>, transform_indices = @transform_5, window_bounds = array<i64: 128, 128>}, {pipeline_mode = #tpu.pipeline_mode<synchronous>, transform_indices = @transform_6, window_bounds = array<i64: 1, 128>}, {transform_indices = @transform_7, window_bounds = array<i64: 1, 256, 128>}]} {
    %c0 = arith.constant 0 : index
    %c0_0 = arith.constant 0 : index
    %c0_1 = arith.constant 0 : index
    %0 = vector.load %arg1[%c0, %c0_0, %c0_1] : memref<1x256x128xf32, #tpu.memory_space<vmem>>, vector<1x256x128xf32>
    %1 = vector.shape_cast %0 : vector<1x256x128xf32> to vector<256x128xf32>
    %cst = arith.constant dense<0.000000e+00> : vector<256xf32>
    %2 = vector.multi_reduction <add>, %1, %cst [1] : vector<256x128xf32> to vector<256xf32>
    %3 = vector.shape_cast %2 : vector<256xf32> to vector<256x1xf32>
    %cst_2 = arith.constant 1.280000e+02 : f32
    %4 = vector.broadcast %cst_2 : f32 to vector<256x1xf32>
    %5 = arith.divf %3, %4 : vector<256x1xf32>
    %6 = vector.broadcast %5 : vector<256x1xf32> to vector<256x128xf32>
    %7 = arith.subf %1, %6 : vector<256x128xf32>
    %8 = arith.mulf %7, %7 : vector<256x128xf32>
    %cst_3 = arith.constant dense<0.000000e+00> : vector<256xf32>
    %9 = vector.multi_reduction <add>, %8, %cst_3 [1] : vector<256x128xf32> to vector<256xf32>
    %10 = vector.shape_cast %9 : vector<256xf32> to vector<256x1xf32>
    %cst_4 = arith.constant 1.280000e+02 : f32
    %11 = vector.broadcast %cst_4 : f32 to vector<256x1xf32>
    %12 = arith.divf %10, %11 : vector<256x1xf32>
    %cst_5 = arith.constant 9.99999974E-6 : f32
    %13 = vector.broadcast %cst_5 : f32 to vector<256x1xf32>
    %14 = arith.addf %12, %13 : vector<256x1xf32>
    %15 = math.rsqrt %14 : vector<256x1xf32>
    %16 = vector.broadcast %15 : vector<256x1xf32> to vector<256x128xf32>
    %17 = arith.mulf %7, %16 : vector<256x128xf32>
    %c0_6 = arith.constant 0 : index
    %c0_7 = arith.constant 0 : index
    %18 = vector.load %arg2[%c0_6, %c0_7] : memref<1x128xf32, #tpu.memory_space<vmem>>, vector<1x128xf32>
    %19 = vector.broadcast %18 : vector<1x128xf32> to vector<256x128xf32>
    %20 = arith.mulf %17, %19 : vector<256x128xf32>
    %c0_8 = arith.constant 0 : index
    %c0_9 = arith.constant 0 : index
    %21 = vector.load %arg3[%c0_8, %c0_9] : memref<1x128xf32, #tpu.memory_space<vmem>>, vector<1x128xf32>
    %22 = vector.broadcast %21 : vector<1x128xf32> to vector<256x128xf32>
    %23 = arith.addf %20, %22 : vector<256x128xf32>
    %24 = arith.truncf %23 : vector<256x128xf32> to vector<256x128xbf16>
    %c0_10 = arith.constant 0 : index
    %c0_11 = arith.constant 0 : index
    %25 = vector.load %arg4[%c0_10, %c0_11] : memref<128x384xbf16, #tpu.memory_space<vmem>>, vector<128x384xbf16>
    %cst_12 = arith.constant dense<0.000000e+00> : vector<256x384xf32>
    %26 = tpu.matmul %24, %25, %cst_12 {dimension_numbers = #tpu.dot_dimension_numbers<[1], [0], [0], [1], [0, 0, 1, 1], [], []>} : vector<256x128xbf16>, vector<128x384xbf16>, vector<256x384xf32> -> vector<256x384xf32>
    %c0_13 = arith.constant 0 : index
    %c0_14 = arith.constant 0 : index
    %27 = vector.load %arg5[%c0_13, %c0_14] : memref<1x384xf32, #tpu.memory_space<vmem>>, vector<1x384xf32>
    %28 = vector.broadcast %27 : vector<1x384xf32> to vector<256x384xf32>
    %29 = arith.addf %26, %28 : vector<256x384xf32>
    %30 = arith.truncf %29 : vector<256x384xf32> to vector<256x384xbf16>
    %31 = vector.extract_strided_slice %30 {offsets = [0, 0], sizes = [256, 16], strides = [1, 1]} : vector<256x384xbf16> to vector<256x16xbf16>
    %32 = vector.extract_strided_slice %30 {offsets = [0, 128], sizes = [256, 16], strides = [1, 1]} : vector<256x384xbf16> to vector<256x16xbf16>
    %33 = vector.extract_strided_slice %30 {offsets = [0, 256], sizes = [256, 16], strides = [1, 1]} : vector<256x384xbf16> to vector<256x16xbf16>
    %cst_15 = arith.constant dense<0.000000e+00> : vector<256x256xf32>
    %34 = tpu.matmul %31, %32, %cst_15 {dimension_numbers = #tpu.dot_dimension_numbers<[1], [1], [0], [0], [0, 0, 1, 0], [], []>} : vector<256x16xbf16>, vector<256x16xbf16>, vector<256x256xf32> -> vector<256x256xf32>
    %cst_16 = arith.constant dense<0xFF800000> : vector<256xf32>
    %35 = vector.multi_reduction <maximumf>, %34, %cst_16 [1] : vector<256x256xf32> to vector<256xf32>
    %36 = vector.shape_cast %35 : vector<256xf32> to vector<256x1xf32>
    %37 = vector.broadcast %36 : vector<256x1xf32> to vector<256x256xf32>
    %38 = arith.subf %34, %37 : vector<256x256xf32>
    %39 = math.exp %38 : vector<256x256xf32>
    %cst_17 = arith.constant dense<0.000000e+00> : vector<256xf32>
    %40 = vector.multi_reduction <add>, %39, %cst_17 [1] : vector<256x256xf32> to vector<256xf32>
    %41 = vector.shape_cast %40 : vector<256xf32> to vector<256x1xf32>
    %42 = arith.truncf %39 : vector<256x256xf32> to vector<256x256xbf16>
    %cst_18 = arith.constant dense<0.000000e+00> : vector<256x16xf32>
    %43 = tpu.matmul %42, %33, %cst_18 {dimension_numbers = #tpu.dot_dimension_numbers<[1], [0], [0], [1], [0, 0, 1, 1], [], []>} : vector<256x256xbf16>, vector<256x16xbf16>, vector<256x16xf32> -> vector<256x16xf32>
    %44 = tpu.reciprocal %41 {approx = true} : vector<256x1xf32> -> vector<256x1xf32>
    %45 = vector.broadcast %44 : vector<256x1xf32> to vector<256x16xf32>
    %46 = arith.mulf %43, %45 : vector<256x16xf32>
    %47 = arith.truncf %46 : vector<256x16xf32> to vector<256x16xbf16>
    %48 = vector.extract_strided_slice %30 {offsets = [0, 16], sizes = [256, 16], strides = [1, 1]} : vector<256x384xbf16> to vector<256x16xbf16>
    %49 = vector.extract_strided_slice %30 {offsets = [0, 144], sizes = [256, 16], strides = [1, 1]} : vector<256x384xbf16> to vector<256x16xbf16>
    %50 = vector.extract_strided_slice %30 {offsets = [0, 272], sizes = [256, 16], strides = [1, 1]} : vector<256x384xbf16> to vector<256x16xbf16>
    %cst_19 = arith.constant dense<0.000000e+00> : vector<256x256xf32>
    %51 = tpu.matmul %48, %49, %cst_19 {dimension_numbers = #tpu.dot_dimension_numbers<[1], [1], [0], [0], [0, 0, 1, 0], [], []>} : vector<256x16xbf16>, vector<256x16xbf16>, vector<256x256xf32> -> vector<256x256xf32>
    %cst_20 = arith.constant dense<0xFF800000> : vector<256xf32>
    %52 = vector.multi_reduction <maximumf>, %51, %cst_20 [1] : vector<256x256xf32> to vector<256xf32>
    %53 = vector.shape_cast %52 : vector<256xf32> to vector<256x1xf32>
    %54 = vector.broadcast %53 : vector<256x1xf32> to vector<256x256xf32>
    %55 = arith.subf %51, %54 : vector<256x256xf32>
    %56 = math.exp %55 : vector<256x256xf32>
    %cst_21 = arith.constant dense<0.000000e+00> : vector<256xf32>
    %57 = vector.multi_reduction <add>, %56, %cst_21 [1] : vector<256x256xf32> to vector<256xf32>
    %58 = vector.shape_cast %57 : vector<256xf32> to vector<256x1xf32>
    %59 = arith.truncf %56 : vector<256x256xf32> to vector<256x256xbf16>
    %cst_22 = arith.constant dense<0.000000e+00> : vector<256x16xf32>
    %60 = tpu.matmul %59, %50, %cst_22 {dimension_numbers = #tpu.dot_dimension_numbers<[1], [0], [0], [1], [0, 0, 1, 1], [], []>} : vector<256x256xbf16>, vector<256x16xbf16>, vector<256x16xf32> -> vector<256x16xf32>
    %61 = tpu.reciprocal %58 {approx = true} : vector<256x1xf32> -> vector<256x1xf32>
    %62 = vector.broadcast %61 : vector<256x1xf32> to vector<256x16xf32>
    %63 = arith.mulf %60, %62 : vector<256x16xf32>
    %64 = arith.truncf %63 : vector<256x16xf32> to vector<256x16xbf16>
    %65 = vector.extract_strided_slice %30 {offsets = [0, 32], sizes = [256, 16], strides = [1, 1]} : vector<256x384xbf16> to vector<256x16xbf16>
    %66 = vector.extract_strided_slice %30 {offsets = [0, 160], sizes = [256, 16], strides = [1, 1]} : vector<256x384xbf16> to vector<256x16xbf16>
    %67 = vector.extract_strided_slice %30 {offsets = [0, 288], sizes = [256, 16], strides = [1, 1]} : vector<256x384xbf16> to vector<256x16xbf16>
    %cst_23 = arith.constant dense<0.000000e+00> : vector<256x256xf32>
    %68 = tpu.matmul %65, %66, %cst_23 {dimension_numbers = #tpu.dot_dimension_numbers<[1], [1], [0], [0], [0, 0, 1, 0], [], []>} : vector<256x16xbf16>, vector<256x16xbf16>, vector<256x256xf32> -> vector<256x256xf32>
    %cst_24 = arith.constant dense<0xFF800000> : vector<256xf32>
    %69 = vector.multi_reduction <maximumf>, %68, %cst_24 [1] : vector<256x256xf32> to vector<256xf32>
    %70 = vector.shape_cast %69 : vector<256xf32> to vector<256x1xf32>
    %71 = vector.broadcast %70 : vector<256x1xf32> to vector<256x256xf32>
    %72 = arith.subf %68, %71 : vector<256x256xf32>
    %73 = math.exp %72 : vector<256x256xf32>
    %cst_25 = arith.constant dense<0.000000e+00> : vector<256xf32>
    %74 = vector.multi_reduction <add>, %73, %cst_25 [1] : vector<256x256xf32> to vector<256xf32>
    %75 = vector.shape_cast %74 : vector<256xf32> to vector<256x1xf32>
    %76 = arith.truncf %73 : vector<256x256xf32> to vector<256x256xbf16>
    %cst_26 = arith.constant dense<0.000000e+00> : vector<256x16xf32>
    %77 = tpu.matmul %76, %67, %cst_26 {dimension_numbers = #tpu.dot_dimension_numbers<[1], [0], [0], [1], [0, 0, 1, 1], [], []>} : vector<256x256xbf16>, vector<256x16xbf16>, vector<256x16xf32> -> vector<256x16xf32>
    %78 = tpu.reciprocal %75 {approx = true} : vector<256x1xf32> -> vector<256x1xf32>
    %79 = vector.broadcast %78 : vector<256x1xf32> to vector<256x16xf32>
    %80 = arith.mulf %77, %79 : vector<256x16xf32>
    %81 = arith.truncf %80 : vector<256x16xf32> to vector<256x16xbf16>
    %82 = vector.extract_strided_slice %30 {offsets = [0, 48], sizes = [256, 16], strides = [1, 1]} : vector<256x384xbf16> to vector<256x16xbf16>
    %83 = vector.extract_strided_slice %30 {offsets = [0, 176], sizes = [256, 16], strides = [1, 1]} : vector<256x384xbf16> to vector<256x16xbf16>
    %84 = vector.extract_strided_slice %30 {offsets = [0, 304], sizes = [256, 16], strides = [1, 1]} : vector<256x384xbf16> to vector<256x16xbf16>
    %cst_27 = arith.constant dense<0.000000e+00> : vector<256x256xf32>
    %85 = tpu.matmul %82, %83, %cst_27 {dimension_numbers = #tpu.dot_dimension_numbers<[1], [1], [0], [0], [0, 0, 1, 0], [], []>} : vector<256x16xbf16>, vector<256x16xbf16>, vector<256x256xf32> -> vector<256x256xf32>
    %cst_28 = arith.constant dense<0xFF800000> : vector<256xf32>
    %86 = vector.multi_reduction <maximumf>, %85, %cst_28 [1] : vector<256x256xf32> to vector<256xf32>
    %87 = vector.shape_cast %86 : vector<256xf32> to vector<256x1xf32>
    %88 = vector.broadcast %87 : vector<256x1xf32> to vector<256x256xf32>
    %89 = arith.subf %85, %88 : vector<256x256xf32>
    %90 = math.exp %89 : vector<256x256xf32>
    %cst_29 = arith.constant dense<0.000000e+00> : vector<256xf32>
    %91 = vector.multi_reduction <add>, %90, %cst_29 [1] : vector<256x256xf32> to vector<256xf32>
    %92 = vector.shape_cast %91 : vector<256xf32> to vector<256x1xf32>
    %93 = arith.truncf %90 : vector<256x256xf32> to vector<256x256xbf16>
    %cst_30 = arith.constant dense<0.000000e+00> : vector<256x16xf32>
    %94 = tpu.matmul %93, %84, %cst_30 {dimension_numbers = #tpu.dot_dimension_numbers<[1], [0], [0], [1], [0, 0, 1, 1], [], []>} : vector<256x256xbf16>, vector<256x16xbf16>, vector<256x16xf32> -> vector<256x16xf32>
    %95 = tpu.reciprocal %92 {approx = true} : vector<256x1xf32> -> vector<256x1xf32>
    %96 = vector.broadcast %95 : vector<256x1xf32> to vector<256x16xf32>
    %97 = arith.mulf %94, %96 : vector<256x16xf32>
    %98 = arith.truncf %97 : vector<256x16xf32> to vector<256x16xbf16>
    %99 = vector.extract_strided_slice %30 {offsets = [0, 64], sizes = [256, 16], strides = [1, 1]} : vector<256x384xbf16> to vector<256x16xbf16>
    %100 = vector.extract_strided_slice %30 {offsets = [0, 192], sizes = [256, 16], strides = [1, 1]} : vector<256x384xbf16> to vector<256x16xbf16>
    %101 = vector.extract_strided_slice %30 {offsets = [0, 320], sizes = [256, 16], strides = [1, 1]} : vector<256x384xbf16> to vector<256x16xbf16>
    %cst_31 = arith.constant dense<0.000000e+00> : vector<256x256xf32>
    %102 = tpu.matmul %99, %100, %cst_31 {dimension_numbers = #tpu.dot_dimension_numbers<[1], [1], [0], [0], [0, 0, 1, 0], [], []>} : vector<256x16xbf16>, vector<256x16xbf16>, vector<256x256xf32> -> vector<256x256xf32>
    %cst_32 = arith.constant dense<0xFF800000> : vector<256xf32>
    %103 = vector.multi_reduction <maximumf>, %102, %cst_32 [1] : vector<256x256xf32> to vector<256xf32>
    %104 = vector.shape_cast %103 : vector<256xf32> to vector<256x1xf32>
    %105 = vector.broadcast %104 : vector<256x1xf32> to vector<256x256xf32>
    %106 = arith.subf %102, %105 : vector<256x256xf32>
    %107 = math.exp %106 : vector<256x256xf32>
    %cst_33 = arith.constant dense<0.000000e+00> : vector<256xf32>
    %108 = vector.multi_reduction <add>, %107, %cst_33 [1] : vector<256x256xf32> to vector<256xf32>
    %109 = vector.shape_cast %108 : vector<256xf32> to vector<256x1xf32>
    %110 = arith.truncf %107 : vector<256x256xf32> to vector<256x256xbf16>
    %cst_34 = arith.constant dense<0.000000e+00> : vector<256x16xf32>
    %111 = tpu.matmul %110, %101, %cst_34 {dimension_numbers = #tpu.dot_dimension_numbers<[1], [0], [0], [1], [0, 0, 1, 1], [], []>} : vector<256x256xbf16>, vector<256x16xbf16>, vector<256x16xf32> -> vector<256x16xf32>
    %112 = tpu.reciprocal %109 {approx = true} : vector<256x1xf32> -> vector<256x1xf32>
    %113 = vector.broadcast %112 : vector<256x1xf32> to vector<256x16xf32>
    %114 = arith.mulf %111, %113 : vector<256x16xf32>
    %115 = arith.truncf %114 : vector<256x16xf32> to vector<256x16xbf16>
    %116 = vector.extract_strided_slice %30 {offsets = [0, 80], sizes = [256, 16], strides = [1, 1]} : vector<256x384xbf16> to vector<256x16xbf16>
    %117 = vector.extract_strided_slice %30 {offsets = [0, 208], sizes = [256, 16], strides = [1, 1]} : vector<256x384xbf16> to vector<256x16xbf16>
    %118 = vector.extract_strided_slice %30 {offsets = [0, 336], sizes = [256, 16], strides = [1, 1]} : vector<256x384xbf16> to vector<256x16xbf16>
    %cst_35 = arith.constant dense<0.000000e+00> : vector<256x256xf32>
    %119 = tpu.matmul %116, %117, %cst_35 {dimension_numbers = #tpu.dot_dimension_numbers<[1], [1], [0], [0], [0, 0, 1, 0], [], []>} : vector<256x16xbf16>, vector<256x16xbf16>, vector<256x256xf32> -> vector<256x256xf32>
    %cst_36 = arith.constant dense<0xFF800000> : vector<256xf32>
    %120 = vector.multi_reduction <maximumf>, %119, %cst_36 [1] : vector<256x256xf32> to vector<256xf32>
    %121 = vector.shape_cast %120 : vector<256xf32> to vector<256x1xf32>
    %122 = vector.broadcast %121 : vector<256x1xf32> to vector<256x256xf32>
    %123 = arith.subf %119, %122 : vector<256x256xf32>
    %124 = math.exp %123 : vector<256x256xf32>
    %cst_37 = arith.constant dense<0.000000e+00> : vector<256xf32>
    %125 = vector.multi_reduction <add>, %124, %cst_37 [1] : vector<256x256xf32> to vector<256xf32>
    %126 = vector.shape_cast %125 : vector<256xf32> to vector<256x1xf32>
    %127 = arith.truncf %124 : vector<256x256xf32> to vector<256x256xbf16>
    %cst_38 = arith.constant dense<0.000000e+00> : vector<256x16xf32>
    %128 = tpu.matmul %127, %118, %cst_38 {dimension_numbers = #tpu.dot_dimension_numbers<[1], [0], [0], [1], [0, 0, 1, 1], [], []>} : vector<256x256xbf16>, vector<256x16xbf16>, vector<256x16xf32> -> vector<256x16xf32>
    %129 = tpu.reciprocal %126 {approx = true} : vector<256x1xf32> -> vector<256x1xf32>
    %130 = vector.broadcast %129 : vector<256x1xf32> to vector<256x16xf32>
    %131 = arith.mulf %128, %130 : vector<256x16xf32>
    %132 = arith.truncf %131 : vector<256x16xf32> to vector<256x16xbf16>
    %133 = vector.extract_strided_slice %30 {offsets = [0, 96], sizes = [256, 16], strides = [1, 1]} : vector<256x384xbf16> to vector<256x16xbf16>
    %134 = vector.extract_strided_slice %30 {offsets = [0, 224], sizes = [256, 16], strides = [1, 1]} : vector<256x384xbf16> to vector<256x16xbf16>
    %135 = vector.extract_strided_slice %30 {offsets = [0, 352], sizes = [256, 16], strides = [1, 1]} : vector<256x384xbf16> to vector<256x16xbf16>
    %cst_39 = arith.constant dense<0.000000e+00> : vector<256x256xf32>
    %136 = tpu.matmul %133, %134, %cst_39 {dimension_numbers = #tpu.dot_dimension_numbers<[1], [1], [0], [0], [0, 0, 1, 0], [], []>} : vector<256x16xbf16>, vector<256x16xbf16>, vector<256x256xf32> -> vector<256x256xf32>
    %cst_40 = arith.constant dense<0xFF800000> : vector<256xf32>
    %137 = vector.multi_reduction <maximumf>, %136, %cst_40 [1] : vector<256x256xf32> to vector<256xf32>
    %138 = vector.shape_cast %137 : vector<256xf32> to vector<256x1xf32>
    %139 = vector.broadcast %138 : vector<256x1xf32> to vector<256x256xf32>
    %140 = arith.subf %136, %139 : vector<256x256xf32>
    %141 = math.exp %140 : vector<256x256xf32>
    %cst_41 = arith.constant dense<0.000000e+00> : vector<256xf32>
    %142 = vector.multi_reduction <add>, %141, %cst_41 [1] : vector<256x256xf32> to vector<256xf32>
    %143 = vector.shape_cast %142 : vector<256xf32> to vector<256x1xf32>
    %144 = arith.truncf %141 : vector<256x256xf32> to vector<256x256xbf16>
    %cst_42 = arith.constant dense<0.000000e+00> : vector<256x16xf32>
    %145 = tpu.matmul %144, %135, %cst_42 {dimension_numbers = #tpu.dot_dimension_numbers<[1], [0], [0], [1], [0, 0, 1, 1], [], []>} : vector<256x256xbf16>, vector<256x16xbf16>, vector<256x16xf32> -> vector<256x16xf32>
    %146 = tpu.reciprocal %143 {approx = true} : vector<256x1xf32> -> vector<256x1xf32>
    %147 = vector.broadcast %146 : vector<256x1xf32> to vector<256x16xf32>
    %148 = arith.mulf %145, %147 : vector<256x16xf32>
    %149 = arith.truncf %148 : vector<256x16xf32> to vector<256x16xbf16>
    %150 = vector.extract_strided_slice %30 {offsets = [0, 112], sizes = [256, 16], strides = [1, 1]} : vector<256x384xbf16> to vector<256x16xbf16>
    %151 = vector.extract_strided_slice %30 {offsets = [0, 240], sizes = [256, 16], strides = [1, 1]} : vector<256x384xbf16> to vector<256x16xbf16>
    %152 = vector.extract_strided_slice %30 {offsets = [0, 368], sizes = [256, 16], strides = [1, 1]} : vector<256x384xbf16> to vector<256x16xbf16>
    %cst_43 = arith.constant dense<0.000000e+00> : vector<256x256xf32>
    %153 = tpu.matmul %150, %151, %cst_43 {dimension_numbers = #tpu.dot_dimension_numbers<[1], [1], [0], [0], [0, 0, 1, 0], [], []>} : vector<256x16xbf16>, vector<256x16xbf16>, vector<256x256xf32> -> vector<256x256xf32>
    %cst_44 = arith.constant dense<0xFF800000> : vector<256xf32>
    %154 = vector.multi_reduction <maximumf>, %153, %cst_44 [1] : vector<256x256xf32> to vector<256xf32>
    %155 = vector.shape_cast %154 : vector<256xf32> to vector<256x1xf32>
    %156 = vector.broadcast %155 : vector<256x1xf32> to vector<256x256xf32>
    %157 = arith.subf %153, %156 : vector<256x256xf32>
    %158 = math.exp %157 : vector<256x256xf32>
    %cst_45 = arith.constant dense<0.000000e+00> : vector<256xf32>
    %159 = vector.multi_reduction <add>, %158, %cst_45 [1] : vector<256x256xf32> to vector<256xf32>
    %160 = vector.shape_cast %159 : vector<256xf32> to vector<256x1xf32>
    %161 = arith.truncf %158 : vector<256x256xf32> to vector<256x256xbf16>
    %cst_46 = arith.constant dense<0.000000e+00> : vector<256x16xf32>
    %162 = tpu.matmul %161, %152, %cst_46 {dimension_numbers = #tpu.dot_dimension_numbers<[1], [0], [0], [1], [0, 0, 1, 1], [], []>} : vector<256x256xbf16>, vector<256x16xbf16>, vector<256x16xf32> -> vector<256x16xf32>
    %163 = tpu.reciprocal %160 {approx = true} : vector<256x1xf32> -> vector<256x1xf32>
    %164 = vector.broadcast %163 : vector<256x1xf32> to vector<256x16xf32>
    %165 = arith.mulf %162, %164 : vector<256x16xf32>
    %166 = arith.truncf %165 : vector<256x16xf32> to vector<256x16xbf16>
    %167 = tpu.concatenate %47, %64, %81, %98, %115, %132, %149, %166 in 1 : vector<256x16xbf16>, vector<256x16xbf16>, vector<256x16xbf16>, vector<256x16xbf16>, vector<256x16xbf16>, vector<256x16xbf16>, vector<256x16xbf16>, vector<256x16xbf16> -> vector<256x128xbf16>
    %c0_47 = arith.constant 0 : index
    %c0_48 = arith.constant 0 : index
    %168 = vector.load %arg6[%c0_47, %c0_48] : memref<128x128xbf16, #tpu.memory_space<vmem>>, vector<128x128xbf16>
    %cst_49 = arith.constant dense<0.000000e+00> : vector<256x128xf32>
    %169 = tpu.matmul %167, %168, %cst_49 {dimension_numbers = #tpu.dot_dimension_numbers<[1], [0], [0], [1], [0, 0, 1, 1], [], []>} : vector<256x128xbf16>, vector<128x128xbf16>, vector<256x128xf32> -> vector<256x128xf32>
    %c0_50 = arith.constant 0 : index
    %c0_51 = arith.constant 0 : index
    %170 = vector.load %arg7[%c0_50, %c0_51] : memref<1x128xf32, #tpu.memory_space<vmem>>, vector<1x128xf32>
    %171 = vector.broadcast %170 : vector<1x128xf32> to vector<256x128xf32>
    %172 = arith.addf %169, %171 : vector<256x128xf32>
    %173 = arith.addf %1, %172 : vector<256x128xf32>
    %c0_52 = arith.constant 0 : index
    %c0_53 = arith.constant 0 : index
    %c0_54 = arith.constant 0 : index
    %174 = vector.load %arg8[%c0_52, %c0_53, %c0_54] : memref<1x256x128xf32, #tpu.memory_space<vmem>>, vector<1x256x128xf32>
    %175 = vector.shape_cast %174 : vector<1x256x128xf32> to vector<256x128xf32>
    %176 = vector.shape_cast %173 : vector<256x128xf32> to vector<1x256x128xf32>
    tpu.vector_store %arg8[%c0_52, %c0_53, %c0_54], %176 {strides = array<i32>} : memref<1x256x128xf32, #tpu.memory_space<vmem>>, vector<1x256x128xf32>,
    return
  }
  func.func @transform_0(%arg0: i32) -> (i32, i32, i32) {
    %c0_i32 = arith.constant 0 : i32
    %c0_i32_0 = arith.constant 0 : i32
    %c0_i32_1 = arith.constant 0 : i32
    return %arg0, %c0_i32, %c0_i32_0 : i32, i32, i32
  }
  func.func @transform_1(%arg0: i32) -> (i32, i32) {
    %c0_i32 = arith.constant 0 : i32
    %c0_i32_0 = arith.constant 0 : i32
    %c0_i32_1 = arith.constant 0 : i32
    return %c0_i32, %c0_i32_0 : i32, i32
  }
  func.func @transform_2(%arg0: i32) -> (i32, i32) {
    %c0_i32 = arith.constant 0 : i32
    %c0_i32_0 = arith.constant 0 : i32
    %c0_i32_1 = arith.constant 0 : i32
    return %c0_i32, %c0_i32_0 : i32, i32
  }
  func.func @transform_3(%arg0: i32) -> (i32, i32) {
    %c0_i32 = arith.constant 0 : i32
    %c0_i32_0 = arith.constant 0 : i32
    %c0_i32_1 = arith.constant 0 : i32
    return %c0_i32, %c0_i32_0 : i32, i32
  }
  func.func @transform_4(%arg0: i32) -> (i32, i32) {
    %c0_i32 = arith.constant 0 : i32
    %c0_i32_0 = arith.constant 0 : i32
    %c0_i32_1 = arith.constant 0 : i32
    return %c0_i32, %c0_i32_0 : i32, i32
  }
  func.func @transform_5(%arg0: i32) -> (i32, i32) {
    %c0_i32 = arith.constant 0 : i32
    %c0_i32_0 = arith.constant 0 : i32
    %c0_i32_1 = arith.constant 0 : i32
    return %c0_i32, %c0_i32_0 : i32, i32
  }
  func.func @transform_6(%arg0: i32) -> (i32, i32) {
    %c0_i32 = arith.constant 0 : i32
    %c0_i32_0 = arith.constant 0 : i32
    %c0_i32_1 = arith.constant 0 : i32
    return %c0_i32, %c0_i32_0 : i32, i32
  }
  func.func @transform_7(%arg0: i32) -> (i32, i32, i32) {
    %c0_i32 = arith.constant 0 : i32
    %c0_i32_0 = arith.constant 0 : i32
    %c0_i32_1 = arith.constant 0 : i32
    return %arg0, %c0_i32, %c0_i32_0 : i32, i32, i32
  }
}

</mosaic_0001>

<llo_original>
// kernel: self_attention_pallas.1
$region0: #{self_attention_pallas.1}
  #allocation0 [shape = 'u32[]', space=smem, size = 0x4, offset = 0x4, fixed_abs, tag = 'smem constant byte address 0x4 - core index']
  #allocation1 [shape = 'u32[144,128]{1,0:T(1,128)}', space=vmem, size = 0x12000, scoped, tag = 'internal scratch']
  %s0 = inlined_call_operand.vmem [shape: f32[2,256,128], index: 0, kind: input, shape index: {}, may-alias: {0,7}]
  %s1 = inlined_call_operand.vmem [shape: f32[1,128], index: 1, kind: input, shape index: {}]
  %s2 = inlined_call_operand.vmem [shape: f32[1,128], index: 2, kind: input, shape index: {}]
  %s3 = inlined_call_operand.vmem [shape: bf16[128,384], index: 3, kind: input, shape index: {}]
  %s4 = inlined_call_operand.vmem [shape: f32[1,384], index: 4, kind: input, shape index: {}]
  %s5 = inlined_call_operand.vmem [shape: bf16[128,128], index: 5, kind: input, shape index: {}]
  %s6 = inlined_call_operand.vmem [shape: f32[1,128], index: 6, kind: input, shape index: {}]
  %s7 = inlined_call_operand.vmem [shape: f32[2,256,128], index: 7, kind: output, shape index: {}, may-alias: {0,7}]
  %s8 = sld [smem:[#allocation0]]
  $region61: #{self_attention_pallas.1} parent=0
    _
  %s10 = ssub.s32 1, %s8
  %s11 = scalar_select 0, %s10, %s8
  loop: start=0, step=1, limit=4
  $region2: #{self_attention_pallas.1} parent=0 // loop_pre_header
    _
  $region3: #{self_attention_pallas.1} parent=0 // loop_header
    %s13 = sphi 0, %s17
    %p14 = scmp.ge.s32.totalorder %s13, 4
    %s23 = sphi 0, %s25
    %s26 = sphi 0, %s23
    %s27 = sphi 0, %s26
    %s43 = sphi 0, %s27
    %s47 = sphi 0, %s47
    %s49 = sphi 0, %s47
    %s50 = sphi 0, %s49
    %s64 = sphi 0, %s50
    %s68 = sphi 0, %s68
    %s70 = sphi 0, %s68
    %s71 = sphi 0, %s70
    %s85 = sphi 0, %s71
    %s89 = sphi 0, %s89
    %s91 = sphi 0, %s89
    %s92 = sphi 0, %s91
    %s106 = sphi 0, %s92
    %s110 = sphi 0, %s110
    %s112 = sphi 0, %s110
    %s113 = sphi 0, %s112
    %s127 = sphi 0, %s113
    %s131 = sphi 0, %s131
    %s133 = sphi 0, %s131
    %s134 = sphi 0, %s133
    %s148 = sphi 0, %s134
    %s152 = sphi 0, %s152
    %s154 = sphi 0, %s152
    %s155 = sphi 0, %s154
    %s169 = sphi 0, %s155
    %s175 = sphi 0, %s177
    %s178 = sphi 0, %s175
    %s179 = sphi 0, %s178
    %s195 = sphi 0, %s179
  $region4: #{self_attention_pallas.1} parent=0 // loop_header_branch
    %16 = sbr.rel (%p14) target = $region8
  $region5: #{self_attention_pallas.1} parent=0 // loop_body
    %s18 = ssub.s32 %s13, 1
    %s19 = ssub.s32 %s13, 2
    %s20 = sadd.s32 %s13, 1
    %s21 = ssub.s32 %s13, %s20
    %p22 = scmp.eq.s32.totalorder %s21, 0
    %s24 = sadd.s32 %s23, 1
    %s25 = scalar_select %p22, %s23, %s24
    %p28 = pneg %p22
    %p29 = scmp.eq.s32.totalorder %s13, 1
    %p30 = por %p28, %p29
    %p31 = scmp.ne.s32.totalorder %s23, %s26
    %p32 = scmp.eq.s32.totalorder %s13, 0
    %p33 = por %p31, %p32
    %p34 = scmp.ne.s32.totalorder %s23, %s26
    %p35 = scmp.eq.s32.totalorder %s18, 1
    %p36 = por %p34, %p35
    %p37 = scmp.ne.s32.totalorder %s26, %s27
    %p38 = scmp.eq.s32.totalorder %s18, 0
    %p39 = por %p37, %p38
    %p40 = scmp.ne.s32.totalorder %s26, %s27
    %p41 = scmp.eq.s32.totalorder %s19, 1
    %p42 = por %p40, %p41
    %p44 = scmp.ne.s32.totalorder %s27, %s43
    %p45 = scmp.eq.s32.totalorder %s19, 0
    %p46 = por %p44, %p45
    %s48 = sadd.s32 %s47, 1
    %p51 = scmp.eq.s32.totalorder %s13, 1
    %p52 = scmp.ne.s32.totalorder %s47, %s49
    %p53 = scmp.eq.s32.totalorder %s13, 0
    %p54 = por %p52, %p53
    %p55 = scmp.ne.s32.totalorder %s47, %s49
    %p56 = scmp.eq.s32.totalorder %s18, 1
    %p57 = por %p55, %p56
    %p58 = scmp.ne.s32.totalorder %s49, %s50
    %p59 = scmp.eq.s32.totalorder %s18, 0
    %p60 = por %p58, %p59
    %p61 = scmp.ne.s32.totalorder %s49, %s50
    %p62 = scmp.eq.s32.totalorder %s19, 1
    %p63 = por %p61, %p62
    %p65 = scmp.ne.s32.totalorder %s50, %s64
    %p66 = scmp.eq.s32.totalorder %s19, 0
    %p67 = por %p65, %p66
    %s69 = sadd.s32 %s68, 1
    %p72 = scmp.eq.s32.totalorder %s13, 1
    %p73 = scmp.ne.s32.totalorder %s68, %s70
    %p74 = scmp.eq.s32.totalorder %s13, 0
    %p75 = por %p73, %p74
    %p76 = scmp.ne.s32.totalorder %s68, %s70
    %p77 = scmp.eq.s32.totalorder %s18, 1
    %p78 = por %p76, %p77
    %p79 = scmp.ne.s32.totalorder %s70, %s71
    %p80 = scmp.eq.s32.totalorder %s18, 0
    %p81 = por %p79, %p80
    %p82 = scmp.ne.s32.totalorder %s70, %s71
    %p83 = scmp.eq.s32.totalorder %s19, 1
    %p84 = por %p82, %p83
    %p86 = scmp.ne.s32.totalorder %s71, %s85
    %p87 = scmp.eq.s32.totalorder %s19, 0
    %p88 = por %p86, %p87
    %s90 = sadd.s32 %s89, 1
    %p93 = scmp.eq.s32.totalorder %s13, 1
    %p94 = scmp.ne.s32.totalorder %s89, %s91
    %p95 = scmp.eq.s32.totalorder %s13, 0
    %p96 = por %p94, %p95
    %p97 = scmp.ne.s32.totalorder %s89, %s91
    %p98 = scmp.eq.s32.totalorder %s18, 1
    %p99 = por %p97, %p98
    %p100 = scmp.ne.s32.totalorder %s91, %s92
    %p101 = scmp.eq.s32.totalorder %s18, 0
    %p102 = por %p100, %p101
    %p103 = scmp.ne.s32.totalorder %s91, %s92
    %p104 = scmp.eq.s32.totalorder %s19, 1
    %p105 = por %p103, %p104
    %p107 = scmp.ne.s32.totalorder %s92, %s106
    %p108 = scmp.eq.s32.totalorder %s19, 0
    %p109 = por %p107, %p108
    %s111 = sadd.s32 %s110, 1
    %p114 = scmp.eq.s32.totalorder %s13, 1
    %p115 = scmp.ne.s32.totalorder %s110, %s112
    %p116 = scmp.eq.s32.totalorder %s13, 0
    %p117 = por %p115, %p116
    %p118 = scmp.ne.s32.totalorder %s110, %s112
    %p119 = scmp.eq.s32.totalorder %s18, 1
    %p120 = por %p118, %p119
    %p121 = scmp.ne.s32.totalorder %s112, %s113
    %p122 = scmp.eq.s32.totalorder %s18, 0
    %p123 = por %p121, %p122
    %p124 = scmp.ne.s32.totalorder %s112, %s113
    %p125 = scmp.eq.s32.totalorder %s19, 1
    %p126 = por %p124, %p125
    %p128 = scmp.ne.s32.totalorder %s113, %s127
    %p129 = scmp.eq.s32.totalorder %s19, 0
    %p130 = por %p128, %p129
    %s132 = sadd.s32 %s131, 1
    %p135 = scmp.eq.s32.totalorder %s13, 1
    %p136 = scmp.ne.s32.totalorder %s131, %s133
    %p137 = scmp.eq.s32.totalorder %s13, 0
    %p138 = por %p136, %p137
    %p139 = scmp.ne.s32.totalorder %s131, %s133
    %p140 = scmp.eq.s32.totalorder %s18, 1
    %p141 = por %p139, %p140
    %p142 = scmp.ne.s32.totalorder %s133, %s134
    %p143 = scmp.eq.s32.totalorder %s18, 0
    %p144 = por %p142, %p143
    %p145 = scmp.ne.s32.totalorder %s133, %s134
    %p146 = scmp.eq.s32.totalorder %s19, 1
    %p147 = por %p145, %p146
    %p149 = scmp.ne.s32.totalorder %s134, %s148
    %p150 = scmp.eq.s32.totalorder %s19, 0
    %p151 = por %p149, %p150
    %s153 = sadd.s32 %s152, 1
    %p156 = scmp.eq.s32.totalorder %s13, 1
    %p157 = scmp.ne.s32.totalorder %s152, %s154
    %p158 = scmp.eq.s32.totalorder %s13, 0
    %p159 = por %p157, %p158
    %p160 = scmp.ne.s32.totalorder %s152, %s154
    %p161 = scmp.eq.s32.totalorder %s18, 1
    %p162 = por %p160, %p161
    %p163 = scmp.ne.s32.totalorder %s154, %s155
    %p164 = scmp.eq.s32.totalorder %s18, 0
    %p165 = por %p163, %p164
    %p166 = scmp.ne.s32.totalorder %s154, %s155
    %p167 = scmp.eq.s32.totalorder %s19, 1
    %p168 = por %p166, %p167
    %p170 = scmp.ne.s32.totalorder %s155, %s169
    %p171 = scmp.eq.s32.totalorder %s19, 0
    %p172 = por %p170, %p171
    %s173 = ssub.s32 %s13, %s20
    %p174 = scmp.eq.s32.totalorder %s173, 0
    %s176 = sadd.s32 %s175, 1
    %s177 = scalar_select %p174, %s175, %s176
    %p180 = pneg %p174
    %p181 = scmp.eq.s32.totalorder %s13, 1
    %p182 = por %p180, %p181
    %p183 = scmp.ne.s32.totalorder %s175, %s178
    %p184 = scmp.eq.s32.totalorder %s13, 0
    %p185 = por %p183, %p184
    %p186 = scmp.ne.s32.totalorder %s175, %s178
    %p187 = scmp.eq.s32.totalorder %s18, 1
    %p188 = por %p186, %p187
    %p189 = scmp.ne.s32.totalorder %s178, %s179
    %p190 = scmp.eq.s32.totalorder %s18, 0
    %p191 = por %p189, %p190
    %p192 = scmp.ne.s32.totalorder %s178, %s179
    %p193 = scmp.eq.s32.totalorder %s19, 1
    %p194 = por %p192, %p193
    %p196 = scmp.ne.s32.totalorder %s179, %s195
    %p197 = scmp.eq.s32.totalorder %s19, 0
    %p198 = por %p196, %p197
    %p199 = scmp.le.s32.totalorder 1, %s13
    %p200 = scmp.lt.s32.totalorder %s13, 3
    %p201 = pnand %p199, %p200
    %p202 = pneg %p201
    // Predicated region
    $region9: #{self_attention_pallas.1} parent=5 // pred_check
      _
    $region10: #{self_attention_pallas.1} parent=5 // pred_check_branch
      %204 = sbr.rel (%p201) target = $region12
    $region11: #{self_attention_pallas.1} parent=5 // pred_region
      %s205 = ssub.s32 %s13, 1
      // Predicated region
      $region13: #{self_attention_pallas.1} parent=11 // pred_check
        %p206 = pneg %p60
      $region14: #{self_attention_pallas.1} parent=11 // pred_check_branch
        %208 = sbr.rel (%p206) target = $region16
      $region15: #{self_attention_pallas.1} parent=11 // pred_region
        _
      $region16: #{self_attention_pallas.1} parent=11 // pred_fallthru
        _
      // Predicated region
      $region17: #{self_attention_pallas.1} parent=11 // pred_check
        %p209 = pneg %p81
      $region18: #{self_attention_pallas.1} parent=11 // pred_check_branch
        %211 = sbr.rel (%p209) target = $region20
      $region19: #{self_attention_pallas.1} parent=11 // pred_region
        _
      $region20: #{self_attention_pallas.1} parent=11 // pred_fallthru
        _
      // Predicated region
      $region21: #{self_attention_pallas.1} parent=11 // pred_check
        %p212 = pneg %p102
      $region22: #{self_attention_pallas.1} parent=11 // pred_check_branch
        %214 = sbr.rel (%p212) target = $region24
      $region23: #{self_attention_pallas.1} parent=11 // pred_region
        _
      $region24: #{self_attention_pallas.1} parent=11 // pred_fallthru
        _
      // Predicated region
      $region25: #{self_attention_pallas.1} parent=11 // pred_check
        %p215 = pneg %p123
      $region26: #{self_attention_pallas.1} parent=11 // pred_check_branch
        %217 = sbr.rel (%p215) target = $region28
      $region27: #{self_attention_pallas.1} parent=11 // pred_region
        _
      $region28: #{self_attention_pallas.1} parent=11 // pred_fallthru
        _
      // Predicated region
      $region29: #{self_attention_pallas.1} parent=11 // pred_check
        %p218 = pneg %p144
      $region30: #{self_attention_pallas.1} parent=11 // pred_check_branch
        %220 = sbr.rel (%p218) target = $region32
      $region31: #{self_attention_pallas.1} parent=11 // pred_region
        _
      $region32: #{self_attention_pallas.1} parent=11 // pred_fallthru
        _
      // Predicated region
      $region33: #{self_attention_pallas.1} parent=11 // pred_check
        %p221 = pneg %p165
      $region34: #{self_attention_pallas.1} parent=11 // pred_check_branch
        %223 = sbr.rel (%p221) target = $region36
      $region35: #{self_attention_pallas.1} parent=11 // pred_region
        _
      $region36: #{self_attention_pallas.1} parent=11 // pred_fallthru
        _
    $region12: #{self_attention_pallas.1} parent=5 // pred_fallthru
      _
    %p224 = scmp.lt.s32.totalorder %s13, 2
    // Predicated region
    $region37: #{self_attention_pallas.1} parent=5 // pred_check
      %p225 = pneg %p224
    $region38: #{self_attention_pallas.1} parent=5 // pred_check_branch
      %227 = sbr.rel (%p225) target = $region40
    $region39: #{self_attention_pallas.1} parent=5 // pred_region
      // Predicated region
      $region41: #{self_attention_pallas.1} parent=39 // pred_check
        %p228 = pneg %p33
      $region42: #{self_attention_pallas.1} parent=39 // pred_check_branch
        %230 = sbr.rel (%p228) target = $region44
      $region43: #{self_attention_pallas.1} parent=39 // pred_region
        %p231 = scmp.lt.s32.totalorder %s13, 1
        %s232 = scalar_select %p231, %s13, 1
        %s233 = smul.addr %s232, 32
        %s234 = smul.addr %s233, 8
        %s235 = scalar_lea.vmem %s0, %s234
      $region44: #{self_attention_pallas.1} parent=39 // pred_fallthru
        _
    $region40: #{self_attention_pallas.1} parent=5 // pred_fallthru
      _
    %p236 = scmp.le.s32.totalorder 1, %s13
    %p237 = scmp.lt.s32.totalorder %s13, 3
    %p238 = pnand %p236, %p237
    %p239 = pneg %p238
    // Predicated region
    $region45: #{self_attention_pallas.1} parent=5 // pred_check
      _
    $region46: #{self_attention_pallas.1} parent=5 // pred_check_branch
      %241 = sbr.rel (%p238) target = $region48
    $region47: #{self_attention_pallas.1} parent=5 // pred_region
      %s242 = ssub.s32 %s13, 1
      %p243 = scmp.lt.s32.totalorder %s18, 1
      %s244 = scalar_select %p243, %s18, 1
      %s245 = smul.addr %s244, 32
      %s246 = smul.addr %s245, 8
      %s247 = scalar_lea.vmem %s0, %s246
      %p248 = pneg %p39
      %p249 = pneg %p36
      %p250 = pneg %p60
      %p251 = pneg %p57
      %p252 = pneg %p81
      %p253 = pneg %p78
      %p254 = pneg %p102
      %p255 = pneg %p99
      %p256 = pneg %p123
      %p257 = pneg %p120
      %p258 = pneg %p144
      %p259 = pneg %p141
      %p260 = pneg %p165
      %p261 = pneg %p162
      %p262 = pneg %p191
      %p263 = pneg %p188
      %p264 = scmp.lt.s32.totalorder %s18, 1
      %s265 = scalar_select %p264, %s18, 1
      %s266 = smul.addr %s265, 32
      %s267 = smul.addr %s266, 8
      %s268 = scalar_lea.vmem %s7, %s267
      %p269 = scmp.lt.s32.totalorder %s18, 1
      %s270 = scalar_select %p269, %s18, 1
      %s271 = smul.addr %s270, 32
      %s272 = smul.addr %s271, 8
      %s273 = scalar_lea.vmem %s0, %s272
      %p274 = scmp.lt.s32.totalorder %s18, 1
      %s275 = scalar_select %p274, %s18, 1
      %s276 = smul.addr %s275, 32
      %s277 = smul.addr %s276, 8
      %s278 = scalar_lea.vmem %s7, %s277
      %v280 = vld [vmem:[%s273] sm:$0xff]
      %v281 = vld [vmem:[%s273 + $0x8] sm:$0xff]
      %v282 = vld [vmem:[%s273 + $0x10] sm:$0xff]
      %v283 = vld [vmem:[%s273 + $0x18] sm:$0xff]
      %v284 = vld [vmem:[%s273 + $0x20] sm:$0xff]
      %v285 = vld [vmem:[%s273 + $0x28] sm:$0xff]
      %v286 = vld [vmem:[%s273 + $0x30] sm:$0xff]
      %v287 = vld [vmem:[%s273 + $0x38] sm:$0xff]
      %v288 = vld [vmem:[%s273 + $0x40] sm:$0xff]
      %v289 = vld [vmem:[%s273 + $0x48] sm:$0xff]
      %v290 = vld [vmem:[%s273 + $0x50] sm:$0xff]
      %v291 = vld [vmem:[%s273 + $0x58] sm:$0xff]
      %v292 = vld [vmem:[%s273 + $0x60] sm:$0xff]
      %v293 = vld [vmem:[%s273 + $0x68] sm:$0xff]
      %v294 = vld [vmem:[%s273 + $0x70] sm:$0xff]
      %v295 = vld [vmem:[%s273 + $0x78] sm:$0xff]
      %v296 = vld [vmem:[%s273 + $0x80] sm:$0xff]
      %v297 = vld [vmem:[%s273 + $0x88] sm:$0xff]
      %v298 = vld [vmem:[%s273 + $0x90] sm:$0xff]
      %v299 = vld [vmem:[%s273 + $0x98] sm:$0xff]
      %v300 = vld [vmem:[%s273 + $0xa0] sm:$0xff]
      %v301 = vld [vmem:[%s273 + $0xa8] sm:$0xff]
      %v302 = vld [vmem:[%s273 + $0xb0] sm:$0xff]
      %v303 = vld [vmem:[%s273 + $0xb8] sm:$0xff]
      %v304 = vld [vmem:[%s273 + $0xc0] sm:$0xff]
      %v305 = vld [vmem:[%s273 + $0xc8] sm:$0xff]
      %v306 = vld [vmem:[%s273 + $0xd0] sm:$0xff]
      %v307 = vld [vmem:[%s273 + $0xd8] sm:$0xff]
      %v308 = vld [vmem:[%s273 + $0xe0] sm:$0xff]
      %v309 = vld [vmem:[%s273 + $0xe8] sm:$0xff]
      %v310 = vld [vmem:[%s273 + $0xf0] sm:$0xff]
      %v311 = vld [vmem:[%s273 + $0xf8] sm:$0xff]
      %312 = vadd.xlane.f32.xlu0 %v280
      %v313 = vpop.xlane.xlu0 %312
      %314 = vadd.xlane.f32.xlu0 %v281
      %v315 = vpop.xlane.xlu0 %314
      %316 = vadd.xlane.f32.xlu0 %v282
      %v317 = vpop.xlane.xlu0 %316
      %318 = vadd.xlane.f32.xlu0 %v283
      %v319 = vpop.xlane.xlu0 %318
      %320 = vadd.xlane.f32.xlu0 %v284
      %v321 = vpop.xlane.xlu0 %320
      %322 = vadd.xlane.f32.xlu0 %v285
      %v323 = vpop.xlane.xlu0 %322
      %324 = vadd.xlane.f32.xlu0 %v286
      %v325 = vpop.xlane.xlu0 %324
      %326 = vadd.xlane.f32.xlu0 %v287
      %v327 = vpop.xlane.xlu0 %326
      %328 = vadd.xlane.f32.xlu0 %v288
      %v329 = vpop.xlane.xlu0 %328
      %330 = vadd.xlane.f32.xlu0 %v289
      %v331 = vpop.xlane.xlu0 %330
      %332 = vadd.xlane.f32.xlu0 %v290
      %v333 = vpop.xlane.xlu0 %332
      %334 = vadd.xlane.f32.xlu0 %v291
      %v335 = vpop.xlane.xlu0 %334
      %336 = vadd.xlane.f32.xlu0 %v292
      %v337 = vpop.xlane.xlu0 %336
      %338 = vadd.xlane.f32.xlu0 %v293
      %v339 = vpop.xlane.xlu0 %338
      %340 = vadd.xlane.f32.xlu0 %v294
      %v341 = vpop.xlane.xlu0 %340
      %342 = vadd.xlane.f32.xlu0 %v295
      %v343 = vpop.xlane.xlu0 %342
      %344 = vadd.xlane.f32.xlu0 %v296
      %v345 = vpop.xlane.xlu0 %344
      %346 = vadd.xlane.f32.xlu0 %v297
      %v347 = vpop.xlane.xlu0 %346
      %348 = vadd.xlane.f32.xlu0 %v298
      %v349 = vpop.xlane.xlu0 %348
      %350 = vadd.xlane.f32.xlu0 %v299
      %v351 = vpop.xlane.xlu0 %350
      %352 = vadd.xlane.f32.xlu0 %v300
      %v353 = vpop.xlane.xlu0 %352
      %354 = vadd.xlane.f32.xlu0 %v301
      %v355 = vpop.xlane.xlu0 %354
      %356 = vadd.xlane.f32.xlu0 %v302
      %v357 = vpop.xlane.xlu0 %356
      %358 = vadd.xlane.f32.xlu0 %v303
      %v359 = vpop.xlane.xlu0 %358
      %360 = vadd.xlane.f32.xlu0 %v304
      %v361 = vpop.xlane.xlu0 %360
      %362 = vadd.xlane.f32.xlu0 %v305
      %v363 = vpop.xlane.xlu0 %362
      %364 = vadd.xlane.f32.xlu0 %v306
      %v365 = vpop.xlane.xlu0 %364
      %366 = vadd.xlane.f32.xlu0 %v307
      %v367 = vpop.xlane.xlu0 %366
      %368 = vadd.xlane.f32.xlu0 %v308
      %v369 = vpop.xlane.xlu0 %368
      %370 = vadd.xlane.f32.xlu0 %v309
      %v371 = vpop.xlane.xlu0 %370
      %372 = vadd.xlane.f32.xlu0 %v310
      %v373 = vpop.xlane.xlu0 %372
      %374 = vadd.xlane.f32.xlu0 %v311
      %v375 = vpop.xlane.xlu0 %374
      %v376 = vrcp.pop 128.0
      %v377 = vmul.f32 %v313, %v376
      %v378 = vmul.f32 %v315, %v376
      %v379 = vmul.f32 %v317, %v376
      %v380 = vmul.f32 %v319, %v376
      %v381 = vmul.f32 %v321, %v376
      %v382 = vmul.f32 %v323, %v376
      %v383 = vmul.f32 %v325, %v376
      %v384 = vmul.f32 %v327, %v376
      %v385 = vmul.f32 %v329, %v376
      %v386 = vmul.f32 %v331, %v376
      %v387 = vmul.f32 %v333, %v376
      %v388 = vmul.f32 %v335, %v376
      %v389 = vmul.f32 %v337, %v376
      %v390 = vmul.f32 %v339, %v376
      %v391 = vmul.f32 %v341, %v376
      %v392 = vmul.f32 %v343, %v376
      %v393 = vmul.f32 %v345, %v376
      %v394 = vmul.f32 %v347, %v376
      %v395 = vmul.f32 %v349, %v376
      %v396 = vmul.f32 %v351, %v376
      %v397 = vmul.f32 %v353, %v376
      %v398 = vmul.f32 %v355, %v376
      %v399 = vmul.f32 %v357, %v376
      %v400 = vmul.f32 %v359, %v376
      %v401 = vmul.f32 %v361, %v376
      %v402 = vmul.f32 %v363, %v376
      %v403 = vmul.f32 %v365, %v376
      %v404 = vmul.f32 %v367, %v376
      %v405 = vmul.f32 %v369, %v376
      %v406 = vmul.f32 %v371, %v376
      %v407 = vmul.f32 %v373, %v376
      %v408 = vmul.f32 %v375, %v376
      %v409 = vsub.f32 %v280, %v377
      %v410 = vsub.f32 %v281, %v378
      %v411 = vsub.f32 %v282, %v379
      %v412 = vsub.f32 %v283, %v380
      %v413 = vsub.f32 %v284, %v381
      %v414 = vsub.f32 %v285, %v382
      %v415 = vsub.f32 %v286, %v383
      %v416 = vsub.f32 %v287, %v384
      %v417 = vsub.f32 %v288, %v385
      %v418 = vsub.f32 %v289, %v386
      %v419 = vsub.f32 %v290, %v387
      %v420 = vsub.f32 %v291, %v388
      %v421 = vsub.f32 %v292, %v389
      %v422 = vsub.f32 %v293, %v390
      %v423 = vsub.f32 %v294, %v391
      %v424 = vsub.f32 %v295, %v392
      %v425 = vsub.f32 %v296, %v393
      %v426 = vsub.f32 %v297, %v394
      %v427 = vsub.f32 %v298, %v395
      %v428 = vsub.f32 %v299, %v396
      %v429 = vsub.f32 %v300, %v397
      %v430 = vsub.f32 %v301, %v398
      %v431 = vsub.f32 %v302, %v399
      %v432 = vsub.f32 %v303, %v400
      %v433 = vsub.f32 %v304, %v401
      %v434 = vsub.f32 %v305, %v402
      %v435 = vsub.f32 %v306, %v403
      %v436 = vsub.f32 %v307, %v404
      %v437 = vsub.f32 %v308, %v405
      %v438 = vsub.f32 %v309, %v406
      %v439 = vsub.f32 %v310, %v407
      %v440 = vsub.f32 %v311, %v408
      %v441 = vmul.f32 %v409, %v409
      %v442 = vmul.f32 %v410, %v410
      %v443 = vmul.f32 %v411, %v411
      %v444 = vmul.f32 %v412, %v412
      %v445 = vmul.f32 %v413, %v413
      %v446 = vmul.f32 %v414, %v414
      %v447 = vmul.f32 %v415, %v415
      %v448 = vmul.f32 %v416, %v416
      %v449 = vmul.f32 %v417, %v417
      %v450 = vmul.f32 %v418, %v418
      %v451 = vmul.f32 %v419, %v419
      %v452 = vmul.f32 %v420, %v420
      %v453 = vmul.f32 %v421, %v421
      %v454 = vmul.f32 %v422, %v422
      %v455 = vmul.f32 %v423, %v423
      %v456 = vmul.f32 %v424, %v424
      %v457 = vmul.f32 %v425, %v425
      %v458 = vmul.f32 %v426, %v426
      %v459 = vmul.f32 %v427, %v427
      %v460 = vmul.f32 %v428, %v428
      %v461 = vmul.f32 %v429, %v429
      %v462 = vmul.f32 %v430, %v430
      %v463 = vmul.f32 %v431, %v431
      %v464 = vmul.f32 %v432, %v432
      %v465 = vmul.f32 %v433, %v433
      %v466 = vmul.f32 %v434, %v434
      %v467 = vmul.f32 %v435, %v435
      %v468 = vmul.f32 %v436, %v436
      %v469 = vmul.f32 %v437, %v437
      %v470 = vmul.f32 %v438, %v438
      %v471 = vmul.f32 %v439, %v439
      %v472 = vmul.f32 %v440, %v440
      %473 = vadd.xlane.f32.xlu0 %v441
      %v474 = vpop.xlane.xlu0 %473
      %475 = vadd.xlane.f32.xlu0 %v442
      %v476 = vpop.xlane.xlu0 %475
      %477 = vadd.xlane.f32.xlu0 %v443
      %v478 = vpop.xlane.xlu0 %477
      %479 = vadd.xlane.f32.xlu0 %v444
      %v480 = vpop.xlane.xlu0 %479
      %481 = vadd.xlane.f32.xlu0 %v445
      %v482 = vpop.xlane.xlu0 %481
      %483 = vadd.xlane.f32.xlu0 %v446
      %v484 = vpop.xlane.xlu0 %483
      %485 = vadd.xlane.f32.xlu0 %v447
      %v486 = vpop.xlane.xlu0 %485
      %487 = vadd.xlane.f32.xlu0 %v448
      %v488 = vpop.xlane.xlu0 %487
      %489 = vadd.xlane.f32.xlu0 %v449
      %v490 = vpop.xlane.xlu0 %489
      %491 = vadd.xlane.f32.xlu0 %v450
      %v492 = vpop.xlane.xlu0 %491
      %493 = vadd.xlane.f32.xlu0 %v451
      %v494 = vpop.xlane.xlu0 %493
      %495 = vadd.xlane.f32.xlu0 %v452
      %v496 = vpop.xlane.xlu0 %495
      %497 = vadd.xlane.f32.xlu0 %v453
      %v498 = vpop.xlane.xlu0 %497
      %499 = vadd.xlane.f32.xlu0 %v454
      %v500 = vpop.xlane.xlu0 %499
      %501 = vadd.xlane.f32.xlu0 %v455
      %v502 = vpop.xlane.xlu0 %501
      %503 = vadd.xlane.f32.xlu0 %v456
      %v504 = vpop.xlane.xlu0 %503
      %505 = vadd.xlane.f32.xlu0 %v457
      %v506 = vpop.xlane.xlu0 %505
      %507 = vadd.xlane.f32.xlu0 %v458
      %v508 = vpop.xlane.xlu0 %507
      %509 = vadd.xlane.f32.xlu0 %v459
      %v510 = vpop.xlane.xlu0 %509
      %511 = vadd.xlane.f32.xlu0 %v460
      %v512 = vpop.xlane.xlu0 %511
      %513 = vadd.xlane.f32.xlu0 %v461
      %v514 = vpop.xlane.xlu0 %513
      %515 = vadd.xlane.f32.xlu0 %v462
      %v516 = vpop.xlane.xlu0 %515
      %517 = vadd.xlane.f32.xlu0 %v463
      %v518 = vpop.xlane.xlu0 %517
      %519 = vadd.xlane.f32.xlu0 %v464
      %v520 = vpop.xlane.xlu0 %519
      %521 = vadd.xlane.f32.xlu0 %v465
      %v522 = vpop.xlane.xlu0 %521
      %523 = vadd.xlane.f32.xlu0 %v466
      %v524 = vpop.xlane.xlu0 %523
      %525 = vadd.xlane.f32.xlu0 %v467
      %v526 = vpop.xlane.xlu0 %525
      %527 = vadd.xlane.f32.xlu0 %v468
      %v528 = vpop.xlane.xlu0 %527
      %529 = vadd.xlane.f32.xlu0 %v469
      %v530 = vpop.xlane.xlu0 %529
      %531 = vadd.xlane.f32.xlu0 %v470
      %v532 = vpop.xlane.xlu0 %531
      %533 = vadd.xlane.f32.xlu0 %v471
      %v534 = vpop.xlane.xlu0 %533
      %535 = vadd.xlane.f32.xlu0 %v472
      %v536 = vpop.xlane.xlu0 %535
      %v537 = vmul.f32 %v474, %v376
      %v538 = vmul.f32 %v476, %v376
      %v539 = vmul.f32 %v478, %v376
      %v540 = vmul.f32 %v480, %v376
      %v541 = vmul.f32 %v482, %v376
      %v542 = vmul.f32 %v484, %v376
      %v543 = vmul.f32 %v486, %v376
      %v544 = vmul.f32 %v488, %v376
      %v545 = vmul.f32 %v490, %v376
      %v546 = vmul.f32 %v492, %v376
      %v547 = vmul.f32 %v494, %v376
      %v548 = vmul.f32 %v496, %v376
      %v549 = vmul.f32 %v498, %v376
      %v550 = vmul.f32 %v500, %v376
      %v551 = vmul.f32 %v502, %v376
      %v552 = vmul.f32 %v504, %v376
      %v553 = vmul.f32 %v506, %v376
      %v554 = vmul.f32 %v508, %v376
      %v555 = vmul.f32 %v510, %v376
      %v556 = vmul.f32 %v512, %v376
      %v557 = vmul.f32 %v514, %v376
      %v558 = vmul.f32 %v516, %v376
      %v559 = vmul.f32 %v518, %v376
      %v560 = vmul.f32 %v520, %v376
      %v561 = vmul.f32 %v522, %v376
      %v562 = vmul.f32 %v524, %v376
      %v563 = vmul.f32 %v526, %v376
      %v564 = vmul.f32 %v528, %v376
      %v565 = vmul.f32 %v530, %v376
      %v566 = vmul.f32 %v532, %v376
      %v567 = vmul.f32 %v534, %v376
      %v568 = vmul.f32 %v536, %v376
      %v569 = vadd.f32 %v537, 1e-05
      %v570 = vadd.f32 %v538, 1e-05
      %v571 = vadd.f32 %v539, 1e-05
      %v572 = vadd.f32 %v540, 1e-05
      %v573 = vadd.f32 %v541, 1e-05
      %v574 = vadd.f32 %v542, 1e-05
      %v575 = vadd.f32 %v543, 1e-05
      %v576 = vadd.f32 %v544, 1e-05
      %v577 = vadd.f32 %v545, 1e-05
      %v578 = vadd.f32 %v546, 1e-05
      %v579 = vadd.f32 %v547, 1e-05
      %v580 = vadd.f32 %v548, 1e-05
      %v581 = vadd.f32 %v549, 1e-05
      %v582 = vadd.f32 %v550, 1e-05
      %v583 = vadd.f32 %v551, 1e-05
      %v584 = vadd.f32 %v552, 1e-05
      %v585 = vadd.f32 %v553, 1e-05
      %v586 = vadd.f32 %v554, 1e-05
      %v587 = vadd.f32 %v555, 1e-05
      %v588 = vadd.f32 %v556, 1e-05
      %v589 = vadd.f32 %v557, 1e-05
      %v590 = vadd.f32 %v558, 1e-05
      %v591 = vadd.f32 %v559, 1e-05
      %v592 = vadd.f32 %v560, 1e-05
      %v593 = vadd.f32 %v561, 1e-05
      %v594 = vadd.f32 %v562, 1e-05
      %v595 = vadd.f32 %v563, 1e-05
      %v596 = vadd.f32 %v564, 1e-05
      %v597 = vadd.f32 %v565, 1e-05
      %v598 = vadd.f32 %v566, 1e-05
      %v599 = vadd.f32 %v567, 1e-05
      %v600 = vadd.f32 %v568, 1e-05
      %v601 = vrsqrt.pop %v569
      %v602 = vrsqrt.pop %v570
      %v603 = vrsqrt.pop %v571
      %v604 = vrsqrt.pop %v572
      %v605 = vrsqrt.pop %v573
      %v606 = vrsqrt.pop %v574
      %v607 = vrsqrt.pop %v575
      %v608 = vrsqrt.pop %v576
      %v609 = vrsqrt.pop %v577
      %v610 = vrsqrt.pop %v578
      %v611 = vrsqrt.pop %v579
      %v612 = vrsqrt.pop %v580
      %v613 = vrsqrt.pop %v581
      %v614 = vrsqrt.pop %v582
      %v615 = vrsqrt.pop %v583
      %v616 = vrsqrt.pop %v584
      %v617 = vrsqrt.pop %v585
      %v618 = vrsqrt.pop %v586
      %v619 = vrsqrt.pop %v587
      %v620 = vrsqrt.pop %v588
      %v621 = vrsqrt.pop %v589
      %v622 = vrsqrt.pop %v590
      %v623 = vrsqrt.pop %v591
      %v624 = vrsqrt.pop %v592
      %v625 = vrsqrt.pop %v593
      %v626 = vrsqrt.pop %v594
      %v627 = vrsqrt.pop %v595
      %v628 = vrsqrt.pop %v596
      %v629 = vrsqrt.pop %v597
      %v630 = vrsqrt.pop %v598
      %v631 = vrsqrt.pop %v599
      %v632 = vrsqrt.pop %v600
      %v633 = vmul.f32 %v409, %v601
      %v634 = vmul.f32 %v410, %v602
      %v635 = vmul.f32 %v411, %v603
      %v636 = vmul.f32 %v412, %v604
      %v637 = vmul.f32 %v413, %v605
      %v638 = vmul.f32 %v414, %v606
      %v639 = vmul.f32 %v415, %v607
      %v640 = vmul.f32 %v416, %v608
      %v641 = vmul.f32 %v417, %v609
      %v642 = vmul.f32 %v418, %v610
      %v643 = vmul.f32 %v419, %v611
      %v644 = vmul.f32 %v420, %v612
      %v645 = vmul.f32 %v421, %v613
      %v646 = vmul.f32 %v422, %v614
      %v647 = vmul.f32 %v423, %v615
      %v648 = vmul.f32 %v424, %v616
      %v649 = vmul.f32 %v425, %v617
      %v650 = vmul.f32 %v426, %v618
      %v651 = vmul.f32 %v427, %v619
      %v652 = vmul.f32 %v428, %v620
      %v653 = vmul.f32 %v429, %v621
      %v654 = vmul.f32 %v430, %v622
      %v655 = vmul.f32 %v431, %v623
      %v656 = vmul.f32 %v432, %v624
      %v657 = vmul.f32 %v433, %v625
      %v658 = vmul.f32 %v434, %v626
      %v659 = vmul.f32 %v435, %v627
      %v660 = vmul.f32 %v436, %v628
      %v661 = vmul.f32 %v437, %v629
      %v662 = vmul.f32 %v438, %v630
      %v663 = vmul.f32 %v439, %v631
      %v664 = vmul.f32 %v440, %v632
      %v665 = vld [vmem:[%s1] sm:$0x1]
      %v667 = vlaneseq
      %v668 = vshrl.u32 %v667, 7
      %v669 = vsub.s32 0, %v668
      %v670 = vrot.slane %v665, %v669
      %v672 = vmul.f32 %v633, %v670
      %v673 = vmul.f32 %v634, %v670
      %v674 = vmul.f32 %v635, %v670
      %v675 = vmul.f32 %v636, %v670
      %v676 = vmul.f32 %v637, %v670
      %v677 = vmul.f32 %v638, %v670
      %v678 = vmul.f32 %v639, %v670
      %v679 = vmul.f32 %v640, %v670
      %v680 = vmul.f32 %v641, %v670
      %v681 = vmul.f32 %v642, %v670
      %v682 = vmul.f32 %v643, %v670
      %v683 = vmul.f32 %v644, %v670
      %v684 = vmul.f32 %v645, %v670
      %v685 = vmul.f32 %v646, %v670
      %v686 = vmul.f32 %v647, %v670
      %v687 = vmul.f32 %v648, %v670
      %v688 = vmul.f32 %v649, %v670
      %v689 = vmul.f32 %v650, %v670
      %v690 = vmul.f32 %v651, %v670
      %v691 = vmul.f32 %v652, %v670
      %v692 = vmul.f32 %v653, %v670
      %v693 = vmul.f32 %v654, %v670
      %v694 = vmul.f32 %v655, %v670
      %v695 = vmul.f32 %v656, %v670
      %v696 = vmul.f32 %v657, %v670
      %v697 = vmul.f32 %v658, %v670
      %v698 = vmul.f32 %v659, %v670
      %v699 = vmul.f32 %v660, %v670
      %v700 = vmul.f32 %v661, %v670
      %v701 = vmul.f32 %v662, %v670
      %v702 = vmul.f32 %v663, %v670
      %v703 = vmul.f32 %v664, %v670
      %v704 = vld [vmem:[%s2] sm:$0x1]
      %v706 = vlaneseq
      %v707 = vshrl.u32 %v706, 7
      %v708 = vsub.s32 0, %v707
      %v709 = vrot.slane %v704, %v708
      %v711 = vadd.f32 %v672, %v709
      %v712 = vadd.f32 %v673, %v709
      %v713 = vadd.f32 %v674, %v709
      %v714 = vadd.f32 %v675, %v709
      %v715 = vadd.f32 %v676, %v709
      %v716 = vadd.f32 %v677, %v709
      %v717 = vadd.f32 %v678, %v709
      %v718 = vadd.f32 %v679, %v709
      %v719 = vadd.f32 %v680, %v709
      %v720 = vadd.f32 %v681, %v709
      %v721 = vadd.f32 %v682, %v709
      %v722 = vadd.f32 %v683, %v709
      %v723 = vadd.f32 %v684, %v709
      %v724 = vadd.f32 %v685, %v709
      %v725 = vadd.f32 %v686, %v709
      %v726 = vadd.f32 %v687, %v709
      %v727 = vadd.f32 %v688, %v709
      %v728 = vadd.f32 %v689, %v709
      %v729 = vadd.f32 %v690, %v709
      %v730 = vadd.f32 %v691, %v709
      %v731 = vadd.f32 %v692, %v709
      %v732 = vadd.f32 %v693, %v709
      %v733 = vadd.f32 %v694, %v709
      %v734 = vadd.f32 %v695, %v709
      %v735 = vadd.f32 %v696, %v709
      %v736 = vadd.f32 %v697, %v709
      %v737 = vadd.f32 %v698, %v709
      %v738 = vadd.f32 %v699, %v709
      %v739 = vadd.f32 %v700, %v709
      %v740 = vadd.f32 %v701, %v709
      %v741 = vadd.f32 %v702, %v709
      %v742 = vadd.f32 %v703, %v709
      %v743 = vpack.c.bf16 %v712, %v711
      %v744 = vpack.c.bf16 %v714, %v713
      %v745 = vpack.c.bf16 %v716, %v715
      %v746 = vpack.c.bf16 %v718, %v717
      %v747 = vpack.c.bf16 %v720, %v719
      %v748 = vpack.c.bf16 %v722, %v721
      %v749 = vpack.c.bf16 %v724, %v723
      %v750 = vpack.c.bf16 %v726, %v725
      %v751 = vpack.c.bf16 %v728, %v727
      %v752 = vpack.c.bf16 %v730, %v729
      %v753 = vpack.c.bf16 %v732, %v731
      %v754 = vpack.c.bf16 %v734, %v733
      %v755 = vpack.c.bf16 %v736, %v735
      %v756 = vpack.c.bf16 %v738, %v737
      %v757 = vpack.c.bf16 %v740, %v739
      %v758 = vpack.c.bf16 %v742, %v741
      %v759 = vld [vmem:[%s3] sm:$0xff]
      %v760 = vld [vmem:[%s3 + $0x8] sm:$0xf]
      %v761 = vld [vmem:[%s3 + $0xc] sm:$0xff]
      %v762 = vld [vmem:[%s3 + $0x14] sm:$0xf]
      %v763 = vld [vmem:[%s3 + $0x18] sm:$0xff]
      %v764 = vld [vmem:[%s3 + $0x20] sm:$0xf]
      %v765 = vld [vmem:[%s3 + $0x24] sm:$0xff]
      %v766 = vld [vmem:[%s3 + $0x2c] sm:$0xf]
      %v767 = vld [vmem:[%s3 + $0x30] sm:$0xff]
      %v768 = vld [vmem:[%s3 + $0x38] sm:$0xf]
      %v769 = vld [vmem:[%s3 + $0x3c] sm:$0xff]
      %v770 = vld [vmem:[%s3 + $0x44] sm:$0xf]
      %v771 = vld [vmem:[%s3 + $0x48] sm:$0xff]
      %v772 = vld [vmem:[%s3 + $0x50] sm:$0xf]
      %v773 = vld [vmem:[%s3 + $0x54] sm:$0xff]
      %v774 = vld [vmem:[%s3 + $0x5c] sm:$0xf]
      %v775 = vld [vmem:[%s3 + $0x60] sm:$0xff]
      %v776 = vld [vmem:[%s3 + $0x68] sm:$0xf]
      %v777 = vld [vmem:[%s3 + $0x6c] sm:$0xff]
      %v778 = vld [vmem:[%s3 + $0x74] sm:$0xf]
      %v779 = vld [vmem:[%s3 + $0x78] sm:$0xff]
      %v780 = vld [vmem:[%s3 + $0x80] sm:$0xf]
      %v781 = vld [vmem:[%s3 + $0x84] sm:$0xff]
      %v782 = vld [vmem:[%s3 + $0x8c] sm:$0xf]
      %v783 = vld [vmem:[%s3 + $0x90] sm:$0xff]
      %v784 = vld [vmem:[%s3 + $0x98] sm:$0xf]
      %v785 = vld [vmem:[%s3 + $0x9c] sm:$0xff]
      %v786 = vld [vmem:[%s3 + $0xa4] sm:$0xf]
      %v787 = vld [vmem:[%s3 + $0xa8] sm:$0xff]
      %v788 = vld [vmem:[%s3 + $0xb0] sm:$0xf]
      %v789 = vld [vmem:[%s3 + $0xb4] sm:$0xff]
      %v790 = vld [vmem:[%s3 + $0xbc] sm:$0xf]
      %v791 = vld [vmem:[%s4] sm:$0x7]
      %v793 = vlaneseq
      %v794 = vshrl.u32 %v793, 7
      %v795 = vsub.s32 0, %v794
      %v796 = vrot.slane %v791, %v795
      %v797 = vlaneseq
      %v798 = vshrl.u32 %v797, 7
      %v799 = vsub.s32 1, %v798
      %v800 = vrot.slane %v791, %v799
      %v801 = vlaneseq
      %v802 = vshrl.u32 %v801, 7
      %v803 = vsub.s32 2, %v802
      %v804 = vrot.slane %v791, %v803
      %v840 = vunpack.c.l.b16 %v759
      %v841 = vunpack.c.h.b16 %v759
      %v842 = vunpack.c.l.b16 %v760
      %v843 = vunpack.c.l.b16 %v761
      %v844 = vunpack.c.h.b16 %v761
      %v845 = vunpack.c.l.b16 %v762
      %v846 = vunpack.c.l.b16 %v763
      %v847 = vunpack.c.h.b16 %v763
      %v848 = vunpack.c.l.b16 %v764
      %v849 = vunpack.c.l.b16 %v765
      %v850 = vunpack.c.h.b16 %v765
      %v851 = vunpack.c.l.b16 %v766
      %v852 = vunpack.c.l.b16 %v767
      %v853 = vunpack.c.h.b16 %v767
      %v854 = vunpack.c.l.b16 %v768
      %v855 = vunpack.c.l.b16 %v769
      %v856 = vunpack.c.h.b16 %v769
      %v857 = vunpack.c.l.b16 %v770
      %v858 = vunpack.c.l.b16 %v771
      %v859 = vunpack.c.h.b16 %v771
      %v860 = vunpack.c.l.b16 %v772
      %v861 = vunpack.c.l.b16 %v773
      %v862 = vunpack.c.h.b16 %v773
      %v863 = vunpack.c.l.b16 %v774
      %v864 = vunpack.c.l.b16 %v775
      %v865 = vunpack.c.h.b16 %v775
      %v866 = vunpack.c.l.b16 %v776
      %v867 = vunpack.c.l.b16 %v777
      %v868 = vunpack.c.h.b16 %v777
      %v869 = vunpack.c.l.b16 %v778
      %v870 = vunpack.c.l.b16 %v779
      %v871 = vunpack.c.h.b16 %v779
      %v872 = vunpack.c.l.b16 %v780
      %v873 = vunpack.c.l.b16 %v781
      %v874 = vunpack.c.h.b16 %v781
      %v875 = vunpack.c.l.b16 %v782
      %v876 = vunpack.c.l.b16 %v783
      %v877 = vunpack.c.h.b16 %v783
      %v878 = vunpack.c.l.b16 %v784
      %v879 = vunpack.c.l.b16 %v785
      %v880 = vunpack.c.h.b16 %v785
      %v881 = vunpack.c.l.b16 %v786
      %v882 = vunpack.c.l.b16 %v787
      %v883 = vunpack.c.h.b16 %v787
      %v884 = vunpack.c.l.b16 %v788
      %v885 = vunpack.c.l.b16 %v789
      %v886 = vunpack.c.h.b16 %v789
      %v887 = vunpack.c.l.b16 %v790
      %v888 = vpack.c.b16 %v843, %v840
      %v889 = vpack.c.b16 %v844, %v841
      %v890 = vpack.c.b16 %v845, %v842
      %v891 = vpack.c.b16 %v849, %v846
      %v892 = vpack.c.b16 %v850, %v847
      %v893 = vpack.c.b16 %v851, %v848
      %v894 = vpack.c.b16 %v855, %v852
      %v895 = vpack.c.b16 %v856, %v853
      %v896 = vpack.c.b16 %v857, %v854
      %v897 = vpack.c.b16 %v861, %v858
      %v898 = vpack.c.b16 %v862, %v859
      %v899 = vpack.c.b16 %v863, %v860
      %v900 = vpack.c.b16 %v867, %v864
      %v901 = vpack.c.b16 %v868, %v865
      %v902 = vpack.c.b16 %v869, %v866
      %v903 = vpack.c.b16 %v873, %v870
      %v904 = vpack.c.b16 %v874, %v871
      %v905 = vpack.c.b16 %v875, %v872
      %v906 = vpack.c.b16 %v879, %v876
      %v907 = vpack.c.b16 %v880, %v877
      %v908 = vpack.c.b16 %v881, %v878
      %v909 = vpack.c.b16 %v885, %v882
      %v910 = vpack.c.b16 %v886, %v883
      %v911 = vpack.c.b16 %v887, %v884
      %936 = vmatprep.subr.bf16.mxu0 %v889
      %937 = vmatpush1.bf16.msra.mxu0 %v888
      %938 = vmatprep.subr.bf16.mxu0 %v892
      %939 = vmatpush1.bf16.msra.mxu0 %v891
      %940 = vmatprep.subr.bf16.mxu0 %v895
      %941 = vmatpush1.bf16.msra.mxu0 %v894
      %942 = vmatprep.subr.bf16.mxu0 %v898
      %943 = vmatpush1.bf16.msra.mxu0 %v897
      %944 = vmatprep.subr.bf16.mxu0 %v901
      %945 = vmatpush1.bf16.msra.mxu0 %v900
      %946 = vmatprep.subr.bf16.mxu0 %v904
      %947 = vmatpush1.bf16.msra.mxu0 %v903
      %948 = vmatprep.subr.bf16.mxu0 %v907
      %949 = vmatpush1.bf16.msra.mxu0 %v906
      %950 = vmatprep.subr.bf16.mxu0 %v910
      %951 = vmatpush1.bf16.msra.mxu0 %v909
      %952 = vmatprep.subr.bf16.mxu0 0
      %953 = vmatpush1.bf16.msra.mxu0 0
      %954 = vmatprep.subr.bf16.mxu0 0
      %955 = vmatpush1.bf16.msra.mxu0 0
      %956 = vmatprep.subr.bf16.mxu0 0
      %957 = vmatpush1.bf16.msra.mxu0 0
      %958 = vmatprep.subr.bf16.mxu0 0
      %959 = vmatpush1.bf16.msra.mxu0 0
      %960 = vmatprep.subr.bf16.mxu0 0
      %961 = vmatpush1.bf16.msra.mxu0 0
      %962 = vmatprep.subr.bf16.mxu0 0
      %963 = vmatpush1.bf16.msra.mxu0 0
      %964 = vmatprep.subr.bf16.mxu0 0
      %965 = vmatpush1.bf16.msra.mxu0 0
      %966 = vmatprep.subr.bf16.mxu0 0
      %967 = vmatpush1.bf16.msra.mxu0 0
      %968 = vmatprep.mubr.bf16.mxu0 0
      %969 = vmatmul.mubr.bf16.gmra.mrb[0].mxu0 %v743
      %v970 = vpop.f32.mrb[0].mxu0
      %v971 = vadd.f32 %v796, %v970
      %v972 = vpop.f32.mrb[0].mxu0
      %v973 = vadd.f32 %v800, %v972
      %v974 = vpop.f32.mrb[0].mxu0
      %v975 = vadd.f32 %v796, %v974
      %v976 = vpop.f32.mrb[0].mxu0
      %v977 = vadd.f32 %v800, %v976
      %978 = vmatprep.mubr.bf16.mxu0 0
      %979 = vmatmul.mubr.bf16.gmra.mrb[0].mxu0 %v744
      %v980 = vpop.f32.mrb[0].mxu0
      %v981 = vadd.f32 %v796, %v980
      %v982 = vpop.f32.mrb[0].mxu0
      %v983 = vadd.f32 %v800, %v982
      %v984 = vpop.f32.mrb[0].mxu0
      %v985 = vadd.f32 %v796, %v984
      %v986 = vpop.f32.mrb[0].mxu0
      %v987 = vadd.f32 %v800, %v986
      %988 = vmatprep.mubr.bf16.mxu0 0
      %989 = vmatmul.mubr.bf16.gmra.mrb[0].mxu0 %v745
      %v990 = vpop.f32.mrb[0].mxu0
      %v991 = vadd.f32 %v796, %v990
      %v992 = vpop.f32.mrb[0].mxu0
      %v993 = vadd.f32 %v800, %v992
      %v994 = vpop.f32.mrb[0].mxu0
      %v995 = vadd.f32 %v796, %v994
      %v996 = vpop.f32.mrb[0].mxu0
      %v997 = vadd.f32 %v800, %v996
      %998 = vmatprep.mubr.bf16.mxu0 0
      %999 = vmatmul.mubr.bf16.gmra.mrb[0].mxu0 %v746
      %v1000 = vpop.f32.mrb[0].mxu0
      %v1001 = vadd.f32 %v796, %v1000
      %v1002 = vpop.f32.mrb[0].mxu0
      %v1003 = vadd.f32 %v800, %v1002
      %v1004 = vpop.f32.mrb[0].mxu0
      %v1005 = vadd.f32 %v796, %v1004
      %v1006 = vpop.f32.mrb[0].mxu0
      %v1007 = vadd.f32 %v800, %v1006
      %1008 = vmatprep.mubr.bf16.mxu0 0
      %1009 = vmatmul.mubr.bf16.gmra.mrb[0].mxu0 %v747
      %v1010 = vpop.f32.mrb[0].mxu0
      %v1011 = vadd.f32 %v796, %v1010
      %v1012 = vpop.f32.mrb[0].mxu0
      %v1013 = vadd.f32 %v800, %v1012
      %v1014 = vpop.f32.mrb[0].mxu0
      %v1015 = vadd.f32 %v796, %v1014
      %v1016 = vpop.f32.mrb[0].mxu0
      %v1017 = vadd.f32 %v800, %v1016
      %1018 = vmatprep.mubr.bf16.mxu0 0
      %1019 = vmatmul.mubr.bf16.gmra.mrb[0].mxu0 %v748
      %v1020 = vpop.f32.mrb[0].mxu0
      %v1021 = vadd.f32 %v796, %v1020
      %v1022 = vpop.f32.mrb[0].mxu0
      %v1023 = vadd.f32 %v800, %v1022
      %v1024 = vpop.f32.mrb[0].mxu0
      %v1025 = vadd.f32 %v796, %v1024
      %v1026 = vpop.f32.mrb[0].mxu0
      %v1027 = vadd.f32 %v800, %v1026
      %1028 = vmatprep.mubr.bf16.mxu0 0
      %1029 = vmatmul.mubr.bf16.gmra.mrb[0].mxu0 %v749
      %v1030 = vpop.f32.mrb[0].mxu0
      %v1031 = vadd.f32 %v796, %v1030
      %v1032 = vpop.f32.mrb[0].mxu0
      %v1033 = vadd.f32 %v800, %v1032
      %v1034 = vpop.f32.mrb[0].mxu0
      %v1035 = vadd.f32 %v796, %v1034
      %v1036 = vpop.f32.mrb[0].mxu0
      %v1037 = vadd.f32 %v800, %v1036
      %1038 = vmatprep.mubr.bf16.mxu0 0
      %1039 = vmatmul.mubr.bf16.gmra.mrb[0].mxu0 %v750
      %v1040 = vpop.f32.mrb[0].mxu0
      %v1041 = vadd.f32 %v796, %v1040
      %v1042 = vpop.f32.mrb[0].mxu0
      %v1043 = vadd.f32 %v800, %v1042
      %v1044 = vpop.f32.mrb[0].mxu0
      %v1045 = vadd.f32 %v796, %v1044
      %v1046 = vpop.f32.mrb[0].mxu0
      %v1047 = vadd.f32 %v800, %v1046
      %1048 = vmatprep.mubr.bf16.mxu0 0
      %1049 = vmatmul.mubr.bf16.gmra.mrb[0].mxu0 %v751
      %v1050 = vpop.f32.mrb[0].mxu0
      %v1051 = vadd.f32 %v796, %v1050
      %v1052 = vpop.f32.mrb[0].mxu0
      %v1053 = vadd.f32 %v800, %v1052
      %v1054 = vpop.f32.mrb[0].mxu0
      %v1055 = vadd.f32 %v796, %v1054
      %v1056 = vpop.f32.mrb[0].mxu0
      %v1057 = vadd.f32 %v800, %v1056
      %1058 = vmatprep.mubr.bf16.mxu0 0
      %1059 = vmatmul.mubr.bf16.gmra.mrb[0].mxu0 %v752
      %v1060 = vpop.f32.mrb[0].mxu0
      %v1061 = vadd.f32 %v796, %v1060
      %v1062 = vpop.f32.mrb[0].mxu0
      %v1063 = vadd.f32 %v800, %v1062
      %v1064 = vpop.f32.mrb[0].mxu0
      %v1065 = vadd.f32 %v796, %v1064
      %v1066 = vpop.f32.mrb[0].mxu0
      %v1067 = vadd.f32 %v800, %v1066
      %1068 = vmatprep.mubr.bf16.mxu0 0
      %1069 = vmatmul.mubr.bf16.gmra.mrb[0].mxu0 %v753
      %v1070 = vpop.f32.mrb[0].mxu0
      %v1071 = vadd.f32 %v796, %v1070
      %v1072 = vpop.f32.mrb[0].mxu0
      %v1073 = vadd.f32 %v800, %v1072
      %v1074 = vpop.f32.mrb[0].mxu0
      %v1075 = vadd.f32 %v796, %v1074
      %v1076 = vpop.f32.mrb[0].mxu0
      %v1077 = vadd.f32 %v800, %v1076
      %1078 = vmatprep.mubr.bf16.mxu0 0
      %1079 = vmatmul.mubr.bf16.gmra.mrb[0].mxu0 %v754
      %v1080 = vpop.f32.mrb[0].mxu0
      %v1081 = vadd.f32 %v796, %v1080
      %v1082 = vpop.f32.mrb[0].mxu0
      %v1083 = vadd.f32 %v800, %v1082
      %v1084 = vpop.f32.mrb[0].mxu0
      %v1085 = vadd.f32 %v796, %v1084
      %v1086 = vpop.f32.mrb[0].mxu0
      %v1087 = vadd.f32 %v800, %v1086
      %1088 = vmatprep.mubr.bf16.mxu0 0
      %1089 = vmatmul.mubr.bf16.gmra.mrb[0].mxu0 %v755
      %v1090 = vpop.f32.mrb[0].mxu0
      %v1091 = vadd.f32 %v796, %v1090
      %v1092 = vpop.f32.mrb[0].mxu0
      %v1093 = vadd.f32 %v800, %v1092
      %v1094 = vpop.f32.mrb[0].mxu0
      %v1095 = vadd.f32 %v796, %v1094
      %v1096 = vpop.f32.mrb[0].mxu0
      %v1097 = vadd.f32 %v800, %v1096
      %1098 = vmatprep.mubr.bf16.mxu0 0
      %1099 = vmatmul.mubr.bf16.gmra.mrb[0].mxu0 %v756
      %v1100 = vpop.f32.mrb[0].mxu0
      %v1101 = vadd.f32 %v796, %v1100
      %v1102 = vpop.f32.mrb[0].mxu0
      %v1103 = vadd.f32 %v800, %v1102
      %v1104 = vpop.f32.mrb[0].mxu0
      %v1105 = vadd.f32 %v796, %v1104
      %v1106 = vpop.f32.mrb[0].mxu0
      %v1107 = vadd.f32 %v800, %v1106
      %1108 = vmatprep.mubr.bf16.mxu0 0
      %1109 = vmatmul.mubr.bf16.gmra.mrb[0].mxu0 %v757
      %v1110 = vpop.f32.mrb[0].mxu0
      %v1111 = vadd.f32 %v796, %v1110
      %v1112 = vpop.f32.mrb[0].mxu0
      %v1113 = vadd.f32 %v800, %v1112
      %v1114 = vpop.f32.mrb[0].mxu0
      %v1115 = vadd.f32 %v796, %v1114
      %v1116 = vpop.f32.mrb[0].mxu0
      %v1117 = vadd.f32 %v800, %v1116
      %1118 = vmatprep.mubr.bf16.mxu0 0
      %1119 = vmatmul.mubr.bf16.gmra.mrb[0].mxu0 %v758
      %v1120 = vpop.f32.mrb[0].mxu0
      %v1121 = vadd.f32 %v796, %v1120
      %v1122 = vpop.f32.mrb[0].mxu0
      %v1123 = vadd.f32 %v800, %v1122
      %v1124 = vpop.f32.mrb[0].mxu0
      %v1125 = vadd.f32 %v796, %v1124
      %v1126 = vpop.f32.mrb[0].mxu0
      %v1127 = vadd.f32 %v800, %v1126
      %1128 = vdwg.mxu0
      %1129 = vmatprep.subr.bf16.mxu0 0
      %1130 = vmatpush1.bf16.msra.mxu0 %v890
      %1131 = vmatprep.subr.bf16.mxu0 0
      %1132 = vmatpush1.bf16.msra.mxu0 %v893
      %1133 = vmatprep.subr.bf16.mxu0 0
      %1134 = vmatpush1.bf16.msra.mxu0 %v896
      %1135 = vmatprep.subr.bf16.mxu0 0
      %1136 = vmatpush1.bf16.msra.mxu0 %v899
      %1137 = vmatprep.subr.bf16.mxu0 0
      %1138 = vmatpush1.bf16.msra.mxu0 %v902
      %1139 = vmatprep.subr.bf16.mxu0 0
      %1140 = vmatpush1.bf16.msra.mxu0 %v905
      %1141 = vmatprep.subr.bf16.mxu0 0
      %1142 = vmatpush1.bf16.msra.mxu0 %v908
      %1143 = vmatprep.subr.bf16.mxu0 0
      %1144 = vmatpush1.bf16.msra.mxu0 %v911
      %1145 = vmatprep.subr.bf16.mxu0 0
      %1146 = vmatpush1.bf16.msra.mxu0 0
      %1147 = vmatprep.subr.bf16.mxu0 0
      %1148 = vmatpush1.bf16.msra.mxu0 0
      %1149 = vmatprep.subr.bf16.mxu0 0
      %1150 = vmatpush1.bf16.msra.mxu0 0
      %1151 = vmatprep.subr.bf16.mxu0 0
      %1152 = vmatpush1.bf16.msra.mxu0 0
      %1153 = vmatprep.subr.bf16.mxu0 0
      %1154 = vmatpush1.bf16.msra.mxu0 0
      %1155 = vmatprep.subr.bf16.mxu0 0
      %1156 = vmatpush1.bf16.msra.mxu0 0
      %1157 = vmatprep.subr.bf16.mxu0 0
      %1158 = vmatpush1.bf16.msra.mxu0 0
      %1159 = vmatprep.subr.bf16.mxu0 0
      %1160 = vmatpush1.bf16.msra.mxu0 0
      %1161 = vmatprep.mubr.bf16.mxu0 0
      %1162 = vmatmul.mubr.bf16.gmra.mrb[0].mxu0 %v743
      %v1163 = vpop.f32.mrb[0].mxu0
      %v1164 = vadd.f32 %v804, %v1163
      %v1165 = vpop.f32.mrb[0].mxu0
      %v1166 = vpop.f32.mrb[0].mxu0
      %v1167 = vadd.f32 %v804, %v1166
      %v1168 = vpop.f32.mrb[0].mxu0
      %1169 = vmatprep.mubr.bf16.mxu0 0
      %1170 = vmatmul.mubr.bf16.gmra.mrb[0].mxu0 %v744
      %v1171 = vpop.f32.mrb[0].mxu0
      %v1172 = vadd.f32 %v804, %v1171
      %v1173 = vpop.f32.mrb[0].mxu0
      %v1174 = vpop.f32.mrb[0].mxu0
      %v1175 = vadd.f32 %v804, %v1174
      %v1176 = vpop.f32.mrb[0].mxu0
      %1177 = vmatprep.mubr.bf16.mxu0 0
      %1178 = vmatmul.mubr.bf16.gmra.mrb[0].mxu0 %v745
      %v1179 = vpop.f32.mrb[0].mxu0
      %v1180 = vadd.f32 %v804, %v1179
      %v1181 = vpop.f32.mrb[0].mxu0
      %v1182 = vpop.f32.mrb[0].mxu0
      %v1183 = vadd.f32 %v804, %v1182
      %v1184 = vpop.f32.mrb[0].mxu0
      %1185 = vmatprep.mubr.bf16.mxu0 0
      %1186 = vmatmul.mubr.bf16.gmra.mrb[0].mxu0 %v746
      %v1187 = vpop.f32.mrb[0].mxu0
      %v1188 = vadd.f32 %v804, %v1187
      %v1189 = vpop.f32.mrb[0].mxu0
      %v1190 = vpop.f32.mrb[0].mxu0
      %v1191 = vadd.f32 %v804, %v1190
      %v1192 = vpop.f32.mrb[0].mxu0
      %1193 = vmatprep.mubr.bf16.mxu0 0
      %1194 = vmatmul.mubr.bf16.gmra.mrb[0].mxu0 %v747
      %v1195 = vpop.f32.mrb[0].mxu0
      %v1196 = vadd.f32 %v804, %v1195
      %v1197 = vpop.f32.mrb[0].mxu0
      %v1198 = vpop.f32.mrb[0].mxu0
      %v1199 = vadd.f32 %v804, %v1198
      %v1200 = vpop.f32.mrb[0].mxu0
      %1201 = vmatprep.mubr.bf16.mxu0 0
      %1202 = vmatmul.mubr.bf16.gmra.mrb[0].mxu0 %v748
      %v1203 = vpop.f32.mrb[0].mxu0
      %v1204 = vadd.f32 %v804, %v1203
      %v1205 = vpop.f32.mrb[0].mxu0
      %v1206 = vpop.f32.mrb[0].mxu0
      %v1207 = vadd.f32 %v804, %v1206
      %v1208 = vpop.f32.mrb[0].mxu0
      %1209 = vmatprep.mubr.bf16.mxu0 0
      %1210 = vmatmul.mubr.bf16.gmra.mrb[0].mxu0 %v749
      %v1211 = vpop.f32.mrb[0].mxu0
      %v1212 = vadd.f32 %v804, %v1211
      %v1213 = vpop.f32.mrb[0].mxu0
      %v1214 = vpop.f32.mrb[0].mxu0
      %v1215 = vadd.f32 %v804, %v1214
      %v1216 = vpop.f32.mrb[0].mxu0
      %1217 = vmatprep.mubr.bf16.mxu0 0
      %1218 = vmatmul.mubr.bf16.gmra.mrb[0].mxu0 %v750
      %v1219 = vpop.f32.mrb[0].mxu0
      %v1220 = vadd.f32 %v804, %v1219
      %v1221 = vpop.f32.mrb[0].mxu0
      %v1222 = vpop.f32.mrb[0].mxu0
      %v1223 = vadd.f32 %v804, %v1222
      %v1224 = vpop.f32.mrb[0].mxu0
      %1225 = vmatprep.mubr.bf16.mxu0 0
      %1226 = vmatmul.mubr.bf16.gmra.mrb[0].mxu0 %v751
      %v1227 = vpop.f32.mrb[0].mxu0
      %v1228 = vadd.f32 %v804, %v1227
      %v1229 = vpop.f32.mrb[0].mxu0
      %v1230 = vpop.f32.mrb[0].mxu0
      %v1231 = vadd.f32 %v804, %v1230
      %v1232 = vpop.f32.mrb[0].mxu0
      %1233 = vmatprep.mubr.bf16.mxu0 0
      %1234 = vmatmul.mubr.bf16.gmra.mrb[0].mxu0 %v752
      %v1235 = vpop.f32.mrb[0].mxu0
      %v1236 = vadd.f32 %v804, %v1235
      %v1237 = vpop.f32.mrb[0].mxu0
      %v1238 = vpop.f32.mrb[0].mxu0
      %v1239 = vadd.f32 %v804, %v1238
      %v1240 = vpop.f32.mrb[0].mxu0
      %1241 = vmatprep.mubr.bf16.mxu0 0
      %1242 = vmatmul.mubr.bf16.gmra.mrb[0].mxu0 %v753
      %v1243 = vpop.f32.mrb[0].mxu0
      %v1244 = vadd.f32 %v804, %v1243
      %v1245 = vpop.f32.mrb[0].mxu0
      %v1246 = vpop.f32.mrb[0].mxu0
      %v1247 = vadd.f32 %v804, %v1246
      %v1248 = vpop.f32.mrb[0].mxu0
      %1249 = vmatprep.mubr.bf16.mxu0 0
      %1250 = vmatmul.mubr.bf16.gmra.mrb[0].mxu0 %v754
      %v1251 = vpop.f32.mrb[0].mxu0
      %v1252 = vadd.f32 %v804, %v1251
      %v1253 = vpop.f32.mrb[0].mxu0
      %v1254 = vpop.f32.mrb[0].mxu0
      %v1255 = vadd.f32 %v804, %v1254
      %v1256 = vpop.f32.mrb[0].mxu0
      %1257 = vmatprep.mubr.bf16.mxu0 0
      %1258 = vmatmul.mubr.bf16.gmra.mrb[0].mxu0 %v755
      %v1259 = vpop.f32.mrb[0].mxu0
      %v1260 = vadd.f32 %v804, %v1259
      %v1261 = vpop.f32.mrb[0].mxu0
      %v1262 = vpop.f32.mrb[0].mxu0
      %v1263 = vadd.f32 %v804, %v1262
      %v1264 = vpop.f32.mrb[0].mxu0
      %1265 = vmatprep.mubr.bf16.mxu0 0
      %1266 = vmatmul.mubr.bf16.gmra.mrb[0].mxu0 %v756
      %v1267 = vpop.f32.mrb[0].mxu0
      %v1268 = vadd.f32 %v804, %v1267
      %v1269 = vpop.f32.mrb[0].mxu0
      %v1270 = vpop.f32.mrb[0].mxu0
      %v1271 = vadd.f32 %v804, %v1270
      %v1272 = vpop.f32.mrb[0].mxu0
      %1273 = vmatprep.mubr.bf16.mxu0 0
      %1274 = vmatmul.mubr.bf16.gmra.mrb[0].mxu0 %v757
      %v1275 = vpop.f32.mrb[0].mxu0
      %v1276 = vadd.f32 %v804, %v1275
      %v1277 = vpop.f32.mrb[0].mxu0
      %v1278 = vpop.f32.mrb[0].mxu0
      %v1279 = vadd.f32 %v804, %v1278
      %v1280 = vpop.f32.mrb[0].mxu0
      %1281 = vmatprep.mubr.bf16.mxu0 0
      %1282 = vmatmul.mubr.bf16.gmra.mrb[0].mxu0 %v758
      %v1283 = vpop.f32.mrb[0].mxu0
      %v1284 = vadd.f32 %v804, %v1283
      %v1285 = vpop.f32.mrb[0].mxu0
      %v1286 = vpop.f32.mrb[0].mxu0
      %v1287 = vadd.f32 %v804, %v1286
      %v1288 = vpop.f32.mrb[0].mxu0
      %1289 = vdwg.mxu0
      %v1290 = vpack.c.bf16 %v975, %v971
      %v1291 = vpack.c.bf16 %v977, %v973
      %v1292 = vpack.c.bf16 %v1167, %v1164
      %v1293 = vpack.c.bf16 %v985, %v981
      %v1294 = vpack.c.bf16 %v987, %v983
      %v1295 = vpack.c.bf16 %v1175, %v1172
      %v1296 = vpack.c.bf16 %v995, %v991
      %v1297 = vpack.c.bf16 %v997, %v993
      %v1298 = vpack.c.bf16 %v1183, %v1180
      %v1299 = vpack.c.bf16 %v1005, %v1001
      %v1300 = vpack.c.bf16 %v1007, %v1003
      %v1301 = vpack.c.bf16 %v1191, %v1188
      %v1302 = vpack.c.bf16 %v1015, %v1011
      %v1303 = vpack.c.bf16 %v1017, %v1013
      %v1304 = vpack.c.bf16 %v1199, %v1196
      %v1305 = vpack.c.bf16 %v1025, %v1021
      %v1306 = vpack.c.bf16 %v1027, %v1023
      %v1307 = vpack.c.bf16 %v1207, %v1204
      %v1308 = vpack.c.bf16 %v1035, %v1031
      %v1309 = vpack.c.bf16 %v1037, %v1033
      %v1310 = vpack.c.bf16 %v1215, %v1212
      %v1311 = vpack.c.bf16 %v1045, %v1041
      %v1312 = vpack.c.bf16 %v1047, %v1043
      %v1313 = vpack.c.bf16 %v1223, %v1220
      %v1314 = vpack.c.bf16 %v1055, %v1051
      %v1315 = vpack.c.bf16 %v1057, %v1053
      %v1316 = vpack.c.bf16 %v1231, %v1228
      %v1317 = vpack.c.bf16 %v1065, %v1061
      %v1318 = vpack.c.bf16 %v1067, %v1063
      %v1319 = vpack.c.bf16 %v1239, %v1236
      %v1320 = vpack.c.bf16 %v1075, %v1071
      %v1321 = vpack.c.bf16 %v1077, %v1073
      %v1322 = vpack.c.bf16 %v1247, %v1244
      %v1323 = vpack.c.bf16 %v1085, %v1081
      %v1324 = vpack.c.bf16 %v1087, %v1083
      %v1325 = vpack.c.bf16 %v1255, %v1252
      %v1326 = vpack.c.bf16 %v1095, %v1091
      %v1327 = vpack.c.bf16 %v1097, %v1093
      %v1328 = vpack.c.bf16 %v1263, %v1260
      %v1329 = vpack.c.bf16 %v1105, %v1101
      %v1330 = vpack.c.bf16 %v1107, %v1103
      %v1331 = vpack.c.bf16 %v1271, %v1268
      %v1332 = vpack.c.bf16 %v1115, %v1111
      %v1333 = vpack.c.bf16 %v1117, %v1113
      %v1334 = vpack.c.bf16 %v1279, %v1276
      %v1335 = vpack.c.bf16 %v1125, %v1121
      %v1336 = vpack.c.bf16 %v1127, %v1123
      %v1337 = vpack.c.bf16 %v1287, %v1284
      %vm1338 = vcmask 130048
      %v1340 = vsel %vm1338, %v1290, 0
      %v1343 = vsel %vm1338, %v1293, 0
      %v1346 = vsel %vm1338, %v1296, 0
      %v1349 = vsel %vm1338, %v1299, 0
      %v1352 = vsel %vm1338, %v1302, 0
      %v1355 = vsel %vm1338, %v1305, 0
      %v1358 = vsel %vm1338, %v1308, 0
      %v1361 = vsel %vm1338, %v1311, 0
      %v1364 = vsel %vm1338, %v1314, 0
      %v1367 = vsel %vm1338, %v1317, 0
      %v1370 = vsel %vm1338, %v1320, 0
      %v1373 = vsel %vm1338, %v1323, 0
      %v1376 = vsel %vm1338, %v1326, 0
      %v1379 = vsel %vm1338, %v1329, 0
      %v1382 = vsel %vm1338, %v1332, 0
      %v1385 = vsel %vm1338, %v1335, 0
      %v1388 = vsel %vm1338, %v1291, 0
      %v1391 = vsel %vm1338, %v1294, 0
      %v1394 = vsel %vm1338, %v1297, 0
      %v1397 = vsel %vm1338, %v1300, 0
      %v1400 = vsel %vm1338, %v1303, 0
      %v1403 = vsel %vm1338, %v1306, 0
      %v1406 = vsel %vm1338, %v1309, 0
      %v1409 = vsel %vm1338, %v1312, 0
      %v1412 = vsel %vm1338, %v1315, 0
      %v1415 = vsel %vm1338, %v1318, 0
      %v1418 = vsel %vm1338, %v1321, 0
      %v1421 = vsel %vm1338, %v1324, 0
      %v1424 = vsel %vm1338, %v1327, 0
      %v1427 = vsel %vm1338, %v1330, 0
      %v1430 = vsel %vm1338, %v1333, 0
      %v1433 = vsel %vm1338, %v1336, 0
      %1435 = vmatprep.subr.bf16.mxu0 0
      %1436 = vmatpush1.bf16.xpose.msra.mxu0 %v1388
      %1437 = vmatprep.subr.bf16.mxu0 0
      %1438 = vmatpush1.bf16.xpose.msra.mxu0 %v1391
      %1439 = vmatprep.subr.bf16.mxu0 0
      %1440 = vmatpush1.bf16.xpose.msra.mxu0 %v1394
      %1441 = vmatprep.subr.bf16.mxu0 0
      %1442 = vmatpush1.bf16.xpose.msra.mxu0 %v1397
      %1443 = vmatprep.subr.bf16.mxu0 0
      %1444 = vmatpush1.bf16.xpose.msra.mxu0 %v1400
      %1445 = vmatprep.subr.bf16.mxu0 0
      %1446 = vmatpush1.bf16.xpose.msra.mxu0 %v1403
      %1447 = vmatprep.subr.bf16.mxu0 0
      %1448 = vmatpush1.bf16.xpose.msra.mxu0 %v1406
      %1449 = vmatprep.subr.bf16.mxu0 0
      %1450 = vmatpush1.bf16.xpose.msra.mxu0 %v1409
      %1451 = vmatprep.subr.bf16.mxu0 0
      %1452 = vmatpush1.bf16.xpose.msra.mxu0 %v1412
      %1453 = vmatprep.subr.bf16.mxu0 0
      %1454 = vmatpush1.bf16.xpose.msra.mxu0 %v1415
      %1455 = vmatprep.subr.bf16.mxu0 0
      %1456 = vmatpush1.bf16.xpose.msra.mxu0 %v1418
      %1457 = vmatprep.subr.bf16.mxu0 0
      %1458 = vmatpush1.bf16.xpose.msra.mxu0 %v1421
      %1459 = vmatprep.subr.bf16.mxu0 0
      %1460 = vmatpush1.bf16.xpose.msra.mxu0 %v1424
      %1461 = vmatprep.subr.bf16.mxu0 0
      %1462 = vmatpush1.bf16.xpose.msra.mxu0 %v1427
      %1463 = vmatprep.subr.bf16.mxu0 0
      %1464 = vmatpush1.bf16.xpose.msra.mxu0 %v1430
      %1465 = vmatprep.subr.bf16.mxu0 0
      %1466 = vmatpush1.bf16.xpose.msra.mxu0 %v1433
      %1467 = vmatprep.mubr.bf16.mxu0 0
      %1468 = vmatmul.mubr.bf16.gmra.mrb[0].mxu0 %v1340
      %v1469 = vpop.f32.mrb[0].mxu0
      %v1470 = vadd.f32 0.0, %v1469
      %v1471 = vpop.f32.mrb[0].mxu0
      %v1472 = vadd.f32 0.0, %v1471
      %v1473 = vpop.f32.mrb[0].mxu0
      %v1474 = vadd.f32 0.0, %v1473
      %v1475 = vpop.f32.mrb[0].mxu0
      %v1476 = vadd.f32 0.0, %v1475
      %1477 = vmatprep.mubr.bf16.mxu0 0
      %1478 = vmatmul.mubr.bf16.gmra.mrb[0].mxu0 %v1343
      %v1479 = vpop.f32.mrb[0].mxu0
      %v1480 = vadd.f32 0.0, %v1479
      %v1481 = vpop.f32.mrb[0].mxu0
      %v1482 = vadd.f32 0.0, %v1481
      %v1483 = vpop.f32.mrb[0].mxu0
      %v1484 = vadd.f32 0.0, %v1483
      %v1485 = vpop.f32.mrb[0].mxu0
      %v1486 = vadd.f32 0.0, %v1485
      %1487 = vmatprep.mubr.bf16.mxu0 0
      %1488 = vmatmul.mubr.bf16.gmra.mrb[0].mxu0 %v1346
      %v1489 = vpop.f32.mrb[0].mxu0
      %v1490 = vadd.f32 0.0, %v1489
      %v1491 = vpop.f32.mrb[0].mxu0
      %v1492 = vadd.f32 0.0, %v1491
      %v1493 = vpop.f32.mrb[0].mxu0
      %v1494 = vadd.f32 0.0, %v1493
      %v1495 = vpop.f32.mrb[0].mxu0
      %v1496 = vadd.f32 0.0, %v1495
      %1497 = vmatprep.mubr.bf16.mxu0 0
      %1498 = vmatmul.mubr.bf16.gmra.mrb[0].mxu0 %v1349
      %v1499 = vpop.f32.mrb[0].mxu0
      %v1500 = vadd.f32 0.0, %v1499
      %v1501 = vpop.f32.mrb[0].mxu0
      %v1502 = vadd.f32 0.0, %v1501
      %v1503 = vpop.f32.mrb[0].mxu0
      %v1504 = vadd.f32 0.0, %v1503
      %v1505 = vpop.f32.mrb[0].mxu0
      %v1506 = vadd.f32 0.0, %v1505
      %1507 = vmatprep.mubr.bf16.mxu0 0
      %1508 = vmatmul.mubr.bf16.gmra.mrb[0].mxu0 %v1352
      %v1509 = vpop.f32.mrb[0].mxu0
      %v1510 = vadd.f32 0.0, %v1509
      %v1511 = vpop.f32.mrb[0].mxu0
      %v1512 = vadd.f32 0.0, %v1511
      %v1513 = vpop.f32.mrb[0].mxu0
      %v1514 = vadd.f32 0.0, %v1513
      %v1515 = vpop.f32.mrb[0].mxu0
      %v1516 = vadd.f32 0.0, %v1515
      %1517 = vmatprep.mubr.bf16.mxu0 0
      %1518 = vmatmul.mubr.bf16.gmra.mrb[0].mxu0 %v1355
      %v1519 = vpop.f32.mrb[0].mxu0
      %v1520 = vadd.f32 0.0, %v1519
      %v1521 = vpop.f32.mrb[0].mxu0
      %v1522 = vadd.f32 0.0, %v1521
      %v1523 = vpop.f32.mrb[0].mxu0
      %v1524 = vadd.f32 0.0, %v1523
      %v1525 = vpop.f32.mrb[0].mxu0
      %v1526 = vadd.f32 0.0, %v1525
      %1527 = vmatprep.mubr.bf16.mxu0 0
      %1528 = vmatmul.mubr.bf16.gmra.mrb[0].mxu0 %v1358
      %v1529 = vpop.f32.mrb[0].mxu0
      %v1530 = vadd.f32 0.0, %v1529
      %v1531 = vpop.f32.mrb[0].mxu0
      %v1532 = vadd.f32 0.0, %v1531
      %v1533 = vpop.f32.mrb[0].mxu0
      %v1534 = vadd.f32 0.0, %v1533
      %v1535 = vpop.f32.mrb[0].mxu0
      %v1536 = vadd.f32 0.0, %v1535
      %1537 = vmatprep.mubr.bf16.mxu0 0
      %1538 = vmatmul.mubr.bf16.gmra.mrb[0].mxu0 %v1361
      %v1539 = vpop.f32.mrb[0].mxu0
      %v1540 = vadd.f32 0.0, %v1539
      %v1541 = vpop.f32.mrb[0].mxu0
      %v1542 = vadd.f32 0.0, %v1541
      %v1543 = vpop.f32.mrb[0].mxu0
      %v1544 = vadd.f32 0.0, %v1543
      %v1545 = vpop.f32.mrb[0].mxu0
      %v1546 = vadd.f32 0.0, %v1545
      %1547 = vmatprep.mubr.bf16.mxu0 0
      %1548 = vmatmul.mubr.bf16.gmra.mrb[0].mxu0 %v1364
      %v1549 = vpop.f32.mrb[0].mxu0
      %v1550 = vadd.f32 0.0, %v1549
      %v1551 = vpop.f32.mrb[0].mxu0
      %v1552 = vadd.f32 0.0, %v1551
      %v1553 = vpop.f32.mrb[0].mxu0
      %v1554 = vadd.f32 0.0, %v1553
      %v1555 = vpop.f32.mrb[0].mxu0
      %v1556 = vadd.f32 0.0, %v1555
      %1557 = vmatprep.mubr.bf16.mxu0 0
      %1558 = vmatmul.mubr.bf16.gmra.mrb[0].mxu0 %v1367
      %v1559 = vpop.f32.mrb[0].mxu0
      %v1560 = vadd.f32 0.0, %v1559
      %v1561 = vpop.f32.mrb[0].mxu0
      %v1562 = vadd.f32 0.0, %v1561
      %v1563 = vpop.f32.mrb[0].mxu0
      %v1564 = vadd.f32 0.0, %v1563
      %v1565 = vpop.f32.mrb[0].mxu0
      %v1566 = vadd.f32 0.0, %v1565
      %1567 = vmatprep.mubr.bf16.mxu0 0
      %1568 = vmatmul.mubr.bf16.gmra.mrb[0].mxu0 %v1370
      %v1569 = vpop.f32.mrb[0].mxu0
      %v1570 = vadd.f32 0.0, %v1569
      %v1571 = vpop.f32.mrb[0].mxu0
      %v1572 = vadd.f32 0.0, %v1571
      %v1573 = vpop.f32.mrb[0].mxu0
      %v1574 = vadd.f32 0.0, %v1573
      %v1575 = vpop.f32.mrb[0].mxu0
      %v1576 = vadd.f32 0.0, %v1575
      %1577 = vmatprep.mubr.bf16.mxu0 0
      %1578 = vmatmul.mubr.bf16.gmra.mrb[0].mxu0 %v1373
      %v1579 = vpop.f32.mrb[0].mxu0
      %v1580 = vadd.f32 0.0, %v1579
      %v1581 = vpop.f32.mrb[0].mxu0
      %v1582 = vadd.f32 0.0, %v1581
      %v1583 = vpop.f32.mrb[0].mxu0
      %v1584 = vadd.f32 0.0, %v1583
      %v1585 = vpop.f32.mrb[0].mxu0
      %v1586 = vadd.f32 0.0, %v1585
      %1587 = vmatprep.mubr.bf16.mxu0 0
      %1588 = vmatmul.mubr.bf16.gmra.mrb[0].mxu0 %v1376
      %v1589 = vpop.f32.mrb[0].mxu0
      %v1590 = vadd.f32 0.0, %v1589
      %v1591 = vpop.f32.mrb[0].mxu0
      %v1592 = vadd.f32 0.0, %v1591
      %v1593 = vpop.f32.mrb[0].mxu0
      %v1594 = vadd.f32 0.0, %v1593
      %v1595 = vpop.f32.mrb[0].mxu0
      %v1596 = vadd.f32 0.0, %v1595
      %1597 = vmatprep.mubr.bf16.mxu0 0
      %1598 = vmatmul.mubr.bf16.gmra.mrb[0].mxu0 %v1379
      %v1599 = vpop.f32.mrb[0].mxu0
      %v1600 = vadd.f32 0.0, %v1599
      %v1601 = vpop.f32.mrb[0].mxu0
      %v1602 = vadd.f32 0.0, %v1601
      %v1603 = vpop.f32.mrb[0].mxu0
      %v1604 = vadd.f32 0.0, %v1603
      %v1605 = vpop.f32.mrb[0].mxu0
      %v1606 = vadd.f32 0.0, %v1605
      %1607 = vmatprep.mubr.bf16.mxu0 0
      %1608 = vmatmul.mubr.bf16.gmra.mrb[0].mxu0 %v1382
      %v1609 = vpop.f32.mrb[0].mxu0
      %v1610 = vadd.f32 0.0, %v1609
      %v1611 = vpop.f32.mrb[0].mxu0
      %v1612 = vadd.f32 0.0, %v1611
      %v1613 = vpop.f32.mrb[0].mxu0
      %v1614 = vadd.f32 0.0, %v1613
      %v1615 = vpop.f32.mrb[0].mxu0
      %v1616 = vadd.f32 0.0, %v1615
      %1617 = vmatprep.mubr.bf16.mxu0 0
      %1618 = vmatmul.mubr.bf16.gmra.mrb[0].mxu0 %v1385
      %v1619 = vpop.f32.mrb[0].mxu0
      %v1620 = vadd.f32 0.0, %v1619
      %v1621 = vpop.f32.mrb[0].mxu0
      %v1622 = vadd.f32 0.0, %v1621
      %v1623 = vpop.f32.mrb[0].mxu0
      %v1624 = vadd.f32 0.0, %v1623
      %v1625 = vpop.f32.mrb[0].mxu0
      %v1626 = vadd.f32 0.0, %v1625
      %1627 = vdwg.mxu0
      %v1628 = vmax.f32 %v1470, %v1472
      %1629 = vmax.xlane.f32.xlu0 %v1628
      %v1630 = vpop.xlane.xlu0 %1629
      %v1631 = vmax.f32 %v1474, %v1476
      %1632 = vmax.xlane.f32.xlu0 %v1631
      %v1633 = vpop.xlane.xlu0 %1632
      %v1634 = vmax.f32 %v1480, %v1482
      %1635 = vmax.xlane.f32.xlu0 %v1634
      %v1636 = vpop.xlane.xlu0 %1635
      %v1637 = vmax.f32 %v1484, %v1486
      %1638 = vmax.xlane.f32.xlu0 %v1637
      %v1639 = vpop.xlane.xlu0 %1638
      %v1640 = vmax.f32 %v1490, %v1492
      %1641 = vmax.xlane.f32.xlu0 %v1640
      %v1642 = vpop.xlane.xlu0 %1641
      %v1643 = vmax.f32 %v1494, %v1496
      %1644 = vmax.xlane.f32.xlu0 %v1643
      %v1645 = vpop.xlane.xlu0 %1644
      %v1646 = vmax.f32 %v1500, %v1502
      %1647 = vmax.xlane.f32.xlu0 %v1646
      %v1648 = vpop.xlane.xlu0 %1647
      %v1649 = vmax.f32 %v1504, %v1506
      %1650 = vmax.xlane.f32.xlu0 %v1649
      %v1651 = vpop.xlane.xlu0 %1650
      %v1652 = vmax.f32 %v1510, %v1512
      %1653 = vmax.xlane.f32.xlu0 %v1652
      %v1654 = vpop.xlane.xlu0 %1653
      %v1655 = vmax.f32 %v1514, %v1516
      %1656 = vmax.xlane.f32.xlu0 %v1655
      %v1657 = vpop.xlane.xlu0 %1656
      %v1658 = vmax.f32 %v1520, %v1522
      %1659 = vmax.xlane.f32.xlu0 %v1658
      %v1660 = vpop.xlane.xlu0 %1659
      %v1661 = vmax.f32 %v1524, %v1526
      %1662 = vmax.xlane.f32.xlu0 %v1661
      %v1663 = vpop.xlane.xlu0 %1662
      %v1664 = vmax.f32 %v1530, %v1532
      %1665 = vmax.xlane.f32.xlu0 %v1664
      %v1666 = vpop.xlane.xlu0 %1665
      %v1667 = vmax.f32 %v1534, %v1536
      %1668 = vmax.xlane.f32.xlu0 %v1667
      %v1669 = vpop.xlane.xlu0 %1668
      %v1670 = vmax.f32 %v1540, %v1542
      %1671 = vmax.xlane.f32.xlu0 %v1670
      %v1672 = vpop.xlane.xlu0 %1671
      %v1673 = vmax.f32 %v1544, %v1546
      %1674 = vmax.xlane.f32.xlu0 %v1673
      %v1675 = vpop.xlane.xlu0 %1674
      %v1676 = vmax.f32 %v1550, %v1552
      %1677 = vmax.xlane.f32.xlu0 %v1676
      %v1678 = vpop.xlane.xlu0 %1677
      %v1679 = vmax.f32 %v1554, %v1556
      %1680 = vmax.xlane.f32.xlu0 %v1679
      %v1681 = vpop.xlane.xlu0 %1680
      %v1682 = vmax.f32 %v1560, %v1562
      %1683 = vmax.xlane.f32.xlu0 %v1682
      %v1684 = vpop.xlane.xlu0 %1683
      %v1685 = vmax.f32 %v1564, %v1566
      %1686 = vmax.xlane.f32.xlu0 %v1685
      %v1687 = vpop.xlane.xlu0 %1686
      %v1688 = vmax.f32 %v1570, %v1572
      %1689 = vmax.xlane.f32.xlu0 %v1688
      %v1690 = vpop.xlane.xlu0 %1689
      %v1691 = vmax.f32 %v1574, %v1576
      %1692 = vmax.xlane.f32.xlu0 %v1691
      %v1693 = vpop.xlane.xlu0 %1692
      %v1694 = vmax.f32 %v1580, %v1582
      %1695 = vmax.xlane.f32.xlu0 %v1694
      %v1696 = vpop.xlane.xlu0 %1695
      %v1697 = vmax.f32 %v1584, %v1586
      %1698 = vmax.xlane.f32.xlu0 %v1697
      %v1699 = vpop.xlane.xlu0 %1698
      %v1700 = vmax.f32 %v1590, %v1592
      %1701 = vmax.xlane.f32.xlu0 %v1700
      %v1702 = vpop.xlane.xlu0 %1701
      %v1703 = vmax.f32 %v1594, %v1596
      %1704 = vmax.xlane.f32.xlu0 %v1703
      %v1705 = vpop.xlane.xlu0 %1704
      %v1706 = vmax.f32 %v1600, %v1602
      %1707 = vmax.xlane.f32.xlu0 %v1706
      %v1708 = vpop.xlane.xlu0 %1707
      %v1709 = vmax.f32 %v1604, %v1606
      %1710 = vmax.xlane.f32.xlu0 %v1709
      %v1711 = vpop.xlane.xlu0 %1710
      %v1712 = vmax.f32 %v1610, %v1612
      %1713 = vmax.xlane.f32.xlu0 %v1712
      %v1714 = vpop.xlane.xlu0 %1713
      %v1715 = vmax.f32 %v1614, %v1616
      %1716 = vmax.xlane.f32.xlu0 %v1715
      %v1717 = vpop.xlane.xlu0 %1716
      %v1718 = vmax.f32 %v1620, %v1622
      %1719 = vmax.xlane.f32.xlu0 %v1718
      %v1720 = vpop.xlane.xlu0 %1719
      %v1721 = vmax.f32 %v1624, %v1626
      %1722 = vmax.xlane.f32.xlu0 %v1721
      %v1723 = vpop.xlane.xlu0 %1722
      %v1724 = vsub.f32 %v1470, %v1630
      %v1725 = vsub.f32 %v1472, %v1630
      %v1726 = vsub.f32 %v1474, %v1633
      %v1727 = vsub.f32 %v1476, %v1633
      %v1728 = vsub.f32 %v1480, %v1636
      %v1729 = vsub.f32 %v1482, %v1636
      %v1730 = vsub.f32 %v1484, %v1639
      %v1731 = vsub.f32 %v1486, %v1639
      %v1732 = vsub.f32 %v1490, %v1642
      %v1733 = vsub.f32 %v1492, %v1642
      %v1734 = vsub.f32 %v1494, %v1645
      %v1735 = vsub.f32 %v1496, %v1645
      %v1736 = vsub.f32 %v1500, %v1648
      %v1737 = vsub.f32 %v1502, %v1648
      %v1738 = vsub.f32 %v1504, %v1651
      %v1739 = vsub.f32 %v1506, %v1651
      %v1740 = vsub.f32 %v1510, %v1654
      %v1741 = vsub.f32 %v1512, %v1654
      %v1742 = vsub.f32 %v1514, %v1657
      %v1743 = vsub.f32 %v1516, %v1657
      %v1744 = vsub.f32 %v1520, %v1660
      %v1745 = vsub.f32 %v1522, %v1660
      %v1746 = vsub.f32 %v1524, %v1663
      %v1747 = vsub.f32 %v1526, %v1663
      %v1748 = vsub.f32 %v1530, %v1666
      %v1749 = vsub.f32 %v1532, %v1666
      %v1750 = vsub.f32 %v1534, %v1669
      %v1751 = vsub.f32 %v1536, %v1669
      %v1752 = vsub.f32 %v1540, %v1672
      %v1753 = vsub.f32 %v1542, %v1672
      %v1754 = vsub.f32 %v1544, %v1675
      %v1755 = vsub.f32 %v1546, %v1675
      %v1756 = vsub.f32 %v1550, %v1678
      %v1757 = vsub.f32 %v1552, %v1678
      %v1758 = vsub.f32 %v1554, %v1681
      %v1759 = vsub.f32 %v1556, %v1681
      %v1760 = vsub.f32 %v1560, %v1684
      %v1761 = vsub.f32 %v1562, %v1684
      %v1762 = vsub.f32 %v1564, %v1687
      %v1763 = vsub.f32 %v1566, %v1687
      %v1764 = vsub.f32 %v1570, %v1690
      %v1765 = vsub.f32 %v1572, %v1690
      %v1766 = vsub.f32 %v1574, %v1693
      %v1767 = vsub.f32 %v1576, %v1693
      %v1768 = vsub.f32 %v1580, %v1696
      %v1769 = vsub.f32 %v1582, %v1696
      %v1770 = vsub.f32 %v1584, %v1699
      %v1771 = vsub.f32 %v1586, %v1699
      %v1772 = vsub.f32 %v1590, %v1702
      %v1773 = vsub.f32 %v1592, %v1702
      %v1774 = vsub.f32 %v1594, %v1705
      %v1775 = vsub.f32 %v1596, %v1705
      %v1776 = vsub.f32 %v1600, %v1708
      %v1777 = vsub.f32 %v1602, %v1708
      %v1778 = vsub.f32 %v1604, %v1711
      %v1779 = vsub.f32 %v1606, %v1711
      %v1780 = vsub.f32 %v1610, %v1714
      %v1781 = vsub.f32 %v1612, %v1714
      %v1782 = vsub.f32 %v1614, %v1717
      %v1783 = vsub.f32 %v1616, %v1717
      %v1784 = vsub.f32 %v1620, %v1720
      %v1785 = vsub.f32 %v1622, %v1720
      %v1786 = vsub.f32 %v1624, %v1723
      %v1787 = vsub.f32 %v1626, %v1723
      %v1788 = vmul.f32 %v1724, 1.442695
      %v1789 = vpow.pop %v1788
      %v1790 = vmul.f32 %v1725, 1.442695
      %v1791 = vpow.pop %v1790
      %v1792 = vmul.f32 %v1726, 1.442695
      %v1793 = vpow.pop %v1792
      %v1794 = vmul.f32 %v1727, 1.442695
      %v1795 = vpow.pop %v1794
      %v1796 = vmul.f32 %v1728, 1.442695
      %v1797 = vpow.pop %v1796
      %v1798 = vmul.f32 %v1729, 1.442695
      %v1799 = vpow.pop %v1798
      %v1800 = vmul.f32 %v1730, 1.442695
      %v1801 = vpow.pop %v1800
      %v1802 = vmul.f32 %v1731, 1.442695
      %v1803 = vpow.pop %v1802
      %v1804 = vmul.f32 %v1732, 1.442695
      %v1805 = vpow.pop %v1804
      %v1806 = vmul.f32 %v1733, 1.442695
      %v1807 = vpow.pop %v1806
      %v1808 = vmul.f32 %v1734, 1.442695
      %v1809 = vpow.pop %v1808
      %v1810 = vmul.f32 %v1735, 1.442695
      %v1811 = vpow.pop %v1810
      %v1812 = vmul.f32 %v1736, 1.442695
      %v1813 = vpow.pop %v1812
      %v1814 = vmul.f32 %v1737, 1.442695
      %v1815 = vpow.pop %v1814
      %v1816 = vmul.f32 %v1738, 1.442695
      %v1817 = vpow.pop %v1816
      %v1818 = vmul.f32 %v1739, 1.442695
      %v1819 = vpow.pop %v1818
      %v1820 = vmul.f32 %v1740, 1.442695
      %v1821 = vpow.pop %v1820
      %v1822 = vmul.f32 %v1741, 1.442695
      %v1823 = vpow.pop %v1822
      %v1824 = vmul.f32 %v1742, 1.442695
      %v1825 = vpow.pop %v1824
      %v1826 = vmul.f32 %v1743, 1.442695
      %v1827 = vpow.pop %v1826
      %v1828 = vmul.f32 %v1744, 1.442695
      %v1829 = vpow.pop %v1828
      %v1830 = vmul.f32 %v1745, 1.442695
      %v1831 = vpow.pop %v1830
      %v1832 = vmul.f32 %v1746, 1.442695
      %v1833 = vpow.pop %v1832
      %v1834 = vmul.f32 %v1747, 1.442695
      %v1835 = vpow.pop %v1834
      %v1836 = vmul.f32 %v1748, 1.442695
      %v1837 = vpow.pop %v1836
      %v1838 = vmul.f32 %v1749, 1.442695
      %v1839 = vpow.pop %v1838
      %v1840 = vmul.f32 %v1750, 1.442695
      %v1841 = vpow.pop %v1840
      %v1842 = vmul.f32 %v1751, 1.442695
      %v1843 = vpow.pop %v1842
      %v1844 = vmul.f32 %v1752, 1.442695
      %v1845 = vpow.pop %v1844
      %v1846 = vmul.f32 %v1753, 1.442695
      %v1847 = vpow.pop %v1846
      %v1848 = vmul.f32 %v1754, 1.442695
      %v1849 = vpow.pop %v1848
      %v1850 = vmul.f32 %v1755, 1.442695
      %v1851 = vpow.pop %v1850
      %v1852 = vmul.f32 %v1756, 1.442695
      %v1853 = vpow.pop %v1852
      %v1854 = vmul.f32 %v1757, 1.442695
      %v1855 = vpow.pop %v1854
      %v1856 = vmul.f32 %v1758, 1.442695
      %v1857 = vpow.pop %v1856
      %v1858 = vmul.f32 %v1759, 1.442695
      %v1859 = vpow.pop %v1858
      %v1860 = vmul.f32 %v1760, 1.442695
      %v1861 = vpow.pop %v1860
      %v1862 = vmul.f32 %v1761, 1.442695
      %v1863 = vpow.pop %v1862
      %v1864 = vmul.f32 %v1762, 1.442695
      %v1865 = vpow.pop %v1864
      %v1866 = vmul.f32 %v1763, 1.442695
      %v1867 = vpow.pop %v1866
      %v1868 = vmul.f32 %v1764, 1.442695
      %v1869 = vpow.pop %v1868
      %v1870 = vmul.f32 %v1765, 1.442695
      %v1871 = vpow.pop %v1870
      %v1872 = vmul.f32 %v1766, 1.442695
      %v1873 = vpow.pop %v1872
      %v1874 = vmul.f32 %v1767, 1.442695
      %v1875 = vpow.pop %v1874
      %v1876 = vmul.f32 %v1768, 1.442695
      %v1877 = vpow.pop %v1876
      %v1878 = vmul.f32 %v1769, 1.442695
      %v1879 = vpow.pop %v1878
      %v1880 = vmul.f32 %v1770, 1.442695
      %v1881 = vpow.pop %v1880
      %v1882 = vmul.f32 %v1771, 1.442695
      %v1883 = vpow.pop %v1882
      %v1884 = vmul.f32 %v1772, 1.442695
      %v1885 = vpow.pop %v1884
      %v1886 = vmul.f32 %v1773, 1.442695
      %v1887 = vpow.pop %v1886
      %v1888 = vmul.f32 %v1774, 1.442695
      %v1889 = vpow.pop %v1888
      %v1890 = vmul.f32 %v1775, 1.442695
      %v1891 = vpow.pop %v1890
      %v1892 = vmul.f32 %v1776, 1.442695
      %v1893 = vpow.pop %v1892
      %v1894 = vmul.f32 %v1777, 1.442695
      %v1895 = vpow.pop %v1894
      %v1896 = vmul.f32 %v1778, 1.442695
      %v1897 = vpow.pop %v1896
      %v1898 = vmul.f32 %v1779, 1.442695
      %v1899 = vpow.pop %v1898
      %v1900 = vmul.f32 %v1780, 1.442695
      %v1901 = vpow.pop %v1900
      %v1902 = vmul.f32 %v1781, 1.442695
      %v1903 = vpow.pop %v1902
      %v1904 = vmul.f32 %v1782, 1.442695
      %v1905 = vpow.pop %v1904
      %v1906 = vmul.f32 %v1783, 1.442695
      %v1907 = vpow.pop %v1906
      %v1908 = vmul.f32 %v1784, 1.442695
      %v1909 = vpow.pop %v1908
      %v1910 = vmul.f32 %v1785, 1.442695
      %v1911 = vpow.pop %v1910
      %v1912 = vmul.f32 %v1786, 1.442695
      %v1913 = vpow.pop %v1912
      %v1914 = vmul.f32 %v1787, 1.442695
      %v1915 = vpow.pop %v1914
      %v1916 = vadd.f32 %v1789, %v1791
      %1917 = vadd.xlane.f32.xlu0 %v1916
      %v1918 = vpop.xlane.xlu0 %1917
      %v1919 = vadd.f32 %v1793, %v1795
      %1920 = vadd.xlane.f32.xlu0 %v1919
      %v1921 = vpop.xlane.xlu0 %1920
      %v1922 = vadd.f32 %v1797, %v1799
      %1923 = vadd.xlane.f32.xlu0 %v1922
      %v1924 = vpop.xlane.xlu0 %1923
      %v1925 = vadd.f32 %v1801, %v1803
      %1926 = vadd.xlane.f32.xlu0 %v1925
      %v1927 = vpop.xlane.xlu0 %1926
      %v1928 = vadd.f32 %v1805, %v1807
      %1929 = vadd.xlane.f32.xlu0 %v1928
      %v1930 = vpop.xlane.xlu0 %1929
      %v1931 = vadd.f32 %v1809, %v1811
      %1932 = vadd.xlane.f32.xlu0 %v1931
      %v1933 = vpop.xlane.xlu0 %1932
      %v1934 = vadd.f32 %v1813, %v1815
      %1935 = vadd.xlane.f32.xlu0 %v1934
      %v1936 = vpop.xlane.xlu0 %1935
      %v1937 = vadd.f32 %v1817, %v1819
      %1938 = vadd.xlane.f32.xlu0 %v1937
      %v1939 = vpop.xlane.xlu0 %1938
      %v1940 = vadd.f32 %v1821, %v1823
      %1941 = vadd.xlane.f32.xlu0 %v1940
      %v1942 = vpop.xlane.xlu0 %1941
      %v1943 = vadd.f32 %v1825, %v1827
      %1944 = vadd.xlane.f32.xlu0 %v1943
      %v1945 = vpop.xlane.xlu0 %1944
      %v1946 = vadd.f32 %v1829, %v1831
      %1947 = vadd.xlane.f32.xlu0 %v1946
      %v1948 = vpop.xlane.xlu0 %1947
      %v1949 = vadd.f32 %v1833, %v1835
      %1950 = vadd.xlane.f32.xlu0 %v1949
      %v1951 = vpop.xlane.xlu0 %1950
      %v1952 = vadd.f32 %v1837, %v1839
      %1953 = vadd.xlane.f32.xlu0 %v1952
      %v1954 = vpop.xlane.xlu0 %1953
      %v1955 = vadd.f32 %v1841, %v1843
      %1956 = vadd.xlane.f32.xlu0 %v1955
      %v1957 = vpop.xlane.xlu0 %1956
      %v1958 = vadd.f32 %v1845, %v1847
      %1959 = vadd.xlane.f32.xlu0 %v1958
      %v1960 = vpop.xlane.xlu0 %1959
      %v1961 = vadd.f32 %v1849, %v1851
      %1962 = vadd.xlane.f32.xlu0 %v1961
      %v1963 = vpop.xlane.xlu0 %1962
      %v1964 = vadd.f32 %v1853, %v1855
      %1965 = vadd.xlane.f32.xlu0 %v1964
      %v1966 = vpop.xlane.xlu0 %1965
      %v1967 = vadd.f32 %v1857, %v1859
      %1968 = vadd.xlane.f32.xlu0 %v1967
      %v1969 = vpop.xlane.xlu0 %1968
      %v1970 = vadd.f32 %v1861, %v1863
      %1971 = vadd.xlane.f32.xlu0 %v1970
      %v1972 = vpop.xlane.xlu0 %1971
      %v1973 = vadd.f32 %v1865, %v1867
      %1974 = vadd.xlane.f32.xlu0 %v1973
      %v1975 = vpop.xlane.xlu0 %1974
      %v1976 = vadd.f32 %v1869, %v1871
      %1977 = vadd.xlane.f32.xlu0 %v1976
      %v1978 = vpop.xlane.xlu0 %1977
      %v1979 = vadd.f32 %v1873, %v1875
      %1980 = vadd.xlane.f32.xlu0 %v1979
      %v1981 = vpop.xlane.xlu0 %1980
      %v1982 = vadd.f32 %v1877, %v1879
      %1983 = vadd.xlane.f32.xlu0 %v1982
      %v1984 = vpop.xlane.xlu0 %1983
      %v1985 = vadd.f32 %v1881, %v1883
      %1986 = vadd.xlane.f32.xlu0 %v1985
      %v1987 = vpop.xlane.xlu0 %1986
      %v1988 = vadd.f32 %v1885, %v1887
      %1989 = vadd.xlane.f32.xlu0 %v1988
      %v1990 = vpop.xlane.xlu0 %1989
      %v1991 = vadd.f32 %v1889, %v1891
      %1992 = vadd.xlane.f32.xlu0 %v1991
      %v1993 = vpop.xlane.xlu0 %1992
      %v1994 = vadd.f32 %v1893, %v1895
      %1995 = vadd.xlane.f32.xlu0 %v1994
      %v1996 = vpop.xlane.xlu0 %1995
      %v1997 = vadd.f32 %v1897, %v1899
      %1998 = vadd.xlane.f32.xlu0 %v1997
      %v1999 = vpop.xlane.xlu0 %1998
      %v2000 = vadd.f32 %v1901, %v1903
      %2001 = vadd.xlane.f32.xlu0 %v2000
      %v2002 = vpop.xlane.xlu0 %2001
      %v2003 = vadd.f32 %v1905, %v1907
      %2004 = vadd.xlane.f32.xlu0 %v2003
      %v2005 = vpop.xlane.xlu0 %2004
      %v2006 = vadd.f32 %v1909, %v1911
      %2007 = vadd.xlane.f32.xlu0 %v2006
      %v2008 = vpop.xlane.xlu0 %2007
      %v2009 = vadd.f32 %v1913, %v1915
      %2010 = vadd.xlane.f32.xlu0 %v2009
      %v2011 = vpop.xlane.xlu0 %2010
      %v2012 = vpack.c.bf16 %v1793, %v1789
      %v2013 = vpack.c.bf16 %v1795, %v1791
      %v2014 = vpack.c.bf16 %v1801, %v1797
      %v2015 = vpack.c.bf16 %v1803, %v1799
      %v2016 = vpack.c.bf16 %v1809, %v1805
      %v2017 = vpack.c.bf16 %v1811, %v1807
      %v2018 = vpack.c.bf16 %v1817, %v1813
      %v2019 = vpack.c.bf16 %v1819, %v1815
      %v2020 = vpack.c.bf16 %v1825, %v1821
      %v2021 = vpack.c.bf16 %v1827, %v1823
      %v2022 = vpack.c.bf16 %v1833, %v1829
      %v2023 = vpack.c.bf16 %v1835, %v1831
      %v2024 = vpack.c.bf16 %v1841, %v1837
      %v2025 = vpack.c.bf16 %v1843, %v1839
      %v2026 = vpack.c.bf16 %v1849, %v1845
      %v2027 = vpack.c.bf16 %v1851, %v1847
      %v2028 = vpack.c.bf16 %v1857, %v1853
      %v2029 = vpack.c.bf16 %v1859, %v1855
      %v2030 = vpack.c.bf16 %v1865, %v1861
      %v2031 = vpack.c.bf16 %v1867, %v1863
      %v2032 = vpack.c.bf16 %v1873, %v1869
      %v2033 = vpack.c.bf16 %v1875, %v1871
      %v2034 = vpack.c.bf16 %v1881, %v1877
      %v2035 = vpack.c.bf16 %v1883, %v1879
      %v2036 = vpack.c.bf16 %v1889, %v1885
      %v2037 = vpack.c.bf16 %v1891, %v1887
      %v2038 = vpack.c.bf16 %v1897, %v1893
      %v2039 = vpack.c.bf16 %v1899, %v1895
      %v2040 = vpack.c.bf16 %v1905, %v1901
      %v2041 = vpack.c.bf16 %v1907, %v1903
      %v2042 = vpack.c.bf16 %v1913, %v1909
      %v2043 = vpack.c.bf16 %v1915, %v1911
      %2044 = vmatprep.subr.bf16.mxu0 0
      %2045 = vmatpush1.bf16.msra.mxu0 %v1292
      %2046 = vmatprep.subr.bf16.mxu0 0
      %2047 = vmatpush1.bf16.msra.mxu0 %v1295
      %2048 = vmatprep.subr.bf16.mxu0 0
      %2049 = vmatpush1.bf16.msra.mxu0 %v1298
      %2050 = vmatprep.subr.bf16.mxu0 0
      %2051 = vmatpush1.bf16.msra.mxu0 %v1301
      %2052 = vmatprep.subr.bf16.mxu0 0
      %2053 = vmatpush1.bf16.msra.mxu0 %v1304
      %2054 = vmatprep.subr.bf16.mxu0 0
      %2055 = vmatpush1.bf16.msra.mxu0 %v1307
      %2056 = vmatprep.subr.bf16.mxu0 0
      %2057 = vmatpush1.bf16.msra.mxu0 %v1310
      %2058 = vmatprep.subr.bf16.mxu0 0
      %2059 = vmatpush1.bf16.msra.mxu0 %v1313
      %2060 = vmatprep.subr.bf16.mxu0 0
      %2061 = vmatpush1.bf16.msra.mxu0 %v1316
      %2062 = vmatprep.subr.bf16.mxu0 0
      %2063 = vmatpush1.bf16.msra.mxu0 %v1319
      %2064 = vmatprep.subr.bf16.mxu0 0
      %2065 = vmatpush1.bf16.msra.mxu0 %v1322
      %2066 = vmatprep.subr.bf16.mxu0 0
      %2067 = vmatpush1.bf16.msra.mxu0 %v1325
      %2068 = vmatprep.subr.bf16.mxu0 0
      %2069 = vmatpush1.bf16.msra.mxu0 %v1328
      %2070 = vmatprep.subr.bf16.mxu0 0
      %2071 = vmatpush1.bf16.msra.mxu0 %v1331
      %2072 = vmatprep.subr.bf16.mxu0 0
      %2073 = vmatpush1.bf16.msra.mxu0 %v1334
      %2074 = vmatprep.subr.bf16.mxu0 0
      %2075 = vmatpush1.bf16.msra.mxu0 %v1337
      %2076 = vmatprep.mubr.bf16.mxu0 %v2013
      %2077 = vmatmul.mubr.bf16.gmra.mrb[0].mxu0 %v2012
      %v2078 = vpop.f32.mrb[0].mxu0
      %v2079 = vadd.f32 0.0, %v2078
      %v2080 = vpop.f32.mrb[0].mxu0
      %v2081 = vpop.f32.mrb[0].mxu0
      %v2082 = vadd.f32 0.0, %v2081
      %v2083 = vpop.f32.mrb[0].mxu0
      %2084 = vmatprep.mubr.bf16.mxu0 %v2015
      %2085 = vmatmul.mubr.bf16.gmra.mrb[0].mxu0 %v2014
      %v2086 = vpop.f32.mrb[0].mxu0
      %v2087 = vadd.f32 0.0, %v2086
      %v2088 = vpop.f32.mrb[0].mxu0
      %v2089 = vpop.f32.mrb[0].mxu0
      %v2090 = vadd.f32 0.0, %v2089
      %v2091 = vpop.f32.mrb[0].mxu0
      %2092 = vmatprep.mubr.bf16.mxu0 %v2017
      %2093 = vmatmul.mubr.bf16.gmra.mrb[0].mxu0 %v2016
      %v2094 = vpop.f32.mrb[0].mxu0
      %v2095 = vadd.f32 0.0, %v2094
      %v2096 = vpop.f32.mrb[0].mxu0
      %v2097 = vpop.f32.mrb[0].mxu0
      %v2098 = vadd.f32 0.0, %v2097
      %v2099 = vpop.f32.mrb[0].mxu0
      %2100 = vmatprep.mubr.bf16.mxu0 %v2019
      %2101 = vmatmul.mubr.bf16.gmra.mrb[0].mxu0 %v2018
      %v2102 = vpop.f32.mrb[0].mxu0
      %v2103 = vadd.f32 0.0, %v2102
      %v2104 = vpop.f32.mrb[0].mxu0
      %v2105 = vpop.f32.mrb[0].mxu0
      %v2106 = vadd.f32 0.0, %v2105
      %v2107 = vpop.f32.mrb[0].mxu0
      %2108 = vmatprep.mubr.bf16.mxu0 %v2021
      %2109 = vmatmul.mubr.bf16.gmra.mrb[0].mxu0 %v2020
      %v2110 = vpop.f32.mrb[0].mxu0
      %v2111 = vadd.f32 0.0, %v2110
      %v2112 = vpop.f32.mrb[0].mxu0
      %v2113 = vpop.f32.mrb[0].mxu0
      %v2114 = vadd.f32 0.0, %v2113
      %v2115 = vpop.f32.mrb[0].mxu0
      %2116 = vmatprep.mubr.bf16.mxu0 %v2023
      %2117 = vmatmul.mubr.bf16.gmra.mrb[0].mxu0 %v2022
      %v2118 = vpop.f32.mrb[0].mxu0
      %v2119 = vadd.f32 0.0, %v2118
      %v2120 = vpop.f32.mrb[0].mxu0
      %v2121 = vpop.f32.mrb[0].mxu0
      %v2122 = vadd.f32 0.0, %v2121
      %v2123 = vpop.f32.mrb[0].mxu0
      %2124 = vmatprep.mubr.bf16.mxu0 %v2025
      %2125 = vmatmul.mubr.bf16.gmra.mrb[0].mxu0 %v2024
      %v2126 = vpop.f32.mrb[0].mxu0
      %v2127 = vadd.f32 0.0, %v2126
      %v2128 = vpop.f32.mrb[0].mxu0
      %v2129 = vpop.f32.mrb[0].mxu0
      %v2130 = vadd.f32 0.0, %v2129
      %v2131 = vpop.f32.mrb[0].mxu0
      %2132 = vmatprep.mubr.bf16.mxu0 %v2027
      %2133 = vmatmul.mubr.bf16.gmra.mrb[0].mxu0 %v2026
      %v2134 = vpop.f32.mrb[0].mxu0
      %v2135 = vadd.f32 0.0, %v2134
      %v2136 = vpop.f32.mrb[0].mxu0
      %v2137 = vpop.f32.mrb[0].mxu0
      %v2138 = vadd.f32 0.0, %v2137
      %v2139 = vpop.f32.mrb[0].mxu0
      %2140 = vmatprep.mubr.bf16.mxu0 %v2029
      %2141 = vmatmul.mubr.bf16.gmra.mrb[0].mxu0 %v2028
      %v2142 = vpop.f32.mrb[0].mxu0
      %v2143 = vadd.f32 0.0, %v2142
      %v2144 = vpop.f32.mrb[0].mxu0
      %v2145 = vpop.f32.mrb[0].mxu0
      %v2146 = vadd.f32 0.0, %v2145
      %v2147 = vpop.f32.mrb[0].mxu0
      %2148 = vmatprep.mubr.bf16.mxu0 %v2031
      %2149 = vmatmul.mubr.bf16.gmra.mrb[0].mxu0 %v2030
      %v2150 = vpop.f32.mrb[0].mxu0
      %v2151 = vadd.f32 0.0, %v2150
      %v2152 = vpop.f32.mrb[0].mxu0
      %v2153 = vpop.f32.mrb[0].mxu0
      %v2154 = vadd.f32 0.0, %v2153
      %v2155 = vpop.f32.mrb[0].mxu0
      %2156 = vmatprep.mubr.bf16.mxu0 %v2033
      %2157 = vmatmul.mubr.bf16.gmra.mrb[0].mxu0 %v2032
      %v2158 = vpop.f32.mrb[0].mxu0
      %v2159 = vadd.f32 0.0, %v2158
      %v2160 = vpop.f32.mrb[0].mxu0
      %v2161 = vpop.f32.mrb[0].mxu0
      %v2162 = vadd.f32 0.0, %v2161
      %v2163 = vpop.f32.mrb[0].mxu0
      %2164 = vmatprep.mubr.bf16.mxu0 %v2035
      %2165 = vmatmul.mubr.bf16.gmra.mrb[0].mxu0 %v2034
      %v2166 = vpop.f32.mrb[0].mxu0
      %v2167 = vadd.f32 0.0, %v2166
      %v2168 = vpop.f32.mrb[0].mxu0
      %v2169 = vpop.f32.mrb[0].mxu0
      %v2170 = vadd.f32 0.0, %v2169
      %v2171 = vpop.f32.mrb[0].mxu0
      %2172 = vmatprep.mubr.bf16.mxu0 %v2037
      %2173 = vmatmul.mubr.bf16.gmra.mrb[0].mxu0 %v2036
      %v2174 = vpop.f32.mrb[0].mxu0
      %v2175 = vadd.f32 0.0, %v2174
      %v2176 = vpop.f32.mrb[0].mxu0
      %v2177 = vpop.f32.mrb[0].mxu0
      %v2178 = vadd.f32 0.0, %v2177
      %v2179 = vpop.f32.mrb[0].mxu0
      %2180 = vmatprep.mubr.bf16.mxu0 %v2039
      %2181 = vmatmul.mubr.bf16.gmra.mrb[0].mxu0 %v2038
      %v2182 = vpop.f32.mrb[0].mxu0
      %v2183 = vadd.f32 0.0, %v2182
      %v2184 = vpop.f32.mrb[0].mxu0
      %v2185 = vpop.f32.mrb[0].mxu0
      %v2186 = vadd.f32 0.0, %v2185
      %v2187 = vpop.f32.mrb[0].mxu0
      %2188 = vmatprep.mubr.bf16.mxu0 %v2041
      %2189 = vmatmul.mubr.bf16.gmra.mrb[0].mxu0 %v2040
      %v2190 = vpop.f32.mrb[0].mxu0
      %v2191 = vadd.f32 0.0, %v2190
      %v2192 = vpop.f32.mrb[0].mxu0
      %v2193 = vpop.f32.mrb[0].mxu0
      %v2194 = vadd.f32 0.0, %v2193
      %v2195 = vpop.f32.mrb[0].mxu0
      %2196 = vmatprep.mubr.bf16.mxu0 %v2043
      %2197 = vmatmul.mubr.bf16.gmra.mrb[0].mxu0 %v2042
      %v2198 = vpop.f32.mrb[0].mxu0
      %v2199 = vadd.f32 0.0, %v2198
      %v2200 = vpop.f32.mrb[0].mxu0
      %v2201 = vpop.f32.mrb[0].mxu0
      %v2202 = vadd.f32 0.0, %v2201
      %v2203 = vpop.f32.mrb[0].mxu0
      %2204 = vdwg.mxu0
      %v2205 = vrcp.pop %v1918
      %v2206 = vrcp.pop %v1921
      %v2207 = vrcp.pop %v1924
      %v2208 = vrcp.pop %v1927
      %v2209 = vrcp.pop %v1930
      %v2210 = vrcp.pop %v1933
      %v2211 = vrcp.pop %v1936
      %v2212 = vrcp.pop %v1939
      %v2213 = vrcp.pop %v1942
      %v2214 = vrcp.pop %v1945
      %v2215 = vrcp.pop %v1948
      %v2216 = vrcp.pop %v1951
      %v2217 = vrcp.pop %v1954
      %v2218 = vrcp.pop %v1957
      %v2219 = vrcp.pop %v1960
      %v2220 = vrcp.pop %v1963
      %v2221 = vrcp.pop %v1966
      %v2222 = vrcp.pop %v1969
      %v2223 = vrcp.pop %v1972
      %v2224 = vrcp.pop %v1975
      %v2225 = vrcp.pop %v1978
      %v2226 = vrcp.pop %v1981
      %v2227 = vrcp.pop %v1984
      %v2228 = vrcp.pop %v1987
      %v2229 = vrcp.pop %v1990
      %v2230 = vrcp.pop %v1993
      %v2231 = vrcp.pop %v1996
      %v2232 = vrcp.pop %v1999
      %v2233 = vrcp.pop %v2002
      %v2234 = vrcp.pop %v2005
      %v2235 = vrcp.pop %v2008
      %v2236 = vrcp.pop %v2011
      %v2237 = vmul.f32 %v2079, %v2205
      %v2238 = vmul.f32 %v2082, %v2206
      %v2239 = vmul.f32 %v2087, %v2207
      %v2240 = vmul.f32 %v2090, %v2208
      %v2241 = vmul.f32 %v2095, %v2209
      %v2242 = vmul.f32 %v2098, %v2210
      %v2243 = vmul.f32 %v2103, %v2211
      %v2244 = vmul.f32 %v2106, %v2212
      %v2245 = vmul.f32 %v2111, %v2213
      %v2246 = vmul.f32 %v2114, %v2214
      %v2247 = vmul.f32 %v2119, %v2215
      %v2248 = vmul.f32 %v2122, %v2216
      %v2249 = vmul.f32 %v2127, %v2217
      %v2250 = vmul.f32 %v2130, %v2218
      %v2251 = vmul.f32 %v2135, %v2219
      %v2252 = vmul.f32 %v2138, %v2220
      %v2253 = vmul.f32 %v2143, %v2221
      %v2254 = vmul.f32 %v2146, %v2222
      %v2255 = vmul.f32 %v2151, %v2223
      %v2256 = vmul.f32 %v2154, %v2224
      %v2257 = vmul.f32 %v2159, %v2225
      %v2258 = vmul.f32 %v2162, %v2226
      %v2259 = vmul.f32 %v2167, %v2227
      %v2260 = vmul.f32 %v2170, %v2228
      %v2261 = vmul.f32 %v2175, %v2229
      %v2262 = vmul.f32 %v2178, %v2230
      %v2263 = vmul.f32 %v2183, %v2231
      %v2264 = vmul.f32 %v2186, %v2232
      %v2265 = vmul.f32 %v2191, %v2233
      %v2266 = vmul.f32 %v2194, %v2234
      %v2267 = vmul.f32 %v2199, %v2235
      %v2268 = vmul.f32 %v2202, %v2236
      %v2269 = vpack.c.bf16 %v2238, %v2237
      %v2270 = vpack.c.bf16 %v2240, %v2239
      %v2271 = vpack.c.bf16 %v2242, %v2241
      %v2272 = vpack.c.bf16 %v2244, %v2243
      %v2273 = vpack.c.bf16 %v2246, %v2245
      %v2274 = vpack.c.bf16 %v2248, %v2247
      %v2275 = vpack.c.bf16 %v2250, %v2249
      %v2276 = vpack.c.bf16 %v2252, %v2251
      %v2277 = vpack.c.bf16 %v2254, %v2253
      %v2278 = vpack.c.bf16 %v2256, %v2255
      %v2279 = vpack.c.bf16 %v2258, %v2257
      %v2280 = vpack.c.bf16 %v2260, %v2259
      %v2281 = vpack.c.bf16 %v2262, %v2261
      %v2282 = vpack.c.bf16 %v2264, %v2263
      %v2283 = vpack.c.bf16 %v2266, %v2265
      %v2284 = vpack.c.bf16 %v2268, %v2267
      %2301 = vrot.lane.b32.xlu0 %v1290, 112
      %v2302 = vpop.permute.xlu0 %2301
      %2303 = vrot.lane.b32.xlu0 %v1293, 112
      %v2304 = vpop.permute.xlu0 %2303
      %2305 = vrot.lane.b32.xlu0 %v1296, 112
      %v2306 = vpop.permute.xlu0 %2305
      %2307 = vrot.lane.b32.xlu0 %v1299, 112
      %v2308 = vpop.permute.xlu0 %2307
      %2309 = vrot.lane.b32.xlu0 %v1302, 112
      %v2310 = vpop.permute.xlu0 %2309
      %2311 = vrot.lane.b32.xlu0 %v1305, 112
      %v2312 = vpop.permute.xlu0 %2311
      %2313 = vrot.lane.b32.xlu0 %v1308, 112
      %v2314 = vpop.permute.xlu0 %2313
      %2315 = vrot.lane.b32.xlu0 %v1311, 112
      %v2316 = vpop.permute.xlu0 %2315
      %2317 = vrot.lane.b32.xlu0 %v1314, 112
      %v2318 = vpop.permute.xlu0 %2317
      %2319 = vrot.lane.b32.xlu0 %v1317, 112
      %v2320 = vpop.permute.xlu0 %2319
      %2321 = vrot.lane.b32.xlu0 %v1320, 112
      %v2322 = vpop.permute.xlu0 %2321
      %2323 = vrot.lane.b32.xlu0 %v1323, 112
      %v2324 = vpop.permute.xlu0 %2323
      %2325 = vrot.lane.b32.xlu0 %v1326, 112
      %v2326 = vpop.permute.xlu0 %2325
      %2327 = vrot.lane.b32.xlu0 %v1329, 112
      %v2328 = vpop.permute.xlu0 %2327
      %2329 = vrot.lane.b32.xlu0 %v1332, 112
      %v2330 = vpop.permute.xlu0 %2329
      %2331 = vrot.lane.b32.xlu0 %v1335, 112
      %v2332 = vpop.permute.xlu0 %2331
      %2349 = vrot.lane.b32.xlu0 %v1291, 112
      %v2350 = vpop.permute.xlu0 %2349
      %2351 = vrot.lane.b32.xlu0 %v1294, 112
      %v2352 = vpop.permute.xlu0 %2351
      %2353 = vrot.lane.b32.xlu0 %v1297, 112
      %v2354 = vpop.permute.xlu0 %2353
      %2355 = vrot.lane.b32.xlu0 %v1300, 112
      %v2356 = vpop.permute.xlu0 %2355
      %2357 = vrot.lane.b32.xlu0 %v1303, 112
      %v2358 = vpop.permute.xlu0 %2357
      %2359 = vrot.lane.b32.xlu0 %v1306, 112
      %v2360 = vpop.permute.xlu0 %2359
      %2361 = vrot.lane.b32.xlu0 %v1309, 112
      %v2362 = vpop.permute.xlu0 %2361
      %2363 = vrot.lane.b32.xlu0 %v1312, 112
      %v2364 = vpop.permute.xlu0 %2363
      %2365 = vrot.lane.b32.xlu0 %v1315, 112
      %v2366 = vpop.permute.xlu0 %2365
      %2367 = vrot.lane.b32.xlu0 %v1318, 112
      %v2368 = vpop.permute.xlu0 %2367
      %2369 = vrot.lane.b32.xlu0 %v1321, 112
      %v2370 = vpop.permute.xlu0 %2369
      %2371 = vrot.lane.b32.xlu0 %v1324, 112
      %v2372 = vpop.permute.xlu0 %2371
      %2373 = vrot.lane.b32.xlu0 %v1327, 112
      %v2374 = vpop.permute.xlu0 %2373
      %2375 = vrot.lane.b32.xlu0 %v1330, 112
      %v2376 = vpop.permute.xlu0 %2375
      %2377 = vrot.lane.b32.xlu0 %v1333, 112
      %v2378 = vpop.permute.xlu0 %2377
      %2379 = vrot.lane.b32.xlu0 %v1336, 112
      %v2380 = vpop.permute.xlu0 %2379
      %v2382 = vsel %vm1338, %v2302, 0
      %v2385 = vsel %vm1338, %v2304, 0
      %v2388 = vsel %vm1338, %v2306, 0
      %v2391 = vsel %vm1338, %v2308, 0
      %v2394 = vsel %vm1338, %v2310, 0
      %v2397 = vsel %vm1338, %v2312, 0
      %v2400 = vsel %vm1338, %v2314, 0
      %v2403 = vsel %vm1338, %v2316, 0
      %v2406 = vsel %vm1338, %v2318, 0
      %v2409 = vsel %vm1338, %v2320, 0
      %v2412 = vsel %vm1338, %v2322, 0
      %v2415 = vsel %vm1338, %v2324, 0
      %v2418 = vsel %vm1338, %v2326, 0
      %v2421 = vsel %vm1338, %v2328, 0
      %v2424 = vsel %vm1338, %v2330, 0
      %v2427 = vsel %vm1338, %v2332, 0
      %v2430 = vsel %vm1338, %v2350, 0
      %v2433 = vsel %vm1338, %v2352, 0
      %v2436 = vsel %vm1338, %v2354, 0
      %v2439 = vsel %vm1338, %v2356, 0
      %v2442 = vsel %vm1338, %v2358, 0
      %v2445 = vsel %vm1338, %v2360, 0
      %v2448 = vsel %vm1338, %v2362, 0
      %v2451 = vsel %vm1338, %v2364, 0
      %v2454 = vsel %vm1338, %v2366, 0
      %v2457 = vsel %vm1338, %v2368, 0
      %v2460 = vsel %vm1338, %v2370, 0
      %v2463 = vsel %vm1338, %v2372, 0
      %v2466 = vsel %vm1338, %v2374, 0
      %v2469 = vsel %vm1338, %v2376, 0
      %v2472 = vsel %vm1338, %v2378, 0
      %v2475 = vsel %vm1338, %v2380, 0
      %2477 = vmatprep.subr.bf16.mxu0 0
      %2478 = vmatpush1.bf16.xpose.msra.mxu0 %v2430
      %2479 = vmatprep.subr.bf16.mxu0 0
      %2480 = vmatpush1.bf16.xpose.msra.mxu0 %v2433
      %2481 = vmatprep.subr.bf16.mxu0 0
      %2482 = vmatpush1.bf16.xpose.msra.mxu0 %v2436
      %2483 = vmatprep.subr.bf16.mxu0 0
      %2484 = vmatpush1.bf16.xpose.msra.mxu0 %v2439
      %2485 = vmatprep.subr.bf16.mxu0 0
      %2486 = vmatpush1.bf16.xpose.msra.mxu0 %v2442
      %2487 = vmatprep.subr.bf16.mxu0 0
      %2488 = vmatpush1.bf16.xpose.msra.mxu0 %v2445
      %2489 = vmatprep.subr.bf16.mxu0 0
      %2490 = vmatpush1.bf16.xpose.msra.mxu0 %v2448
      %2491 = vmatprep.subr.bf16.mxu0 0
      %2492 = vmatpush1.bf16.xpose.msra.mxu0 %v2451
      %2493 = vmatprep.subr.bf16.mxu0 0
      %2494 = vmatpush1.bf16.xpose.msra.mxu0 %v2454
      %2495 = vmatprep.subr.bf16.mxu0 0
      %2496 = vmatpush1.bf16.xpose.msra.mxu0 %v2457
      %2497 = vmatprep.subr.bf16.mxu0 0
      %2498 = vmatpush1.bf16.xpose.msra.mxu0 %v2460
      %2499 = vmatprep.subr.bf16.mxu0 0
      %2500 = vmatpush1.bf16.xpose.msra.mxu0 %v2463
      %2501 = vmatprep.subr.bf16.mxu0 0
      %2502 = vmatpush1.bf16.xpose.msra.mxu0 %v2466
      %2503 = vmatprep.subr.bf16.mxu0 0
      %2504 = vmatpush1.bf16.xpose.msra.mxu0 %v2469
      %2505 = vmatprep.subr.bf16.mxu0 0
      %2506 = vmatpush1.bf16.xpose.msra.mxu0 %v2472
      %2507 = vmatprep.subr.bf16.mxu0 0
      %2508 = vmatpush1.bf16.xpose.msra.mxu0 %v2475
      %2509 = vmatprep.mubr.bf16.mxu0 0
      %2510 = vmatmul.mubr.bf16.gmra.mrb[0].mxu0 %v2382
      %v2511 = vpop.f32.mrb[0].mxu0
      %v2512 = vadd.f32 0.0, %v2511
      %v2513 = vpop.f32.mrb[0].mxu0
      %v2514 = vadd.f32 0.0, %v2513
      %v2515 = vpop.f32.mrb[0].mxu0
      %v2516 = vadd.f32 0.0, %v2515
      %v2517 = vpop.f32.mrb[0].mxu0
      %v2518 = vadd.f32 0.0, %v2517
      %2519 = vmatprep.mubr.bf16.mxu0 0
      %2520 = vmatmul.mubr.bf16.gmra.mrb[0].mxu0 %v2385
      %v2521 = vpop.f32.mrb[0].mxu0
      %v2522 = vadd.f32 0.0, %v2521
      %v2523 = vpop.f32.mrb[0].mxu0
      %v2524 = vadd.f32 0.0, %v2523
      %v2525 = vpop.f32.mrb[0].mxu0
      %v2526 = vadd.f32 0.0, %v2525
      %v2527 = vpop.f32.mrb[0].mxu0
      %v2528 = vadd.f32 0.0, %v2527
      %2529 = vmatprep.mubr.bf16.mxu0 0
      %2530 = vmatmul.mubr.bf16.gmra.mrb[0].mxu0 %v2388
      %v2531 = vpop.f32.mrb[0].mxu0
      %v2532 = vadd.f32 0.0, %v2531
      %v2533 = vpop.f32.mrb[0].mxu0
      %v2534 = vadd.f32 0.0, %v2533
      %v2535 = vpop.f32.mrb[0].mxu0
      %v2536 = vadd.f32 0.0, %v2535
      %v2537 = vpop.f32.mrb[0].mxu0
      %v2538 = vadd.f32 0.0, %v2537
      %2539 = vmatprep.mubr.bf16.mxu0 0
      %2540 = vmatmul.mubr.bf16.gmra.mrb[0].mxu0 %v2391
      %v2541 = vpop.f32.mrb[0].mxu0
      %v2542 = vadd.f32 0.0, %v2541
      %v2543 = vpop.f32.mrb[0].mxu0
      %v2544 = vadd.f32 0.0, %v2543
      %v2545 = vpop.f32.mrb[0].mxu0
      %v2546 = vadd.f32 0.0, %v2545
      %v2547 = vpop.f32.mrb[0].mxu0
      %v2548 = vadd.f32 0.0, %v2547
      %2549 = vmatprep.mubr.bf16.mxu0 0
      %2550 = vmatmul.mubr.bf16.gmra.mrb[0].mxu0 %v2394
      %v2551 = vpop.f32.mrb[0].mxu0
      %v2552 = vadd.f32 0.0, %v2551
      %v2553 = vpop.f32.mrb[0].mxu0
      %v2554 = vadd.f32 0.0, %v2553
      %v2555 = vpop.f32.mrb[0].mxu0
      %v2556 = vadd.f32 0.0, %v2555
      %v2557 = vpop.f32.mrb[0].mxu0
      %v2558 = vadd.f32 0.0, %v2557
      %2559 = vmatprep.mubr.bf16.mxu0 0
      %2560 = vmatmul.mubr.bf16.gmra.mrb[0].mxu0 %v2397
      %v2561 = vpop.f32.mrb[0].mxu0
      %v2562 = vadd.f32 0.0, %v2561
      %v2563 = vpop.f32.mrb[0].mxu0
      %v2564 = vadd.f32 0.0, %v2563
      %v2565 = vpop.f32.mrb[0].mxu0
      %v2566 = vadd.f32 0.0, %v2565
      %v2567 = vpop.f32.mrb[0].mxu0
      %v2568 = vadd.f32 0.0, %v2567
      %2569 = vmatprep.mubr.bf16.mxu0 0
      %2570 = vmatmul.mubr.bf16.gmra.mrb[0].mxu0 %v2400
      %v2571 = vpop.f32.mrb[0].mxu0
      %v2572 = vadd.f32 0.0, %v2571
      %v2573 = vpop.f32.mrb[0].mxu0
      %v2574 = vadd.f32 0.0, %v2573
      %v2575 = vpop.f32.mrb[0].mxu0
      %v2576 = vadd.f32 0.0, %v2575
      %v2577 = vpop.f32.mrb[0].mxu0
      %v2578 = vadd.f32 0.0, %v2577
      %2579 = vmatprep.mubr.bf16.mxu0 0
      %2580 = vmatmul.mubr.bf16.gmra.mrb[0].mxu0 %v2403
      %v2581 = vpop.f32.mrb[0].mxu0
      %v2582 = vadd.f32 0.0, %v2581
      %v2583 = vpop.f32.mrb[0].mxu0
      %v2584 = vadd.f32 0.0, %v2583
      %v2585 = vpop.f32.mrb[0].mxu0
      %v2586 = vadd.f32 0.0, %v2585
      %v2587 = vpop.f32.mrb[0].mxu0
      %v2588 = vadd.f32 0.0, %v2587
      %2589 = vmatprep.mubr.bf16.mxu0 0
      %2590 = vmatmul.mubr.bf16.gmra.mrb[0].mxu0 %v2406
      %v2591 = vpop.f32.mrb[0].mxu0
      %v2592 = vadd.f32 0.0, %v2591
      %v2593 = vpop.f32.mrb[0].mxu0
      %v2594 = vadd.f32 0.0, %v2593
      %v2595 = vpop.f32.mrb[0].mxu0
      %v2596 = vadd.f32 0.0, %v2595
      %v2597 = vpop.f32.mrb[0].mxu0
      %v2598 = vadd.f32 0.0, %v2597
      %2599 = vmatprep.mubr.bf16.mxu0 0
      %2600 = vmatmul.mubr.bf16.gmra.mrb[0].mxu0 %v2409
      %v2601 = vpop.f32.mrb[0].mxu0
      %v2602 = vadd.f32 0.0, %v2601
      %v2603 = vpop.f32.mrb[0].mxu0
      %v2604 = vadd.f32 0.0, %v2603
      %v2605 = vpop.f32.mrb[0].mxu0
      %v2606 = vadd.f32 0.0, %v2605
      %v2607 = vpop.f32.mrb[0].mxu0
      %v2608 = vadd.f32 0.0, %v2607
      %2609 = vmatprep.mubr.bf16.mxu0 0
      %2610 = vmatmul.mubr.bf16.gmra.mrb[0].mxu0 %v2412
      %v2611 = vpop.f32.mrb[0].mxu0
      %v2612 = vadd.f32 0.0, %v2611
      %v2613 = vpop.f32.mrb[0].mxu0
      %v2614 = vadd.f32 0.0, %v2613
      %v2615 = vpop.f32.mrb[0].mxu0
      %v2616 = vadd.f32 0.0, %v2615
      %v2617 = vpop.f32.mrb[0].mxu0
      %v2618 = vadd.f32 0.0, %v2617
      %2619 = vmatprep.mubr.bf16.mxu0 0
      %2620 = vmatmul.mubr.bf16.gmra.mrb[0].mxu0 %v2415
      %v2621 = vpop.f32.mrb[0].mxu0
      %v2622 = vadd.f32 0.0, %v2621
      %v2623 = vpop.f32.mrb[0].mxu0
      %v2624 = vadd.f32 0.0, %v2623
      %v2625 = vpop.f32.mrb[0].mxu0
      %v2626 = vadd.f32 0.0, %v2625
      %v2627 = vpop.f32.mrb[0].mxu0
      %v2628 = vadd.f32 0.0, %v2627
      %2629 = vmatprep.mubr.bf16.mxu0 0
      %2630 = vmatmul.mubr.bf16.gmra.mrb[0].mxu0 %v2418
      %v2631 = vpop.f32.mrb[0].mxu0
      %v2632 = vadd.f32 0.0, %v2631
      %v2633 = vpop.f32.mrb[0].mxu0
      %v2634 = vadd.f32 0.0, %v2633
      %v2635 = vpop.f32.mrb[0].mxu0
      %v2636 = vadd.f32 0.0, %v2635
      %v2637 = vpop.f32.mrb[0].mxu0
      %v2638 = vadd.f32 0.0, %v2637
      %2639 = vmatprep.mubr.bf16.mxu0 0
      %2640 = vmatmul.mubr.bf16.gmra.mrb[0].mxu0 %v2421
      %v2641 = vpop.f32.mrb[0].mxu0
      %v2642 = vadd.f32 0.0, %v2641
      %v2643 = vpop.f32.mrb[0].mxu0
      %v2644 = vadd.f32 0.0, %v2643
      %v2645 = vpop.f32.mrb[0].mxu0
      %v2646 = vadd.f32 0.0, %v2645
      %v2647 = vpop.f32.mrb[0].mxu0
      %v2648 = vadd.f32 0.0, %v2647
      %2649 = vmatprep.mubr.bf16.mxu0 0
      %2650 = vmatmul.mubr.bf16.gmra.mrb[0].mxu0 %v2424
      %v2651 = vpop.f32.mrb[0].mxu0
      %v2652 = vadd.f32 0.0, %v2651
      %v2653 = vpop.f32.mrb[0].mxu0
      %v2654 = vadd.f32 0.0, %v2653
      %v2655 = vpop.f32.mrb[0].mxu0
      %v2656 = vadd.f32 0.0, %v2655
      %v2657 = vpop.f32.mrb[0].mxu0
      %v2658 = vadd.f32 0.0, %v2657
      %2659 = vmatprep.mubr.bf16.mxu0 0
      %2660 = vmatmul.mubr.bf16.gmra.mrb[0].mxu0 %v2427
      %v2661 = vpop.f32.mrb[0].mxu0
      %v2662 = vadd.f32 0.0, %v2661
      %v2663 = vpop.f32.mrb[0].mxu0
      %v2664 = vadd.f32 0.0, %v2663
      %v2665 = vpop.f32.mrb[0].mxu0
      %v2666 = vadd.f32 0.0, %v2665
      %v2667 = vpop.f32.mrb[0].mxu0
      %v2668 = vadd.f32 0.0, %v2667
      %2669 = vdwg.mxu0
      %v2670 = vmax.f32 %v2512, %v2514
      %2671 = vmax.xlane.f32.xlu0 %v2670
      %v2672 = vpop.xlane.xlu0 %2671
      %v2673 = vmax.f32 %v2516, %v2518
      %2674 = vmax.xlane.f32.xlu0 %v2673
      %v2675 = vpop.xlane.xlu0 %2674
      %v2676 = vmax.f32 %v2522, %v2524
      %2677 = vmax.xlane.f32.xlu0 %v2676
      %v2678 = vpop.xlane.xlu0 %2677
      %v2679 = vmax.f32 %v2526, %v2528
      %2680 = vmax.xlane.f32.xlu0 %v2679
      %v2681 = vpop.xlane.xlu0 %2680
      %v2682 = vmax.f32 %v2532, %v2534
      %2683 = vmax.xlane.f32.xlu0 %v2682
      %v2684 = vpop.xlane.xlu0 %2683
      %v2685 = vmax.f32 %v2536, %v2538
      %2686 = vmax.xlane.f32.xlu0 %v2685
      %v2687 = vpop.xlane.xlu0 %2686
      %v2688 = vmax.f32 %v2542, %v2544
      %2689 = vmax.xlane.f32.xlu0 %v2688
      %v2690 = vpop.xlane.xlu0 %2689
      %v2691 = vmax.f32 %v2546, %v2548
      %2692 = vmax.xlane.f32.xlu0 %v2691
      %v2693 = vpop.xlane.xlu0 %2692
      %v2694 = vmax.f32 %v2552, %v2554
      %2695 = vmax.xlane.f32.xlu0 %v2694
      %v2696 = vpop.xlane.xlu0 %2695
      %v2697 = vmax.f32 %v2556, %v2558
      %2698 = vmax.xlane.f32.xlu0 %v2697
      %v2699 = vpop.xlane.xlu0 %2698
      %v2700 = vmax.f32 %v2562, %v2564
      %2701 = vmax.xlane.f32.xlu0 %v2700
      %v2702 = vpop.xlane.xlu0 %2701
      %v2703 = vmax.f32 %v2566, %v2568
      %2704 = vmax.xlane.f32.xlu0 %v2703
      %v2705 = vpop.xlane.xlu0 %2704
      %v2706 = vmax.f32 %v2572, %v2574
      %2707 = vmax.xlane.f32.xlu0 %v2706
      %v2708 = vpop.xlane.xlu0 %2707
      %v2709 = vmax.f32 %v2576, %v2578
      %2710 = vmax.xlane.f32.xlu0 %v2709
      %v2711 = vpop.xlane.xlu0 %2710
      %v2712 = vmax.f32 %v2582, %v2584
      %2713 = vmax.xlane.f32.xlu0 %v2712
      %v2714 = vpop.xlane.xlu0 %2713
      %v2715 = vmax.f32 %v2586, %v2588
      %2716 = vmax.xlane.f32.xlu0 %v2715
      %v2717 = vpop.xlane.xlu0 %2716
      %v2718 = vmax.f32 %v2592, %v2594
      %2719 = vmax.xlane.f32.xlu0 %v2718
      %v2720 = vpop.xlane.xlu0 %2719
      %v2721 = vmax.f32 %v2596, %v2598
      %2722 = vmax.xlane.f32.xlu0 %v2721
      %v2723 = vpop.xlane.xlu0 %2722
      %v2724 = vmax.f32 %v2602, %v2604
      %2725 = vmax.xlane.f32.xlu0 %v2724
      %v2726 = vpop.xlane.xlu0 %2725
      %v2727 = vmax.f32 %v2606, %v2608
      %2728 = vmax.xlane.f32.xlu0 %v2727
      %v2729 = vpop.xlane.xlu0 %2728
      %v2730 = vmax.f32 %v2612, %v2614
      %2731 = vmax.xlane.f32.xlu0 %v2730
      %v2732 = vpop.xlane.xlu0 %2731
      %v2733 = vmax.f32 %v2616, %v2618
      %2734 = vmax.xlane.f32.xlu0 %v2733
      %v2735 = vpop.xlane.xlu0 %2734
      %v2736 = vmax.f32 %v2622, %v2624
      %2737 = vmax.xlane.f32.xlu0 %v2736
      %v2738 = vpop.xlane.xlu0 %2737
      %v2739 = vmax.f32 %v2626, %v2628
      %2740 = vmax.xlane.f32.xlu0 %v2739
      %v2741 = vpop.xlane.xlu0 %2740
      %v2742 = vmax.f32 %v2632, %v2634
      %2743 = vmax.xlane.f32.xlu0 %v2742
      %v2744 = vpop.xlane.xlu0 %2743
      %v2745 = vmax.f32 %v2636, %v2638
      %2746 = vmax.xlane.f32.xlu0 %v2745
      %v2747 = vpop.xlane.xlu0 %2746
      %v2748 = vmax.f32 %v2642, %v2644
      %2749 = vmax.xlane.f32.xlu0 %v2748
      %v2750 = vpop.xlane.xlu0 %2749
      %v2751 = vmax.f32 %v2646, %v2648
      %2752 = vmax.xlane.f32.xlu0 %v2751
      %v2753 = vpop.xlane.xlu0 %2752
      %v2754 = vmax.f32 %v2652, %v2654
      %2755 = vmax.xlane.f32.xlu0 %v2754
      %v2756 = vpop.xlane.xlu0 %2755
      %v2757 = vmax.f32 %v2656, %v2658
      %2758 = vmax.xlane.f32.xlu0 %v2757
      %v2759 = vpop.xlane.xlu0 %2758
      %v2760 = vmax.f32 %v2662, %v2664
      %2761 = vmax.xlane.f32.xlu0 %v2760
      %v2762 = vpop.xlane.xlu0 %2761
      %v2763 = vmax.f32 %v2666, %v2668
      %2764 = vmax.xlane.f32.xlu0 %v2763
      %v2765 = vpop.xlane.xlu0 %2764
      %v2766 = vsub.f32 %v2512, %v2672
      %v2767 = vsub.f32 %v2514, %v2672
      %v2768 = vsub.f32 %v2516, %v2675
      %v2769 = vsub.f32 %v2518, %v2675
      %v2770 = vsub.f32 %v2522, %v2678
      %v2771 = vsub.f32 %v2524, %v2678
      %v2772 = vsub.f32 %v2526, %v2681
      %v2773 = vsub.f32 %v2528, %v2681
      %v2774 = vsub.f32 %v2532, %v2684
      %v2775 = vsub.f32 %v2534, %v2684
      %v2776 = vsub.f32 %v2536, %v2687
      %v2777 = vsub.f32 %v2538, %v2687
      %v2778 = vsub.f32 %v2542, %v2690
      %v2779 = vsub.f32 %v2544, %v2690
      %v2780 = vsub.f32 %v2546, %v2693
      %v2781 = vsub.f32 %v2548, %v2693
      %v2782 = vsub.f32 %v2552, %v2696
      %v2783 = vsub.f32 %v2554, %v2696
      %v2784 = vsub.f32 %v2556, %v2699
      %v2785 = vsub.f32 %v2558, %v2699
      %v2786 = vsub.f32 %v2562, %v2702
      %v2787 = vsub.f32 %v2564, %v2702
      %v2788 = vsub.f32 %v2566, %v2705
      %v2789 = vsub.f32 %v2568, %v2705
      %v2790 = vsub.f32 %v2572, %v2708
      %v2791 = vsub.f32 %v2574, %v2708
      %v2792 = vsub.f32 %v2576, %v2711
      %v2793 = vsub.f32 %v2578, %v2711
      %v2794 = vsub.f32 %v2582, %v2714
      %v2795 = vsub.f32 %v2584, %v2714
      %v2796 = vsub.f32 %v2586, %v2717
      %v2797 = vsub.f32 %v2588, %v2717
      %v2798 = vsub.f32 %v2592, %v2720
      %v2799 = vsub.f32 %v2594, %v2720
      %v2800 = vsub.f32 %v2596, %v2723
      %v2801 = vsub.f32 %v2598, %v2723
      %v2802 = vsub.f32 %v2602, %v2726
      %v2803 = vsub.f32 %v2604, %v2726
      %v2804 = vsub.f32 %v2606, %v2729
      %v2805 = vsub.f32 %v2608, %v2729
      %v2806 = vsub.f32 %v2612, %v2732
      %v2807 = vsub.f32 %v2614, %v2732
      %v2808 = vsub.f32 %v2616, %v2735
      %v2809 = vsub.f32 %v2618, %v2735
      %v2810 = vsub.f32 %v2622, %v2738
      %v2811 = vsub.f32 %v2624, %v2738
      %v2812 = vsub.f32 %v2626, %v2741
      %v2813 = vsub.f32 %v2628, %v2741
      %v2814 = vsub.f32 %v2632, %v2744
      %v2815 = vsub.f32 %v2634, %v2744
      %v2816 = vsub.f32 %v2636, %v2747
      %v2817 = vsub.f32 %v2638, %v2747
      %v2818 = vsub.f32 %v2642, %v2750
      %v2819 = vsub.f32 %v2644, %v2750
      %v2820 = vsub.f32 %v2646, %v2753
      %v2821 = vsub.f32 %v2648, %v2753
      %v2822 = vsub.f32 %v2652, %v2756
      %v2823 = vsub.f32 %v2654, %v2756
      %v2824 = vsub.f32 %v2656, %v2759
      %v2825 = vsub.f32 %v2658, %v2759
      %v2826 = vsub.f32 %v2662, %v2762
      %v2827 = vsub.f32 %v2664, %v2762
      %v2828 = vsub.f32 %v2666, %v2765
      %v2829 = vsub.f32 %v2668, %v2765
      %v2830 = vmul.f32 %v2766, 1.442695
      %v2831 = vpow.pop %v2830
      %v2832 = vmul.f32 %v2767, 1.442695
      %v2833 = vpow.pop %v2832
      %v2834 = vmul.f32 %v2768, 1.442695
      %v2835 = vpow.pop %v2834
      %v2836 = vmul.f32 %v2769, 1.442695
      %v2837 = vpow.pop %v2836
      %v2838 = vmul.f32 %v2770, 1.442695
      %v2839 = vpow.pop %v2838
      %v2840 = vmul.f32 %v2771, 1.442695
      %v2841 = vpow.pop %v2840
      %v2842 = vmul.f32 %v2772, 1.442695
      %v2843 = vpow.pop %v2842
      %v2844 = vmul.f32 %v2773, 1.442695
      %v2845 = vpow.pop %v2844
      %v2846 = vmul.f32 %v2774, 1.442695
      %v2847 = vpow.pop %v2846
      %v2848 = vmul.f32 %v2775, 1.442695
      %v2849 = vpow.pop %v2848
      %v2850 = vmul.f32 %v2776, 1.442695
      %v2851 = vpow.pop %v2850
      %v2852 = vmul.f32 %v2777, 1.442695
      %v2853 = vpow.pop %v2852
      %v2854 = vmul.f32 %v2778, 1.442695
      %v2855 = vpow.pop %v2854
      %v2856 = vmul.f32 %v2779, 1.442695
      %v2857 = vpow.pop %v2856
      %v2858 = vmul.f32 %v2780, 1.442695
      %v2859 = vpow.pop %v2858
      %v2860 = vmul.f32 %v2781, 1.442695
      %v2861 = vpow.pop %v2860
      %v2862 = vmul.f32 %v2782, 1.442695
      %v2863 = vpow.pop %v2862
      %v2864 = vmul.f32 %v2783, 1.442695
      %v2865 = vpow.pop %v2864
      %v2866 = vmul.f32 %v2784, 1.442695
      %v2867 = vpow.pop %v2866
      %v2868 = vmul.f32 %v2785, 1.442695
      %v2869 = vpow.pop %v2868
      %v2870 = vmul.f32 %v2786, 1.442695
      %v2871 = vpow.pop %v2870
      %v2872 = vmul.f32 %v2787, 1.442695
      %v2873 = vpow.pop %v2872
      %v2874 = vmul.f32 %v2788, 1.442695
      %v2875 = vpow.pop %v2874
      %v2876 = vmul.f32 %v2789, 1.442695
      %v2877 = vpow.pop %v2876
      %v2878 = vmul.f32 %v2790, 1.442695
      %v2879 = vpow.pop %v2878
      %v2880 = vmul.f32 %v2791, 1.442695
      %v2881 = vpow.pop %v2880
      %v2882 = vmul.f32 %v2792, 1.442695
      %v2883 = vpow.pop %v2882
      %v2884 = vmul.f32 %v2793, 1.442695
      %v2885 = vpow.pop %v2884
      %v2886 = vmul.f32 %v2794, 1.442695
      %v2887 = vpow.pop %v2886
      %v2888 = vmul.f32 %v2795, 1.442695
      %v2889 = vpow.pop %v2888
      %v2890 = vmul.f32 %v2796, 1.442695
      %v2891 = vpow.pop %v2890
      %v2892 = vmul.f32 %v2797, 1.442695
      %v2893 = vpow.pop %v2892
      %v2894 = vmul.f32 %v2798, 1.442695
      %v2895 = vpow.pop %v2894
      %v2896 = vmul.f32 %v2799, 1.442695
      %v2897 = vpow.pop %v2896
      %v2898 = vmul.f32 %v2800, 1.442695
      %v2899 = vpow.pop %v2898
      %v2900 = vmul.f32 %v2801, 1.442695
      %v2901 = vpow.pop %v2900
      %v2902 = vmul.f32 %v2802, 1.442695
      %v2903 = vpow.pop %v2902
      %v2904 = vmul.f32 %v2803, 1.442695
      %v2905 = vpow.pop %v2904
      %v2906 = vmul.f32 %v2804, 1.442695
      %v2907 = vpow.pop %v2906
      %v2908 = vmul.f32 %v2805, 1.442695
      %v2909 = vpow.pop %v2908
      %v2910 = vmul.f32 %v2806, 1.442695
      %v2911 = vpow.pop %v2910
      %v2912 = vmul.f32 %v2807, 1.442695
      %v2913 = vpow.pop %v2912
      %v2914 = vmul.f32 %v2808, 1.442695
      %v2915 = vpow.pop %v2914
      %v2916 = vmul.f32 %v2809, 1.442695
      %v2917 = vpow.pop %v2916
      %v2918 = vmul.f32 %v2810, 1.442695
      %v2919 = vpow.pop %v2918
      %v2920 = vmul.f32 %v2811, 1.442695
      %v2921 = vpow.pop %v2920
      %v2922 = vmul.f32 %v2812, 1.442695
      %v2923 = vpow.pop %v2922
      %v2924 = vmul.f32 %v2813, 1.442695
      %v2925 = vpow.pop %v2924
      %v2926 = vmul.f32 %v2814, 1.442695
      %v2927 = vpow.pop %v2926
      %v2928 = vmul.f32 %v2815, 1.442695
      %v2929 = vpow.pop %v2928
      %v2930 = vmul.f32 %v2816, 1.442695
      %v2931 = vpow.pop %v2930
      %v2932 = vmul.f32 %v2817, 1.442695
      %v2933 = vpow.pop %v2932
      %v2934 = vmul.f32 %v2818, 1.442695
      %v2935 = vpow.pop %v2934
      %v2936 = vmul.f32 %v2819, 1.442695
      %v2937 = vpow.pop %v2936
      %v2938 = vmul.f32 %v2820, 1.442695
      %v2939 = vpow.pop %v2938
      %v2940 = vmul.f32 %v2821, 1.442695
      %v2941 = vpow.pop %v2940
      %v2942 = vmul.f32 %v2822, 1.442695
      %v2943 = vpow.pop %v2942
      %v2944 = vmul.f32 %v2823, 1.442695
      %v2945 = vpow.pop %v2944
      %v2946 = vmul.f32 %v2824, 1.442695
      %v2947 = vpow.pop %v2946
      %v2948 = vmul.f32 %v2825, 1.442695
      %v2949 = vpow.pop %v2948
      %v2950 = vmul.f32 %v2826, 1.442695
      %v2951 = vpow.pop %v2950
      %v2952 = vmul.f32 %v2827, 1.442695
      %v2953 = vpow.pop %v2952
      %v2954 = vmul.f32 %v2828, 1.442695
      %v2955 = vpow.pop %v2954
      %v2956 = vmul.f32 %v2829, 1.442695
      %v2957 = vpow.pop %v2956
      %v2958 = vadd.f32 %v2831, %v2833
      %2959 = vadd.xlane.f32.xlu0 %v2958
      %v2960 = vpop.xlane.xlu0 %2959
      %v2961 = vadd.f32 %v2835, %v2837
      %2962 = vadd.xlane.f32.xlu0 %v2961
      %v2963 = vpop.xlane.xlu0 %2962
      %v2964 = vadd.f32 %v2839, %v2841
      %2965 = vadd.xlane.f32.xlu0 %v2964
      %v2966 = vpop.xlane.xlu0 %2965
      %v2967 = vadd.f32 %v2843, %v2845
      %2968 = vadd.xlane.f32.xlu0 %v2967
      %v2969 = vpop.xlane.xlu0 %2968
      %v2970 = vadd.f32 %v2847, %v2849
      %2971 = vadd.xlane.f32.xlu0 %v2970
      %v2972 = vpop.xlane.xlu0 %2971
      %v2973 = vadd.f32 %v2851, %v2853
      %2974 = vadd.xlane.f32.xlu0 %v2973
      %v2975 = vpop.xlane.xlu0 %2974
      %v2976 = vadd.f32 %v2855, %v2857
      %2977 = vadd.xlane.f32.xlu0 %v2976
      %v2978 = vpop.xlane.xlu0 %2977
      %v2979 = vadd.f32 %v2859, %v2861
      %2980 = vadd.xlane.f32.xlu0 %v2979
      %v2981 = vpop.xlane.xlu0 %2980
      %v2982 = vadd.f32 %v2863, %v2865
      %2983 = vadd.xlane.f32.xlu0 %v2982
      %v2984 = vpop.xlane.xlu0 %2983
      %v2985 = vadd.f32 %v2867, %v2869
      %2986 = vadd.xlane.f32.xlu0 %v2985
      %v2987 = vpop.xlane.xlu0 %2986
      %v2988 = vadd.f32 %v2871, %v2873
      %2989 = vadd.xlane.f32.xlu0 %v2988
      %v2990 = vpop.xlane.xlu0 %2989
      %v2991 = vadd.f32 %v2875, %v2877
      %2992 = vadd.xlane.f32.xlu0 %v2991
      %v2993 = vpop.xlane.xlu0 %2992
      %v2994 = vadd.f32 %v2879, %v2881
      %2995 = vadd.xlane.f32.xlu0 %v2994
      %v2996 = vpop.xlane.xlu0 %2995
      %v2997 = vadd.f32 %v2883, %v2885
      %2998 = vadd.xlane.f32.xlu0 %v2997
      %v2999 = vpop.xlane.xlu0 %2998
      %v3000 = vadd.f32 %v2887, %v2889
      %3001 = vadd.xlane.f32.xlu0 %v3000
      %v3002 = vpop.xlane.xlu0 %3001
      %v3003 = vadd.f32 %v2891, %v2893
      %3004 = vadd.xlane.f32.xlu0 %v3003
      %v3005 = vpop.xlane.xlu0 %3004
      %v3006 = vadd.f32 %v2895, %v2897
      %3007 = vadd.xlane.f32.xlu0 %v3006
      %v3008 = vpop.xlane.xlu0 %3007
      %v3009 = vadd.f32 %v2899, %v2901
      %3010 = vadd.xlane.f32.xlu0 %v3009
      %v3011 = vpop.xlane.xlu0 %3010
      %v3012 = vadd.f32 %v2903, %v2905
      %3013 = vadd.xlane.f32.xlu0 %v3012
      %v3014 = vpop.xlane.xlu0 %3013
      %v3015 = vadd.f32 %v2907, %v2909
      %3016 = vadd.xlane.f32.xlu0 %v3015
      %v3017 = vpop.xlane.xlu0 %3016
      %v3018 = vadd.f32 %v2911, %v2913
      %3019 = vadd.xlane.f32.xlu0 %v3018
      %v3020 = vpop.xlane.xlu0 %3019
      %v3021 = vadd.f32 %v2915, %v2917
      %3022 = vadd.xlane.f32.xlu0 %v3021
      %v3023 = vpop.xlane.xlu0 %3022
      %v3024 = vadd.f32 %v2919, %v2921
      %3025 = vadd.xlane.f32.xlu0 %v3024
      %v3026 = vpop.xlane.xlu0 %3025
      %v3027 = vadd.f32 %v2923, %v2925
      %3028 = vadd.xlane.f32.xlu0 %v3027
      %v3029 = vpop.xlane.xlu0 %3028
      %v3030 = vadd.f32 %v2927, %v2929
      %3031 = vadd.xlane.f32.xlu0 %v3030
      %v3032 = vpop.xlane.xlu0 %3031
      %v3033 = vadd.f32 %v2931, %v2933
      %3034 = vadd.xlane.f32.xlu0 %v3033
      %v3035 = vpop.xlane.xlu0 %3034
      %v3036 = vadd.f32 %v2935, %v2937
      %3037 = vadd.xlane.f32.xlu0 %v3036
      %v3038 = vpop.xlane.xlu0 %3037
      %v3039 = vadd.f32 %v2939, %v2941
      %3040 = vadd.xlane.f32.xlu0 %v3039
      %v3041 = vpop.xlane.xlu0 %3040
      %v3042 = vadd.f32 %v2943, %v2945
      %3043 = vadd.xlane.f32.xlu0 %v3042
      %v3044 = vpop.xlane.xlu0 %3043
      %v3045 = vadd.f32 %v2947, %v2949
      %3046 = vadd.xlane.f32.xlu0 %v3045
      %v3047 = vpop.xlane.xlu0 %3046
      %v3048 = vadd.f32 %v2951, %v2953
      %3049 = vadd.xlane.f32.xlu0 %v3048
      %v3050 = vpop.xlane.xlu0 %3049
      %v3051 = vadd.f32 %v2955, %v2957
      %3052 = vadd.xlane.f32.xlu0 %v3051
      %v3053 = vpop.xlane.xlu0 %3052
      %v3054 = vpack.c.bf16 %v2835, %v2831
      %v3055 = vpack.c.bf16 %v2837, %v2833
      %v3056 = vpack.c.bf16 %v2843, %v2839
      %v3057 = vpack.c.bf16 %v2845, %v2841
      %v3058 = vpack.c.bf16 %v2851, %v2847
      %v3059 = vpack.c.bf16 %v2853, %v2849
      %v3060 = vpack.c.bf16 %v2859, %v2855
      %v3061 = vpack.c.bf16 %v2861, %v2857
      %v3062 = vpack.c.bf16 %v2867, %v2863
      %v3063 = vpack.c.bf16 %v2869, %v2865
      %v3064 = vpack.c.bf16 %v2875, %v2871
      %v3065 = vpack.c.bf16 %v2877, %v2873
      %v3066 = vpack.c.bf16 %v2883, %v2879
      %v3067 = vpack.c.bf16 %v2885, %v2881
      %v3068 = vpack.c.bf16 %v2891, %v2887
      %v3069 = vpack.c.bf16 %v2893, %v2889
      %v3070 = vpack.c.bf16 %v2899, %v2895
      %v3071 = vpack.c.bf16 %v2901, %v2897
      %v3072 = vpack.c.bf16 %v2907, %v2903
      %v3073 = vpack.c.bf16 %v2909, %v2905
      %v3074 = vpack.c.bf16 %v2915, %v2911
      %v3075 = vpack.c.bf16 %v2917, %v2913
      %v3076 = vpack.c.bf16 %v2923, %v2919
      %v3077 = vpack.c.bf16 %v2925, %v2921
      %v3078 = vpack.c.bf16 %v2931, %v2927
      %v3079 = vpack.c.bf16 %v2933, %v2929
      %v3080 = vpack.c.bf16 %v2939, %v2935
      %v3081 = vpack.c.bf16 %v2941, %v2937
      %v3082 = vpack.c.bf16 %v2947, %v2943
      %v3083 = vpack.c.bf16 %v2949, %v2945
      %v3084 = vpack.c.bf16 %v2955, %v2951
      %v3085 = vpack.c.bf16 %v2957, %v2953
      %3102 = vrot.lane.b32.xlu0 %v1292, 112
      %v3103 = vpop.permute.xlu0 %3102
      %3104 = vrot.lane.b32.xlu0 %v1295, 112
      %v3105 = vpop.permute.xlu0 %3104
      %3106 = vrot.lane.b32.xlu0 %v1298, 112
      %v3107 = vpop.permute.xlu0 %3106
      %3108 = vrot.lane.b32.xlu0 %v1301, 112
      %v3109 = vpop.permute.xlu0 %3108
      %3110 = vrot.lane.b32.xlu0 %v1304, 112
      %v3111 = vpop.permute.xlu0 %3110
      %3112 = vrot.lane.b32.xlu0 %v1307, 112
      %v3113 = vpop.permute.xlu0 %3112
      %3114 = vrot.lane.b32.xlu0 %v1310, 112
      %v3115 = vpop.permute.xlu0 %3114
      %3116 = vrot.lane.b32.xlu0 %v1313, 112
      %v3117 = vpop.permute.xlu0 %3116
      %3118 = vrot.lane.b32.xlu0 %v1316, 112
      %v3119 = vpop.permute.xlu0 %3118
      %3120 = vrot.lane.b32.xlu0 %v1319, 112
      %v3121 = vpop.permute.xlu0 %3120
      %3122 = vrot.lane.b32.xlu0 %v1322, 112
      %v3123 = vpop.permute.xlu0 %3122
      %3124 = vrot.lane.b32.xlu0 %v1325, 112
      %v3125 = vpop.permute.xlu0 %3124
      %3126 = vrot.lane.b32.xlu0 %v1328, 112
      %v3127 = vpop.permute.xlu0 %3126
      %3128 = vrot.lane.b32.xlu0 %v1331, 112
      %v3129 = vpop.permute.xlu0 %3128
      %3130 = vrot.lane.b32.xlu0 %v1334, 112
      %v3131 = vpop.permute.xlu0 %3130
      %3132 = vrot.lane.b32.xlu0 %v1337, 112
      %v3133 = vpop.permute.xlu0 %3132
      %3150 = vmatprep.subr.bf16.mxu0 0
      %3151 = vmatpush1.bf16.msra.mxu0 %v3103
      %3152 = vmatprep.subr.bf16.mxu0 0
      %3153 = vmatpush1.bf16.msra.mxu0 %v3105
      %3154 = vmatprep.subr.bf16.mxu0 0
      %3155 = vmatpush1.bf16.msra.mxu0 %v3107
      %3156 = vmatprep.subr.bf16.mxu0 0
      %3157 = vmatpush1.bf16.msra.mxu0 %v3109
      %3158 = vmatprep.subr.bf16.mxu0 0
      %3159 = vmatpush1.bf16.msra.mxu0 %v3111
      %3160 = vmatprep.subr.bf16.mxu0 0
      %3161 = vmatpush1.bf16.msra.mxu0 %v3113
      %3162 = vmatprep.subr.bf16.mxu0 0
      %3163 = vmatpush1.bf16.msra.mxu0 %v3115
      %3164 = vmatprep.subr.bf16.mxu0 0
      %3165 = vmatpush1.bf16.msra.mxu0 %v3117
      %3166 = vmatprep.subr.bf16.mxu0 0
      %3167 = vmatpush1.bf16.msra.mxu0 %v3119
      %3168 = vmatprep.subr.bf16.mxu0 0
      %3169 = vmatpush1.bf16.msra.mxu0 %v3121
      %3170 = vmatprep.subr.bf16.mxu0 0
      %3171 = vmatpush1.bf16.msra.mxu0 %v3123
      %3172 = vmatprep.subr.bf16.mxu0 0
      %3173 = vmatpush1.bf16.msra.mxu0 %v3125
      %3174 = vmatprep.subr.bf16.mxu0 0
      %3175 = vmatpush1.bf16.msra.mxu0 %v3127
      %3176 = vmatprep.subr.bf16.mxu0 0
      %3177 = vmatpush1.bf16.msra.mxu0 %v3129
      %3178 = vmatprep.subr.bf16.mxu0 0
      %3179 = vmatpush1.bf16.msra.mxu0 %v3131
      %3180 = vmatprep.subr.bf16.mxu0 0
      %3181 = vmatpush1.bf16.msra.mxu0 %v3133
      %3182 = vmatprep.mubr.bf16.mxu0 %v3055
      %3183 = vmatmul.mubr.bf16.gmra.mrb[0].mxu0 %v3054
      %v3184 = vpop.f32.mrb[0].mxu0
      %v3185 = vadd.f32 0.0, %v3184
      %v3186 = vpop.f32.mrb[0].mxu0
      %v3187 = vpop.f32.mrb[0].mxu0
      %v3188 = vadd.f32 0.0, %v3187
      %v3189 = vpop.f32.mrb[0].mxu0
      %3190 = vmatprep.mubr.bf16.mxu0 %v3057
      %3191 = vmatmul.mubr.bf16.gmra.mrb[0].mxu0 %v3056
      %v3192 = vpop.f32.mrb[0].mxu0
      %v3193 = vadd.f32 0.0, %v3192
      %v3194 = vpop.f32.mrb[0].mxu0
      %v3195 = vpop.f32.mrb[0].mxu0
      %v3196 = vadd.f32 0.0, %v3195
      %v3197 = vpop.f32.mrb[0].mxu0
      %3198 = vmatprep.mubr.bf16.mxu0 %v3059
      %3199 = vmatmul.mubr.bf16.gmra.mrb[0].mxu0 %v3058
      %v3200 = vpop.f32.mrb[0].mxu0
      %v3201 = vadd.f32 0.0, %v3200
      %v3202 = vpop.f32.mrb[0].mxu0
      %v3203 = vpop.f32.mrb[0].mxu0
      %v3204 = vadd.f32 0.0, %v3203
      %v3205 = vpop.f32.mrb[0].mxu0
      %3206 = vmatprep.mubr.bf16.mxu0 %v3061
      %3207 = vmatmul.mubr.bf16.gmra.mrb[0].mxu0 %v3060
      %v3208 = vpop.f32.mrb[0].mxu0
      %v3209 = vadd.f32 0.0, %v3208
      %v3210 = vpop.f32.mrb[0].mxu0
      %v3211 = vpop.f32.mrb[0].mxu0
      %v3212 = vadd.f32 0.0, %v3211
      %v3213 = vpop.f32.mrb[0].mxu0
      %3214 = vmatprep.mubr.bf16.mxu0 %v3063
      %3215 = vmatmul.mubr.bf16.gmra.mrb[0].mxu0 %v3062
      %v3216 = vpop.f32.mrb[0].mxu0
      %v3217 = vadd.f32 0.0, %v3216
      %v3218 = vpop.f32.mrb[0].mxu0
      %v3219 = vpop.f32.mrb[0].mxu0
      %v3220 = vadd.f32 0.0, %v3219
      %v3221 = vpop.f32.mrb[0].mxu0
      %3222 = vmatprep.mubr.bf16.mxu0 %v3065
      %3223 = vmatmul.mubr.bf16.gmra.mrb[0].mxu0 %v3064
      %v3224 = vpop.f32.mrb[0].mxu0
      %v3225 = vadd.f32 0.0, %v3224
      %v3226 = vpop.f32.mrb[0].mxu0
      %v3227 = vpop.f32.mrb[0].mxu0
      %v3228 = vadd.f32 0.0, %v3227
      %v3229 = vpop.f32.mrb[0].mxu0
      %3230 = vmatprep.mubr.bf16.mxu0 %v3067
      %3231 = vmatmul.mubr.bf16.gmra.mrb[0].mxu0 %v3066
      %v3232 = vpop.f32.mrb[0].mxu0
      %v3233 = vadd.f32 0.0, %v3232
      %v3234 = vpop.f32.mrb[0].mxu0
      %v3235 = vpop.f32.mrb[0].mxu0
      %v3236 = vadd.f32 0.0, %v3235
      %v3237 = vpop.f32.mrb[0].mxu0
      %3238 = vmatprep.mubr.bf16.mxu0 %v3069
      %3239 = vmatmul.mubr.bf16.gmra.mrb[0].mxu0 %v3068
      %v3240 = vpop.f32.mrb[0].mxu0
      %v3241 = vadd.f32 0.0, %v3240
      %v3242 = vpop.f32.mrb[0].mxu0
      %v3243 = vpop.f32.mrb[0].mxu0
      %v3244 = vadd.f32 0.0, %v3243
      %v3245 = vpop.f32.mrb[0].mxu0
      %3246 = vmatprep.mubr.bf16.mxu0 %v3071
      %3247 = vmatmul.mubr.bf16.gmra.mrb[0].mxu0 %v3070
      %v3248 = vpop.f32.mrb[0].mxu0
      %v3249 = vadd.f32 0.0, %v3248
      %v3250 = vpop.f32.mrb[0].mxu0
      %v3251 = vpop.f32.mrb[0].mxu0
      %v3252 = vadd.f32 0.0, %v3251
      %v3253 = vpop.f32.mrb[0].mxu0
      %3254 = vmatprep.mubr.bf16.mxu0 %v3073
      %3255 = vmatmul.mubr.bf16.gmra.mrb[0].mxu0 %v3072
      %v3256 = vpop.f32.mrb[0].mxu0
      %v3257 = vadd.f32 0.0, %v3256
      %v3258 = vpop.f32.mrb[0].mxu0
      %v3259 = vpop.f32.mrb[0].mxu0
      %v3260 = vadd.f32 0.0, %v3259
      %v3261 = vpop.f32.mrb[0].mxu0
      %3262 = vmatprep.mubr.bf16.mxu0 %v3075
      %3263 = vmatmul.mubr.bf16.gmra.mrb[0].mxu0 %v3074
      %v3264 = vpop.f32.mrb[0].mxu0
      %v3265 = vadd.f32 0.0, %v3264
      %v3266 = vpop.f32.mrb[0].mxu0
      %v3267 = vpop.f32.mrb[0].mxu0
      %v3268 = vadd.f32 0.0, %v3267
      %v3269 = vpop.f32.mrb[0].mxu0
      %3270 = vmatprep.mubr.bf16.mxu0 %v3077
      %3271 = vmatmul.mubr.bf16.gmra.mrb[0].mxu0 %v3076
      %v3272 = vpop.f32.mrb[0].mxu0
      %v3273 = vadd.f32 0.0, %v3272
      %v3274 = vpop.f32.mrb[0].mxu0
      %v3275 = vpop.f32.mrb[0].mxu0
      %v3276 = vadd.f32 0.0, %v3275
      %v3277 = vpop.f32.mrb[0].mxu0
      %3278 = vmatprep.mubr.bf16.mxu0 %v3079
      %3279 = vmatmul.mubr.bf16.gmra.mrb[0].mxu0 %v3078
      %v3280 = vpop.f32.mrb[0].mxu0
      %v3281 = vadd.f32 0.0, %v3280
      %v3282 = vpop.f32.mrb[0].mxu0
      %v3283 = vpop.f32.mrb[0].mxu0
      %v3284 = vadd.f32 0.0, %v3283
      %v3285 = vpop.f32.mrb[0].mxu0
      %3286 = vmatprep.mubr.bf16.mxu0 %v3081
      %3287 = vmatmul.mubr.bf16.gmra.mrb[0].mxu0 %v3080
      %v3288 = vpop.f32.mrb[0].mxu0
      %v3289 = vadd.f32 0.0, %v3288
      %v3290 = vpop.f32.mrb[0].mxu0
      %v3291 = vpop.f32.mrb[0].mxu0
      %v3292 = vadd.f32 0.0, %v3291
      %v3293 = vpop.f32.mrb[0].mxu0
      %3294 = vmatprep.mubr.bf16.mxu0 %v3083
      %3295 = vmatmul.mubr.bf16.gmra.mrb[0].mxu0 %v3082
      %v3296 = vpop.f32.mrb[0].mxu0
      %v3297 = vadd.f32 0.0, %v3296
      %v3298 = vpop.f32.mrb[0].mxu0
      %v3299 = vpop.f32.mrb[0].mxu0
      %v3300 = vadd.f32 0.0, %v3299
      %v3301 = vpop.f32.mrb[0].mxu0
      %3302 = vmatprep.mubr.bf16.mxu0 %v3085
      %3303 = vmatmul.mubr.bf16.gmra.mrb[0].mxu0 %v3084
      %v3304 = vpop.f32.mrb[0].mxu0
      %v3305 = vadd.f32 0.0, %v3304
      %v3306 = vpop.f32.mrb[0].mxu0
      %v3307 = vpop.f32.mrb[0].mxu0
      %v3308 = vadd.f32 0.0, %v3307
      %v3309 = vpop.f32.mrb[0].mxu0
      %3310 = vdwg.mxu0
      %v3311 = vrcp.pop %v2960
      %v3312 = vrcp.pop %v2963
      %v3313 = vrcp.pop %v2966
      %v3314 = vrcp.pop %v2969
      %v3315 = vrcp.pop %v2972
      %v3316 = vrcp.pop %v2975
      %v3317 = vrcp.pop %v2978
      %v3318 = vrcp.pop %v2981
      %v3319 = vrcp.pop %v2984
      %v3320 = vrcp.pop %v2987
      %v3321 = vrcp.pop %v2990
      %v3322 = vrcp.pop %v2993
      %v3323 = vrcp.pop %v2996
      %v3324 = vrcp.pop %v2999
      %v3325 = vrcp.pop %v3002
      %v3326 = vrcp.pop %v3005
      %v3327 = vrcp.pop %v3008
      %v3328 = vrcp.pop %v3011
      %v3329 = vrcp.pop %v3014
      %v3330 = vrcp.pop %v3017
      %v3331 = vrcp.pop %v3020
      %v3332 = vrcp.pop %v3023
      %v3333 = vrcp.pop %v3026
      %v3334 = vrcp.pop %v3029
      %v3335 = vrcp.pop %v3032
      %v3336 = vrcp.pop %v3035
      %v3337 = vrcp.pop %v3038
      %v3338 = vrcp.pop %v3041
      %v3339 = vrcp.pop %v3044
      %v3340 = vrcp.pop %v3047
      %v3341 = vrcp.pop %v3050
      %v3342 = vrcp.pop %v3053
      %v3343 = vmul.f32 %v3185, %v3311
      %v3344 = vmul.f32 %v3188, %v3312
      %v3345 = vmul.f32 %v3193, %v3313
      %v3346 = vmul.f32 %v3196, %v3314
      %v3347 = vmul.f32 %v3201, %v3315
      %v3348 = vmul.f32 %v3204, %v3316
      %v3349 = vmul.f32 %v3209, %v3317
      %v3350 = vmul.f32 %v3212, %v3318
      %v3351 = vmul.f32 %v3217, %v3319
      %v3352 = vmul.f32 %v3220, %v3320
      %v3353 = vmul.f32 %v3225, %v3321
      %v3354 = vmul.f32 %v3228, %v3322
      %v3355 = vmul.f32 %v3233, %v3323
      %v3356 = vmul.f32 %v3236, %v3324
      %v3357 = vmul.f32 %v3241, %v3325
      %v3358 = vmul.f32 %v3244, %v3326
      %v3359 = vmul.f32 %v3249, %v3327
      %v3360 = vmul.f32 %v3252, %v3328
      %v3361 = vmul.f32 %v3257, %v3329
      %v3362 = vmul.f32 %v3260, %v3330
      %v3363 = vmul.f32 %v3265, %v3331
      %v3364 = vmul.f32 %v3268, %v3332
      %v3365 = vmul.f32 %v3273, %v3333
      %v3366 = vmul.f32 %v3276, %v3334
      %v3367 = vmul.f32 %v3281, %v3335
      %v3368 = vmul.f32 %v3284, %v3336
      %v3369 = vmul.f32 %v3289, %v3337
      %v3370 = vmul.f32 %v3292, %v3338
      %v3371 = vmul.f32 %v3297, %v3339
      %v3372 = vmul.f32 %v3300, %v3340
      %v3373 = vmul.f32 %v3305, %v3341
      %v3374 = vmul.f32 %v3308, %v3342
      %v3375 = vpack.c.bf16 %v3344, %v3343
      %v3376 = vpack.c.bf16 %v3346, %v3345
      %v3377 = vpack.c.bf16 %v3348, %v3347
      %v3378 = vpack.c.bf16 %v3350, %v3349
      %v3379 = vpack.c.bf16 %v3352, %v3351
      %v3380 = vpack.c.bf16 %v3354, %v3353
      %v3381 = vpack.c.bf16 %v3356, %v3355
      %v3382 = vpack.c.bf16 %v3358, %v3357
      %v3383 = vpack.c.bf16 %v3360, %v3359
      %v3384 = vpack.c.bf16 %v3362, %v3361
      %v3385 = vpack.c.bf16 %v3364, %v3363
      %v3386 = vpack.c.bf16 %v3366, %v3365
      %v3387 = vpack.c.bf16 %v3368, %v3367
      %v3388 = vpack.c.bf16 %v3370, %v3369
      %v3389 = vpack.c.bf16 %v3372, %v3371
      %v3390 = vpack.c.bf16 %v3374, %v3373
      %3391 = vrot.lane.b32.xlu0 %v1290, 96
      %v3392 = vpop.permute.xlu0 %3391
      %3393 = vrot.lane.b32.xlu0 %v1293, 96
      %v3394 = vpop.permute.xlu0 %3393
      %3395 = vrot.lane.b32.xlu0 %v1296, 96
      %v3396 = vpop.permute.xlu0 %3395
      %3397 = vrot.lane.b32.xlu0 %v1299, 96
      %v3398 = vpop.permute.xlu0 %3397
      %3399 = vrot.lane.b32.xlu0 %v1302, 96
      %v3400 = vpop.permute.xlu0 %3399
      %3401 = vrot.lane.b32.xlu0 %v1305, 96
      %v3402 = vpop.permute.xlu0 %3401
      %3403 = vrot.lane.b32.xlu0 %v1308, 96
      %v3404 = vpop.permute.xlu0 %3403
      %3405 = vrot.lane.b32.xlu0 %v1311, 96
      %v3406 = vpop.permute.xlu0 %3405
      %3407 = vrot.lane.b32.xlu0 %v1314, 96
      %v3408 = vpop.permute.xlu0 %3407
      %3409 = vrot.lane.b32.xlu0 %v1317, 96
      %v3410 = vpop.permute.xlu0 %3409
      %3411 = vrot.lane.b32.xlu0 %v1320, 96
      %v3412 = vpop.permute.xlu0 %3411
      %3413 = vrot.lane.b32.xlu0 %v1323, 96
      %v3414 = vpop.permute.xlu0 %3413
      %3415 = vrot.lane.b32.xlu0 %v1326, 96
      %v3416 = vpop.permute.xlu0 %3415
      %3417 = vrot.lane.b32.xlu0 %v1329, 96
      %v3418 = vpop.permute.xlu0 %3417
      %3419 = vrot.lane.b32.xlu0 %v1332, 96
      %v3420 = vpop.permute.xlu0 %3419
      %3421 = vrot.lane.b32.xlu0 %v1335, 96
      %v3422 = vpop.permute.xlu0 %3421
      %3423 = vrot.lane.b32.xlu0 %v1291, 96
      %v3424 = vpop.permute.xlu0 %3423
      %3425 = vrot.lane.b32.xlu0 %v1294, 96
      %v3426 = vpop.permute.xlu0 %3425
      %3427 = vrot.lane.b32.xlu0 %v1297, 96
      %v3428 = vpop.permute.xlu0 %3427
      %3429 = vrot.lane.b32.xlu0 %v1300, 96
      %v3430 = vpop.permute.xlu0 %3429
      %3431 = vrot.lane.b32.xlu0 %v1303, 96
      %v3432 = vpop.permute.xlu0 %3431
      %3433 = vrot.lane.b32.xlu0 %v1306, 96
      %v3434 = vpop.permute.xlu0 %3433
      %3435 = vrot.lane.b32.xlu0 %v1309, 96
      %v3436 = vpop.permute.xlu0 %3435
      %3437 = vrot.lane.b32.xlu0 %v1312, 96
      %v3438 = vpop.permute.xlu0 %3437
      %3439 = vrot.lane.b32.xlu0 %v1315, 96
      %v3440 = vpop.permute.xlu0 %3439
      %3441 = vrot.lane.b32.xlu0 %v1318, 96
      %v3442 = vpop.permute.xlu0 %3441
      %3443 = vrot.lane.b32.xlu0 %v1321, 96
      %v3444 = vpop.permute.xlu0 %3443
      %3445 = vrot.lane.b32.xlu0 %v1324, 96
      %v3446 = vpop.permute.xlu0 %3445
      %3447 = vrot.lane.b32.xlu0 %v1327, 96
      %v3448 = vpop.permute.xlu0 %3447
      %3449 = vrot.lane.b32.xlu0 %v1330, 96
      %v3450 = vpop.permute.xlu0 %3449
      %3451 = vrot.lane.b32.xlu0 %v1333, 96
      %v3452 = vpop.permute.xlu0 %3451
      %3453 = vrot.lane.b32.xlu0 %v1336, 96
      %v3454 = vpop.permute.xlu0 %3453
      %v3456 = vsel %vm1338, %v3392, 0
      %v3459 = vsel %vm1338, %v3394, 0
      %v3462 = vsel %vm1338, %v3396, 0
      %v3465 = vsel %vm1338, %v3398, 0
      %v3468 = vsel %vm1338, %v3400, 0
      %v3471 = vsel %vm1338, %v3402, 0
      %v3474 = vsel %vm1338, %v3404, 0
      %v3477 = vsel %vm1338, %v3406, 0
      %v3480 = vsel %vm1338, %v3408, 0
      %v3483 = vsel %vm1338, %v3410, 0
      %v3486 = vsel %vm1338, %v3412, 0
      %v3489 = vsel %vm1338, %v3414, 0
      %v3492 = vsel %vm1338, %v3416, 0
      %v3495 = vsel %vm1338, %v3418, 0
      %v3498 = vsel %vm1338, %v3420, 0
      %v3501 = vsel %vm1338, %v3422, 0
      %v3504 = vsel %vm1338, %v3424, 0
      %v3507 = vsel %vm1338, %v3426, 0
      %v3510 = vsel %vm1338, %v3428, 0
      %v3513 = vsel %vm1338, %v3430, 0
      %v3516 = vsel %vm1338, %v3432, 0
      %v3519 = vsel %vm1338, %v3434, 0
      %v3522 = vsel %vm1338, %v3436, 0
      %v3525 = vsel %vm1338, %v3438, 0
      %v3528 = vsel %vm1338, %v3440, 0
      %v3531 = vsel %vm1338, %v3442, 0
      %v3534 = vsel %vm1338, %v3444, 0
      %v3537 = vsel %vm1338, %v3446, 0
      %v3540 = vsel %vm1338, %v3448, 0
      %v3543 = vsel %vm1338, %v3450, 0
      %v3546 = vsel %vm1338, %v3452, 0
      %v3549 = vsel %vm1338, %v3454, 0
      %3551 = vmatprep.subr.bf16.mxu0 0
      %3552 = vmatpush1.bf16.xpose.msra.mxu0 %v3504
      %3553 = vmatprep.subr.bf16.mxu0 0
      %3554 = vmatpush1.bf16.xpose.msra.mxu0 %v3507
      %3555 = vmatprep.subr.bf16.mxu0 0
      %3556 = vmatpush1.bf16.xpose.msra.mxu0 %v3510
      %3557 = vmatprep.subr.bf16.mxu0 0
      %3558 = vmatpush1.bf16.xpose.msra.mxu0 %v3513
      %3559 = vmatprep.subr.bf16.mxu0 0
      %3560 = vmatpush1.bf16.xpose.msra.mxu0 %v3516
      %3561 = vmatprep.subr.bf16.mxu0 0
      %3562 = vmatpush1.bf16.xpose.msra.mxu0 %v3519
      %3563 = vmatprep.subr.bf16.mxu0 0
      %3564 = vmatpush1.bf16.xpose.msra.mxu0 %v3522
      %3565 = vmatprep.subr.bf16.mxu0 0
      %3566 = vmatpush1.bf16.xpose.msra.mxu0 %v3525
      %3567 = vmatprep.subr.bf16.mxu0 0
      %3568 = vmatpush1.bf16.xpose.msra.mxu0 %v3528
      %3569 = vmatprep.subr.bf16.mxu0 0
      %3570 = vmatpush1.bf16.xpose.msra.mxu0 %v3531
      %3571 = vmatprep.subr.bf16.mxu0 0
      %3572 = vmatpush1.bf16.xpose.msra.mxu0 %v3534
      %3573 = vmatprep.subr.bf16.mxu0 0
      %3574 = vmatpush1.bf16.xpose.msra.mxu0 %v3537
      %3575 = vmatprep.subr.bf16.mxu0 0
      %3576 = vmatpush1.bf16.xpose.msra.mxu0 %v3540
      %3577 = vmatprep.subr.bf16.mxu0 0
      %3578 = vmatpush1.bf16.xpose.msra.mxu0 %v3543
      %3579 = vmatprep.subr.bf16.mxu0 0
      %3580 = vmatpush1.bf16.xpose.msra.mxu0 %v3546
      %3581 = vmatprep.subr.bf16.mxu0 0
      %3582 = vmatpush1.bf16.xpose.msra.mxu0 %v3549
      %3583 = vmatprep.mubr.bf16.mxu0 0
      %3584 = vmatmul.mubr.bf16.gmra.mrb[0].mxu0 %v3456
      %v3585 = vpop.f32.mrb[0].mxu0
      %v3586 = vadd.f32 0.0, %v3585
      %v3587 = vpop.f32.mrb[0].mxu0
      %v3588 = vadd.f32 0.0, %v3587
      %v3589 = vpop.f32.mrb[0].mxu0
      %v3590 = vadd.f32 0.0, %v3589
      %v3591 = vpop.f32.mrb[0].mxu0
      %v3592 = vadd.f32 0.0, %v3591
      %3593 = vmatprep.mubr.bf16.mxu0 0
      %3594 = vmatmul.mubr.bf16.gmra.mrb[0].mxu0 %v3459
      %v3595 = vpop.f32.mrb[0].mxu0
      %v3596 = vadd.f32 0.0, %v3595
      %v3597 = vpop.f32.mrb[0].mxu0
      %v3598 = vadd.f32 0.0, %v3597
      %v3599 = vpop.f32.mrb[0].mxu0
      %v3600 = vadd.f32 0.0, %v3599
      %v3601 = vpop.f32.mrb[0].mxu0
      %v3602 = vadd.f32 0.0, %v3601
      %3603 = vmatprep.mubr.bf16.mxu0 0
      %3604 = vmatmul.mubr.bf16.gmra.mrb[0].mxu0 %v3462
      %v3605 = vpop.f32.mrb[0].mxu0
      %v3606 = vadd.f32 0.0, %v3605
      %v3607 = vpop.f32.mrb[0].mxu0
      %v3608 = vadd.f32 0.0, %v3607
      %v3609 = vpop.f32.mrb[0].mxu0
      %v3610 = vadd.f32 0.0, %v3609
      %v3611 = vpop.f32.mrb[0].mxu0
      %v3612 = vadd.f32 0.0, %v3611
      %3613 = vmatprep.mubr.bf16.mxu0 0
      %3614 = vmatmul.mubr.bf16.gmra.mrb[0].mxu0 %v3465
      %v3615 = vpop.f32.mrb[0].mxu0
      %v3616 = vadd.f32 0.0, %v3615
      %v3617 = vpop.f32.mrb[0].mxu0
      %v3618 = vadd.f32 0.0, %v3617
      %v3619 = vpop.f32.mrb[0].mxu0
      %v3620 = vadd.f32 0.0, %v3619
      %v3621 = vpop.f32.mrb[0].mxu0
      %v3622 = vadd.f32 0.0, %v3621
      %3623 = vmatprep.mubr.bf16.mxu0 0
      %3624 = vmatmul.mubr.bf16.gmra.mrb[0].mxu0 %v3468
      %v3625 = vpop.f32.mrb[0].mxu0
      %v3626 = vadd.f32 0.0, %v3625
      %v3627 = vpop.f32.mrb[0].mxu0
      %v3628 = vadd.f32 0.0, %v3627
      %v3629 = vpop.f32.mrb[0].mxu0
      %v3630 = vadd.f32 0.0, %v3629
      %v3631 = vpop.f32.mrb[0].mxu0
      %v3632 = vadd.f32 0.0, %v3631
      %3633 = vmatprep.mubr.bf16.mxu0 0
      %3634 = vmatmul.mubr.bf16.gmra.mrb[0].mxu0 %v3471
      %v3635 = vpop.f32.mrb[0].mxu0
      %v3636 = vadd.f32 0.0, %v3635
      %v3637 = vpop.f32.mrb[0].mxu0
      %v3638 = vadd.f32 0.0, %v3637
      %v3639 = vpop.f32.mrb[0].mxu0
      %v3640 = vadd.f32 0.0, %v3639
      %v3641 = vpop.f32.mrb[0].mxu0
      %v3642 = vadd.f32 0.0, %v3641
      %3643 = vmatprep.mubr.bf16.mxu0 0
      %3644 = vmatmul.mubr.bf16.gmra.mrb[0].mxu0 %v3474
      %v3645 = vpop.f32.mrb[0].mxu0
      %v3646 = vadd.f32 0.0, %v3645
      %v3647 = vpop.f32.mrb[0].mxu0
      %v3648 = vadd.f32 0.0, %v3647
      %v3649 = vpop.f32.mrb[0].mxu0
      %v3650 = vadd.f32 0.0, %v3649
      %v3651 = vpop.f32.mrb[0].mxu0
      %v3652 = vadd.f32 0.0, %v3651
      %3653 = vmatprep.mubr.bf16.mxu0 0
      %3654 = vmatmul.mubr.bf16.gmra.mrb[0].mxu0 %v3477
      %v3655 = vpop.f32.mrb[0].mxu0
      %v3656 = vadd.f32 0.0, %v3655
      %v3657 = vpop.f32.mrb[0].mxu0
      %v3658 = vadd.f32 0.0, %v3657
      %v3659 = vpop.f32.mrb[0].mxu0
      %v3660 = vadd.f32 0.0, %v3659
      %v3661 = vpop.f32.mrb[0].mxu0
      %v3662 = vadd.f32 0.0, %v3661
      %3663 = vmatprep.mubr.bf16.mxu0 0
      %3664 = vmatmul.mubr.bf16.gmra.mrb[0].mxu0 %v3480
      %v3665 = vpop.f32.mrb[0].mxu0
      %v3666 = vadd.f32 0.0, %v3665
      %v3667 = vpop.f32.mrb[0].mxu0
      %v3668 = vadd.f32 0.0, %v3667
      %v3669 = vpop.f32.mrb[0].mxu0
      %v3670 = vadd.f32 0.0, %v3669
      %v3671 = vpop.f32.mrb[0].mxu0
      %v3672 = vadd.f32 0.0, %v3671
      %3673 = vmatprep.mubr.bf16.mxu0 0
      %3674 = vmatmul.mubr.bf16.gmra.mrb[0].mxu0 %v3483
      %v3675 = vpop.f32.mrb[0].mxu0
      %v3676 = vadd.f32 0.0, %v3675
      %v3677 = vpop.f32.mrb[0].mxu0
      %v3678 = vadd.f32 0.0, %v3677
      %v3679 = vpop.f32.mrb[0].mxu0
      %v3680 = vadd.f32 0.0, %v3679
      %v3681 = vpop.f32.mrb[0].mxu0
      %v3682 = vadd.f32 0.0, %v3681
      %3683 = vmatprep.mubr.bf16.mxu0 0
      %3684 = vmatmul.mubr.bf16.gmra.mrb[0].mxu0 %v3486
      %v3685 = vpop.f32.mrb[0].mxu0
      %v3686 = vadd.f32 0.0, %v3685
      %v3687 = vpop.f32.mrb[0].mxu0
      %v3688 = vadd.f32 0.0, %v3687
      %v3689 = vpop.f32.mrb[0].mxu0
      %v3690 = vadd.f32 0.0, %v3689
      %v3691 = vpop.f32.mrb[0].mxu0
      %v3692 = vadd.f32 0.0, %v3691
      %3693 = vmatprep.mubr.bf16.mxu0 0
      %3694 = vmatmul.mubr.bf16.gmra.mrb[0].mxu0 %v3489
      %v3695 = vpop.f32.mrb[0].mxu0
      %v3696 = vadd.f32 0.0, %v3695
      %v3697 = vpop.f32.mrb[0].mxu0
      %v3698 = vadd.f32 0.0, %v3697
      %v3699 = vpop.f32.mrb[0].mxu0
      %v3700 = vadd.f32 0.0, %v3699
      %v3701 = vpop.f32.mrb[0].mxu0
      %v3702 = vadd.f32 0.0, %v3701
      %3703 = vmatprep.mubr.bf16.mxu0 0
      %3704 = vmatmul.mubr.bf16.gmra.mrb[0].mxu0 %v3492
      %v3705 = vpop.f32.mrb[0].mxu0
      %v3706 = vadd.f32 0.0, %v3705
      %v3707 = vpop.f32.mrb[0].mxu0
      %v3708 = vadd.f32 0.0, %v3707
      %v3709 = vpop.f32.mrb[0].mxu0
      %v3710 = vadd.f32 0.0, %v3709
      %v3711 = vpop.f32.mrb[0].mxu0
      %v3712 = vadd.f32 0.0, %v3711
      %3713 = vmatprep.mubr.bf16.mxu0 0
      %3714 = vmatmul.mubr.bf16.gmra.mrb[0].mxu0 %v3495
      %v3715 = vpop.f32.mrb[0].mxu0
      %v3716 = vadd.f32 0.0, %v3715
      %v3717 = vpop.f32.mrb[0].mxu0
      %v3718 = vadd.f32 0.0, %v3717
      %v3719 = vpop.f32.mrb[0].mxu0
      %v3720 = vadd.f32 0.0, %v3719
      %v3721 = vpop.f32.mrb[0].mxu0
      %v3722 = vadd.f32 0.0, %v3721
      %3723 = vmatprep.mubr.bf16.mxu0 0
      %3724 = vmatmul.mubr.bf16.gmra.mrb[0].mxu0 %v3498
      %v3725 = vpop.f32.mrb[0].mxu0
      %v3726 = vadd.f32 0.0, %v3725
      %v3727 = vpop.f32.mrb[0].mxu0
      %v3728 = vadd.f32 0.0, %v3727
      %v3729 = vpop.f32.mrb[0].mxu0
      %v3730 = vadd.f32 0.0, %v3729
      %v3731 = vpop.f32.mrb[0].mxu0
      %v3732 = vadd.f32 0.0, %v3731
      %3733 = vmatprep.mubr.bf16.mxu0 0
      %3734 = vmatmul.mubr.bf16.gmra.mrb[0].mxu0 %v3501
      %v3735 = vpop.f32.mrb[0].mxu0
      %v3736 = vadd.f32 0.0, %v3735
      %v3737 = vpop.f32.mrb[0].mxu0
      %v3738 = vadd.f32 0.0, %v3737
      %v3739 = vpop.f32.mrb[0].mxu0
      %v3740 = vadd.f32 0.0, %v3739
      %v3741 = vpop.f32.mrb[0].mxu0
      %v3742 = vadd.f32 0.0, %v3741
      %3743 = vdwg.mxu0
      %v3744 = vmax.f32 %v3586, %v3588
      %3745 = vmax.xlane.f32.xlu0 %v3744
      %v3746 = vpop.xlane.xlu0 %3745
      %v3747 = vmax.f32 %v3590, %v3592
      %3748 = vmax.xlane.f32.xlu0 %v3747
      %v3749 = vpop.xlane.xlu0 %3748
      %v3750 = vmax.f32 %v3596, %v3598
      %3751 = vmax.xlane.f32.xlu0 %v3750
      %v3752 = vpop.xlane.xlu0 %3751
      %v3753 = vmax.f32 %v3600, %v3602
      %3754 = vmax.xlane.f32.xlu0 %v3753
      %v3755 = vpop.xlane.xlu0 %3754
      %v3756 = vmax.f32 %v3606, %v3608
      %3757 = vmax.xlane.f32.xlu0 %v3756
      %v3758 = vpop.xlane.xlu0 %3757
      %v3759 = vmax.f32 %v3610, %v3612
      %3760 = vmax.xlane.f32.xlu0 %v3759
      %v3761 = vpop.xlane.xlu0 %3760
      %v3762 = vmax.f32 %v3616, %v3618
      %3763 = vmax.xlane.f32.xlu0 %v3762
      %v3764 = vpop.xlane.xlu0 %3763
      %v3765 = vmax.f32 %v3620, %v3622
      %3766 = vmax.xlane.f32.xlu0 %v3765
      %v3767 = vpop.xlane.xlu0 %3766
      %v3768 = vmax.f32 %v3626, %v3628
      %3769 = vmax.xlane.f32.xlu0 %v3768
      %v3770 = vpop.xlane.xlu0 %3769
      %v3771 = vmax.f32 %v3630, %v3632
      %3772 = vmax.xlane.f32.xlu0 %v3771
      %v3773 = vpop.xlane.xlu0 %3772
      %v3774 = vmax.f32 %v3636, %v3638
      %3775 = vmax.xlane.f32.xlu0 %v3774
      %v3776 = vpop.xlane.xlu0 %3775
      %v3777 = vmax.f32 %v3640, %v3642
      %3778 = vmax.xlane.f32.xlu0 %v3777
      %v3779 = vpop.xlane.xlu0 %3778
      %v3780 = vmax.f32 %v3646, %v3648
      %3781 = vmax.xlane.f32.xlu0 %v3780
      %v3782 = vpop.xlane.xlu0 %3781
      %v3783 = vmax.f32 %v3650, %v3652
      %3784 = vmax.xlane.f32.xlu0 %v3783
      %v3785 = vpop.xlane.xlu0 %3784
      %v3786 = vmax.f32 %v3656, %v3658
      %3787 = vmax.xlane.f32.xlu0 %v3786
      %v3788 = vpop.xlane.xlu0 %3787
      %v3789 = vmax.f32 %v3660, %v3662
      %3790 = vmax.xlane.f32.xlu0 %v3789
      %v3791 = vpop.xlane.xlu0 %3790
      %v3792 = vmax.f32 %v3666, %v3668
      %3793 = vmax.xlane.f32.xlu0 %v3792
      %v3794 = vpop.xlane.xlu0 %3793
      %v3795 = vmax.f32 %v3670, %v3672
      %3796 = vmax.xlane.f32.xlu0 %v3795
      %v3797 = vpop.xlane.xlu0 %3796
      %v3798 = vmax.f32 %v3676, %v3678
      %3799 = vmax.xlane.f32.xlu0 %v3798
      %v3800 = vpop.xlane.xlu0 %3799
      %v3801 = vmax.f32 %v3680, %v3682
      %3802 = vmax.xlane.f32.xlu0 %v3801
      %v3803 = vpop.xlane.xlu0 %3802
      %v3804 = vmax.f32 %v3686, %v3688
      %3805 = vmax.xlane.f32.xlu0 %v3804
      %v3806 = vpop.xlane.xlu0 %3805
      %v3807 = vmax.f32 %v3690, %v3692
      %3808 = vmax.xlane.f32.xlu0 %v3807
      %v3809 = vpop.xlane.xlu0 %3808
      %v3810 = vmax.f32 %v3696, %v3698
      %3811 = vmax.xlane.f32.xlu0 %v3810
      %v3812 = vpop.xlane.xlu0 %3811
      %v3813 = vmax.f32 %v3700, %v3702
      %3814 = vmax.xlane.f32.xlu0 %v3813
      %v3815 = vpop.xlane.xlu0 %3814
      %v3816 = vmax.f32 %v3706, %v3708
      %3817 = vmax.xlane.f32.xlu0 %v3816
      %v3818 = vpop.xlane.xlu0 %3817
      %v3819 = vmax.f32 %v3710, %v3712
      %3820 = vmax.xlane.f32.xlu0 %v3819
      %v3821 = vpop.xlane.xlu0 %3820
      %v3822 = vmax.f32 %v3716, %v3718
      %3823 = vmax.xlane.f32.xlu0 %v3822
      %v3824 = vpop.xlane.xlu0 %3823
      %v3825 = vmax.f32 %v3720, %v3722
      %3826 = vmax.xlane.f32.xlu0 %v3825
      %v3827 = vpop.xlane.xlu0 %3826
      %v3828 = vmax.f32 %v3726, %v3728
      %3829 = vmax.xlane.f32.xlu0 %v3828
      %v3830 = vpop.xlane.xlu0 %3829
      %v3831 = vmax.f32 %v3730, %v3732
      %3832 = vmax.xlane.f32.xlu0 %v3831
      %v3833 = vpop.xlane.xlu0 %3832
      %v3834 = vmax.f32 %v3736, %v3738
      %3835 = vmax.xlane.f32.xlu0 %v3834
      %v3836 = vpop.xlane.xlu0 %3835
      %v3837 = vmax.f32 %v3740, %v3742
      %3838 = vmax.xlane.f32.xlu0 %v3837
      %v3839 = vpop.xlane.xlu0 %3838
      %v3840 = vsub.f32 %v3586, %v3746
      %v3841 = vsub.f32 %v3588, %v3746
      %v3842 = vsub.f32 %v3590, %v3749
      %v3843 = vsub.f32 %v3592, %v3749
      %v3844 = vsub.f32 %v3596, %v3752
      %v3845 = vsub.f32 %v3598, %v3752
      %v3846 = vsub.f32 %v3600, %v3755
      %v3847 = vsub.f32 %v3602, %v3755
      %v3848 = vsub.f32 %v3606, %v3758
      %v3849 = vsub.f32 %v3608, %v3758
      %v3850 = vsub.f32 %v3610, %v3761
      %v3851 = vsub.f32 %v3612, %v3761
      %v3852 = vsub.f32 %v3616, %v3764
      %v3853 = vsub.f32 %v3618, %v3764
      %v3854 = vsub.f32 %v3620, %v3767
      %v3855 = vsub.f32 %v3622, %v3767
      %v3856 = vsub.f32 %v3626, %v3770
      %v3857 = vsub.f32 %v3628, %v3770
      %v3858 = vsub.f32 %v3630, %v3773
      %v3859 = vsub.f32 %v3632, %v3773
      %v3860 = vsub.f32 %v3636, %v3776
      %v3861 = vsub.f32 %v3638, %v3776
      %v3862 = vsub.f32 %v3640, %v3779
      %v3863 = vsub.f32 %v3642, %v3779
      %v3864 = vsub.f32 %v3646, %v3782
      %v3865 = vsub.f32 %v3648, %v3782
      %v3866 = vsub.f32 %v3650, %v3785
      %v3867 = vsub.f32 %v3652, %v3785
      %v3868 = vsub.f32 %v3656, %v3788
      %v3869 = vsub.f32 %v3658, %v3788
      %v3870 = vsub.f32 %v3660, %v3791
      %v3871 = vsub.f32 %v3662, %v3791
      %v3872 = vsub.f32 %v3666, %v3794
      %v3873 = vsub.f32 %v3668, %v3794
      %v3874 = vsub.f32 %v3670, %v3797
      %v3875 = vsub.f32 %v3672, %v3797
      %v3876 = vsub.f32 %v3676, %v3800
      %v3877 = vsub.f32 %v3678, %v3800
      %v3878 = vsub.f32 %v3680, %v3803
      %v3879 = vsub.f32 %v3682, %v3803
      %v3880 = vsub.f32 %v3686, %v3806
      %v3881 = vsub.f32 %v3688, %v3806
      %v3882 = vsub.f32 %v3690, %v3809
      %v3883 = vsub.f32 %v3692, %v3809
      %v3884 = vsub.f32 %v3696, %v3812
      %v3885 = vsub.f32 %v3698, %v3812
      %v3886 = vsub.f32 %v3700, %v3815
      %v3887 = vsub.f32 %v3702, %v3815
      %v3888 = vsub.f32 %v3706, %v3818
      %v3889 = vsub.f32 %v3708, %v3818
      %v3890 = vsub.f32 %v3710, %v3821
      %v3891 = vsub.f32 %v3712, %v3821
      %v3892 = vsub.f32 %v3716, %v3824
      %v3893 = vsub.f32 %v3718, %v3824
      %v3894 = vsub.f32 %v3720, %v3827
      %v3895 = vsub.f32 %v3722, %v3827
      %v3896 = vsub.f32 %v3726, %v3830
      %v3897 = vsub.f32 %v3728, %v3830
      %v3898 = vsub.f32 %v3730, %v3833
      %v3899 = vsub.f32 %v3732, %v3833
      %v3900 = vsub.f32 %v3736, %v3836
      %v3901 = vsub.f32 %v3738, %v3836
      %v3902 = vsub.f32 %v3740, %v3839
      %v3903 = vsub.f32 %v3742, %v3839
      %v3904 = vmul.f32 %v3840, 1.442695
      %v3905 = vpow.pop %v3904
      %v3906 = vmul.f32 %v3841, 1.442695
      %v3907 = vpow.pop %v3906
      %v3908 = vmul.f32 %v3842, 1.442695
      %v3909 = vpow.pop %v3908
      %v3910 = vmul.f32 %v3843, 1.442695
      %v3911 = vpow.pop %v3910
      %v3912 = vmul.f32 %v3844, 1.442695
      %v3913 = vpow.pop %v3912
      %v3914 = vmul.f32 %v3845, 1.442695
      %v3915 = vpow.pop %v3914
      %v3916 = vmul.f32 %v3846, 1.442695
      %v3917 = vpow.pop %v3916
      %v3918 = vmul.f32 %v3847, 1.442695
      %v3919 = vpow.pop %v3918
      %v3920 = vmul.f32 %v3848, 1.442695
      %v3921 = vpow.pop %v3920
      %v3922 = vmul.f32 %v3849, 1.442695
      %v3923 = vpow.pop %v3922
      %v3924 = vmul.f32 %v3850, 1.442695
      %v3925 = vpow.pop %v3924
      %v3926 = vmul.f32 %v3851, 1.442695
      %v3927 = vpow.pop %v3926
      %v3928 = vmul.f32 %v3852, 1.442695
      %v3929 = vpow.pop %v3928
      %v3930 = vmul.f32 %v3853, 1.442695
      %v3931 = vpow.pop %v3930
      %v3932 = vmul.f32 %v3854, 1.442695
      %v3933 = vpow.pop %v3932
      %v3934 = vmul.f32 %v3855, 1.442695
      %v3935 = vpow.pop %v3934
      %v3936 = vmul.f32 %v3856, 1.442695
      %v3937 = vpow.pop %v3936
      %v3938 = vmul.f32 %v3857, 1.442695
      %v3939 = vpow.pop %v3938
      %v3940 = vmul.f32 %v3858, 1.442695
      %v3941 = vpow.pop %v3940
      %v3942 = vmul.f32 %v3859, 1.442695
      %v3943 = vpow.pop %v3942
      %v3944 = vmul.f32 %v3860, 1.442695
      %v3945 = vpow.pop %v3944
      %v3946 = vmul.f32 %v3861, 1.442695
      %v3947 = vpow.pop %v3946
      %v3948 = vmul.f32 %v3862, 1.442695
      %v3949 = vpow.pop %v3948
      %v3950 = vmul.f32 %v3863, 1.442695
      %v3951 = vpow.pop %v3950
      %v3952 = vmul.f32 %v3864, 1.442695
      %v3953 = vpow.pop %v3952
      %v3954 = vmul.f32 %v3865, 1.442695
      %v3955 = vpow.pop %v3954
      %v3956 = vmul.f32 %v3866, 1.442695
      %v3957 = vpow.pop %v3956
      %v3958 = vmul.f32 %v3867, 1.442695
      %v3959 = vpow.pop %v3958
      %v3960 = vmul.f32 %v3868, 1.442695
      %v3961 = vpow.pop %v3960
      %v3962 = vmul.f32 %v3869, 1.442695
      %v3963 = vpow.pop %v3962
      %v3964 = vmul.f32 %v3870, 1.442695
      %v3965 = vpow.pop %v3964
      %v3966 = vmul.f32 %v3871, 1.442695
      %v3967 = vpow.pop %v3966
      %v3968 = vmul.f32 %v3872, 1.442695
      %v3969 = vpow.pop %v3968
      %v3970 = vmul.f32 %v3873, 1.442695
      %v3971 = vpow.pop %v3970
      %v3972 = vmul.f32 %v3874, 1.442695
      %v3973 = vpow.pop %v3972
      %v3974 = vmul.f32 %v3875, 1.442695
      %v3975 = vpow.pop %v3974
      %v3976 = vmul.f32 %v3876, 1.442695
      %v3977 = vpow.pop %v3976
      %v3978 = vmul.f32 %v3877, 1.442695
      %v3979 = vpow.pop %v3978
      %v3980 = vmul.f32 %v3878, 1.442695
      %v3981 = vpow.pop %v3980
      %v3982 = vmul.f32 %v3879, 1.442695
      %v3983 = vpow.pop %v3982
      %v3984 = vmul.f32 %v3880, 1.442695
      %v3985 = vpow.pop %v3984
      %v3986 = vmul.f32 %v3881, 1.442695
      %v3987 = vpow.pop %v3986
      %v3988 = vmul.f32 %v3882, 1.442695
      %v3989 = vpow.pop %v3988
      %v3990 = vmul.f32 %v3883, 1.442695
      %v3991 = vpow.pop %v3990
      %v3992 = vmul.f32 %v3884, 1.442695
      %v3993 = vpow.pop %v3992
      %v3994 = vmul.f32 %v3885, 1.442695
      %v3995 = vpow.pop %v3994
      %v3996 = vmul.f32 %v3886, 1.442695
      %v3997 = vpow.pop %v3996
      %v3998 = vmul.f32 %v3887, 1.442695
      %v3999 = vpow.pop %v3998
      %v4000 = vmul.f32 %v3888, 1.442695
      %v4001 = vpow.pop %v4000
      %v4002 = vmul.f32 %v3889, 1.442695
      %v4003 = vpow.pop %v4002
      %v4004 = vmul.f32 %v3890, 1.442695
      %v4005 = vpow.pop %v4004
      %v4006 = vmul.f32 %v3891, 1.442695
      %v4007 = vpow.pop %v4006
      %v4008 = vmul.f32 %v3892, 1.442695
      %v4009 = vpow.pop %v4008
      %v4010 = vmul.f32 %v3893, 1.442695
      %v4011 = vpow.pop %v4010
      %v4012 = vmul.f32 %v3894, 1.442695
      %v4013 = vpow.pop %v4012
      %v4014 = vmul.f32 %v3895, 1.442695
      %v4015 = vpow.pop %v4014
      %v4016 = vmul.f32 %v3896, 1.442695
      %v4017 = vpow.pop %v4016
      %v4018 = vmul.f32 %v3897, 1.442695
      %v4019 = vpow.pop %v4018
      %v4020 = vmul.f32 %v3898, 1.442695
      %v4021 = vpow.pop %v4020
      %v4022 = vmul.f32 %v3899, 1.442695
      %v4023 = vpow.pop %v4022
      %v4024 = vmul.f32 %v3900, 1.442695
      %v4025 = vpow.pop %v4024
      %v4026 = vmul.f32 %v3901, 1.442695
      %v4027 = vpow.pop %v4026
      %v4028 = vmul.f32 %v3902, 1.442695
      %v4029 = vpow.pop %v4028
      %v4030 = vmul.f32 %v3903, 1.442695
      %v4031 = vpow.pop %v4030
      %v4032 = vadd.f32 %v3905, %v3907
      %4033 = vadd.xlane.f32.xlu0 %v4032
      %v4034 = vpop.xlane.xlu0 %4033
      %v4035 = vadd.f32 %v3909, %v3911
      %4036 = vadd.xlane.f32.xlu0 %v4035
      %v4037 = vpop.xlane.xlu0 %4036
      %v4038 = vadd.f32 %v3913, %v3915
      %4039 = vadd.xlane.f32.xlu0 %v4038
      %v4040 = vpop.xlane.xlu0 %4039
      %v4041 = vadd.f32 %v3917, %v3919
      %4042 = vadd.xlane.f32.xlu0 %v4041
      %v4043 = vpop.xlane.xlu0 %4042
      %v4044 = vadd.f32 %v3921, %v3923
      %4045 = vadd.xlane.f32.xlu0 %v4044
      %v4046 = vpop.xlane.xlu0 %4045
      %v4047 = vadd.f32 %v3925, %v3927
      %4048 = vadd.xlane.f32.xlu0 %v4047
      %v4049 = vpop.xlane.xlu0 %4048
      %v4050 = vadd.f32 %v3929, %v3931
      %4051 = vadd.xlane.f32.xlu0 %v4050
      %v4052 = vpop.xlane.xlu0 %4051
      %v4053 = vadd.f32 %v3933, %v3935
      %4054 = vadd.xlane.f32.xlu0 %v4053
      %v4055 = vpop.xlane.xlu0 %4054
      %v4056 = vadd.f32 %v3937, %v3939
      %4057 = vadd.xlane.f32.xlu0 %v4056
      %v4058 = vpop.xlane.xlu0 %4057
      %v4059 = vadd.f32 %v3941, %v3943
      %4060 = vadd.xlane.f32.xlu0 %v4059
      %v4061 = vpop.xlane.xlu0 %4060
      %v4062 = vadd.f32 %v3945, %v3947
      %4063 = vadd.xlane.f32.xlu0 %v4062
      %v4064 = vpop.xlane.xlu0 %4063
      %v4065 = vadd.f32 %v3949, %v3951
      %4066 = vadd.xlane.f32.xlu0 %v4065
      %v4067 = vpop.xlane.xlu0 %4066
      %v4068 = vadd.f32 %v3953, %v3955
      %4069 = vadd.xlane.f32.xlu0 %v4068
      %v4070 = vpop.xlane.xlu0 %4069
      %v4071 = vadd.f32 %v3957, %v3959
      %4072 = vadd.xlane.f32.xlu0 %v4071
      %v4073 = vpop.xlane.xlu0 %4072
      %v4074 = vadd.f32 %v3961, %v3963
      %4075 = vadd.xlane.f32.xlu0 %v4074
      %v4076 = vpop.xlane.xlu0 %4075
      %v4077 = vadd.f32 %v3965, %v3967
      %4078 = vadd.xlane.f32.xlu0 %v4077
      %v4079 = vpop.xlane.xlu0 %4078
      %v4080 = vadd.f32 %v3969, %v3971
      %4081 = vadd.xlane.f32.xlu0 %v4080
      %v4082 = vpop.xlane.xlu0 %4081
      %v4083 = vadd.f32 %v3973, %v3975
      %4084 = vadd.xlane.f32.xlu0 %v4083
      %v4085 = vpop.xlane.xlu0 %4084
      %v4086 = vadd.f32 %v3977, %v3979
      %4087 = vadd.xlane.f32.xlu0 %v4086
      %v4088 = vpop.xlane.xlu0 %4087
      %v4089 = vadd.f32 %v3981, %v3983
      %4090 = vadd.xlane.f32.xlu0 %v4089
      %v4091 = vpop.xlane.xlu0 %4090
      %v4092 = vadd.f32 %v3985, %v3987
      %4093 = vadd.xlane.f32.xlu0 %v4092
      %v4094 = vpop.xlane.xlu0 %4093
      %v4095 = vadd.f32 %v3989, %v3991
      %4096 = vadd.xlane.f32.xlu0 %v4095
      %v4097 = vpop.xlane.xlu0 %4096
      %v4098 = vadd.f32 %v3993, %v3995
      %4099 = vadd.xlane.f32.xlu0 %v4098
      %v4100 = vpop.xlane.xlu0 %4099
      %v4101 = vadd.f32 %v3997, %v3999
      %4102 = vadd.xlane.f32.xlu0 %v4101
      %v4103 = vpop.xlane.xlu0 %4102
      %v4104 = vadd.f32 %v4001, %v4003
      %4105 = vadd.xlane.f32.xlu0 %v4104
      %v4106 = vpop.xlane.xlu0 %4105
      %v4107 = vadd.f32 %v4005, %v4007
      %4108 = vadd.xlane.f32.xlu0 %v4107
      %v4109 = vpop.xlane.xlu0 %4108
      %v4110 = vadd.f32 %v4009, %v4011
      %4111 = vadd.xlane.f32.xlu0 %v4110
      %v4112 = vpop.xlane.xlu0 %4111
      %v4113 = vadd.f32 %v4013, %v4015
      %4114 = vadd.xlane.f32.xlu0 %v4113
      %v4115 = vpop.xlane.xlu0 %4114
      %v4116 = vadd.f32 %v4017, %v4019
      %4117 = vadd.xlane.f32.xlu0 %v4116
      %v4118 = vpop.xlane.xlu0 %4117
      %v4119 = vadd.f32 %v4021, %v4023
      %4120 = vadd.xlane.f32.xlu0 %v4119
      %v4121 = vpop.xlane.xlu0 %4120
      %v4122 = vadd.f32 %v4025, %v4027
      %4123 = vadd.xlane.f32.xlu0 %v4122
      %v4124 = vpop.xlane.xlu0 %4123
      %v4125 = vadd.f32 %v4029, %v4031
      %4126 = vadd.xlane.f32.xlu0 %v4125
      %v4127 = vpop.xlane.xlu0 %4126
      %v4128 = vpack.c.bf16 %v3909, %v3905
      %v4129 = vpack.c.bf16 %v3911, %v3907
      %v4130 = vpack.c.bf16 %v3917, %v3913
      %v4131 = vpack.c.bf16 %v3919, %v3915
      %v4132 = vpack.c.bf16 %v3925, %v3921
      %v4133 = vpack.c.bf16 %v3927, %v3923
      %v4134 = vpack.c.bf16 %v3933, %v3929
      %v4135 = vpack.c.bf16 %v3935, %v3931
      %v4136 = vpack.c.bf16 %v3941, %v3937
      %v4137 = vpack.c.bf16 %v3943, %v3939
      %v4138 = vpack.c.bf16 %v3949, %v3945
      %v4139 = vpack.c.bf16 %v3951, %v3947
      %v4140 = vpack.c.bf16 %v3957, %v3953
      %v4141 = vpack.c.bf16 %v3959, %v3955
      %v4142 = vpack.c.bf16 %v3965, %v3961
      %v4143 = vpack.c.bf16 %v3967, %v3963
      %v4144 = vpack.c.bf16 %v3973, %v3969
      %v4145 = vpack.c.bf16 %v3975, %v3971
      %v4146 = vpack.c.bf16 %v3981, %v3977
      %v4147 = vpack.c.bf16 %v3983, %v3979
      %v4148 = vpack.c.bf16 %v3989, %v3985
      %v4149 = vpack.c.bf16 %v3991, %v3987
      %v4150 = vpack.c.bf16 %v3997, %v3993
      %v4151 = vpack.c.bf16 %v3999, %v3995
      %v4152 = vpack.c.bf16 %v4005, %v4001
      %v4153 = vpack.c.bf16 %v4007, %v4003
      %v4154 = vpack.c.bf16 %v4013, %v4009
      %v4155 = vpack.c.bf16 %v4015, %v4011
      %v4156 = vpack.c.bf16 %v4021, %v4017
      %v4157 = vpack.c.bf16 %v4023, %v4019
      %v4158 = vpack.c.bf16 %v4029, %v4025
      %v4159 = vpack.c.bf16 %v4031, %v4027
      %4160 = vrot.lane.b32.xlu0 %v1292, 96
      %v4161 = vpop.permute.xlu0 %4160
      %4162 = vrot.lane.b32.xlu0 %v1295, 96
      %v4163 = vpop.permute.xlu0 %4162
      %4164 = vrot.lane.b32.xlu0 %v1298, 96
      %v4165 = vpop.permute.xlu0 %4164
      %4166 = vrot.lane.b32.xlu0 %v1301, 96
      %v4167 = vpop.permute.xlu0 %4166
      %4168 = vrot.lane.b32.xlu0 %v1304, 96
      %v4169 = vpop.permute.xlu0 %4168
      %4170 = vrot.lane.b32.xlu0 %v1307, 96
      %v4171 = vpop.permute.xlu0 %4170
      %4172 = vrot.lane.b32.xlu0 %v1310, 96
      %v4173 = vpop.permute.xlu0 %4172
      %4174 = vrot.lane.b32.xlu0 %v1313, 96
      %v4175 = vpop.permute.xlu0 %4174
      %4176 = vrot.lane.b32.xlu0 %v1316, 96
      %v4177 = vpop.permute.xlu0 %4176
      %4178 = vrot.lane.b32.xlu0 %v1319, 96
      %v4179 = vpop.permute.xlu0 %4178
      %4180 = vrot.lane.b32.xlu0 %v1322, 96
      %v4181 = vpop.permute.xlu0 %4180
      %4182 = vrot.lane.b32.xlu0 %v1325, 96
      %v4183 = vpop.permute.xlu0 %4182
      %4184 = vrot.lane.b32.xlu0 %v1328, 96
      %v4185 = vpop.permute.xlu0 %4184
      %4186 = vrot.lane.b32.xlu0 %v1331, 96
      %v4187 = vpop.permute.xlu0 %4186
      %4188 = vrot.lane.b32.xlu0 %v1334, 96
      %v4189 = vpop.permute.xlu0 %4188
      %4190 = vrot.lane.b32.xlu0 %v1337, 96
      %v4191 = vpop.permute.xlu0 %4190
      %4208 = vmatprep.subr.bf16.mxu0 0
      %4209 = vmatpush1.bf16.msra.mxu0 %v4161
      %4210 = vmatprep.subr.bf16.mxu0 0
      %4211 = vmatpush1.bf16.msra.mxu0 %v4163
      %4212 = vmatprep.subr.bf16.mxu0 0
      %4213 = vmatpush1.bf16.msra.mxu0 %v4165
      %4214 = vmatprep.subr.bf16.mxu0 0
      %4215 = vmatpush1.bf16.msra.mxu0 %v4167
      %4216 = vmatprep.subr.bf16.mxu0 0
      %4217 = vmatpush1.bf16.msra.mxu0 %v4169
      %4218 = vmatprep.subr.bf16.mxu0 0
      %4219 = vmatpush1.bf16.msra.mxu0 %v4171
      %4220 = vmatprep.subr.bf16.mxu0 0
      %4221 = vmatpush1.bf16.msra.mxu0 %v4173
      %4222 = vmatprep.subr.bf16.mxu0 0
      %4223 = vmatpush1.bf16.msra.mxu0 %v4175
      %4224 = vmatprep.subr.bf16.mxu0 0
      %4225 = vmatpush1.bf16.msra.mxu0 %v4177
      %4226 = vmatprep.subr.bf16.mxu0 0
      %4227 = vmatpush1.bf16.msra.mxu0 %v4179
      %4228 = vmatprep.subr.bf16.mxu0 0
      %4229 = vmatpush1.bf16.msra.mxu0 %v4181
      %4230 = vmatprep.subr.bf16.mxu0 0
      %4231 = vmatpush1.bf16.msra.mxu0 %v4183
      %4232 = vmatprep.subr.bf16.mxu0 0
      %4233 = vmatpush1.bf16.msra.mxu0 %v4185
      %4234 = vmatprep.subr.bf16.mxu0 0
      %4235 = vmatpush1.bf16.msra.mxu0 %v4187
      %4236 = vmatprep.subr.bf16.mxu0 0
      %4237 = vmatpush1.bf16.msra.mxu0 %v4189
      %4238 = vmatprep.subr.bf16.mxu0 0
      %4239 = vmatpush1.bf16.msra.mxu0 %v4191
      %4240 = vmatprep.mubr.bf16.mxu0 %v4129
      %4241 = vmatmul.mubr.bf16.gmra.mrb[0].mxu0 %v4128
      %v4242 = vpop.f32.mrb[0].mxu0
      %v4243 = vadd.f32 0.0, %v4242
      %v4244 = vpop.f32.mrb[0].mxu0
      %v4245 = vpop.f32.mrb[0].mxu0
      %v4246 = vadd.f32 0.0, %v4245
      %v4247 = vpop.f32.mrb[0].mxu0
      %4248 = vmatprep.mubr.bf16.mxu0 %v4131
      %4249 = vmatmul.mubr.bf16.gmra.mrb[0].mxu0 %v4130
      %v4250 = vpop.f32.mrb[0].mxu0
      %v4251 = vadd.f32 0.0, %v4250
      %v4252 = vpop.f32.mrb[0].mxu0
      %v4253 = vpop.f32.mrb[0].mxu0
      %v4254 = vadd.f32 0.0, %v4253
      %v4255 = vpop.f32.mrb[0].mxu0
      %4256 = vmatprep.mubr.bf16.mxu0 %v4133
      %4257 = vmatmul.mubr.bf16.gmra.mrb[0].mxu0 %v4132
      %v4258 = vpop.f32.mrb[0].mxu0
      %v4259 = vadd.f32 0.0, %v4258
      %v4260 = vpop.f32.mrb[0].mxu0
      %v4261 = vpop.f32.mrb[0].mxu0
      %v4262 = vadd.f32 0.0, %v4261
      %v4263 = vpop.f32.mrb[0].mxu0
      %4264 = vmatprep.mubr.bf16.mxu0 %v4135
      %4265 = vmatmul.mubr.bf16.gmra.mrb[0].mxu0 %v4134
      %v4266 = vpop.f32.mrb[0].mxu0
      %v4267 = vadd.f32 0.0, %v4266
      %v4268 = vpop.f32.mrb[0].mxu0
      %v4269 = vpop.f32.mrb[0].mxu0
      %v4270 = vadd.f32 0.0, %v4269
      %v4271 = vpop.f32.mrb[0].mxu0
      %4272 = vmatprep.mubr.bf16.mxu0 %v4137
      %4273 = vmatmul.mubr.bf16.gmra.mrb[0].mxu0 %v4136
      %v4274 = vpop.f32.mrb[0].mxu0
      %v4275 = vadd.f32 0.0, %v4274
      %v4276 = vpop.f32.mrb[0].mxu0
      %v4277 = vpop.f32.mrb[0].mxu0
      %v4278 = vadd.f32 0.0, %v4277
      %v4279 = vpop.f32.mrb[0].mxu0
      %4280 = vmatprep.mubr.bf16.mxu0 %v4139
      %4281 = vmatmul.mubr.bf16.gmra.mrb[0].mxu0 %v4138
      %v4282 = vpop.f32.mrb[0].mxu0
      %v4283 = vadd.f32 0.0, %v4282
      %v4284 = vpop.f32.mrb[0].mxu0
      %v4285 = vpop.f32.mrb[0].mxu0
      %v4286 = vadd.f32 0.0, %v4285
      %v4287 = vpop.f32.mrb[0].mxu0
      %4288 = vmatprep.mubr.bf16.mxu0 %v4141
      %4289 = vmatmul.mubr.bf16.gmra.mrb[0].mxu0 %v4140
      %v4290 = vpop.f32.mrb[0].mxu0
      %v4291 = vadd.f32 0.0, %v4290
      %v4292 = vpop.f32.mrb[0].mxu0
      %v4293 = vpop.f32.mrb[0].mxu0
      %v4294 = vadd.f32 0.0, %v4293
      %v4295 = vpop.f32.mrb[0].mxu0
      %4296 = vmatprep.mubr.bf16.mxu0 %v4143
      %4297 = vmatmul.mubr.bf16.gmra.mrb[0].mxu0 %v4142
      %v4298 = vpop.f32.mrb[0].mxu0
      %v4299 = vadd.f32 0.0, %v4298
      %v4300 = vpop.f32.mrb[0].mxu0
      %v4301 = vpop.f32.mrb[0].mxu0
      %v4302 = vadd.f32 0.0, %v4301
      %v4303 = vpop.f32.mrb[0].mxu0
      %4304 = vmatprep.mubr.bf16.mxu0 %v4145
      %4305 = vmatmul.mubr.bf16.gmra.mrb[0].mxu0 %v4144
      %v4306 = vpop.f32.mrb[0].mxu0
      %v4307 = vadd.f32 0.0, %v4306
      %v4308 = vpop.f32.mrb[0].mxu0
      %v4309 = vpop.f32.mrb[0].mxu0
      %v4310 = vadd.f32 0.0, %v4309
      %v4311 = vpop.f32.mrb[0].mxu0
      %4312 = vmatprep.mubr.bf16.mxu0 %v4147
      %4313 = vmatmul.mubr.bf16.gmra.mrb[0].mxu0 %v4146
      %v4314 = vpop.f32.mrb[0].mxu0
      %v4315 = vadd.f32 0.0, %v4314
      %v4316 = vpop.f32.mrb[0].mxu0
      %v4317 = vpop.f32.mrb[0].mxu0
      %v4318 = vadd.f32 0.0, %v4317
      %v4319 = vpop.f32.mrb[0].mxu0
      %4320 = vmatprep.mubr.bf16.mxu0 %v4149
      %4321 = vmatmul.mubr.bf16.gmra.mrb[0].mxu0 %v4148
      %v4322 = vpop.f32.mrb[0].mxu0
      %v4323 = vadd.f32 0.0, %v4322
      %v4324 = vpop.f32.mrb[0].mxu0
      %v4325 = vpop.f32.mrb[0].mxu0
      %v4326 = vadd.f32 0.0, %v4325
      %v4327 = vpop.f32.mrb[0].mxu0
      %4328 = vmatprep.mubr.bf16.mxu0 %v4151
      %4329 = vmatmul.mubr.bf16.gmra.mrb[0].mxu0 %v4150
      %v4330 = vpop.f32.mrb[0].mxu0
      %v4331 = vadd.f32 0.0, %v4330
      %v4332 = vpop.f32.mrb[0].mxu0
      %v4333 = vpop.f32.mrb[0].mxu0
      %v4334 = vadd.f32 0.0, %v4333
      %v4335 = vpop.f32.mrb[0].mxu0
      %4336 = vmatprep.mubr.bf16.mxu0 %v4153
      %4337 = vmatmul.mubr.bf16.gmra.mrb[0].mxu0 %v4152
      %v4338 = vpop.f32.mrb[0].mxu0
      %v4339 = vadd.f32 0.0, %v4338
      %v4340 = vpop.f32.mrb[0].mxu0
      %v4341 = vpop.f32.mrb[0].mxu0
      %v4342 = vadd.f32 0.0, %v4341
      %v4343 = vpop.f32.mrb[0].mxu0
      %4344 = vmatprep.mubr.bf16.mxu0 %v4155
      %4345 = vmatmul.mubr.bf16.gmra.mrb[0].mxu0 %v4154
      %v4346 = vpop.f32.mrb[0].mxu0
      %v4347 = vadd.f32 0.0, %v4346
      %v4348 = vpop.f32.mrb[0].mxu0
      %v4349 = vpop.f32.mrb[0].mxu0
      %v4350 = vadd.f32 0.0, %v4349
      %v4351 = vpop.f32.mrb[0].mxu0
      %4352 = vmatprep.mubr.bf16.mxu0 %v4157
      %4353 = vmatmul.mubr.bf16.gmra.mrb[0].mxu0 %v4156
      %v4354 = vpop.f32.mrb[0].mxu0
      %v4355 = vadd.f32 0.0, %v4354
      %v4356 = vpop.f32.mrb[0].mxu0
      %v4357 = vpop.f32.mrb[0].mxu0
      %v4358 = vadd.f32 0.0, %v4357
      %v4359 = vpop.f32.mrb[0].mxu0
      %4360 = vmatprep.mubr.bf16.mxu0 %v4159
      %4361 = vmatmul.mubr.bf16.gmra.mrb[0].mxu0 %v4158
      %v4362 = vpop.f32.mrb[0].mxu0
      %v4363 = vadd.f32 0.0, %v4362
      %v4364 = vpop.f32.mrb[0].mxu0
      %v4365 = vpop.f32.mrb[0].mxu0
      %v4366 = vadd.f32 0.0, %v4365
      %v4367 = vpop.f32.mrb[0].mxu0
      %4368 = vdwg.mxu0
      %v4369 = vrcp.pop %v4034
      %v4370 = vrcp.pop %v4037
      %v4371 = vrcp.pop %v4040
      %v4372 = vrcp.pop %v4043
      %v4373 = vrcp.pop %v4046
      %v4374 = vrcp.pop %v4049
      %v4375 = vrcp.pop %v4052
      %v4376 = vrcp.pop %v4055
      %v4377 = vrcp.pop %v4058
      %v4378 = vrcp.pop %v4061
      %v4379 = vrcp.pop %v4064
      %v4380 = vrcp.pop %v4067
      %v4381 = vrcp.pop %v4070
      %v4382 = vrcp.pop %v4073
      %v4383 = vrcp.pop %v4076
      %v4384 = vrcp.pop %v4079
      %v4385 = vrcp.pop %v4082
      %v4386 = vrcp.pop %v4085
      %v4387 = vrcp.pop %v4088
      %v4388 = vrcp.pop %v4091
      %v4389 = vrcp.pop %v4094
      %v4390 = vrcp.pop %v4097
      %v4391 = vrcp.pop %v4100
      %v4392 = vrcp.pop %v4103
      %v4393 = vrcp.pop %v4106
      %v4394 = vrcp.pop %v4109
      %v4395 = vrcp.pop %v4112
      %v4396 = vrcp.pop %v4115
      %v4397 = vrcp.pop %v4118
      %v4398 = vrcp.pop %v4121
      %v4399 = vrcp.pop %v4124
      %v4400 = vrcp.pop %v4127
      %v4401 = vmul.f32 %v4243, %v4369
      %v4402 = vmul.f32 %v4246, %v4370
      %v4403 = vmul.f32 %v4251, %v4371
      %v4404 = vmul.f32 %v4254, %v4372
      %v4405 = vmul.f32 %v4259, %v4373
      %v4406 = vmul.f32 %v4262, %v4374
      %v4407 = vmul.f32 %v4267, %v4375
      %v4408 = vmul.f32 %v4270, %v4376
      %v4409 = vmul.f32 %v4275, %v4377
      %v4410 = vmul.f32 %v4278, %v4378
      %v4411 = vmul.f32 %v4283, %v4379
      %v4412 = vmul.f32 %v4286, %v4380
      %v4413 = vmul.f32 %v4291, %v4381
      %v4414 = vmul.f32 %v4294, %v4382
      %v4415 = vmul.f32 %v4299, %v4383
      %v4416 = vmul.f32 %v4302, %v4384
      %v4417 = vmul.f32 %v4307, %v4385
      %v4418 = vmul.f32 %v4310, %v4386
      %v4419 = vmul.f32 %v4315, %v4387
      %v4420 = vmul.f32 %v4318, %v4388
      %v4421 = vmul.f32 %v4323, %v4389
      %v4422 = vmul.f32 %v4326, %v4390
      %v4423 = vmul.f32 %v4331, %v4391
      %v4424 = vmul.f32 %v4334, %v4392
      %v4425 = vmul.f32 %v4339, %v4393
      %v4426 = vmul.f32 %v4342, %v4394
      %v4427 = vmul.f32 %v4347, %v4395
      %v4428 = vmul.f32 %v4350, %v4396
      %v4429 = vmul.f32 %v4355, %v4397
      %v4430 = vmul.f32 %v4358, %v4398
      %v4431 = vmul.f32 %v4363, %v4399
      %v4432 = vmul.f32 %v4366, %v4400
      %v4433 = vpack.c.bf16 %v4402, %v4401
      %v4434 = vpack.c.bf16 %v4404, %v4403
      %v4435 = vpack.c.bf16 %v4406, %v4405
      %v4436 = vpack.c.bf16 %v4408, %v4407
      %v4437 = vpack.c.bf16 %v4410, %v4409
      %v4438 = vpack.c.bf16 %v4412, %v4411
      %v4439 = vpack.c.bf16 %v4414, %v4413
      %v4440 = vpack.c.bf16 %v4416, %v4415
      %v4441 = vpack.c.bf16 %v4418, %v4417
      %v4442 = vpack.c.bf16 %v4420, %v4419
      %v4443 = vpack.c.bf16 %v4422, %v4421
      %v4444 = vpack.c.bf16 %v4424, %v4423
      %v4445 = vpack.c.bf16 %v4426, %v4425
      %v4446 = vpack.c.bf16 %v4428, %v4427
      %v4447 = vpack.c.bf16 %v4430, %v4429
      %v4448 = vpack.c.bf16 %v4432, %v4431
      %4449 = vrot.lane.b32.xlu0 %v1290, 80
      %v4450 = vpop.permute.xlu0 %4449
      %4451 = vrot.lane.b32.xlu0 %v1293, 80
      %v4452 = vpop.permute.xlu0 %4451
      %4453 = vrot.lane.b32.xlu0 %v1296, 80
      %v4454 = vpop.permute.xlu0 %4453
      %4455 = vrot.lane.b32.xlu0 %v1299, 80
      %v4456 = vpop.permute.xlu0 %4455
      %4457 = vrot.lane.b32.xlu0 %v1302, 80
      %v4458 = vpop.permute.xlu0 %4457
      %4459 = vrot.lane.b32.xlu0 %v1305, 80
      %v4460 = vpop.permute.xlu0 %4459
      %4461 = vrot.lane.b32.xlu0 %v1308, 80
      %v4462 = vpop.permute.xlu0 %4461
      %4463 = vrot.lane.b32.xlu0 %v1311, 80
      %v4464 = vpop.permute.xlu0 %4463
      %4465 = vrot.lane.b32.xlu0 %v1314, 80
      %v4466 = vpop.permute.xlu0 %4465
      %4467 = vrot.lane.b32.xlu0 %v1317, 80
      %v4468 = vpop.permute.xlu0 %4467
      %4469 = vrot.lane.b32.xlu0 %v1320, 80
      %v4470 = vpop.permute.xlu0 %4469
      %4471 = vrot.lane.b32.xlu0 %v1323, 80
      %v4472 = vpop.permute.xlu0 %4471
      %4473 = vrot.lane.b32.xlu0 %v1326, 80
      %v4474 = vpop.permute.xlu0 %4473
      %4475 = vrot.lane.b32.xlu0 %v1329, 80
      %v4476 = vpop.permute.xlu0 %4475
      %4477 = vrot.lane.b32.xlu0 %v1332, 80
      %v4478 = vpop.permute.xlu0 %4477
      %4479 = vrot.lane.b32.xlu0 %v1335, 80
      %v4480 = vpop.permute.xlu0 %4479
      %4481 = vrot.lane.b32.xlu0 %v1291, 80
      %v4482 = vpop.permute.xlu0 %4481
      %4483 = vrot.lane.b32.xlu0 %v1294, 80
      %v4484 = vpop.permute.xlu0 %4483
      %4485 = vrot.lane.b32.xlu0 %v1297, 80
      %v4486 = vpop.permute.xlu0 %4485
      %4487 = vrot.lane.b32.xlu0 %v1300, 80
      %v4488 = vpop.permute.xlu0 %4487
      %4489 = vrot.lane.b32.xlu0 %v1303, 80
      %v4490 = vpop.permute.xlu0 %4489
      %4491 = vrot.lane.b32.xlu0 %v1306, 80
      %v4492 = vpop.permute.xlu0 %4491
      %4493 = vrot.lane.b32.xlu0 %v1309, 80
      %v4494 = vpop.permute.xlu0 %4493
      %4495 = vrot.lane.b32.xlu0 %v1312, 80
      %v4496 = vpop.permute.xlu0 %4495
      %4497 = vrot.lane.b32.xlu0 %v1315, 80
      %v4498 = vpop.permute.xlu0 %4497
      %4499 = vrot.lane.b32.xlu0 %v1318, 80
      %v4500 = vpop.permute.xlu0 %4499
      %4501 = vrot.lane.b32.xlu0 %v1321, 80
      %v4502 = vpop.permute.xlu0 %4501
      %4503 = vrot.lane.b32.xlu0 %v1324, 80
      %v4504 = vpop.permute.xlu0 %4503
      %4505 = vrot.lane.b32.xlu0 %v1327, 80
      %v4506 = vpop.permute.xlu0 %4505
      %4507 = vrot.lane.b32.xlu0 %v1330, 80
      %v4508 = vpop.permute.xlu0 %4507
      %4509 = vrot.lane.b32.xlu0 %v1333, 80
      %v4510 = vpop.permute.xlu0 %4509
      %4511 = vrot.lane.b32.xlu0 %v1336, 80
      %v4512 = vpop.permute.xlu0 %4511
      %v4514 = vsel %vm1338, %v4450, 0
      %v4517 = vsel %vm1338, %v4452, 0
      %v4520 = vsel %vm1338, %v4454, 0
      %v4523 = vsel %vm1338, %v4456, 0
      %v4526 = vsel %vm1338, %v4458, 0
      %v4529 = vsel %vm1338, %v4460, 0
      %v4532 = vsel %vm1338, %v4462, 0
      %v4535 = vsel %vm1338, %v4464, 0
      %v4538 = vsel %vm1338, %v4466, 0
      %v4541 = vsel %vm1338, %v4468, 0
      %v4544 = vsel %vm1338, %v4470, 0
      %v4547 = vsel %vm1338, %v4472, 0
      %v4550 = vsel %vm1338, %v4474, 0
      %v4553 = vsel %vm1338, %v4476, 0
      %v4556 = vsel %vm1338, %v4478, 0
      %v4559 = vsel %vm1338, %v4480, 0
      %v4562 = vsel %vm1338, %v4482, 0
      %v4565 = vsel %vm1338, %v4484, 0
      %v4568 = vsel %vm1338, %v4486, 0
      %v4571 = vsel %vm1338, %v4488, 0
      %v4574 = vsel %vm1338, %v4490, 0
      %v4577 = vsel %vm1338, %v4492, 0
      %v4580 = vsel %vm1338, %v4494, 0
      %v4583 = vsel %vm1338, %v4496, 0
      %v4586 = vsel %vm1338, %v4498, 0
      %v4589 = vsel %vm1338, %v4500, 0
      %v4592 = vsel %vm1338, %v4502, 0
      %v4595 = vsel %vm1338, %v4504, 0
      %v4598 = vsel %vm1338, %v4506, 0
      %v4601 = vsel %vm1338, %v4508, 0
      %v4604 = vsel %vm1338, %v4510, 0
      %v4607 = vsel %vm1338, %v4512, 0
      %4609 = vmatprep.subr.bf16.mxu0 0
      %4610 = vmatpush1.bf16.xpose.msra.mxu0 %v4562
      %4611 = vmatprep.subr.bf16.mxu0 0
      %4612 = vmatpush1.bf16.xpose.msra.mxu0 %v4565
      %4613 = vmatprep.subr.bf16.mxu0 0
      %4614 = vmatpush1.bf16.xpose.msra.mxu0 %v4568
      %4615 = vmatprep.subr.bf16.mxu0 0
      %4616 = vmatpush1.bf16.xpose.msra.mxu0 %v4571
      %4617 = vmatprep.subr.bf16.mxu0 0
      %4618 = vmatpush1.bf16.xpose.msra.mxu0 %v4574
      %4619 = vmatprep.subr.bf16.mxu0 0
      %4620 = vmatpush1.bf16.xpose.msra.mxu0 %v4577
      %4621 = vmatprep.subr.bf16.mxu0 0
      %4622 = vmatpush1.bf16.xpose.msra.mxu0 %v4580
      %4623 = vmatprep.subr.bf16.mxu0 0
      %4624 = vmatpush1.bf16.xpose.msra.mxu0 %v4583
      %4625 = vmatprep.subr.bf16.mxu0 0
      %4626 = vmatpush1.bf16.xpose.msra.mxu0 %v4586
      %4627 = vmatprep.subr.bf16.mxu0 0
      %4628 = vmatpush1.bf16.xpose.msra.mxu0 %v4589
      %4629 = vmatprep.subr.bf16.mxu0 0
      %4630 = vmatpush1.bf16.xpose.msra.mxu0 %v4592
      %4631 = vmatprep.subr.bf16.mxu0 0
      %4632 = vmatpush1.bf16.xpose.msra.mxu0 %v4595
      %4633 = vmatprep.subr.bf16.mxu0 0
      %4634 = vmatpush1.bf16.xpose.msra.mxu0 %v4598
      %4635 = vmatprep.subr.bf16.mxu0 0
      %4636 = vmatpush1.bf16.xpose.msra.mxu0 %v4601
      %4637 = vmatprep.subr.bf16.mxu0 0
      %4638 = vmatpush1.bf16.xpose.msra.mxu0 %v4604
      %4639 = vmatprep.subr.bf16.mxu0 0
      %4640 = vmatpush1.bf16.xpose.msra.mxu0 %v4607
      %4641 = vmatprep.mubr.bf16.mxu0 0
      %4642 = vmatmul.mubr.bf16.gmra.mrb[0].mxu0 %v4514
      %v4643 = vpop.f32.mrb[0].mxu0
      %v4644 = vadd.f32 0.0, %v4643
      %v4645 = vpop.f32.mrb[0].mxu0
      %v4646 = vadd.f32 0.0, %v4645
      %v4647 = vpop.f32.mrb[0].mxu0
      %v4648 = vadd.f32 0.0, %v4647
      %v4649 = vpop.f32.mrb[0].mxu0
      %v4650 = vadd.f32 0.0, %v4649
      %4651 = vmatprep.mubr.bf16.mxu0 0
      %4652 = vmatmul.mubr.bf16.gmra.mrb[0].mxu0 %v4517
      %v4653 = vpop.f32.mrb[0].mxu0
      %v4654 = vadd.f32 0.0, %v4653
      %v4655 = vpop.f32.mrb[0].mxu0
      %v4656 = vadd.f32 0.0, %v4655
      %v4657 = vpop.f32.mrb[0].mxu0
      %v4658 = vadd.f32 0.0, %v4657
      %v4659 = vpop.f32.mrb[0].mxu0
      %v4660 = vadd.f32 0.0, %v4659
      %4661 = vmatprep.mubr.bf16.mxu0 0
      %4662 = vmatmul.mubr.bf16.gmra.mrb[0].mxu0 %v4520
      %v4663 = vpop.f32.mrb[0].mxu0
      %v4664 = vadd.f32 0.0, %v4663
      %v4665 = vpop.f32.mrb[0].mxu0
      %v4666 = vadd.f32 0.0, %v4665
      %v4667 = vpop.f32.mrb[0].mxu0
      %v4668 = vadd.f32 0.0, %v4667
      %v4669 = vpop.f32.mrb[0].mxu0
      %v4670 = vadd.f32 0.0, %v4669
      %4671 = vmatprep.mubr.bf16.mxu0 0
      %4672 = vmatmul.mubr.bf16.gmra.mrb[0].mxu0 %v4523
      %v4673 = vpop.f32.mrb[0].mxu0
      %v4674 = vadd.f32 0.0, %v4673
      %v4675 = vpop.f32.mrb[0].mxu0
      %v4676 = vadd.f32 0.0, %v4675
      %v4677 = vpop.f32.mrb[0].mxu0
      %v4678 = vadd.f32 0.0, %v4677
      %v4679 = vpop.f32.mrb[0].mxu0
      %v4680 = vadd.f32 0.0, %v4679
      %4681 = vmatprep.mubr.bf16.mxu0 0
      %4682 = vmatmul.mubr.bf16.gmra.mrb[0].mxu0 %v4526
      %v4683 = vpop.f32.mrb[0].mxu0
      %v4684 = vadd.f32 0.0, %v4683
      %v4685 = vpop.f32.mrb[0].mxu0
      %v4686 = vadd.f32 0.0, %v4685
      %v4687 = vpop.f32.mrb[0].mxu0
      %v4688 = vadd.f32 0.0, %v4687
      %v4689 = vpop.f32.mrb[0].mxu0
      %v4690 = vadd.f32 0.0, %v4689
      %4691 = vmatprep.mubr.bf16.mxu0 0
      %4692 = vmatmul.mubr.bf16.gmra.mrb[0].mxu0 %v4529
      %v4693 = vpop.f32.mrb[0].mxu0
      %v4694 = vadd.f32 0.0, %v4693
      %v4695 = vpop.f32.mrb[0].mxu0
      %v4696 = vadd.f32 0.0, %v4695
      %v4697 = vpop.f32.mrb[0].mxu0
      %v4698 = vadd.f32 0.0, %v4697
      %v4699 = vpop.f32.mrb[0].mxu0
      %v4700 = vadd.f32 0.0, %v4699
      %4701 = vmatprep.mubr.bf16.mxu0 0
      %4702 = vmatmul.mubr.bf16.gmra.mrb[0].mxu0 %v4532
      %v4703 = vpop.f32.mrb[0].mxu0
      %v4704 = vadd.f32 0.0, %v4703
      %v4705 = vpop.f32.mrb[0].mxu0
      %v4706 = vadd.f32 0.0, %v4705
      %v4707 = vpop.f32.mrb[0].mxu0
      %v4708 = vadd.f32 0.0, %v4707
      %v4709 = vpop.f32.mrb[0].mxu0
      %v4710 = vadd.f32 0.0, %v4709
      %4711 = vmatprep.mubr.bf16.mxu0 0
      %4712 = vmatmul.mubr.bf16.gmra.mrb[0].mxu0 %v4535
      %v4713 = vpop.f32.mrb[0].mxu0
      %v4714 = vadd.f32 0.0, %v4713
      %v4715 = vpop.f32.mrb[0].mxu0
      %v4716 = vadd.f32 0.0, %v4715
      %v4717 = vpop.f32.mrb[0].mxu0
      %v4718 = vadd.f32 0.0, %v4717
      %v4719 = vpop.f32.mrb[0].mxu0
      %v4720 = vadd.f32 0.0, %v4719
      %4721 = vmatprep.mubr.bf16.mxu0 0
      %4722 = vmatmul.mubr.bf16.gmra.mrb[0].mxu0 %v4538
      %v4723 = vpop.f32.mrb[0].mxu0
      %v4724 = vadd.f32 0.0, %v4723
      %v4725 = vpop.f32.mrb[0].mxu0
      %v4726 = vadd.f32 0.0, %v4725
      %v4727 = vpop.f32.mrb[0].mxu0
      %v4728 = vadd.f32 0.0, %v4727
      %v4729 = vpop.f32.mrb[0].mxu0
      %v4730 = vadd.f32 0.0, %v4729
      %4731 = vmatprep.mubr.bf16.mxu0 0
      %4732 = vmatmul.mubr.bf16.gmra.mrb[0].mxu0 %v4541
      %v4733 = vpop.f32.mrb[0].mxu0
      %v4734 = vadd.f32 0.0, %v4733
      %v4735 = vpop.f32.mrb[0].mxu0
      %v4736 = vadd.f32 0.0, %v4735
      %v4737 = vpop.f32.mrb[0].mxu0
      %v4738 = vadd.f32 0.0, %v4737
      %v4739 = vpop.f32.mrb[0].mxu0
      %v4740 = vadd.f32 0.0, %v4739
      %4741 = vmatprep.mubr.bf16.mxu0 0
      %4742 = vmatmul.mubr.bf16.gmra.mrb[0].mxu0 %v4544
      %v4743 = vpop.f32.mrb[0].mxu0
      %v4744 = vadd.f32 0.0, %v4743
      %v4745 = vpop.f32.mrb[0].mxu0
      %v4746 = vadd.f32 0.0, %v4745
      %v4747 = vpop.f32.mrb[0].mxu0
      %v4748 = vadd.f32 0.0, %v4747
      %v4749 = vpop.f32.mrb[0].mxu0
      %v4750 = vadd.f32 0.0, %v4749
      %4751 = vmatprep.mubr.bf16.mxu0 0
      %4752 = vmatmul.mubr.bf16.gmra.mrb[0].mxu0 %v4547
      %v4753 = vpop.f32.mrb[0].mxu0
      %v4754 = vadd.f32 0.0, %v4753
      %v4755 = vpop.f32.mrb[0].mxu0
      %v4756 = vadd.f32 0.0, %v4755
      %v4757 = vpop.f32.mrb[0].mxu0
      %v4758 = vadd.f32 0.0, %v4757
      %v4759 = vpop.f32.mrb[0].mxu0
      %v4760 = vadd.f32 0.0, %v4759
      %4761 = vmatprep.mubr.bf16.mxu0 0
      %4762 = vmatmul.mubr.bf16.gmra.mrb[0].mxu0 %v4550
      %v4763 = vpop.f32.mrb[0].mxu0
      %v4764 = vadd.f32 0.0, %v4763
      %v4765 = vpop.f32.mrb[0].mxu0
      %v4766 = vadd.f32 0.0, %v4765
      %v4767 = vpop.f32.mrb[0].mxu0
      %v4768 = vadd.f32 0.0, %v4767
      %v4769 = vpop.f32.mrb[0].mxu0
      %v4770 = vadd.f32 0.0, %v4769
      %4771 = vmatprep.mubr.bf16.mxu0 0
      %4772 = vmatmul.mubr.bf16.gmra.mrb[0].mxu0 %v4553
      %v4773 = vpop.f32.mrb[0].mxu0
      %v4774 = vadd.f32 0.0, %v4773
      %v4775 = vpop.f32.mrb[0].mxu0
      %v4776 = vadd.f32 0.0, %v4775
      %v4777 = vpop.f32.mrb[0].mxu0
      %v4778 = vadd.f32 0.0, %v4777
      %v4779 = vpop.f32.mrb[0].mxu0
      %v4780 = vadd.f32 0.0, %v4779
      %4781 = vmatprep.mubr.bf16.mxu0 0
      %4782 = vmatmul.mubr.bf16.gmra.mrb[0].mxu0 %v4556
      %v4783 = vpop.f32.mrb[0].mxu0
      %v4784 = vadd.f32 0.0, %v4783
      %v4785 = vpop.f32.mrb[0].mxu0
      %v4786 = vadd.f32 0.0, %v4785
      %v4787 = vpop.f32.mrb[0].mxu0
      %v4788 = vadd.f32 0.0, %v4787
      %v4789 = vpop.f32.mrb[0].mxu0
      %v4790 = vadd.f32 0.0, %v4789
      %4791 = vmatprep.mubr.bf16.mxu0 0
      %4792 = vmatmul.mubr.bf16.gmra.mrb[0].mxu0 %v4559
      %v4793 = vpop.f32.mrb[0].mxu0
      %v4794 = vadd.f32 0.0, %v4793
      %v4795 = vpop.f32.mrb[0].mxu0
      %v4796 = vadd.f32 0.0, %v4795
      %v4797 = vpop.f32.mrb[0].mxu0
      %v4798 = vadd.f32 0.0, %v4797
      %v4799 = vpop.f32.mrb[0].mxu0
      %v4800 = vadd.f32 0.0, %v4799
      %4801 = vdwg.mxu0
      %v4802 = vmax.f32 %v4644, %v4646
      %4803 = vmax.xlane.f32.xlu0 %v4802
      %v4804 = vpop.xlane.xlu0 %4803
      %v4805 = vmax.f32 %v4648, %v4650
      %4806 = vmax.xlane.f32.xlu0 %v4805
      %v4807 = vpop.xlane.xlu0 %4806
      %v4808 = vmax.f32 %v4654, %v4656
      %4809 = vmax.xlane.f32.xlu0 %v4808
      %v4810 = vpop.xlane.xlu0 %4809
      %v4811 = vmax.f32 %v4658, %v4660
      %4812 = vmax.xlane.f32.xlu0 %v4811
      %v4813 = vpop.xlane.xlu0 %4812
      %v4814 = vmax.f32 %v4664, %v4666
      %4815 = vmax.xlane.f32.xlu0 %v4814
      %v4816 = vpop.xlane.xlu0 %4815
      %v4817 = vmax.f32 %v4668, %v4670
      %4818 = vmax.xlane.f32.xlu0 %v4817
      %v4819 = vpop.xlane.xlu0 %4818
      %v4820 = vmax.f32 %v4674, %v4676
      %4821 = vmax.xlane.f32.xlu0 %v4820
      %v4822 = vpop.xlane.xlu0 %4821
      %v4823 = vmax.f32 %v4678, %v4680
      %4824 = vmax.xlane.f32.xlu0 %v4823
      %v4825 = vpop.xlane.xlu0 %4824
      %v4826 = vmax.f32 %v4684, %v4686
      %4827 = vmax.xlane.f32.xlu0 %v4826
      %v4828 = vpop.xlane.xlu0 %4827
      %v4829 = vmax.f32 %v4688, %v4690
      %4830 = vmax.xlane.f32.xlu0 %v4829
      %v4831 = vpop.xlane.xlu0 %4830
      %v4832 = vmax.f32 %v4694, %v4696
      %4833 = vmax.xlane.f32.xlu0 %v4832
      %v4834 = vpop.xlane.xlu0 %4833
      %v4835 = vmax.f32 %v4698, %v4700
      %4836 = vmax.xlane.f32.xlu0 %v4835
      %v4837 = vpop.xlane.xlu0 %4836
      %v4838 = vmax.f32 %v4704, %v4706
      %4839 = vmax.xlane.f32.xlu0 %v4838
      %v4840 = vpop.xlane.xlu0 %4839
      %v4841 = vmax.f32 %v4708, %v4710
      %4842 = vmax.xlane.f32.xlu0 %v4841
      %v4843 = vpop.xlane.xlu0 %4842
      %v4844 = vmax.f32 %v4714, %v4716
      %4845 = vmax.xlane.f32.xlu0 %v4844
      %v4846 = vpop.xlane.xlu0 %4845
      %v4847 = vmax.f32 %v4718, %v4720
      %4848 = vmax.xlane.f32.xlu0 %v4847
      %v4849 = vpop.xlane.xlu0 %4848
      %v4850 = vmax.f32 %v4724, %v4726
      %4851 = vmax.xlane.f32.xlu0 %v4850
      %v4852 = vpop.xlane.xlu0 %4851
      %v4853 = vmax.f32 %v4728, %v4730
      %4854 = vmax.xlane.f32.xlu0 %v4853
      %v4855 = vpop.xlane.xlu0 %4854
      %v4856 = vmax.f32 %v4734, %v4736
      %4857 = vmax.xlane.f32.xlu0 %v4856
      %v4858 = vpop.xlane.xlu0 %4857
      %v4859 = vmax.f32 %v4738, %v4740
      %4860 = vmax.xlane.f32.xlu0 %v4859
      %v4861 = vpop.xlane.xlu0 %4860
      %v4862 = vmax.f32 %v4744, %v4746
      %4863 = vmax.xlane.f32.xlu0 %v4862
      %v4864 = vpop.xlane.xlu0 %4863
      %v4865 = vmax.f32 %v4748, %v4750
      %4866 = vmax.xlane.f32.xlu0 %v4865
      %v4867 = vpop.xlane.xlu0 %4866
      %v4868 = vmax.f32 %v4754, %v4756
      %4869 = vmax.xlane.f32.xlu0 %v4868
      %v4870 = vpop.xlane.xlu0 %4869
      %v4871 = vmax.f32 %v4758, %v4760
      %4872 = vmax.xlane.f32.xlu0 %v4871
      %v4873 = vpop.xlane.xlu0 %4872
      %v4874 = vmax.f32 %v4764, %v4766
      %4875 = vmax.xlane.f32.xlu0 %v4874
      %v4876 = vpop.xlane.xlu0 %4875
      %v4877 = vmax.f32 %v4768, %v4770
      %4878 = vmax.xlane.f32.xlu0 %v4877
      %v4879 = vpop.xlane.xlu0 %4878
      %v4880 = vmax.f32 %v4774, %v4776
      %4881 = vmax.xlane.f32.xlu0 %v4880
      %v4882 = vpop.xlane.xlu0 %4881
      %v4883 = vmax.f32 %v4778, %v4780
      %4884 = vmax.xlane.f32.xlu0 %v4883
      %v4885 = vpop.xlane.xlu0 %4884
      %v4886 = vmax.f32 %v4784, %v4786
      %4887 = vmax.xlane.f32.xlu0 %v4886
      %v4888 = vpop.xlane.xlu0 %4887
      %v4889 = vmax.f32 %v4788, %v4790
      %4890 = vmax.xlane.f32.xlu0 %v4889
      %v4891 = vpop.xlane.xlu0 %4890
      %v4892 = vmax.f32 %v4794, %v4796
      %4893 = vmax.xlane.f32.xlu0 %v4892
      %v4894 = vpop.xlane.xlu0 %4893
      %v4895 = vmax.f32 %v4798, %v4800
      %4896 = vmax.xlane.f32.xlu0 %v4895
      %v4897 = vpop.xlane.xlu0 %4896
      %v4898 = vsub.f32 %v4644, %v4804
      %v4899 = vsub.f32 %v4646, %v4804
      %v4900 = vsub.f32 %v4648, %v4807
      %v4901 = vsub.f32 %v4650, %v4807
      %v4902 = vsub.f32 %v4654, %v4810
      %v4903 = vsub.f32 %v4656, %v4810
      %v4904 = vsub.f32 %v4658, %v4813
      %v4905 = vsub.f32 %v4660, %v4813
      %v4906 = vsub.f32 %v4664, %v4816
      %v4907 = vsub.f32 %v4666, %v4816
      %v4908 = vsub.f32 %v4668, %v4819
      %v4909 = vsub.f32 %v4670, %v4819
      %v4910 = vsub.f32 %v4674, %v4822
      %v4911 = vsub.f32 %v4676, %v4822
      %v4912 = vsub.f32 %v4678, %v4825
      %v4913 = vsub.f32 %v4680, %v4825
      %v4914 = vsub.f32 %v4684, %v4828
      %v4915 = vsub.f32 %v4686, %v4828
      %v4916 = vsub.f32 %v4688, %v4831
      %v4917 = vsub.f32 %v4690, %v4831
      %v4918 = vsub.f32 %v4694, %v4834
      %v4919 = vsub.f32 %v4696, %v4834
      %v4920 = vsub.f32 %v4698, %v4837
      %v4921 = vsub.f32 %v4700, %v4837
      %v4922 = vsub.f32 %v4704, %v4840
      %v4923 = vsub.f32 %v4706, %v4840
      %v4924 = vsub.f32 %v4708, %v4843
      %v4925 = vsub.f32 %v4710, %v4843
      %v4926 = vsub.f32 %v4714, %v4846
      %v4927 = vsub.f32 %v4716, %v4846
      %v4928 = vsub.f32 %v4718, %v4849
      %v4929 = vsub.f32 %v4720, %v4849
      %v4930 = vsub.f32 %v4724, %v4852
      %v4931 = vsub.f32 %v4726, %v4852
      %v4932 = vsub.f32 %v4728, %v4855
      %v4933 = vsub.f32 %v4730, %v4855
      %v4934 = vsub.f32 %v4734, %v4858
      %v4935 = vsub.f32 %v4736, %v4858
      %v4936 = vsub.f32 %v4738, %v4861
      %v4937 = vsub.f32 %v4740, %v4861
      %v4938 = vsub.f32 %v4744, %v4864
      %v4939 = vsub.f32 %v4746, %v4864
      %v4940 = vsub.f32 %v4748, %v4867
      %v4941 = vsub.f32 %v4750, %v4867
      %v4942 = vsub.f32 %v4754, %v4870
      %v4943 = vsub.f32 %v4756, %v4870
      %v4944 = vsub.f32 %v4758, %v4873
      %v4945 = vsub.f32 %v4760, %v4873
      %v4946 = vsub.f32 %v4764, %v4876
      %v4947 = vsub.f32 %v4766, %v4876
      %v4948 = vsub.f32 %v4768, %v4879
      %v4949 = vsub.f32 %v4770, %v4879
      %v4950 = vsub.f32 %v4774, %v4882
      %v4951 = vsub.f32 %v4776, %v4882
      %v4952 = vsub.f32 %v4778, %v4885
      %v4953 = vsub.f32 %v4780, %v4885
      %v4954 = vsub.f32 %v4784, %v4888
      %v4955 = vsub.f32 %v4786, %v4888
      %v4956 = vsub.f32 %v4788, %v4891
      %v4957 = vsub.f32 %v4790, %v4891
      %v4958 = vsub.f32 %v4794, %v4894
      %v4959 = vsub.f32 %v4796, %v4894
      %v4960 = vsub.f32 %v4798, %v4897
      %v4961 = vsub.f32 %v4800, %v4897
      %v4962 = vmul.f32 %v4898, 1.442695
      %v4963 = vpow.pop %v4962
      %v4964 = vmul.f32 %v4899, 1.442695
      %v4965 = vpow.pop %v4964
      %v4966 = vmul.f32 %v4900, 1.442695
      %v4967 = vpow.pop %v4966
      %v4968 = vmul.f32 %v4901, 1.442695
      %v4969 = vpow.pop %v4968
      %v4970 = vmul.f32 %v4902, 1.442695
      %v4971 = vpow.pop %v4970
      %v4972 = vmul.f32 %v4903, 1.442695
      %v4973 = vpow.pop %v4972
      %v4974 = vmul.f32 %v4904, 1.442695
      %v4975 = vpow.pop %v4974
      %v4976 = vmul.f32 %v4905, 1.442695
      %v4977 = vpow.pop %v4976
      %v4978 = vmul.f32 %v4906, 1.442695
      %v4979 = vpow.pop %v4978
      %v4980 = vmul.f32 %v4907, 1.442695
      %v4981 = vpow.pop %v4980
      %v4982 = vmul.f32 %v4908, 1.442695
      %v4983 = vpow.pop %v4982
      %v4984 = vmul.f32 %v4909, 1.442695
      %v4985 = vpow.pop %v4984
      %v4986 = vmul.f32 %v4910, 1.442695
      %v4987 = vpow.pop %v4986
      %v4988 = vmul.f32 %v4911, 1.442695
      %v4989 = vpow.pop %v4988
      %v4990 = vmul.f32 %v4912, 1.442695
      %v4991 = vpow.pop %v4990
      %v4992 = vmul.f32 %v4913, 1.442695
      %v4993 = vpow.pop %v4992
      %v4994 = vmul.f32 %v4914, 1.442695
      %v4995 = vpow.pop %v4994
      %v4996 = vmul.f32 %v4915, 1.442695
      %v4997 = vpow.pop %v4996
      %v4998 = vmul.f32 %v4916, 1.442695
      %v4999 = vpow.pop %v4998
      %v5000 = vmul.f32 %v4917, 1.442695
      %v5001 = vpow.pop %v5000
      %v5002 = vmul.f32 %v4918, 1.442695
      %v5003 = vpow.pop %v5002
      %v5004 = vmul.f32 %v4919, 1.442695
      %v5005 = vpow.pop %v5004
      %v5006 = vmul.f32 %v4920, 1.442695
      %v5007 = vpow.pop %v5006
      %v5008 = vmul.f32 %v4921, 1.442695
      %v5009 = vpow.pop %v5008
      %v5010 = vmul.f32 %v4922, 1.442695
      %v5011 = vpow.pop %v5010
      %v5012 = vmul.f32 %v4923, 1.442695
      %v5013 = vpow.pop %v5012
      %v5014 = vmul.f32 %v4924, 1.442695
      %v5015 = vpow.pop %v5014
      %v5016 = vmul.f32 %v4925, 1.442695
      %v5017 = vpow.pop %v5016
      %v5018 = vmul.f32 %v4926, 1.442695
      %v5019 = vpow.pop %v5018
      %v5020 = vmul.f32 %v4927, 1.442695
      %v5021 = vpow.pop %v5020
      %v5022 = vmul.f32 %v4928, 1.442695
      %v5023 = vpow.pop %v5022
      %v5024 = vmul.f32 %v4929, 1.442695
      %v5025 = vpow.pop %v5024
      %v5026 = vmul.f32 %v4930, 1.442695
      %v5027 = vpow.pop %v5026
      %v5028 = vmul.f32 %v4931, 1.442695
      %v5029 = vpow.pop %v5028
      %v5030 = vmul.f32 %v4932, 1.442695
      %v5031 = vpow.pop %v5030
      %v5032 = vmul.f32 %v4933, 1.442695
      %v5033 = vpow.pop %v5032
      %v5034 = vmul.f32 %v4934, 1.442695
      %v5035 = vpow.pop %v5034
      %v5036 = vmul.f32 %v4935, 1.442695
      %v5037 = vpow.pop %v5036
      %v5038 = vmul.f32 %v4936, 1.442695
      %v5039 = vpow.pop %v5038
      %v5040 = vmul.f32 %v4937, 1.442695
      %v5041 = vpow.pop %v5040
      %v5042 = vmul.f32 %v4938, 1.442695
      %v5043 = vpow.pop %v5042
      %v5044 = vmul.f32 %v4939, 1.442695
      %v5045 = vpow.pop %v5044
      %v5046 = vmul.f32 %v4940, 1.442695
      %v5047 = vpow.pop %v5046
      %v5048 = vmul.f32 %v4941, 1.442695
      %v5049 = vpow.pop %v5048
      %v5050 = vmul.f32 %v4942, 1.442695
      %v5051 = vpow.pop %v5050
      %v5052 = vmul.f32 %v4943, 1.442695
      %v5053 = vpow.pop %v5052
      %v5054 = vmul.f32 %v4944, 1.442695
      %v5055 = vpow.pop %v5054
      %v5056 = vmul.f32 %v4945, 1.442695
      %v5057 = vpow.pop %v5056
      %v5058 = vmul.f32 %v4946, 1.442695
      %v5059 = vpow.pop %v5058
      %v5060 = vmul.f32 %v4947, 1.442695
      %v5061 = vpow.pop %v5060
      %v5062 = vmul.f32 %v4948, 1.442695
      %v5063 = vpow.pop %v5062
      %v5064 = vmul.f32 %v4949, 1.442695
      %v5065 = vpow.pop %v5064
      %v5066 = vmul.f32 %v4950, 1.442695
      %v5067 = vpow.pop %v5066
      %v5068 = vmul.f32 %v4951, 1.442695
      %v5069 = vpow.pop %v5068
      %v5070 = vmul.f32 %v4952, 1.442695
      %v5071 = vpow.pop %v5070
      %v5072 = vmul.f32 %v4953, 1.442695
      %v5073 = vpow.pop %v5072
      %v5074 = vmul.f32 %v4954, 1.442695
      %v5075 = vpow.pop %v5074
      %v5076 = vmul.f32 %v4955, 1.442695
      %v5077 = vpow.pop %v5076
      %v5078 = vmul.f32 %v4956, 1.442695
      %v5079 = vpow.pop %v5078
      %v5080 = vmul.f32 %v4957, 1.442695
      %v5081 = vpow.pop %v5080
      %v5082 = vmul.f32 %v4958, 1.442695
      %v5083 = vpow.pop %v5082
      %v5084 = vmul.f32 %v4959, 1.442695
      %v5085 = vpow.pop %v5084
      %v5086 = vmul.f32 %v4960, 1.442695
      %v5087 = vpow.pop %v5086
      %v5088 = vmul.f32 %v4961, 1.442695
      %v5089 = vpow.pop %v5088
      %v5090 = vadd.f32 %v4963, %v4965
      %5091 = vadd.xlane.f32.xlu0 %v5090
      %v5092 = vpop.xlane.xlu0 %5091
      %v5093 = vadd.f32 %v4967, %v4969
      %5094 = vadd.xlane.f32.xlu0 %v5093
      %v5095 = vpop.xlane.xlu0 %5094
      %v5096 = vadd.f32 %v4971, %v4973
      %5097 = vadd.xlane.f32.xlu0 %v5096
      %v5098 = vpop.xlane.xlu0 %5097
      %v5099 = vadd.f32 %v4975, %v4977
      %5100 = vadd.xlane.f32.xlu0 %v5099
      %v5101 = vpop.xlane.xlu0 %5100
      %v5102 = vadd.f32 %v4979, %v4981
      %5103 = vadd.xlane.f32.xlu0 %v5102
      %v5104 = vpop.xlane.xlu0 %5103
      %v5105 = vadd.f32 %v4983, %v4985
      %5106 = vadd.xlane.f32.xlu0 %v5105
      %v5107 = vpop.xlane.xlu0 %5106
      %v5108 = vadd.f32 %v4987, %v4989
      %5109 = vadd.xlane.f32.xlu0 %v5108
      %v5110 = vpop.xlane.xlu0 %5109
      %v5111 = vadd.f32 %v4991, %v4993
      %5112 = vadd.xlane.f32.xlu0 %v5111
      %v5113 = vpop.xlane.xlu0 %5112
      %v5114 = vadd.f32 %v4995, %v4997
      %5115 = vadd.xlane.f32.xlu0 %v5114
      %v5116 = vpop.xlane.xlu0 %5115
      %v5117 = vadd.f32 %v4999, %v5001
      %5118 = vadd.xlane.f32.xlu0 %v5117
      %v5119 = vpop.xlane.xlu0 %5118
      %v5120 = vadd.f32 %v5003, %v5005
      %5121 = vadd.xlane.f32.xlu0 %v5120
      %v5122 = vpop.xlane.xlu0 %5121
      %v5123 = vadd.f32 %v5007, %v5009
      %5124 = vadd.xlane.f32.xlu0 %v5123
      %v5125 = vpop.xlane.xlu0 %5124
      %v5126 = vadd.f32 %v5011, %v5013
      %5127 = vadd.xlane.f32.xlu0 %v5126
      %v5128 = vpop.xlane.xlu0 %5127
      %v5129 = vadd.f32 %v5015, %v5017
      %5130 = vadd.xlane.f32.xlu0 %v5129
      %v5131 = vpop.xlane.xlu0 %5130
      %v5132 = vadd.f32 %v5019, %v5021
      %5133 = vadd.xlane.f32.xlu0 %v5132
      %v5134 = vpop.xlane.xlu0 %5133
      %v5135 = vadd.f32 %v5023, %v5025
      %5136 = vadd.xlane.f32.xlu0 %v5135
      %v5137 = vpop.xlane.xlu0 %5136
      %v5138 = vadd.f32 %v5027, %v5029
      %5139 = vadd.xlane.f32.xlu0 %v5138
      %v5140 = vpop.xlane.xlu0 %5139
      %v5141 = vadd.f32 %v5031, %v5033
      %5142 = vadd.xlane.f32.xlu0 %v5141
      %v5143 = vpop.xlane.xlu0 %5142
      %v5144 = vadd.f32 %v5035, %v5037
      %5145 = vadd.xlane.f32.xlu0 %v5144
      %v5146 = vpop.xlane.xlu0 %5145
      %v5147 = vadd.f32 %v5039, %v5041
      %5148 = vadd.xlane.f32.xlu0 %v5147
      %v5149 = vpop.xlane.xlu0 %5148
      %v5150 = vadd.f32 %v5043, %v5045
      %5151 = vadd.xlane.f32.xlu0 %v5150
      %v5152 = vpop.xlane.xlu0 %5151
      %v5153 = vadd.f32 %v5047, %v5049
      %5154 = vadd.xlane.f32.xlu0 %v5153
      %v5155 = vpop.xlane.xlu0 %5154
      %v5156 = vadd.f32 %v5051, %v5053
      %5157 = vadd.xlane.f32.xlu0 %v5156
      %v5158 = vpop.xlane.xlu0 %5157
      %v5159 = vadd.f32 %v5055, %v5057
      %5160 = vadd.xlane.f32.xlu0 %v5159
      %v5161 = vpop.xlane.xlu0 %5160
      %v5162 = vadd.f32 %v5059, %v5061
      %5163 = vadd.xlane.f32.xlu0 %v5162
      %v5164 = vpop.xlane.xlu0 %5163
      %v5165 = vadd.f32 %v5063, %v5065
      %5166 = vadd.xlane.f32.xlu0 %v5165
      %v5167 = vpop.xlane.xlu0 %5166
      %v5168 = vadd.f32 %v5067, %v5069
      %5169 = vadd.xlane.f32.xlu0 %v5168
      %v5170 = vpop.xlane.xlu0 %5169
      %v5171 = vadd.f32 %v5071, %v5073
      %5172 = vadd.xlane.f32.xlu0 %v5171
      %v5173 = vpop.xlane.xlu0 %5172
      %v5174 = vadd.f32 %v5075, %v5077
      %5175 = vadd.xlane.f32.xlu0 %v5174
      %v5176 = vpop.xlane.xlu0 %5175
      %v5177 = vadd.f32 %v5079, %v5081
      %5178 = vadd.xlane.f32.xlu0 %v5177
      %v5179 = vpop.xlane.xlu0 %5178
      %v5180 = vadd.f32 %v5083, %v5085
      %5181 = vadd.xlane.f32.xlu0 %v5180
      %v5182 = vpop.xlane.xlu0 %5181
      %v5183 = vadd.f32 %v5087, %v5089
      %5184 = vadd.xlane.f32.xlu0 %v5183
      %v5185 = vpop.xlane.xlu0 %5184
      %v5186 = vpack.c.bf16 %v4967, %v4963
      %v5187 = vpack.c.bf16 %v4969, %v4965
      %v5188 = vpack.c.bf16 %v4975, %v4971
      %v5189 = vpack.c.bf16 %v4977, %v4973
      %v5190 = vpack.c.bf16 %v4983, %v4979
      %v5191 = vpack.c.bf16 %v4985, %v4981
      %v5192 = vpack.c.bf16 %v4991, %v4987
      %v5193 = vpack.c.bf16 %v4993, %v4989
      %v5194 = vpack.c.bf16 %v4999, %v4995
      %v5195 = vpack.c.bf16 %v5001, %v4997
      %v5196 = vpack.c.bf16 %v5007, %v5003
      %v5197 = vpack.c.bf16 %v5009, %v5005
      %v5198 = vpack.c.bf16 %v5015, %v5011
      %v5199 = vpack.c.bf16 %v5017, %v5013
      %v5200 = vpack.c.bf16 %v5023, %v5019
      %v5201 = vpack.c.bf16 %v5025, %v5021
      %v5202 = vpack.c.bf16 %v5031, %v5027
      %v5203 = vpack.c.bf16 %v5033, %v5029
      %v5204 = vpack.c.bf16 %v5039, %v5035
      %v5205 = vpack.c.bf16 %v5041, %v5037
      %v5206 = vpack.c.bf16 %v5047, %v5043
      %v5207 = vpack.c.bf16 %v5049, %v5045
      %v5208 = vpack.c.bf16 %v5055, %v5051
      %v5209 = vpack.c.bf16 %v5057, %v5053
      %v5210 = vpack.c.bf16 %v5063, %v5059
      %v5211 = vpack.c.bf16 %v5065, %v5061
      %v5212 = vpack.c.bf16 %v5071, %v5067
      %v5213 = vpack.c.bf16 %v5073, %v5069
      %v5214 = vpack.c.bf16 %v5079, %v5075
      %v5215 = vpack.c.bf16 %v5081, %v5077
      %v5216 = vpack.c.bf16 %v5087, %v5083
      %v5217 = vpack.c.bf16 %v5089, %v5085
      %5218 = vrot.lane.b32.xlu0 %v1292, 80
      %v5219 = vpop.permute.xlu0 %5218
      %5220 = vrot.lane.b32.xlu0 %v1295, 80
      %v5221 = vpop.permute.xlu0 %5220
      %5222 = vrot.lane.b32.xlu0 %v1298, 80
      %v5223 = vpop.permute.xlu0 %5222
      %5224 = vrot.lane.b32.xlu0 %v1301, 80
      %v5225 = vpop.permute.xlu0 %5224
      %5226 = vrot.lane.b32.xlu0 %v1304, 80
      %v5227 = vpop.permute.xlu0 %5226
      %5228 = vrot.lane.b32.xlu0 %v1307, 80
      %v5229 = vpop.permute.xlu0 %5228
      %5230 = vrot.lane.b32.xlu0 %v1310, 80
      %v5231 = vpop.permute.xlu0 %5230
      %5232 = vrot.lane.b32.xlu0 %v1313, 80
      %v5233 = vpop.permute.xlu0 %5232
      %5234 = vrot.lane.b32.xlu0 %v1316, 80
      %v5235 = vpop.permute.xlu0 %5234
      %5236 = vrot.lane.b32.xlu0 %v1319, 80
      %v5237 = vpop.permute.xlu0 %5236
      %5238 = vrot.lane.b32.xlu0 %v1322, 80
      %v5239 = vpop.permute.xlu0 %5238
      %5240 = vrot.lane.b32.xlu0 %v1325, 80
      %v5241 = vpop.permute.xlu0 %5240
      %5242 = vrot.lane.b32.xlu0 %v1328, 80
      %v5243 = vpop.permute.xlu0 %5242
      %5244 = vrot.lane.b32.xlu0 %v1331, 80
      %v5245 = vpop.permute.xlu0 %5244
      %5246 = vrot.lane.b32.xlu0 %v1334, 80
      %v5247 = vpop.permute.xlu0 %5246
      %5248 = vrot.lane.b32.xlu0 %v1337, 80
      %v5249 = vpop.permute.xlu0 %5248
      %5266 = vmatprep.subr.bf16.mxu0 0
      %5267 = vmatpush1.bf16.msra.mxu0 %v5219
      %5268 = vmatprep.subr.bf16.mxu0 0
      %5269 = vmatpush1.bf16.msra.mxu0 %v5221
      %5270 = vmatprep.subr.bf16.mxu0 0
      %5271 = vmatpush1.bf16.msra.mxu0 %v5223
      %5272 = vmatprep.subr.bf16.mxu0 0
      %5273 = vmatpush1.bf16.msra.mxu0 %v5225
      %5274 = vmatprep.subr.bf16.mxu0 0
      %5275 = vmatpush1.bf16.msra.mxu0 %v5227
      %5276 = vmatprep.subr.bf16.mxu0 0
      %5277 = vmatpush1.bf16.msra.mxu0 %v5229
      %5278 = vmatprep.subr.bf16.mxu0 0
      %5279 = vmatpush1.bf16.msra.mxu0 %v5231
      %5280 = vmatprep.subr.bf16.mxu0 0
      %5281 = vmatpush1.bf16.msra.mxu0 %v5233
      %5282 = vmatprep.subr.bf16.mxu0 0
      %5283 = vmatpush1.bf16.msra.mxu0 %v5235
      %5284 = vmatprep.subr.bf16.mxu0 0
      %5285 = vmatpush1.bf16.msra.mxu0 %v5237
      %5286 = vmatprep.subr.bf16.mxu0 0
      %5287 = vmatpush1.bf16.msra.mxu0 %v5239
      %5288 = vmatprep.subr.bf16.mxu0 0
      %5289 = vmatpush1.bf16.msra.mxu0 %v5241
      %5290 = vmatprep.subr.bf16.mxu0 0
      %5291 = vmatpush1.bf16.msra.mxu0 %v5243
      %5292 = vmatprep.subr.bf16.mxu0 0
      %5293 = vmatpush1.bf16.msra.mxu0 %v5245
      %5294 = vmatprep.subr.bf16.mxu0 0
      %5295 = vmatpush1.bf16.msra.mxu0 %v5247
      %5296 = vmatprep.subr.bf16.mxu0 0
      %5297 = vmatpush1.bf16.msra.mxu0 %v5249
      %5298 = vmatprep.mubr.bf16.mxu0 %v5187
      %5299 = vmatmul.mubr.bf16.gmra.mrb[0].mxu0 %v5186
      %v5300 = vpop.f32.mrb[0].mxu0
      %v5301 = vadd.f32 0.0, %v5300
      %v5302 = vpop.f32.mrb[0].mxu0
      %v5303 = vpop.f32.mrb[0].mxu0
      %v5304 = vadd.f32 0.0, %v5303
      %v5305 = vpop.f32.mrb[0].mxu0
      %5306 = vmatprep.mubr.bf16.mxu0 %v5189
      %5307 = vmatmul.mubr.bf16.gmra.mrb[0].mxu0 %v5188
      %v5308 = vpop.f32.mrb[0].mxu0
      %v5309 = vadd.f32 0.0, %v5308
      %v5310 = vpop.f32.mrb[0].mxu0
      %v5311 = vpop.f32.mrb[0].mxu0
      %v5312 = vadd.f32 0.0, %v5311
      %v5313 = vpop.f32.mrb[0].mxu0
      %5314 = vmatprep.mubr.bf16.mxu0 %v5191
      %5315 = vmatmul.mubr.bf16.gmra.mrb[0].mxu0 %v5190
      %v5316 = vpop.f32.mrb[0].mxu0
      %v5317 = vadd.f32 0.0, %v5316
      %v5318 = vpop.f32.mrb[0].mxu0
      %v5319 = vpop.f32.mrb[0].mxu0
      %v5320 = vadd.f32 0.0, %v5319
      %v5321 = vpop.f32.mrb[0].mxu0
      %5322 = vmatprep.mubr.bf16.mxu0 %v5193
      %5323 = vmatmul.mubr.bf16.gmra.mrb[0].mxu0 %v5192
      %v5324 = vpop.f32.mrb[0].mxu0
      %v5325 = vadd.f32 0.0, %v5324
      %v5326 = vpop.f32.mrb[0].mxu0
      %v5327 = vpop.f32.mrb[0].mxu0
      %v5328 = vadd.f32 0.0, %v5327
      %v5329 = vpop.f32.mrb[0].mxu0
      %5330 = vmatprep.mubr.bf16.mxu0 %v5195
      %5331 = vmatmul.mubr.bf16.gmra.mrb[0].mxu0 %v5194
      %v5332 = vpop.f32.mrb[0].mxu0
      %v5333 = vadd.f32 0.0, %v5332
      %v5334 = vpop.f32.mrb[0].mxu0
      %v5335 = vpop.f32.mrb[0].mxu0
      %v5336 = vadd.f32 0.0, %v5335
      %v5337 = vpop.f32.mrb[0].mxu0
      %5338 = vmatprep.mubr.bf16.mxu0 %v5197
      %5339 = vmatmul.mubr.bf16.gmra.mrb[0].mxu0 %v5196
      %v5340 = vpop.f32.mrb[0].mxu0
      %v5341 = vadd.f32 0.0, %v5340
      %v5342 = vpop.f32.mrb[0].mxu0
      %v5343 = vpop.f32.mrb[0].mxu0
      %v5344 = vadd.f32 0.0, %v5343
      %v5345 = vpop.f32.mrb[0].mxu0
      %5346 = vmatprep.mubr.bf16.mxu0 %v5199
      %5347 = vmatmul.mubr.bf16.gmra.mrb[0].mxu0 %v5198
      %v5348 = vpop.f32.mrb[0].mxu0
      %v5349 = vadd.f32 0.0, %v5348
      %v5350 = vpop.f32.mrb[0].mxu0
      %v5351 = vpop.f32.mrb[0].mxu0
      %v5352 = vadd.f32 0.0, %v5351
      %v5353 = vpop.f32.mrb[0].mxu0
      %5354 = vmatprep.mubr.bf16.mxu0 %v5201
      %5355 = vmatmul.mubr.bf16.gmra.mrb[0].mxu0 %v5200
      %v5356 = vpop.f32.mrb[0].mxu0
      %v5357 = vadd.f32 0.0, %v5356
      %v5358 = vpop.f32.mrb[0].mxu0
      %v5359 = vpop.f32.mrb[0].mxu0
      %v5360 = vadd.f32 0.0, %v5359
      %v5361 = vpop.f32.mrb[0].mxu0
      %5362 = vmatprep.mubr.bf16.mxu0 %v5203
      %5363 = vmatmul.mubr.bf16.gmra.mrb[0].mxu0 %v5202
      %v5364 = vpop.f32.mrb[0].mxu0
      %v5365 = vadd.f32 0.0, %v5364
      %v5366 = vpop.f32.mrb[0].mxu0
      %v5367 = vpop.f32.mrb[0].mxu0
      %v5368 = vadd.f32 0.0, %v5367
      %v5369 = vpop.f32.mrb[0].mxu0
      %5370 = vmatprep.mubr.bf16.mxu0 %v5205
      %5371 = vmatmul.mubr.bf16.gmra.mrb[0].mxu0 %v5204
      %v5372 = vpop.f32.mrb[0].mxu0
      %v5373 = vadd.f32 0.0, %v5372
      %v5374 = vpop.f32.mrb[0].mxu0
      %v5375 = vpop.f32.mrb[0].mxu0
      %v5376 = vadd.f32 0.0, %v5375
      %v5377 = vpop.f32.mrb[0].mxu0
      %5378 = vmatprep.mubr.bf16.mxu0 %v5207
      %5379 = vmatmul.mubr.bf16.gmra.mrb[0].mxu0 %v5206
      %v5380 = vpop.f32.mrb[0].mxu0
      %v5381 = vadd.f32 0.0, %v5380
      %v5382 = vpop.f32.mrb[0].mxu0
      %v5383 = vpop.f32.mrb[0].mxu0
      %v5384 = vadd.f32 0.0, %v5383
      %v5385 = vpop.f32.mrb[0].mxu0
      %5386 = vmatprep.mubr.bf16.mxu0 %v5209
      %5387 = vmatmul.mubr.bf16.gmra.mrb[0].mxu0 %v5208
      %v5388 = vpop.f32.mrb[0].mxu0
      %v5389 = vadd.f32 0.0, %v5388
      %v5390 = vpop.f32.mrb[0].mxu0
      %v5391 = vpop.f32.mrb[0].mxu0
      %v5392 = vadd.f32 0.0, %v5391
      %v5393 = vpop.f32.mrb[0].mxu0
      %5394 = vmatprep.mubr.bf16.mxu0 %v5211
      %5395 = vmatmul.mubr.bf16.gmra.mrb[0].mxu0 %v5210
      %v5396 = vpop.f32.mrb[0].mxu0
      %v5397 = vadd.f32 0.0, %v5396
      %v5398 = vpop.f32.mrb[0].mxu0
      %v5399 = vpop.f32.mrb[0].mxu0
      %v5400 = vadd.f32 0.0, %v5399
      %v5401 = vpop.f32.mrb[0].mxu0
      %5402 = vmatprep.mubr.bf16.mxu0 %v5213
      %5403 = vmatmul.mubr.bf16.gmra.mrb[0].mxu0 %v5212
      %v5404 = vpop.f32.mrb[0].mxu0
      %v5405 = vadd.f32 0.0, %v5404
      %v5406 = vpop.f32.mrb[0].mxu0
      %v5407 = vpop.f32.mrb[0].mxu0
      %v5408 = vadd.f32 0.0, %v5407
      %v5409 = vpop.f32.mrb[0].mxu0
      %5410 = vmatprep.mubr.bf16.mxu0 %v5215
      %5411 = vmatmul.mubr.bf16.gmra.mrb[0].mxu0 %v5214
      %v5412 = vpop.f32.mrb[0].mxu0
      %v5413 = vadd.f32 0.0, %v5412
      %v5414 = vpop.f32.mrb[0].mxu0
      %v5415 = vpop.f32.mrb[0].mxu0
      %v5416 = vadd.f32 0.0, %v5415
      %v5417 = vpop.f32.mrb[0].mxu0
      %5418 = vmatprep.mubr.bf16.mxu0 %v5217
      %5419 = vmatmul.mubr.bf16.gmra.mrb[0].mxu0 %v5216
      %v5420 = vpop.f32.mrb[0].mxu0
      %v5421 = vadd.f32 0.0, %v5420
      %v5422 = vpop.f32.mrb[0].mxu0
      %v5423 = vpop.f32.mrb[0].mxu0
      %v5424 = vadd.f32 0.0, %v5423
      %v5425 = vpop.f32.mrb[0].mxu0
      %5426 = vdwg.mxu0
      %v5427 = vrcp.pop %v5092
      %v5428 = vrcp.pop %v5095
      %v5429 = vrcp.pop %v5098
      %v5430 = vrcp.pop %v5101
      %v5431 = vrcp.pop %v5104
      %v5432 = vrcp.pop %v5107
      %v5433 = vrcp.pop %v5110
      %v5434 = vrcp.pop %v5113
      %v5435 = vrcp.pop %v5116
      %v5436 = vrcp.pop %v5119
      %v5437 = vrcp.pop %v5122
      %v5438 = vrcp.pop %v5125
      %v5439 = vrcp.pop %v5128
      %v5440 = vrcp.pop %v5131
      %v5441 = vrcp.pop %v5134
      %v5442 = vrcp.pop %v5137
      %v5443 = vrcp.pop %v5140
      %v5444 = vrcp.pop %v5143
      %v5445 = vrcp.pop %v5146
      %v5446 = vrcp.pop %v5149
      %v5447 = vrcp.pop %v5152
      %v5448 = vrcp.pop %v5155
      %v5449 = vrcp.pop %v5158
      %v5450 = vrcp.pop %v5161
      %v5451 = vrcp.pop %v5164
      %v5452 = vrcp.pop %v5167
      %v5453 = vrcp.pop %v5170
      %v5454 = vrcp.pop %v5173
      %v5455 = vrcp.pop %v5176
      %v5456 = vrcp.pop %v5179
      %v5457 = vrcp.pop %v5182
      %v5458 = vrcp.pop %v5185
      %v5459 = vmul.f32 %v5301, %v5427
      %v5460 = vmul.f32 %v5304, %v5428
      %v5461 = vmul.f32 %v5309, %v5429
      %v5462 = vmul.f32 %v5312, %v5430
      %v5463 = vmul.f32 %v5317, %v5431
      %v5464 = vmul.f32 %v5320, %v5432
      %v5465 = vmul.f32 %v5325, %v5433
      %v5466 = vmul.f32 %v5328, %v5434
      %v5467 = vmul.f32 %v5333, %v5435
      %v5468 = vmul.f32 %v5336, %v5436
      %v5469 = vmul.f32 %v5341, %v5437
      %v5470 = vmul.f32 %v5344, %v5438
      %v5471 = vmul.f32 %v5349, %v5439
      %v5472 = vmul.f32 %v5352, %v5440
      %v5473 = vmul.f32 %v5357, %v5441
      %v5474 = vmul.f32 %v5360, %v5442
      %v5475 = vmul.f32 %v5365, %v5443
      %v5476 = vmul.f32 %v5368, %v5444
      %v5477 = vmul.f32 %v5373, %v5445
      %v5478 = vmul.f32 %v5376, %v5446
      %v5479 = vmul.f32 %v5381, %v5447
      %v5480 = vmul.f32 %v5384, %v5448
      %v5481 = vmul.f32 %v5389, %v5449
      %v5482 = vmul.f32 %v5392, %v5450
      %v5483 = vmul.f32 %v5397, %v5451
      %v5484 = vmul.f32 %v5400, %v5452
      %v5485 = vmul.f32 %v5405, %v5453
      %v5486 = vmul.f32 %v5408, %v5454
      %v5487 = vmul.f32 %v5413, %v5455
      %v5488 = vmul.f32 %v5416, %v5456
      %v5489 = vmul.f32 %v5421, %v5457
      %v5490 = vmul.f32 %v5424, %v5458
      %v5491 = vpack.c.bf16 %v5460, %v5459
      %v5492 = vpack.c.bf16 %v5462, %v5461
      %v5493 = vpack.c.bf16 %v5464, %v5463
      %v5494 = vpack.c.bf16 %v5466, %v5465
      %v5495 = vpack.c.bf16 %v5468, %v5467
      %v5496 = vpack.c.bf16 %v5470, %v5469
      %v5497 = vpack.c.bf16 %v5472, %v5471
      %v5498 = vpack.c.bf16 %v5474, %v5473
      %v5499 = vpack.c.bf16 %v5476, %v5475
      %v5500 = vpack.c.bf16 %v5478, %v5477
      %v5501 = vpack.c.bf16 %v5480, %v5479
      %v5502 = vpack.c.bf16 %v5482, %v5481
      %v5503 = vpack.c.bf16 %v5484, %v5483
      %v5504 = vpack.c.bf16 %v5486, %v5485
      %v5505 = vpack.c.bf16 %v5488, %v5487
      %v5506 = vpack.c.bf16 %v5490, %v5489
      %5507 = vrot.lane.b32.xlu0 %v1290, 64
      %v5508 = vpop.permute.xlu0 %5507
      %5509 = vrot.lane.b32.xlu0 %v1293, 64
      %v5510 = vpop.permute.xlu0 %5509
      %5511 = vrot.lane.b32.xlu0 %v1296, 64
      %v5512 = vpop.permute.xlu0 %5511
      %5513 = vrot.lane.b32.xlu0 %v1299, 64
      %v5514 = vpop.permute.xlu0 %5513
      %5515 = vrot.lane.b32.xlu0 %v1302, 64
      %v5516 = vpop.permute.xlu0 %5515
      %5517 = vrot.lane.b32.xlu0 %v1305, 64
      %v5518 = vpop.permute.xlu0 %5517
      %5519 = vrot.lane.b32.xlu0 %v1308, 64
      %v5520 = vpop.permute.xlu0 %5519
      %5521 = vrot.lane.b32.xlu0 %v1311, 64
      %v5522 = vpop.permute.xlu0 %5521
      %5523 = vrot.lane.b32.xlu0 %v1314, 64
      %v5524 = vpop.permute.xlu0 %5523
      %5525 = vrot.lane.b32.xlu0 %v1317, 64
      %v5526 = vpop.permute.xlu0 %5525
      %5527 = vrot.lane.b32.xlu0 %v1320, 64
      %v5528 = vpop.permute.xlu0 %5527
      %5529 = vrot.lane.b32.xlu0 %v1323, 64
      %v5530 = vpop.permute.xlu0 %5529
      %5531 = vrot.lane.b32.xlu0 %v1326, 64
      %v5532 = vpop.permute.xlu0 %5531
      %5533 = vrot.lane.b32.xlu0 %v1329, 64
      %v5534 = vpop.permute.xlu0 %5533
      %5535 = vrot.lane.b32.xlu0 %v1332, 64
      %v5536 = vpop.permute.xlu0 %5535
      %5537 = vrot.lane.b32.xlu0 %v1335, 64
      %v5538 = vpop.permute.xlu0 %5537
      %5539 = vrot.lane.b32.xlu0 %v1291, 64
      %v5540 = vpop.permute.xlu0 %5539
      %5541 = vrot.lane.b32.xlu0 %v1294, 64
      %v5542 = vpop.permute.xlu0 %5541
      %5543 = vrot.lane.b32.xlu0 %v1297, 64
      %v5544 = vpop.permute.xlu0 %5543
      %5545 = vrot.lane.b32.xlu0 %v1300, 64
      %v5546 = vpop.permute.xlu0 %5545
      %5547 = vrot.lane.b32.xlu0 %v1303, 64
      %v5548 = vpop.permute.xlu0 %5547
      %5549 = vrot.lane.b32.xlu0 %v1306, 64
      %v5550 = vpop.permute.xlu0 %5549
      %5551 = vrot.lane.b32.xlu0 %v1309, 64
      %v5552 = vpop.permute.xlu0 %5551
      %5553 = vrot.lane.b32.xlu0 %v1312, 64
      %v5554 = vpop.permute.xlu0 %5553
      %5555 = vrot.lane.b32.xlu0 %v1315, 64
      %v5556 = vpop.permute.xlu0 %5555
      %5557 = vrot.lane.b32.xlu0 %v1318, 64
      %v5558 = vpop.permute.xlu0 %5557
      %5559 = vrot.lane.b32.xlu0 %v1321, 64
      %v5560 = vpop.permute.xlu0 %5559
      %5561 = vrot.lane.b32.xlu0 %v1324, 64
      %v5562 = vpop.permute.xlu0 %5561
      %5563 = vrot.lane.b32.xlu0 %v1327, 64
      %v5564 = vpop.permute.xlu0 %5563
      %5565 = vrot.lane.b32.xlu0 %v1330, 64
      %v5566 = vpop.permute.xlu0 %5565
      %5567 = vrot.lane.b32.xlu0 %v1333, 64
      %v5568 = vpop.permute.xlu0 %5567
      %5569 = vrot.lane.b32.xlu0 %v1336, 64
      %v5570 = vpop.permute.xlu0 %5569
      %v5572 = vsel %vm1338, %v5508, 0
      %v5575 = vsel %vm1338, %v5510, 0
      %v5578 = vsel %vm1338, %v5512, 0
      %v5581 = vsel %vm1338, %v5514, 0
      %v5584 = vsel %vm1338, %v5516, 0
      %v5587 = vsel %vm1338, %v5518, 0
      %v5590 = vsel %vm1338, %v5520, 0
      %v5593 = vsel %vm1338, %v5522, 0
      %v5596 = vsel %vm1338, %v5524, 0
      %v5599 = vsel %vm1338, %v5526, 0
      %v5602 = vsel %vm1338, %v5528, 0
      %v5605 = vsel %vm1338, %v5530, 0
      %v5608 = vsel %vm1338, %v5532, 0
      %v5611 = vsel %vm1338, %v5534, 0
      %v5614 = vsel %vm1338, %v5536, 0
      %v5617 = vsel %vm1338, %v5538, 0
      %v5620 = vsel %vm1338, %v5540, 0
      %v5623 = vsel %vm1338, %v5542, 0
      %v5626 = vsel %vm1338, %v5544, 0
      %v5629 = vsel %vm1338, %v5546, 0
      %v5632 = vsel %vm1338, %v5548, 0
      %v5635 = vsel %vm1338, %v5550, 0
      %v5638 = vsel %vm1338, %v5552, 0
      %v5641 = vsel %vm1338, %v5554, 0
      %v5644 = vsel %vm1338, %v5556, 0
      %v5647 = vsel %vm1338, %v5558, 0
      %v5650 = vsel %vm1338, %v5560, 0
      %v5653 = vsel %vm1338, %v5562, 0
      %v5656 = vsel %vm1338, %v5564, 0
      %v5659 = vsel %vm1338, %v5566, 0
      %v5662 = vsel %vm1338, %v5568, 0
      %v5665 = vsel %vm1338, %v5570, 0
      %5667 = vmatprep.subr.bf16.mxu0 0
      %5668 = vmatpush1.bf16.xpose.msra.mxu0 %v5620
      %5669 = vmatprep.subr.bf16.mxu0 0
      %5670 = vmatpush1.bf16.xpose.msra.mxu0 %v5623
      %5671 = vmatprep.subr.bf16.mxu0 0
      %5672 = vmatpush1.bf16.xpose.msra.mxu0 %v5626
      %5673 = vmatprep.subr.bf16.mxu0 0
      %5674 = vmatpush1.bf16.xpose.msra.mxu0 %v5629
      %5675 = vmatprep.subr.bf16.mxu0 0
      %5676 = vmatpush1.bf16.xpose.msra.mxu0 %v5632
      %5677 = vmatprep.subr.bf16.mxu0 0
      %5678 = vmatpush1.bf16.xpose.msra.mxu0 %v5635
      %5679 = vmatprep.subr.bf16.mxu0 0
      %5680 = vmatpush1.bf16.xpose.msra.mxu0 %v5638
      %5681 = vmatprep.subr.bf16.mxu0 0
      %5682 = vmatpush1.bf16.xpose.msra.mxu0 %v5641
      %5683 = vmatprep.subr.bf16.mxu0 0
      %5684 = vmatpush1.bf16.xpose.msra.mxu0 %v5644
      %5685 = vmatprep.subr.bf16.mxu0 0
      %5686 = vmatpush1.bf16.xpose.msra.mxu0 %v5647
      %5687 = vmatprep.subr.bf16.mxu0 0
      %5688 = vmatpush1.bf16.xpose.msra.mxu0 %v5650
      %5689 = vmatprep.subr.bf16.mxu0 0
      %5690 = vmatpush1.bf16.xpose.msra.mxu0 %v5653
      %5691 = vmatprep.subr.bf16.mxu0 0
      %5692 = vmatpush1.bf16.xpose.msra.mxu0 %v5656
      %5693 = vmatprep.subr.bf16.mxu0 0
      %5694 = vmatpush1.bf16.xpose.msra.mxu0 %v5659
      %5695 = vmatprep.subr.bf16.mxu0 0
      %5696 = vmatpush1.bf16.xpose.msra.mxu0 %v5662
      %5697 = vmatprep.subr.bf16.mxu0 0
      %5698 = vmatpush1.bf16.xpose.msra.mxu0 %v5665
      %5699 = vmatprep.mubr.bf16.mxu0 0
      %5700 = vmatmul.mubr.bf16.gmra.mrb[0].mxu0 %v5572
      %v5701 = vpop.f32.mrb[0].mxu0
      %v5702 = vadd.f32 0.0, %v5701
      %v5703 = vpop.f32.mrb[0].mxu0
      %v5704 = vadd.f32 0.0, %v5703
      %v5705 = vpop.f32.mrb[0].mxu0
      %v5706 = vadd.f32 0.0, %v5705
      %v5707 = vpop.f32.mrb[0].mxu0
      %v5708 = vadd.f32 0.0, %v5707
      %5709 = vmatprep.mubr.bf16.mxu0 0
      %5710 = vmatmul.mubr.bf16.gmra.mrb[0].mxu0 %v5575
      %v5711 = vpop.f32.mrb[0].mxu0
      %v5712 = vadd.f32 0.0, %v5711
      %v5713 = vpop.f32.mrb[0].mxu0
      %v5714 = vadd.f32 0.0, %v5713
      %v5715 = vpop.f32.mrb[0].mxu0
      %v5716 = vadd.f32 0.0, %v5715
      %v5717 = vpop.f32.mrb[0].mxu0
      %v5718 = vadd.f32 0.0, %v5717
      %5719 = vmatprep.mubr.bf16.mxu0 0
      %5720 = vmatmul.mubr.bf16.gmra.mrb[0].mxu0 %v5578
      %v5721 = vpop.f32.mrb[0].mxu0
      %v5722 = vadd.f32 0.0, %v5721
      %v5723 = vpop.f32.mrb[0].mxu0
      %v5724 = vadd.f32 0.0, %v5723
      %v5725 = vpop.f32.mrb[0].mxu0
      %v5726 = vadd.f32 0.0, %v5725
      %v5727 = vpop.f32.mrb[0].mxu0
      %v5728 = vadd.f32 0.0, %v5727
      %5729 = vmatprep.mubr.bf16.mxu0 0
      %5730 = vmatmul.mubr.bf16.gmra.mrb[0].mxu0 %v5581
      %v5731 = vpop.f32.mrb[0].mxu0
      %v5732 = vadd.f32 0.0, %v5731
      %v5733 = vpop.f32.mrb[0].mxu0
      %v5734 = vadd.f32 0.0, %v5733
      %v5735 = vpop.f32.mrb[0].mxu0
      %v5736 = vadd.f32 0.0, %v5735
      %v5737 = vpop.f32.mrb[0].mxu0
      %v5738 = vadd.f32 0.0, %v5737
      %5739 = vmatprep.mubr.bf16.mxu0 0
      %5740 = vmatmul.mubr.bf16.gmra.mrb[0].mxu0 %v5584
      %v5741 = vpop.f32.mrb[0].mxu0
      %v5742 = vadd.f32 0.0, %v5741
      %v5743 = vpop.f32.mrb[0].mxu0
      %v5744 = vadd.f32 0.0, %v5743
      %v5745 = vpop.f32.mrb[0].mxu0
      %v5746 = vadd.f32 0.0, %v5745
      %v5747 = vpop.f32.mrb[0].mxu0
      %v5748 = vadd.f32 0.0, %v5747
      %5749 = vmatprep.mubr.bf16.mxu0 0
      %5750 = vmatmul.mubr.bf16.gmra.mrb[0].mxu0 %v5587
      %v5751 = vpop.f32.mrb[0].mxu0
      %v5752 = vadd.f32 0.0, %v5751
      %v5753 = vpop.f32.mrb[0].mxu0
      %v5754 = vadd.f32 0.0, %v5753
      %v5755 = vpop.f32.mrb[0].mxu0
      %v5756 = vadd.f32 0.0, %v5755
      %v5757 = vpop.f32.mrb[0].mxu0
      %v5758 = vadd.f32 0.0, %v5757
      %5759 = vmatprep.mubr.bf16.mxu0 0
      %5760 = vmatmul.mubr.bf16.gmra.mrb[0].mxu0 %v5590
      %v5761 = vpop.f32.mrb[0].mxu0
      %v5762 = vadd.f32 0.0, %v5761
      %v5763 = vpop.f32.mrb[0].mxu0
      %v5764 = vadd.f32 0.0, %v5763
      %v5765 = vpop.f32.mrb[0].mxu0
      %v5766 = vadd.f32 0.0, %v5765
      %v5767 = vpop.f32.mrb[0].mxu0
      %v5768 = vadd.f32 0.0, %v5767
      %5769 = vmatprep.mubr.bf16.mxu0 0
      %5770 = vmatmul.mubr.bf16.gmra.mrb[0].mxu0 %v5593
      %v5771 = vpop.f32.mrb[0].mxu0
      %v5772 = vadd.f32 0.0, %v5771
      %v5773 = vpop.f32.mrb[0].mxu0
      %v5774 = vadd.f32 0.0, %v5773
      %v5775 = vpop.f32.mrb[0].mxu0
      %v5776 = vadd.f32 0.0, %v5775
      %v5777 = vpop.f32.mrb[0].mxu0
      %v5778 = vadd.f32 0.0, %v5777
      %5779 = vmatprep.mubr.bf16.mxu0 0
      %5780 = vmatmul.mubr.bf16.gmra.mrb[0].mxu0 %v5596
      %v5781 = vpop.f32.mrb[0].mxu0
      %v5782 = vadd.f32 0.0, %v5781
      %v5783 = vpop.f32.mrb[0].mxu0
      %v5784 = vadd.f32 0.0, %v5783
      %v5785 = vpop.f32.mrb[0].mxu0
      %v5786 = vadd.f32 0.0, %v5785
      %v5787 = vpop.f32.mrb[0].mxu0
      %v5788 = vadd.f32 0.0, %v5787
      %5789 = vmatprep.mubr.bf16.mxu0 0
      %5790 = vmatmul.mubr.bf16.gmra.mrb[0].mxu0 %v5599
      %v5791 = vpop.f32.mrb[0].mxu0
      %v5792 = vadd.f32 0.0, %v5791
      %v5793 = vpop.f32.mrb[0].mxu0
      %v5794 = vadd.f32 0.0, %v5793
      %v5795 = vpop.f32.mrb[0].mxu0
      %v5796 = vadd.f32 0.0, %v5795
      %v5797 = vpop.f32.mrb[0].mxu0
      %v5798 = vadd.f32 0.0, %v5797
      %5799 = vmatprep.mubr.bf16.mxu0 0
      %5800 = vmatmul.mubr.bf16.gmra.mrb[0].mxu0 %v5602
      %v5801 = vpop.f32.mrb[0].mxu0
      %v5802 = vadd.f32 0.0, %v5801
      %v5803 = vpop.f32.mrb[0].mxu0
      %v5804 = vadd.f32 0.0, %v5803
      %v5805 = vpop.f32.mrb[0].mxu0
      %v5806 = vadd.f32 0.0, %v5805
      %v5807 = vpop.f32.mrb[0].mxu0
      %v5808 = vadd.f32 0.0, %v5807
      %5809 = vmatprep.mubr.bf16.mxu0 0
      %5810 = vmatmul.mubr.bf16.gmra.mrb[0].mxu0 %v5605
      %v5811 = vpop.f32.mrb[0].mxu0
      %v5812 = vadd.f32 0.0, %v5811
      %v5813 = vpop.f32.mrb[0].mxu0
      %v5814 = vadd.f32 0.0, %v5813
      %v5815 = vpop.f32.mrb[0].mxu0
      %v5816 = vadd.f32 0.0, %v5815
      %v5817 = vpop.f32.mrb[0].mxu0
      %v5818 = vadd.f32 0.0, %v5817
      %5819 = vmatprep.mubr.bf16.mxu0 0
      %5820 = vmatmul.mubr.bf16.gmra.mrb[0].mxu0 %v5608
      %v5821 = vpop.f32.mrb[0].mxu0
      %v5822 = vadd.f32 0.0, %v5821
      %v5823 = vpop.f32.mrb[0].mxu0
      %v5824 = vadd.f32 0.0, %v5823
      %v5825 = vpop.f32.mrb[0].mxu0
      %v5826 = vadd.f32 0.0, %v5825
      %v5827 = vpop.f32.mrb[0].mxu0
      %v5828 = vadd.f32 0.0, %v5827
      %5829 = vmatprep.mubr.bf16.mxu0 0
      %5830 = vmatmul.mubr.bf16.gmra.mrb[0].mxu0 %v5611
      %v5831 = vpop.f32.mrb[0].mxu0
      %v5832 = vadd.f32 0.0, %v5831
      %v5833 = vpop.f32.mrb[0].mxu0
      %v5834 = vadd.f32 0.0, %v5833
      %v5835 = vpop.f32.mrb[0].mxu0
      %v5836 = vadd.f32 0.0, %v5835
      %v5837 = vpop.f32.mrb[0].mxu0
      %v5838 = vadd.f32 0.0, %v5837
      %5839 = vmatprep.mubr.bf16.mxu0 0
      %5840 = vmatmul.mubr.bf16.gmra.mrb[0].mxu0 %v5614
      %v5841 = vpop.f32.mrb[0].mxu0
      %v5842 = vadd.f32 0.0, %v5841
      %v5843 = vpop.f32.mrb[0].mxu0
      %v5844 = vadd.f32 0.0, %v5843
      %v5845 = vpop.f32.mrb[0].mxu0
      %v5846 = vadd.f32 0.0, %v5845
      %v5847 = vpop.f32.mrb[0].mxu0
      %v5848 = vadd.f32 0.0, %v5847
      %5849 = vmatprep.mubr.bf16.mxu0 0
      %5850 = vmatmul.mubr.bf16.gmra.mrb[0].mxu0 %v5617
      %v5851 = vpop.f32.mrb[0].mxu0
      %v5852 = vadd.f32 0.0, %v5851
      %v5853 = vpop.f32.mrb[0].mxu0
      %v5854 = vadd.f32 0.0, %v5853
      %v5855 = vpop.f32.mrb[0].mxu0
      %v5856 = vadd.f32 0.0, %v5855
      %v5857 = vpop.f32.mrb[0].mxu0
      %v5858 = vadd.f32 0.0, %v5857
      %5859 = vdwg.mxu0
      %v5860 = vmax.f32 %v5702, %v5704
      %5861 = vmax.xlane.f32.xlu0 %v5860
      %v5862 = vpop.xlane.xlu0 %5861
      %v5863 = vmax.f32 %v5706, %v5708
      %5864 = vmax.xlane.f32.xlu0 %v5863
      %v5865 = vpop.xlane.xlu0 %5864
      %v5866 = vmax.f32 %v5712, %v5714
      %5867 = vmax.xlane.f32.xlu0 %v5866
      %v5868 = vpop.xlane.xlu0 %5867
      %v5869 = vmax.f32 %v5716, %v5718
      %5870 = vmax.xlane.f32.xlu0 %v5869
      %v5871 = vpop.xlane.xlu0 %5870
      %v5872 = vmax.f32 %v5722, %v5724
      %5873 = vmax.xlane.f32.xlu0 %v5872
      %v5874 = vpop.xlane.xlu0 %5873
      %v5875 = vmax.f32 %v5726, %v5728
      %5876 = vmax.xlane.f32.xlu0 %v5875
      %v5877 = vpop.xlane.xlu0 %5876
      %v5878 = vmax.f32 %v5732, %v5734
      %5879 = vmax.xlane.f32.xlu0 %v5878
      %v5880 = vpop.xlane.xlu0 %5879
      %v5881 = vmax.f32 %v5736, %v5738
      %5882 = vmax.xlane.f32.xlu0 %v5881
      %v5883 = vpop.xlane.xlu0 %5882
      %v5884 = vmax.f32 %v5742, %v5744
      %5885 = vmax.xlane.f32.xlu0 %v5884
      %v5886 = vpop.xlane.xlu0 %5885
      %v5887 = vmax.f32 %v5746, %v5748
      %5888 = vmax.xlane.f32.xlu0 %v5887
      %v5889 = vpop.xlane.xlu0 %5888
      %v5890 = vmax.f32 %v5752, %v5754
      %5891 = vmax.xlane.f32.xlu0 %v5890
      %v5892 = vpop.xlane.xlu0 %5891
      %v5893 = vmax.f32 %v5756, %v5758
      %5894 = vmax.xlane.f32.xlu0 %v5893
      %v5895 = vpop.xlane.xlu0 %5894
      %v5896 = vmax.f32 %v5762, %v5764
      %5897 = vmax.xlane.f32.xlu0 %v5896
      %v5898 = vpop.xlane.xlu0 %5897
      %v5899 = vmax.f32 %v5766, %v5768
      %5900 = vmax.xlane.f32.xlu0 %v5899
      %v5901 = vpop.xlane.xlu0 %5900
      %v5902 = vmax.f32 %v5772, %v5774
      %5903 = vmax.xlane.f32.xlu0 %v5902
      %v5904 = vpop.xlane.xlu0 %5903
      %v5905 = vmax.f32 %v5776, %v5778
      %5906 = vmax.xlane.f32.xlu0 %v5905
      %v5907 = vpop.xlane.xlu0 %5906
      %v5908 = vmax.f32 %v5782, %v5784
      %5909 = vmax.xlane.f32.xlu0 %v5908
      %v5910 = vpop.xlane.xlu0 %5909
      %v5911 = vmax.f32 %v5786, %v5788
      %5912 = vmax.xlane.f32.xlu0 %v5911
      %v5913 = vpop.xlane.xlu0 %5912
      %v5914 = vmax.f32 %v5792, %v5794
      %5915 = vmax.xlane.f32.xlu0 %v5914
      %v5916 = vpop.xlane.xlu0 %5915
      %v5917 = vmax.f32 %v5796, %v5798
      %5918 = vmax.xlane.f32.xlu0 %v5917
      %v5919 = vpop.xlane.xlu0 %5918
      %v5920 = vmax.f32 %v5802, %v5804
      %5921 = vmax.xlane.f32.xlu0 %v5920
      %v5922 = vpop.xlane.xlu0 %5921
      %v5923 = vmax.f32 %v5806, %v5808
      %5924 = vmax.xlane.f32.xlu0 %v5923
      %v5925 = vpop.xlane.xlu0 %5924
      %v5926 = vmax.f32 %v5812, %v5814
      %5927 = vmax.xlane.f32.xlu0 %v5926
      %v5928 = vpop.xlane.xlu0 %5927
      %v5929 = vmax.f32 %v5816, %v5818
      %5930 = vmax.xlane.f32.xlu0 %v5929
      %v5931 = vpop.xlane.xlu0 %5930
      %v5932 = vmax.f32 %v5822, %v5824
      %5933 = vmax.xlane.f32.xlu0 %v5932
      %v5934 = vpop.xlane.xlu0 %5933
      %v5935 = vmax.f32 %v5826, %v5828
      %5936 = vmax.xlane.f32.xlu0 %v5935
      %v5937 = vpop.xlane.xlu0 %5936
      %v5938 = vmax.f32 %v5832, %v5834
      %5939 = vmax.xlane.f32.xlu0 %v5938
      %v5940 = vpop.xlane.xlu0 %5939
      %v5941 = vmax.f32 %v5836, %v5838
      %5942 = vmax.xlane.f32.xlu0 %v5941
      %v5943 = vpop.xlane.xlu0 %5942
      %v5944 = vmax.f32 %v5842, %v5844
      %5945 = vmax.xlane.f32.xlu0 %v5944
      %v5946 = vpop.xlane.xlu0 %5945
      %v5947 = vmax.f32 %v5846, %v5848
      %5948 = vmax.xlane.f32.xlu0 %v5947
      %v5949 = vpop.xlane.xlu0 %5948
      %v5950 = vmax.f32 %v5852, %v5854
      %5951 = vmax.xlane.f32.xlu0 %v5950
      %v5952 = vpop.xlane.xlu0 %5951
      %v5953 = vmax.f32 %v5856, %v5858
      %5954 = vmax.xlane.f32.xlu0 %v5953
      %v5955 = vpop.xlane.xlu0 %5954
      %v5956 = vsub.f32 %v5702, %v5862
      %v5957 = vsub.f32 %v5704, %v5862
      %v5958 = vsub.f32 %v5706, %v5865
      %v5959 = vsub.f32 %v5708, %v5865
      %v5960 = vsub.f32 %v5712, %v5868
      %v5961 = vsub.f32 %v5714, %v5868
      %v5962 = vsub.f32 %v5716, %v5871
      %v5963 = vsub.f32 %v5718, %v5871
      %v5964 = vsub.f32 %v5722, %v5874
      %v5965 = vsub.f32 %v5724, %v5874
      %v5966 = vsub.f32 %v5726, %v5877
      %v5967 = vsub.f32 %v5728, %v5877
      %v5968 = vsub.f32 %v5732, %v5880
      %v5969 = vsub.f32 %v5734, %v5880
      %v5970 = vsub.f32 %v5736, %v5883
      %v5971 = vsub.f32 %v5738, %v5883
      %v5972 = vsub.f32 %v5742, %v5886
      %v5973 = vsub.f32 %v5744, %v5886
      %v5974 = vsub.f32 %v5746, %v5889
      %v5975 = vsub.f32 %v5748, %v5889
      %v5976 = vsub.f32 %v5752, %v5892
      %v5977 = vsub.f32 %v5754, %v5892
      %v5978 = vsub.f32 %v5756, %v5895
      %v5979 = vsub.f32 %v5758, %v5895
      %v5980 = vsub.f32 %v5762, %v5898
      %v5981 = vsub.f32 %v5764, %v5898
      %v5982 = vsub.f32 %v5766, %v5901
      %v5983 = vsub.f32 %v5768, %v5901
      %v5984 = vsub.f32 %v5772, %v5904
      %v5985 = vsub.f32 %v5774, %v5904
      %v5986 = vsub.f32 %v5776, %v5907
      %v5987 = vsub.f32 %v5778, %v5907
      %v5988 = vsub.f32 %v5782, %v5910
      %v5989 = vsub.f32 %v5784, %v5910
      %v5990 = vsub.f32 %v5786, %v5913
      %v5991 = vsub.f32 %v5788, %v5913
      %v5992 = vsub.f32 %v5792, %v5916
      %v5993 = vsub.f32 %v5794, %v5916
      %v5994 = vsub.f32 %v5796, %v5919
      %v5995 = vsub.f32 %v5798, %v5919
      %v5996 = vsub.f32 %v5802, %v5922
      %v5997 = vsub.f32 %v5804, %v5922
      %v5998 = vsub.f32 %v5806, %v5925
      %v5999 = vsub.f32 %v5808, %v5925
      %v6000 = vsub.f32 %v5812, %v5928
      %v6001 = vsub.f32 %v5814, %v5928
      %v6002 = vsub.f32 %v5816, %v5931
      %v6003 = vsub.f32 %v5818, %v5931
      %v6004 = vsub.f32 %v5822, %v5934
      %v6005 = vsub.f32 %v5824, %v5934
      %v6006 = vsub.f32 %v5826, %v5937
      %v6007 = vsub.f32 %v5828, %v5937
      %v6008 = vsub.f32 %v5832, %v5940
      %v6009 = vsub.f32 %v5834, %v5940
      %v6010 = vsub.f32 %v5836, %v5943
      %v6011 = vsub.f32 %v5838, %v5943
      %v6012 = vsub.f32 %v5842, %v5946
      %v6013 = vsub.f32 %v5844, %v5946
      %v6014 = vsub.f32 %v5846, %v5949
      %v6015 = vsub.f32 %v5848, %v5949
      %v6016 = vsub.f32 %v5852, %v5952
      %v6017 = vsub.f32 %v5854, %v5952
      %v6018 = vsub.f32 %v5856, %v5955
      %v6019 = vsub.f32 %v5858, %v5955
      %v6020 = vmul.f32 %v5956, 1.442695
      %v6021 = vpow.pop %v6020
      %v6022 = vmul.f32 %v5957, 1.442695
      %v6023 = vpow.pop %v6022
      %v6024 = vmul.f32 %v5958, 1.442695
      %v6025 = vpow.pop %v6024
      %v6026 = vmul.f32 %v5959, 1.442695
      %v6027 = vpow.pop %v6026
      %v6028 = vmul.f32 %v5960, 1.442695
      %v6029 = vpow.pop %v6028
      %v6030 = vmul.f32 %v5961, 1.442695
      %v6031 = vpow.pop %v6030
      %v6032 = vmul.f32 %v5962, 1.442695
      %v6033 = vpow.pop %v6032
      %v6034 = vmul.f32 %v5963, 1.442695
      %v6035 = vpow.pop %v6034
      %v6036 = vmul.f32 %v5964, 1.442695
      %v6037 = vpow.pop %v6036
      %v6038 = vmul.f32 %v5965, 1.442695
      %v6039 = vpow.pop %v6038
      %v6040 = vmul.f32 %v5966, 1.442695
      %v6041 = vpow.pop %v6040
      %v6042 = vmul.f32 %v5967, 1.442695
      %v6043 = vpow.pop %v6042
      %v6044 = vmul.f32 %v5968, 1.442695
      %v6045 = vpow.pop %v6044
      %v6046 = vmul.f32 %v5969, 1.442695
      %v6047 = vpow.pop %v6046
      %v6048 = vmul.f32 %v5970, 1.442695
      %v6049 = vpow.pop %v6048
      %v6050 = vmul.f32 %v5971, 1.442695
      %v6051 = vpow.pop %v6050
      %v6052 = vmul.f32 %v5972, 1.442695
      %v6053 = vpow.pop %v6052
      %v6054 = vmul.f32 %v5973, 1.442695
      %v6055 = vpow.pop %v6054
      %v6056 = vmul.f32 %v5974, 1.442695
      %v6057 = vpow.pop %v6056
      %v6058 = vmul.f32 %v5975, 1.442695
      %v6059 = vpow.pop %v6058
      %v6060 = vmul.f32 %v5976, 1.442695
      %v6061 = vpow.pop %v6060
      %v6062 = vmul.f32 %v5977, 1.442695
      %v6063 = vpow.pop %v6062
      %v6064 = vmul.f32 %v5978, 1.442695
      %v6065 = vpow.pop %v6064
      %v6066 = vmul.f32 %v5979, 1.442695
      %v6067 = vpow.pop %v6066
      %v6068 = vmul.f32 %v5980, 1.442695
      %v6069 = vpow.pop %v6068
      %v6070 = vmul.f32 %v5981, 1.442695
      %v6071 = vpow.pop %v6070
      %v6072 = vmul.f32 %v5982, 1.442695
      %v6073 = vpow.pop %v6072
      %v6074 = vmul.f32 %v5983, 1.442695
      %v6075 = vpow.pop %v6074
      %v6076 = vmul.f32 %v5984, 1.442695
      %v6077 = vpow.pop %v6076
      %v6078 = vmul.f32 %v5985, 1.442695
      %v6079 = vpow.pop %v6078
      %v6080 = vmul.f32 %v5986, 1.442695
      %v6081 = vpow.pop %v6080
      %v6082 = vmul.f32 %v5987, 1.442695
      %v6083 = vpow.pop %v6082
      %v6084 = vmul.f32 %v5988, 1.442695
      %v6085 = vpow.pop %v6084
      %v6086 = vmul.f32 %v5989, 1.442695
      %v6087 = vpow.pop %v6086
      %v6088 = vmul.f32 %v5990, 1.442695
      %v6089 = vpow.pop %v6088
      %v6090 = vmul.f32 %v5991, 1.442695
      %v6091 = vpow.pop %v6090
      %v6092 = vmul.f32 %v5992, 1.442695
      %v6093 = vpow.pop %v6092
      %v6094 = vmul.f32 %v5993, 1.442695
      %v6095 = vpow.pop %v6094
      %v6096 = vmul.f32 %v5994, 1.442695
      %v6097 = vpow.pop %v6096
      %v6098 = vmul.f32 %v5995, 1.442695
      %v6099 = vpow.pop %v6098
      %v6100 = vmul.f32 %v5996, 1.442695
      %v6101 = vpow.pop %v6100
      %v6102 = vmul.f32 %v5997, 1.442695
      %v6103 = vpow.pop %v6102
      %v6104 = vmul.f32 %v5998, 1.442695
      %v6105 = vpow.pop %v6104
      %v6106 = vmul.f32 %v5999, 1.442695
      %v6107 = vpow.pop %v6106
      %v6108 = vmul.f32 %v6000, 1.442695
      %v6109 = vpow.pop %v6108
      %v6110 = vmul.f32 %v6001, 1.442695
      %v6111 = vpow.pop %v6110
      %v6112 = vmul.f32 %v6002, 1.442695
      %v6113 = vpow.pop %v6112
      %v6114 = vmul.f32 %v6003, 1.442695
      %v6115 = vpow.pop %v6114
      %v6116 = vmul.f32 %v6004, 1.442695
      %v6117 = vpow.pop %v6116
      %v6118 = vmul.f32 %v6005, 1.442695
      %v6119 = vpow.pop %v6118
      %v6120 = vmul.f32 %v6006, 1.442695
      %v6121 = vpow.pop %v6120
      %v6122 = vmul.f32 %v6007, 1.442695
      %v6123 = vpow.pop %v6122
      %v6124 = vmul.f32 %v6008, 1.442695
      %v6125 = vpow.pop %v6124
      %v6126 = vmul.f32 %v6009, 1.442695
      %v6127 = vpow.pop %v6126
      %v6128 = vmul.f32 %v6010, 1.442695
      %v6129 = vpow.pop %v6128
      %v6130 = vmul.f32 %v6011, 1.442695
      %v6131 = vpow.pop %v6130
      %v6132 = vmul.f32 %v6012, 1.442695
      %v6133 = vpow.pop %v6132
      %v6134 = vmul.f32 %v6013, 1.442695
      %v6135 = vpow.pop %v6134
      %v6136 = vmul.f32 %v6014, 1.442695
      %v6137 = vpow.pop %v6136
      %v6138 = vmul.f32 %v6015, 1.442695
      %v6139 = vpow.pop %v6138
      %v6140 = vmul.f32 %v6016, 1.442695
      %v6141 = vpow.pop %v6140
      %v6142 = vmul.f32 %v6017, 1.442695
      %v6143 = vpow.pop %v6142
      %v6144 = vmul.f32 %v6018, 1.442695
      %v6145 = vpow.pop %v6144
      %v6146 = vmul.f32 %v6019, 1.442695
      %v6147 = vpow.pop %v6146
      %v6148 = vadd.f32 %v6021, %v6023
      %6149 = vadd.xlane.f32.xlu0 %v6148
      %v6150 = vpop.xlane.xlu0 %6149
      %v6151 = vadd.f32 %v6025, %v6027
      %6152 = vadd.xlane.f32.xlu0 %v6151
      %v6153 = vpop.xlane.xlu0 %6152
      %v6154 = vadd.f32 %v6029, %v6031
      %6155 = vadd.xlane.f32.xlu0 %v6154
      %v6156 = vpop.xlane.xlu0 %6155
      %v6157 = vadd.f32 %v6033, %v6035
      %6158 = vadd.xlane.f32.xlu0 %v6157
      %v6159 = vpop.xlane.xlu0 %6158
      %v6160 = vadd.f32 %v6037, %v6039
      %6161 = vadd.xlane.f32.xlu0 %v6160
      %v6162 = vpop.xlane.xlu0 %6161
      %v6163 = vadd.f32 %v6041, %v6043
      %6164 = vadd.xlane.f32.xlu0 %v6163
      %v6165 = vpop.xlane.xlu0 %6164
      %v6166 = vadd.f32 %v6045, %v6047
      %6167 = vadd.xlane.f32.xlu0 %v6166
      %v6168 = vpop.xlane.xlu0 %6167
      %v6169 = vadd.f32 %v6049, %v6051
      %6170 = vadd.xlane.f32.xlu0 %v6169
      %v6171 = vpop.xlane.xlu0 %6170
      %v6172 = vadd.f32 %v6053, %v6055
      %6173 = vadd.xlane.f32.xlu0 %v6172
      %v6174 = vpop.xlane.xlu0 %6173
      %v6175 = vadd.f32 %v6057, %v6059
      %6176 = vadd.xlane.f32.xlu0 %v6175
      %v6177 = vpop.xlane.xlu0 %6176
      %v6178 = vadd.f32 %v6061, %v6063
      %6179 = vadd.xlane.f32.xlu0 %v6178
      %v6180 = vpop.xlane.xlu0 %6179
      %v6181 = vadd.f32 %v6065, %v6067
      %6182 = vadd.xlane.f32.xlu0 %v6181
      %v6183 = vpop.xlane.xlu0 %6182
      %v6184 = vadd.f32 %v6069, %v6071
      %6185 = vadd.xlane.f32.xlu0 %v6184
      %v6186 = vpop.xlane.xlu0 %6185
      %v6187 = vadd.f32 %v6073, %v6075
      %6188 = vadd.xlane.f32.xlu0 %v6187
      %v6189 = vpop.xlane.xlu0 %6188
      %v6190 = vadd.f32 %v6077, %v6079
      %6191 = vadd.xlane.f32.xlu0 %v6190
      %v6192 = vpop.xlane.xlu0 %6191
      %v6193 = vadd.f32 %v6081, %v6083
      %6194 = vadd.xlane.f32.xlu0 %v6193
      %v6195 = vpop.xlane.xlu0 %6194
      %v6196 = vadd.f32 %v6085, %v6087
      %6197 = vadd.xlane.f32.xlu0 %v6196
      %v6198 = vpop.xlane.xlu0 %6197
      %v6199 = vadd.f32 %v6089, %v6091
      %6200 = vadd.xlane.f32.xlu0 %v6199
      %v6201 = vpop.xlane.xlu0 %6200
      %v6202 = vadd.f32 %v6093, %v6095
      %6203 = vadd.xlane.f32.xlu0 %v6202
      %v6204 = vpop.xlane.xlu0 %6203
      %v6205 = vadd.f32 %v6097, %v6099
      %6206 = vadd.xlane.f32.xlu0 %v6205
      %v6207 = vpop.xlane.xlu0 %6206
      %v6208 = vadd.f32 %v6101, %v6103
      %6209 = vadd.xlane.f32.xlu0 %v6208
      %v6210 = vpop.xlane.xlu0 %6209
      %v6211 = vadd.f32 %v6105, %v6107
      %6212 = vadd.xlane.f32.xlu0 %v6211
      %v6213 = vpop.xlane.xlu0 %6212
      %v6214 = vadd.f32 %v6109, %v6111
      %6215 = vadd.xlane.f32.xlu0 %v6214
      %v6216 = vpop.xlane.xlu0 %6215
      %v6217 = vadd.f32 %v6113, %v6115
      %6218 = vadd.xlane.f32.xlu0 %v6217
      %v6219 = vpop.xlane.xlu0 %6218
      %v6220 = vadd.f32 %v6117, %v6119
      %6221 = vadd.xlane.f32.xlu0 %v6220
      %v6222 = vpop.xlane.xlu0 %6221
      %v6223 = vadd.f32 %v6121, %v6123
      %6224 = vadd.xlane.f32.xlu0 %v6223
      %v6225 = vpop.xlane.xlu0 %6224
      %v6226 = vadd.f32 %v6125, %v6127
      %6227 = vadd.xlane.f32.xlu0 %v6226
      %v6228 = vpop.xlane.xlu0 %6227
      %v6229 = vadd.f32 %v6129, %v6131
      %6230 = vadd.xlane.f32.xlu0 %v6229
      %v6231 = vpop.xlane.xlu0 %6230
      %v6232 = vadd.f32 %v6133, %v6135
      %6233 = vadd.xlane.f32.xlu0 %v6232
      %v6234 = vpop.xlane.xlu0 %6233
      %v6235 = vadd.f32 %v6137, %v6139
      %6236 = vadd.xlane.f32.xlu0 %v6235
      %v6237 = vpop.xlane.xlu0 %6236
      %v6238 = vadd.f32 %v6141, %v6143
      %6239 = vadd.xlane.f32.xlu0 %v6238
      %v6240 = vpop.xlane.xlu0 %6239
      %v6241 = vadd.f32 %v6145, %v6147
      %6242 = vadd.xlane.f32.xlu0 %v6241
      %v6243 = vpop.xlane.xlu0 %6242
      %v6244 = vpack.c.bf16 %v6025, %v6021
      %v6245 = vpack.c.bf16 %v6027, %v6023
      %v6246 = vpack.c.bf16 %v6033, %v6029
      %v6247 = vpack.c.bf16 %v6035, %v6031
      %v6248 = vpack.c.bf16 %v6041, %v6037
      %v6249 = vpack.c.bf16 %v6043, %v6039
      %v6250 = vpack.c.bf16 %v6049, %v6045
      %v6251 = vpack.c.bf16 %v6051, %v6047
      %v6252 = vpack.c.bf16 %v6057, %v6053
      %v6253 = vpack.c.bf16 %v6059, %v6055
      %v6254 = vpack.c.bf16 %v6065, %v6061
      %v6255 = vpack.c.bf16 %v6067, %v6063
      %v6256 = vpack.c.bf16 %v6073, %v6069
      %v6257 = vpack.c.bf16 %v6075, %v6071
      %v6258 = vpack.c.bf16 %v6081, %v6077
      %v6259 = vpack.c.bf16 %v6083, %v6079
      %v6260 = vpack.c.bf16 %v6089, %v6085
      %v6261 = vpack.c.bf16 %v6091, %v6087
      %v6262 = vpack.c.bf16 %v6097, %v6093
      %v6263 = vpack.c.bf16 %v6099, %v6095
      %v6264 = vpack.c.bf16 %v6105, %v6101
      %v6265 = vpack.c.bf16 %v6107, %v6103
      %v6266 = vpack.c.bf16 %v6113, %v6109
      %v6267 = vpack.c.bf16 %v6115, %v6111
      %v6268 = vpack.c.bf16 %v6121, %v6117
      %v6269 = vpack.c.bf16 %v6123, %v6119
      %v6270 = vpack.c.bf16 %v6129, %v6125
      %v6271 = vpack.c.bf16 %v6131, %v6127
      %v6272 = vpack.c.bf16 %v6137, %v6133
      %v6273 = vpack.c.bf16 %v6139, %v6135
      %v6274 = vpack.c.bf16 %v6145, %v6141
      %v6275 = vpack.c.bf16 %v6147, %v6143
      %6276 = vrot.lane.b32.xlu0 %v1292, 64
      %v6277 = vpop.permute.xlu0 %6276
      %6278 = vrot.lane.b32.xlu0 %v1295, 64
      %v6279 = vpop.permute.xlu0 %6278
      %6280 = vrot.lane.b32.xlu0 %v1298, 64
      %v6281 = vpop.permute.xlu0 %6280
      %6282 = vrot.lane.b32.xlu0 %v1301, 64
      %v6283 = vpop.permute.xlu0 %6282
      %6284 = vrot.lane.b32.xlu0 %v1304, 64
      %v6285 = vpop.permute.xlu0 %6284
      %6286 = vrot.lane.b32.xlu0 %v1307, 64
      %v6287 = vpop.permute.xlu0 %6286
      %6288 = vrot.lane.b32.xlu0 %v1310, 64
      %v6289 = vpop.permute.xlu0 %6288
      %6290 = vrot.lane.b32.xlu0 %v1313, 64
      %v6291 = vpop.permute.xlu0 %6290
      %6292 = vrot.lane.b32.xlu0 %v1316, 64
      %v6293 = vpop.permute.xlu0 %6292
      %6294 = vrot.lane.b32.xlu0 %v1319, 64
      %v6295 = vpop.permute.xlu0 %6294
      %6296 = vrot.lane.b32.xlu0 %v1322, 64
      %v6297 = vpop.permute.xlu0 %6296
      %6298 = vrot.lane.b32.xlu0 %v1325, 64
      %v6299 = vpop.permute.xlu0 %6298
      %6300 = vrot.lane.b32.xlu0 %v1328, 64
      %v6301 = vpop.permute.xlu0 %6300
      %6302 = vrot.lane.b32.xlu0 %v1331, 64
      %v6303 = vpop.permute.xlu0 %6302
      %6304 = vrot.lane.b32.xlu0 %v1334, 64
      %v6305 = vpop.permute.xlu0 %6304
      %6306 = vrot.lane.b32.xlu0 %v1337, 64
      %v6307 = vpop.permute.xlu0 %6306
      %6324 = vmatprep.subr.bf16.mxu0 0
      %6325 = vmatpush1.bf16.msra.mxu0 %v6277
      %6326 = vmatprep.subr.bf16.mxu0 0
      %6327 = vmatpush1.bf16.msra.mxu0 %v6279
      %6328 = vmatprep.subr.bf16.mxu0 0
      %6329 = vmatpush1.bf16.msra.mxu0 %v6281
      %6330 = vmatprep.subr.bf16.mxu0 0
      %6331 = vmatpush1.bf16.msra.mxu0 %v6283
      %6332 = vmatprep.subr.bf16.mxu0 0
      %6333 = vmatpush1.bf16.msra.mxu0 %v6285
      %6334 = vmatprep.subr.bf16.mxu0 0
      %6335 = vmatpush1.bf16.msra.mxu0 %v6287
      %6336 = vmatprep.subr.bf16.mxu0 0
      %6337 = vmatpush1.bf16.msra.mxu0 %v6289
      %6338 = vmatprep.subr.bf16.mxu0 0
      %6339 = vmatpush1.bf16.msra.mxu0 %v6291
      %6340 = vmatprep.subr.bf16.mxu0 0
      %6341 = vmatpush1.bf16.msra.mxu0 %v6293
      %6342 = vmatprep.subr.bf16.mxu0 0
      %6343 = vmatpush1.bf16.msra.mxu0 %v6295
      %6344 = vmatprep.subr.bf16.mxu0 0
      %6345 = vmatpush1.bf16.msra.mxu0 %v6297
      %6346 = vmatprep.subr.bf16.mxu0 0
      %6347 = vmatpush1.bf16.msra.mxu0 %v6299
      %6348 = vmatprep.subr.bf16.mxu0 0
      %6349 = vmatpush1.bf16.msra.mxu0 %v6301
      %6350 = vmatprep.subr.bf16.mxu0 0
      %6351 = vmatpush1.bf16.msra.mxu0 %v6303
      %6352 = vmatprep.subr.bf16.mxu0 0
      %6353 = vmatpush1.bf16.msra.mxu0 %v6305
      %6354 = vmatprep.subr.bf16.mxu0 0
      %6355 = vmatpush1.bf16.msra.mxu0 %v6307
      %6356 = vmatprep.mubr.bf16.mxu0 %v6245
      %6357 = vmatmul.mubr.bf16.gmra.mrb[0].mxu0 %v6244
      %v6358 = vpop.f32.mrb[0].mxu0
      %v6359 = vadd.f32 0.0, %v6358
      %v6360 = vpop.f32.mrb[0].mxu0
      %v6361 = vpop.f32.mrb[0].mxu0
      %v6362 = vadd.f32 0.0, %v6361
      %v6363 = vpop.f32.mrb[0].mxu0
      %6364 = vmatprep.mubr.bf16.mxu0 %v6247
      %6365 = vmatmul.mubr.bf16.gmra.mrb[0].mxu0 %v6246
      %v6366 = vpop.f32.mrb[0].mxu0
      %v6367 = vadd.f32 0.0, %v6366
      %v6368 = vpop.f32.mrb[0].mxu0
      %v6369 = vpop.f32.mrb[0].mxu0
      %v6370 = vadd.f32 0.0, %v6369
      %v6371 = vpop.f32.mrb[0].mxu0
      %6372 = vmatprep.mubr.bf16.mxu0 %v6249
      %6373 = vmatmul.mubr.bf16.gmra.mrb[0].mxu0 %v6248
      %v6374 = vpop.f32.mrb[0].mxu0
      %v6375 = vadd.f32 0.0, %v6374
      %v6376 = vpop.f32.mrb[0].mxu0
      %v6377 = vpop.f32.mrb[0].mxu0
      %v6378 = vadd.f32 0.0, %v6377
      %v6379 = vpop.f32.mrb[0].mxu0
      %6380 = vmatprep.mubr.bf16.mxu0 %v6251
      %6381 = vmatmul.mubr.bf16.gmra.mrb[0].mxu0 %v6250
      %v6382 = vpop.f32.mrb[0].mxu0
      %v6383 = vadd.f32 0.0, %v6382
      %v6384 = vpop.f32.mrb[0].mxu0
      %v6385 = vpop.f32.mrb[0].mxu0
      %v6386 = vadd.f32 0.0, %v6385
      %v6387 = vpop.f32.mrb[0].mxu0
      %6388 = vmatprep.mubr.bf16.mxu0 %v6253
      %6389 = vmatmul.mubr.bf16.gmra.mrb[0].mxu0 %v6252
      %v6390 = vpop.f32.mrb[0].mxu0
      %v6391 = vadd.f32 0.0, %v6390
      %v6392 = vpop.f32.mrb[0].mxu0
      %v6393 = vpop.f32.mrb[0].mxu0
      %v6394 = vadd.f32 0.0, %v6393
      %v6395 = vpop.f32.mrb[0].mxu0
      %6396 = vmatprep.mubr.bf16.mxu0 %v6255
      %6397 = vmatmul.mubr.bf16.gmra.mrb[0].mxu0 %v6254
      %v6398 = vpop.f32.mrb[0].mxu0
      %v6399 = vadd.f32 0.0, %v6398
      %v6400 = vpop.f32.mrb[0].mxu0
      %v6401 = vpop.f32.mrb[0].mxu0
      %v6402 = vadd.f32 0.0, %v6401
      %v6403 = vpop.f32.mrb[0].mxu0
      %6404 = vmatprep.mubr.bf16.mxu0 %v6257
      %6405 = vmatmul.mubr.bf16.gmra.mrb[0].mxu0 %v6256
      %v6406 = vpop.f32.mrb[0].mxu0
      %v6407 = vadd.f32 0.0, %v6406
      %v6408 = vpop.f32.mrb[0].mxu0
      %v6409 = vpop.f32.mrb[0].mxu0
      %v6410 = vadd.f32 0.0, %v6409
      %v6411 = vpop.f32.mrb[0].mxu0
      %6412 = vmatprep.mubr.bf16.mxu0 %v6259
      %6413 = vmatmul.mubr.bf16.gmra.mrb[0].mxu0 %v6258
      %v6414 = vpop.f32.mrb[0].mxu0
      %v6415 = vadd.f32 0.0, %v6414
      %v6416 = vpop.f32.mrb[0].mxu0
      %v6417 = vpop.f32.mrb[0].mxu0
      %v6418 = vadd.f32 0.0, %v6417
      %v6419 = vpop.f32.mrb[0].mxu0
      %6420 = vmatprep.mubr.bf16.mxu0 %v6261
      %6421 = vmatmul.mubr.bf16.gmra.mrb[0].mxu0 %v6260
      %v6422 = vpop.f32.mrb[0].mxu0
      %v6423 = vadd.f32 0.0, %v6422
      %v6424 = vpop.f32.mrb[0].mxu0
      %v6425 = vpop.f32.mrb[0].mxu0
      %v6426 = vadd.f32 0.0, %v6425
      %v6427 = vpop.f32.mrb[0].mxu0
      %6428 = vmatprep.mubr.bf16.mxu0 %v6263
      %6429 = vmatmul.mubr.bf16.gmra.mrb[0].mxu0 %v6262
      %v6430 = vpop.f32.mrb[0].mxu0
      %v6431 = vadd.f32 0.0, %v6430
      %v6432 = vpop.f32.mrb[0].mxu0
      %v6433 = vpop.f32.mrb[0].mxu0
      %v6434 = vadd.f32 0.0, %v6433
      %v6435 = vpop.f32.mrb[0].mxu0
      %6436 = vmatprep.mubr.bf16.mxu0 %v6265
      %6437 = vmatmul.mubr.bf16.gmra.mrb[0].mxu0 %v6264
      %v6438 = vpop.f32.mrb[0].mxu0
      %v6439 = vadd.f32 0.0, %v6438
      %v6440 = vpop.f32.mrb[0].mxu0
      %v6441 = vpop.f32.mrb[0].mxu0
      %v6442 = vadd.f32 0.0, %v6441
      %v6443 = vpop.f32.mrb[0].mxu0
      %6444 = vmatprep.mubr.bf16.mxu0 %v6267
      %6445 = vmatmul.mubr.bf16.gmra.mrb[0].mxu0 %v6266
      %v6446 = vpop.f32.mrb[0].mxu0
      %v6447 = vadd.f32 0.0, %v6446
      %v6448 = vpop.f32.mrb[0].mxu0
      %v6449 = vpop.f32.mrb[0].mxu0
      %v6450 = vadd.f32 0.0, %v6449
      %v6451 = vpop.f32.mrb[0].mxu0
      %6452 = vmatprep.mubr.bf16.mxu0 %v6269
      %6453 = vmatmul.mubr.bf16.gmra.mrb[0].mxu0 %v6268
      %v6454 = vpop.f32.mrb[0].mxu0
      %v6455 = vadd.f32 0.0, %v6454
      %v6456 = vpop.f32.mrb[0].mxu0
      %v6457 = vpop.f32.mrb[0].mxu0
      %v6458 = vadd.f32 0.0, %v6457
      %v6459 = vpop.f32.mrb[0].mxu0
      %6460 = vmatprep.mubr.bf16.mxu0 %v6271
      %6461 = vmatmul.mubr.bf16.gmra.mrb[0].mxu0 %v6270
      %v6462 = vpop.f32.mrb[0].mxu0
      %v6463 = vadd.f32 0.0, %v6462
      %v6464 = vpop.f32.mrb[0].mxu0
      %v6465 = vpop.f32.mrb[0].mxu0
      %v6466 = vadd.f32 0.0, %v6465
      %v6467 = vpop.f32.mrb[0].mxu0
      %6468 = vmatprep.mubr.bf16.mxu0 %v6273
      %6469 = vmatmul.mubr.bf16.gmra.mrb[0].mxu0 %v6272
      %v6470 = vpop.f32.mrb[0].mxu0
      %v6471 = vadd.f32 0.0, %v6470
      %v6472 = vpop.f32.mrb[0].mxu0
      %v6473 = vpop.f32.mrb[0].mxu0
      %v6474 = vadd.f32 0.0, %v6473
      %v6475 = vpop.f32.mrb[0].mxu0
      %6476 = vmatprep.mubr.bf16.mxu0 %v6275
      %6477 = vmatmul.mubr.bf16.gmra.mrb[0].mxu0 %v6274
      %v6478 = vpop.f32.mrb[0].mxu0
      %v6479 = vadd.f32 0.0, %v6478
      %v6480 = vpop.f32.mrb[0].mxu0
      %v6481 = vpop.f32.mrb[0].mxu0
      %v6482 = vadd.f32 0.0, %v6481
      %v6483 = vpop.f32.mrb[0].mxu0
      %6484 = vdwg.mxu0
      %v6485 = vrcp.pop %v6150
      %v6486 = vrcp.pop %v6153
      %v6487 = vrcp.pop %v6156
      %v6488 = vrcp.pop %v6159
      %v6489 = vrcp.pop %v6162
      %v6490 = vrcp.pop %v6165
      %v6491 = vrcp.pop %v6168
      %v6492 = vrcp.pop %v6171
      %v6493 = vrcp.pop %v6174
      %v6494 = vrcp.pop %v6177
      %v6495 = vrcp.pop %v6180
      %v6496 = vrcp.pop %v6183
      %v6497 = vrcp.pop %v6186
      %v6498 = vrcp.pop %v6189
      %v6499 = vrcp.pop %v6192
      %v6500 = vrcp.pop %v6195
      %v6501 = vrcp.pop %v6198
      %v6502 = vrcp.pop %v6201
      %v6503 = vrcp.pop %v6204
      %v6504 = vrcp.pop %v6207
      %v6505 = vrcp.pop %v6210
      %v6506 = vrcp.pop %v6213
      %v6507 = vrcp.pop %v6216
      %v6508 = vrcp.pop %v6219
      %v6509 = vrcp.pop %v6222
      %v6510 = vrcp.pop %v6225
      %v6511 = vrcp.pop %v6228
      %v6512 = vrcp.pop %v6231
      %v6513 = vrcp.pop %v6234
      %v6514 = vrcp.pop %v6237
      %v6515 = vrcp.pop %v6240
      %v6516 = vrcp.pop %v6243
      %v6517 = vmul.f32 %v6359, %v6485
      %v6518 = vmul.f32 %v6362, %v6486
      %v6519 = vmul.f32 %v6367, %v6487
      %v6520 = vmul.f32 %v6370, %v6488
      %v6521 = vmul.f32 %v6375, %v6489
      %v6522 = vmul.f32 %v6378, %v6490
      %v6523 = vmul.f32 %v6383, %v6491
      %v6524 = vmul.f32 %v6386, %v6492
      %v6525 = vmul.f32 %v6391, %v6493
      %v6526 = vmul.f32 %v6394, %v6494
      %v6527 = vmul.f32 %v6399, %v6495
      %v6528 = vmul.f32 %v6402, %v6496
      %v6529 = vmul.f32 %v6407, %v6497
      %v6530 = vmul.f32 %v6410, %v6498
      %v6531 = vmul.f32 %v6415, %v6499
      %v6532 = vmul.f32 %v6418, %v6500
      %v6533 = vmul.f32 %v6423, %v6501
      %v6534 = vmul.f32 %v6426, %v6502
      %v6535 = vmul.f32 %v6431, %v6503
      %v6536 = vmul.f32 %v6434, %v6504
      %v6537 = vmul.f32 %v6439, %v6505
      %v6538 = vmul.f32 %v6442, %v6506
      %v6539 = vmul.f32 %v6447, %v6507
      %v6540 = vmul.f32 %v6450, %v6508
      %v6541 = vmul.f32 %v6455, %v6509
      %v6542 = vmul.f32 %v6458, %v6510
      %v6543 = vmul.f32 %v6463, %v6511
      %v6544 = vmul.f32 %v6466, %v6512
      %v6545 = vmul.f32 %v6471, %v6513
      %v6546 = vmul.f32 %v6474, %v6514
      %v6547 = vmul.f32 %v6479, %v6515
      %v6548 = vmul.f32 %v6482, %v6516
      %v6549 = vpack.c.bf16 %v6518, %v6517
      %v6550 = vpack.c.bf16 %v6520, %v6519
      %v6551 = vpack.c.bf16 %v6522, %v6521
      %v6552 = vpack.c.bf16 %v6524, %v6523
      %v6553 = vpack.c.bf16 %v6526, %v6525
      %v6554 = vpack.c.bf16 %v6528, %v6527
      %v6555 = vpack.c.bf16 %v6530, %v6529
      %v6556 = vpack.c.bf16 %v6532, %v6531
      %v6557 = vpack.c.bf16 %v6534, %v6533
      %v6558 = vpack.c.bf16 %v6536, %v6535
      %v6559 = vpack.c.bf16 %v6538, %v6537
      %v6560 = vpack.c.bf16 %v6540, %v6539
      %v6561 = vpack.c.bf16 %v6542, %v6541
      %v6562 = vpack.c.bf16 %v6544, %v6543
      %v6563 = vpack.c.bf16 %v6546, %v6545
      %v6564 = vpack.c.bf16 %v6548, %v6547
      %6565 = vrot.lane.b32.xlu0 %v1290, 48
      %v6566 = vpop.permute.xlu0 %6565
      %6567 = vrot.lane.b32.xlu0 %v1293, 48
      %v6568 = vpop.permute.xlu0 %6567
      %6569 = vrot.lane.b32.xlu0 %v1296, 48
      %v6570 = vpop.permute.xlu0 %6569
      %6571 = vrot.lane.b32.xlu0 %v1299, 48
      %v6572 = vpop.permute.xlu0 %6571
      %6573 = vrot.lane.b32.xlu0 %v1302, 48
      %v6574 = vpop.permute.xlu0 %6573
      %6575 = vrot.lane.b32.xlu0 %v1305, 48
      %v6576 = vpop.permute.xlu0 %6575
      %6577 = vrot.lane.b32.xlu0 %v1308, 48
      %v6578 = vpop.permute.xlu0 %6577
      %6579 = vrot.lane.b32.xlu0 %v1311, 48
      %v6580 = vpop.permute.xlu0 %6579
      %6581 = vrot.lane.b32.xlu0 %v1314, 48
      %v6582 = vpop.permute.xlu0 %6581
      %6583 = vrot.lane.b32.xlu0 %v1317, 48
      %v6584 = vpop.permute.xlu0 %6583
      %6585 = vrot.lane.b32.xlu0 %v1320, 48
      %v6586 = vpop.permute.xlu0 %6585
      %6587 = vrot.lane.b32.xlu0 %v1323, 48
      %v6588 = vpop.permute.xlu0 %6587
      %6589 = vrot.lane.b32.xlu0 %v1326, 48
      %v6590 = vpop.permute.xlu0 %6589
      %6591 = vrot.lane.b32.xlu0 %v1329, 48
      %v6592 = vpop.permute.xlu0 %6591
      %6593 = vrot.lane.b32.xlu0 %v1332, 48
      %v6594 = vpop.permute.xlu0 %6593
      %6595 = vrot.lane.b32.xlu0 %v1335, 48
      %v6596 = vpop.permute.xlu0 %6595
      %6597 = vrot.lane.b32.xlu0 %v1291, 48
      %v6598 = vpop.permute.xlu0 %6597
      %6599 = vrot.lane.b32.xlu0 %v1294, 48
      %v6600 = vpop.permute.xlu0 %6599
      %6601 = vrot.lane.b32.xlu0 %v1297, 48
      %v6602 = vpop.permute.xlu0 %6601
      %6603 = vrot.lane.b32.xlu0 %v1300, 48
      %v6604 = vpop.permute.xlu0 %6603
      %6605 = vrot.lane.b32.xlu0 %v1303, 48
      %v6606 = vpop.permute.xlu0 %6605
      %6607 = vrot.lane.b32.xlu0 %v1306, 48
      %v6608 = vpop.permute.xlu0 %6607
      %6609 = vrot.lane.b32.xlu0 %v1309, 48
      %v6610 = vpop.permute.xlu0 %6609
      %6611 = vrot.lane.b32.xlu0 %v1312, 48
      %v6612 = vpop.permute.xlu0 %6611
      %6613 = vrot.lane.b32.xlu0 %v1315, 48
      %v6614 = vpop.permute.xlu0 %6613
      %6615 = vrot.lane.b32.xlu0 %v1318, 48
      %v6616 = vpop.permute.xlu0 %6615
      %6617 = vrot.lane.b32.xlu0 %v1321, 48
      %v6618 = vpop.permute.xlu0 %6617
      %6619 = vrot.lane.b32.xlu0 %v1324, 48
      %v6620 = vpop.permute.xlu0 %6619
      %6621 = vrot.lane.b32.xlu0 %v1327, 48
      %v6622 = vpop.permute.xlu0 %6621
      %6623 = vrot.lane.b32.xlu0 %v1330, 48
      %v6624 = vpop.permute.xlu0 %6623
      %6625 = vrot.lane.b32.xlu0 %v1333, 48
      %v6626 = vpop.permute.xlu0 %6625
      %6627 = vrot.lane.b32.xlu0 %v1336, 48
      %v6628 = vpop.permute.xlu0 %6627
      %v6630 = vsel %vm1338, %v6566, 0
      %v6633 = vsel %vm1338, %v6568, 0
      %v6636 = vsel %vm1338, %v6570, 0
      %v6639 = vsel %vm1338, %v6572, 0
      %v6642 = vsel %vm1338, %v6574, 0
      %v6645 = vsel %vm1338, %v6576, 0
      %v6648 = vsel %vm1338, %v6578, 0
      %v6651 = vsel %vm1338, %v6580, 0
      %v6654 = vsel %vm1338, %v6582, 0
      %v6657 = vsel %vm1338, %v6584, 0
      %v6660 = vsel %vm1338, %v6586, 0
      %v6663 = vsel %vm1338, %v6588, 0
      %v6666 = vsel %vm1338, %v6590, 0
      %v6669 = vsel %vm1338, %v6592, 0
      %v6672 = vsel %vm1338, %v6594, 0
      %v6675 = vsel %vm1338, %v6596, 0
      %v6678 = vsel %vm1338, %v6598, 0
      %v6681 = vsel %vm1338, %v6600, 0
      %v6684 = vsel %vm1338, %v6602, 0
      %v6687 = vsel %vm1338, %v6604, 0
      %v6690 = vsel %vm1338, %v6606, 0
      %v6693 = vsel %vm1338, %v6608, 0
      %v6696 = vsel %vm1338, %v6610, 0
      %v6699 = vsel %vm1338, %v6612, 0
      %v6702 = vsel %vm1338, %v6614, 0
      %v6705 = vsel %vm1338, %v6616, 0
      %v6708 = vsel %vm1338, %v6618, 0
      %v6711 = vsel %vm1338, %v6620, 0
      %v6714 = vsel %vm1338, %v6622, 0
      %v6717 = vsel %vm1338, %v6624, 0
      %v6720 = vsel %vm1338, %v6626, 0
      %v6723 = vsel %vm1338, %v6628, 0
      %6725 = vmatprep.subr.bf16.mxu0 0
      %6726 = vmatpush1.bf16.xpose.msra.mxu0 %v6678
      %6727 = vmatprep.subr.bf16.mxu0 0
      %6728 = vmatpush1.bf16.xpose.msra.mxu0 %v6681
      %6729 = vmatprep.subr.bf16.mxu0 0
      %6730 = vmatpush1.bf16.xpose.msra.mxu0 %v6684
      %6731 = vmatprep.subr.bf16.mxu0 0
      %6732 = vmatpush1.bf16.xpose.msra.mxu0 %v6687
      %6733 = vmatprep.subr.bf16.mxu0 0
      %6734 = vmatpush1.bf16.xpose.msra.mxu0 %v6690
      %6735 = vmatprep.subr.bf16.mxu0 0
      %6736 = vmatpush1.bf16.xpose.msra.mxu0 %v6693
      %6737 = vmatprep.subr.bf16.mxu0 0
      %6738 = vmatpush1.bf16.xpose.msra.mxu0 %v6696
      %6739 = vmatprep.subr.bf16.mxu0 0
      %6740 = vmatpush1.bf16.xpose.msra.mxu0 %v6699
      %6741 = vmatprep.subr.bf16.mxu0 0
      %6742 = vmatpush1.bf16.xpose.msra.mxu0 %v6702
      %6743 = vmatprep.subr.bf16.mxu0 0
      %6744 = vmatpush1.bf16.xpose.msra.mxu0 %v6705
      %6745 = vmatprep.subr.bf16.mxu0 0
      %6746 = vmatpush1.bf16.xpose.msra.mxu0 %v6708
      %6747 = vmatprep.subr.bf16.mxu0 0
      %6748 = vmatpush1.bf16.xpose.msra.mxu0 %v6711
      %6749 = vmatprep.subr.bf16.mxu0 0
      %6750 = vmatpush1.bf16.xpose.msra.mxu0 %v6714
      %6751 = vmatprep.subr.bf16.mxu0 0
      %6752 = vmatpush1.bf16.xpose.msra.mxu0 %v6717
      %6753 = vmatprep.subr.bf16.mxu0 0
      %6754 = vmatpush1.bf16.xpose.msra.mxu0 %v6720
      %6755 = vmatprep.subr.bf16.mxu0 0
      %6756 = vmatpush1.bf16.xpose.msra.mxu0 %v6723
      %6757 = vmatprep.mubr.bf16.mxu0 0
      %6758 = vmatmul.mubr.bf16.gmra.mrb[0].mxu0 %v6630
      %v6759 = vpop.f32.mrb[0].mxu0
      %v6760 = vadd.f32 0.0, %v6759
      %v6761 = vpop.f32.mrb[0].mxu0
      %v6762 = vadd.f32 0.0, %v6761
      %v6763 = vpop.f32.mrb[0].mxu0
      %v6764 = vadd.f32 0.0, %v6763
      %v6765 = vpop.f32.mrb[0].mxu0
      %v6766 = vadd.f32 0.0, %v6765
      %6767 = vmatprep.mubr.bf16.mxu0 0
      %6768 = vmatmul.mubr.bf16.gmra.mrb[0].mxu0 %v6633
      %v6769 = vpop.f32.mrb[0].mxu0
      %v6770 = vadd.f32 0.0, %v6769
      %v6771 = vpop.f32.mrb[0].mxu0
      %v6772 = vadd.f32 0.0, %v6771
      %v6773 = vpop.f32.mrb[0].mxu0
      %v6774 = vadd.f32 0.0, %v6773
      %v6775 = vpop.f32.mrb[0].mxu0
      %v6776 = vadd.f32 0.0, %v6775
      %6777 = vmatprep.mubr.bf16.mxu0 0
      %6778 = vmatmul.mubr.bf16.gmra.mrb[0].mxu0 %v6636
      %v6779 = vpop.f32.mrb[0].mxu0
      %v6780 = vadd.f32 0.0, %v6779
      %v6781 = vpop.f32.mrb[0].mxu0
      %v6782 = vadd.f32 0.0, %v6781
      %v6783 = vpop.f32.mrb[0].mxu0
      %v6784 = vadd.f32 0.0, %v6783
      %v6785 = vpop.f32.mrb[0].mxu0
      %v6786 = vadd.f32 0.0, %v6785
      %6787 = vmatprep.mubr.bf16.mxu0 0
      %6788 = vmatmul.mubr.bf16.gmra.mrb[0].mxu0 %v6639
      %v6789 = vpop.f32.mrb[0].mxu0
      %v6790 = vadd.f32 0.0, %v6789
      %v6791 = vpop.f32.mrb[0].mxu0
      %v6792 = vadd.f32 0.0, %v6791
      %v6793 = vpop.f32.mrb[0].mxu0
      %v6794 = vadd.f32 0.0, %v6793
      %v6795 = vpop.f32.mrb[0].mxu0
      %v6796 = vadd.f32 0.0, %v6795
      %6797 = vmatprep.mubr.bf16.mxu0 0
      %6798 = vmatmul.mubr.bf16.gmra.mrb[0].mxu0 %v6642
      %v6799 = vpop.f32.mrb[0].mxu0
      %v6800 = vadd.f32 0.0, %v6799
      %v6801 = vpop.f32.mrb[0].mxu0
      %v6802 = vadd.f32 0.0, %v6801
      %v6803 = vpop.f32.mrb[0].mxu0
      %v6804 = vadd.f32 0.0, %v6803
      %v6805 = vpop.f32.mrb[0].mxu0
      %v6806 = vadd.f32 0.0, %v6805
      %6807 = vmatprep.mubr.bf16.mxu0 0
      %6808 = vmatmul.mubr.bf16.gmra.mrb[0].mxu0 %v6645
      %v6809 = vpop.f32.mrb[0].mxu0
      %v6810 = vadd.f32 0.0, %v6809
      %v6811 = vpop.f32.mrb[0].mxu0
      %v6812 = vadd.f32 0.0, %v6811
      %v6813 = vpop.f32.mrb[0].mxu0
      %v6814 = vadd.f32 0.0, %v6813
      %v6815 = vpop.f32.mrb[0].mxu0
      %v6816 = vadd.f32 0.0, %v6815
      %6817 = vmatprep.mubr.bf16.mxu0 0
      %6818 = vmatmul.mubr.bf16.gmra.mrb[0].mxu0 %v6648
      %v6819 = vpop.f32.mrb[0].mxu0
      %v6820 = vadd.f32 0.0, %v6819
      %v6821 = vpop.f32.mrb[0].mxu0
      %v6822 = vadd.f32 0.0, %v6821
      %v6823 = vpop.f32.mrb[0].mxu0
      %v6824 = vadd.f32 0.0, %v6823
      %v6825 = vpop.f32.mrb[0].mxu0
      %v6826 = vadd.f32 0.0, %v6825
      %6827 = vmatprep.mubr.bf16.mxu0 0
      %6828 = vmatmul.mubr.bf16.gmra.mrb[0].mxu0 %v6651
      %v6829 = vpop.f32.mrb[0].mxu0
      %v6830 = vadd.f32 0.0, %v6829
      %v6831 = vpop.f32.mrb[0].mxu0
      %v6832 = vadd.f32 0.0, %v6831
      %v6833 = vpop.f32.mrb[0].mxu0
      %v6834 = vadd.f32 0.0, %v6833
      %v6835 = vpop.f32.mrb[0].mxu0
      %v6836 = vadd.f32 0.0, %v6835
      %6837 = vmatprep.mubr.bf16.mxu0 0
      %6838 = vmatmul.mubr.bf16.gmra.mrb[0].mxu0 %v6654
      %v6839 = vpop.f32.mrb[0].mxu0
      %v6840 = vadd.f32 0.0, %v6839
      %v6841 = vpop.f32.mrb[0].mxu0
      %v6842 = vadd.f32 0.0, %v6841
      %v6843 = vpop.f32.mrb[0].mxu0
      %v6844 = vadd.f32 0.0, %v6843
      %v6845 = vpop.f32.mrb[0].mxu0
      %v6846 = vadd.f32 0.0, %v6845
      %6847 = vmatprep.mubr.bf16.mxu0 0
      %6848 = vmatmul.mubr.bf16.gmra.mrb[0].mxu0 %v6657
      %v6849 = vpop.f32.mrb[0].mxu0
      %v6850 = vadd.f32 0.0, %v6849
      %v6851 = vpop.f32.mrb[0].mxu0
      %v6852 = vadd.f32 0.0, %v6851
      %v6853 = vpop.f32.mrb[0].mxu0
      %v6854 = vadd.f32 0.0, %v6853
      %v6855 = vpop.f32.mrb[0].mxu0
      %v6856 = vadd.f32 0.0, %v6855
      %6857 = vmatprep.mubr.bf16.mxu0 0
      %6858 = vmatmul.mubr.bf16.gmra.mrb[0].mxu0 %v6660
      %v6859 = vpop.f32.mrb[0].mxu0
      %v6860 = vadd.f32 0.0, %v6859
      %v6861 = vpop.f32.mrb[0].mxu0
      %v6862 = vadd.f32 0.0, %v6861
      %v6863 = vpop.f32.mrb[0].mxu0
      %v6864 = vadd.f32 0.0, %v6863
      %v6865 = vpop.f32.mrb[0].mxu0
      %v6866 = vadd.f32 0.0, %v6865
      %6867 = vmatprep.mubr.bf16.mxu0 0
      %6868 = vmatmul.mubr.bf16.gmra.mrb[0].mxu0 %v6663
      %v6869 = vpop.f32.mrb[0].mxu0
      %v6870 = vadd.f32 0.0, %v6869
      %v6871 = vpop.f32.mrb[0].mxu0
      %v6872 = vadd.f32 0.0, %v6871
      %v6873 = vpop.f32.mrb[0].mxu0
      %v6874 = vadd.f32 0.0, %v6873
      %v6875 = vpop.f32.mrb[0].mxu0
      %v6876 = vadd.f32 0.0, %v6875
      %6877 = vmatprep.mubr.bf16.mxu0 0
      %6878 = vmatmul.mubr.bf16.gmra.mrb[0].mxu0 %v6666
      %v6879 = vpop.f32.mrb[0].mxu0
      %v6880 = vadd.f32 0.0, %v6879
      %v6881 = vpop.f32.mrb[0].mxu0
      %v6882 = vadd.f32 0.0, %v6881
      %v6883 = vpop.f32.mrb[0].mxu0
      %v6884 = vadd.f32 0.0, %v6883
      %v6885 = vpop.f32.mrb[0].mxu0
      %v6886 = vadd.f32 0.0, %v6885
      %6887 = vmatprep.mubr.bf16.mxu0 0
      %6888 = vmatmul.mubr.bf16.gmra.mrb[0].mxu0 %v6669
      %v6889 = vpop.f32.mrb[0].mxu0
      %v6890 = vadd.f32 0.0, %v6889
      %v6891 = vpop.f32.mrb[0].mxu0
      %v6892 = vadd.f32 0.0, %v6891
      %v6893 = vpop.f32.mrb[0].mxu0
      %v6894 = vadd.f32 0.0, %v6893
      %v6895 = vpop.f32.mrb[0].mxu0
      %v6896 = vadd.f32 0.0, %v6895
      %6897 = vmatprep.mubr.bf16.mxu0 0
      %6898 = vmatmul.mubr.bf16.gmra.mrb[0].mxu0 %v6672
      %v6899 = vpop.f32.mrb[0].mxu0
      %v6900 = vadd.f32 0.0, %v6899
      %v6901 = vpop.f32.mrb[0].mxu0
      %v6902 = vadd.f32 0.0, %v6901
      %v6903 = vpop.f32.mrb[0].mxu0
      %v6904 = vadd.f32 0.0, %v6903
      %v6905 = vpop.f32.mrb[0].mxu0
      %v6906 = vadd.f32 0.0, %v6905
      %6907 = vmatprep.mubr.bf16.mxu0 0
      %6908 = vmatmul.mubr.bf16.gmra.mrb[0].mxu0 %v6675
      %v6909 = vpop.f32.mrb[0].mxu0
      %v6910 = vadd.f32 0.0, %v6909
      %v6911 = vpop.f32.mrb[0].mxu0
      %v6912 = vadd.f32 0.0, %v6911
      %v6913 = vpop.f32.mrb[0].mxu0
      %v6914 = vadd.f32 0.0, %v6913
      %v6915 = vpop.f32.mrb[0].mxu0
      %v6916 = vadd.f32 0.0, %v6915
      %6917 = vdwg.mxu0
      %v6918 = vmax.f32 %v6760, %v6762
      %6919 = vmax.xlane.f32.xlu0 %v6918
      %v6920 = vpop.xlane.xlu0 %6919
      %v6921 = vmax.f32 %v6764, %v6766
      %6922 = vmax.xlane.f32.xlu0 %v6921
      %v6923 = vpop.xlane.xlu0 %6922
      %v6924 = vmax.f32 %v6770, %v6772
      %6925 = vmax.xlane.f32.xlu0 %v6924
      %v6926 = vpop.xlane.xlu0 %6925
      %v6927 = vmax.f32 %v6774, %v6776
      %6928 = vmax.xlane.f32.xlu0 %v6927
      %v6929 = vpop.xlane.xlu0 %6928
      %v6930 = vmax.f32 %v6780, %v6782
      %6931 = vmax.xlane.f32.xlu0 %v6930
      %v6932 = vpop.xlane.xlu0 %6931
      %v6933 = vmax.f32 %v6784, %v6786
      %6934 = vmax.xlane.f32.xlu0 %v6933
      %v6935 = vpop.xlane.xlu0 %6934
      %v6936 = vmax.f32 %v6790, %v6792
      %6937 = vmax.xlane.f32.xlu0 %v6936
      %v6938 = vpop.xlane.xlu0 %6937
      %v6939 = vmax.f32 %v6794, %v6796
      %6940 = vmax.xlane.f32.xlu0 %v6939
      %v6941 = vpop.xlane.xlu0 %6940
      %v6942 = vmax.f32 %v6800, %v6802
      %6943 = vmax.xlane.f32.xlu0 %v6942
      %v6944 = vpop.xlane.xlu0 %6943
      %v6945 = vmax.f32 %v6804, %v6806
      %6946 = vmax.xlane.f32.xlu0 %v6945
      %v6947 = vpop.xlane.xlu0 %6946
      %v6948 = vmax.f32 %v6810, %v6812
      %6949 = vmax.xlane.f32.xlu0 %v6948
      %v6950 = vpop.xlane.xlu0 %6949
      %v6951 = vmax.f32 %v6814, %v6816
      %6952 = vmax.xlane.f32.xlu0 %v6951
      %v6953 = vpop.xlane.xlu0 %6952
      %v6954 = vmax.f32 %v6820, %v6822
      %6955 = vmax.xlane.f32.xlu0 %v6954
      %v6956 = vpop.xlane.xlu0 %6955
      %v6957 = vmax.f32 %v6824, %v6826
      %6958 = vmax.xlane.f32.xlu0 %v6957
      %v6959 = vpop.xlane.xlu0 %6958
      %v6960 = vmax.f32 %v6830, %v6832
      %6961 = vmax.xlane.f32.xlu0 %v6960
      %v6962 = vpop.xlane.xlu0 %6961
      %v6963 = vmax.f32 %v6834, %v6836
      %6964 = vmax.xlane.f32.xlu0 %v6963
      %v6965 = vpop.xlane.xlu0 %6964
      %v6966 = vmax.f32 %v6840, %v6842
      %6967 = vmax.xlane.f32.xlu0 %v6966
      %v6968 = vpop.xlane.xlu0 %6967
      %v6969 = vmax.f32 %v6844, %v6846
      %6970 = vmax.xlane.f32.xlu0 %v6969
      %v6971 = vpop.xlane.xlu0 %6970
      %v6972 = vmax.f32 %v6850, %v6852
      %6973 = vmax.xlane.f32.xlu0 %v6972
      %v6974 = vpop.xlane.xlu0 %6973
      %v6975 = vmax.f32 %v6854, %v6856
      %6976 = vmax.xlane.f32.xlu0 %v6975
      %v6977 = vpop.xlane.xlu0 %6976
      %v6978 = vmax.f32 %v6860, %v6862
      %6979 = vmax.xlane.f32.xlu0 %v6978
      %v6980 = vpop.xlane.xlu0 %6979
      %v6981 = vmax.f32 %v6864, %v6866
      %6982 = vmax.xlane.f32.xlu0 %v6981
      %v6983 = vpop.xlane.xlu0 %6982
      %v6984 = vmax.f32 %v6870, %v6872
      %6985 = vmax.xlane.f32.xlu0 %v6984
      %v6986 = vpop.xlane.xlu0 %6985
      %v6987 = vmax.f32 %v6874, %v6876
      %6988 = vmax.xlane.f32.xlu0 %v6987
      %v6989 = vpop.xlane.xlu0 %6988
      %v6990 = vmax.f32 %v6880, %v6882
      %6991 = vmax.xlane.f32.xlu0 %v6990
      %v6992 = vpop.xlane.xlu0 %6991
      %v6993 = vmax.f32 %v6884, %v6886
      %6994 = vmax.xlane.f32.xlu0 %v6993
      %v6995 = vpop.xlane.xlu0 %6994
      %v6996 = vmax.f32 %v6890, %v6892
      %6997 = vmax.xlane.f32.xlu0 %v6996
      %v6998 = vpop.xlane.xlu0 %6997
      %v6999 = vmax.f32 %v6894, %v6896
      %7000 = vmax.xlane.f32.xlu0 %v6999
      %v7001 = vpop.xlane.xlu0 %7000
      %v7002 = vmax.f32 %v6900, %v6902
      %7003 = vmax.xlane.f32.xlu0 %v7002
      %v7004 = vpop.xlane.xlu0 %7003
      %v7005 = vmax.f32 %v6904, %v6906
      %7006 = vmax.xlane.f32.xlu0 %v7005
      %v7007 = vpop.xlane.xlu0 %7006
      %v7008 = vmax.f32 %v6910, %v6912
      %7009 = vmax.xlane.f32.xlu0 %v7008
      %v7010 = vpop.xlane.xlu0 %7009
      %v7011 = vmax.f32 %v6914, %v6916
      %7012 = vmax.xlane.f32.xlu0 %v7011
      %v7013 = vpop.xlane.xlu0 %7012
      %v7014 = vsub.f32 %v6760, %v6920
      %v7015 = vsub.f32 %v6762, %v6920
      %v7016 = vsub.f32 %v6764, %v6923
      %v7017 = vsub.f32 %v6766, %v6923
      %v7018 = vsub.f32 %v6770, %v6926
      %v7019 = vsub.f32 %v6772, %v6926
      %v7020 = vsub.f32 %v6774, %v6929
      %v7021 = vsub.f32 %v6776, %v6929
      %v7022 = vsub.f32 %v6780, %v6932
      %v7023 = vsub.f32 %v6782, %v6932
      %v7024 = vsub.f32 %v6784, %v6935
      %v7025 = vsub.f32 %v6786, %v6935
      %v7026 = vsub.f32 %v6790, %v6938
      %v7027 = vsub.f32 %v6792, %v6938
      %v7028 = vsub.f32 %v6794, %v6941
      %v7029 = vsub.f32 %v6796, %v6941
      %v7030 = vsub.f32 %v6800, %v6944
      %v7031 = vsub.f32 %v6802, %v6944
      %v7032 = vsub.f32 %v6804, %v6947
      %v7033 = vsub.f32 %v6806, %v6947
      %v7034 = vsub.f32 %v6810, %v6950
      %v7035 = vsub.f32 %v6812, %v6950
      %v7036 = vsub.f32 %v6814, %v6953
      %v7037 = vsub.f32 %v6816, %v6953
      %v7038 = vsub.f32 %v6820, %v6956
      %v7039 = vsub.f32 %v6822, %v6956
      %v7040 = vsub.f32 %v6824, %v6959
      %v7041 = vsub.f32 %v6826, %v6959
      %v7042 = vsub.f32 %v6830, %v6962
      %v7043 = vsub.f32 %v6832, %v6962
      %v7044 = vsub.f32 %v6834, %v6965
      %v7045 = vsub.f32 %v6836, %v6965
      %v7046 = vsub.f32 %v6840, %v6968
      %v7047 = vsub.f32 %v6842, %v6968
      %v7048 = vsub.f32 %v6844, %v6971
      %v7049 = vsub.f32 %v6846, %v6971
      %v7050 = vsub.f32 %v6850, %v6974
      %v7051 = vsub.f32 %v6852, %v6974
      %v7052 = vsub.f32 %v6854, %v6977
      %v7053 = vsub.f32 %v6856, %v6977
      %v7054 = vsub.f32 %v6860, %v6980
      %v7055 = vsub.f32 %v6862, %v6980
      %v7056 = vsub.f32 %v6864, %v6983
      %v7057 = vsub.f32 %v6866, %v6983
      %v7058 = vsub.f32 %v6870, %v6986
      %v7059 = vsub.f32 %v6872, %v6986
      %v7060 = vsub.f32 %v6874, %v6989
      %v7061 = vsub.f32 %v6876, %v6989
      %v7062 = vsub.f32 %v6880, %v6992
      %v7063 = vsub.f32 %v6882, %v6992
      %v7064 = vsub.f32 %v6884, %v6995
      %v7065 = vsub.f32 %v6886, %v6995
      %v7066 = vsub.f32 %v6890, %v6998
      %v7067 = vsub.f32 %v6892, %v6998
      %v7068 = vsub.f32 %v6894, %v7001
      %v7069 = vsub.f32 %v6896, %v7001
      %v7070 = vsub.f32 %v6900, %v7004
      %v7071 = vsub.f32 %v6902, %v7004
      %v7072 = vsub.f32 %v6904, %v7007
      %v7073 = vsub.f32 %v6906, %v7007
      %v7074 = vsub.f32 %v6910, %v7010
      %v7075 = vsub.f32 %v6912, %v7010
      %v7076 = vsub.f32 %v6914, %v7013
      %v7077 = vsub.f32 %v6916, %v7013
      %v7078 = vmul.f32 %v7014, 1.442695
      %v7079 = vpow.pop %v7078
      %v7080 = vmul.f32 %v7015, 1.442695
      %v7081 = vpow.pop %v7080
      %v7082 = vmul.f32 %v7016, 1.442695
      %v7083 = vpow.pop %v7082
      %v7084 = vmul.f32 %v7017, 1.442695
      %v7085 = vpow.pop %v7084
      %v7086 = vmul.f32 %v7018, 1.442695
      %v7087 = vpow.pop %v7086
      %v7088 = vmul.f32 %v7019, 1.442695
      %v7089 = vpow.pop %v7088
      %v7090 = vmul.f32 %v7020, 1.442695
      %v7091 = vpow.pop %v7090
      %v7092 = vmul.f32 %v7021, 1.442695
      %v7093 = vpow.pop %v7092
      %v7094 = vmul.f32 %v7022, 1.442695
      %v7095 = vpow.pop %v7094
      %v7096 = vmul.f32 %v7023, 1.442695
      %v7097 = vpow.pop %v7096
      %v7098 = vmul.f32 %v7024, 1.442695
      %v7099 = vpow.pop %v7098
      %v7100 = vmul.f32 %v7025, 1.442695
      %v7101 = vpow.pop %v7100
      %v7102 = vmul.f32 %v7026, 1.442695
      %v7103 = vpow.pop %v7102
      %v7104 = vmul.f32 %v7027, 1.442695
      %v7105 = vpow.pop %v7104
      %v7106 = vmul.f32 %v7028, 1.442695
      %v7107 = vpow.pop %v7106
      %v7108 = vmul.f32 %v7029, 1.442695
      %v7109 = vpow.pop %v7108
      %v7110 = vmul.f32 %v7030, 1.442695
      %v7111 = vpow.pop %v7110
      %v7112 = vmul.f32 %v7031, 1.442695
      %v7113 = vpow.pop %v7112
      %v7114 = vmul.f32 %v7032, 1.442695
      %v7115 = vpow.pop %v7114
      %v7116 = vmul.f32 %v7033, 1.442695
      %v7117 = vpow.pop %v7116
      %v7118 = vmul.f32 %v7034, 1.442695
      %v7119 = vpow.pop %v7118
      %v7120 = vmul.f32 %v7035, 1.442695
      %v7121 = vpow.pop %v7120
      %v7122 = vmul.f32 %v7036, 1.442695
      %v7123 = vpow.pop %v7122
      %v7124 = vmul.f32 %v7037, 1.442695
      %v7125 = vpow.pop %v7124
      %v7126 = vmul.f32 %v7038, 1.442695
      %v7127 = vpow.pop %v7126
      %v7128 = vmul.f32 %v7039, 1.442695
      %v7129 = vpow.pop %v7128
      %v7130 = vmul.f32 %v7040, 1.442695
      %v7131 = vpow.pop %v7130
      %v7132 = vmul.f32 %v7041, 1.442695
      %v7133 = vpow.pop %v7132
      %v7134 = vmul.f32 %v7042, 1.442695
      %v7135 = vpow.pop %v7134
      %v7136 = vmul.f32 %v7043, 1.442695
      %v7137 = vpow.pop %v7136
      %v7138 = vmul.f32 %v7044, 1.442695
      %v7139 = vpow.pop %v7138
      %v7140 = vmul.f32 %v7045, 1.442695
      %v7141 = vpow.pop %v7140
      %v7142 = vmul.f32 %v7046, 1.442695
      %v7143 = vpow.pop %v7142
      %v7144 = vmul.f32 %v7047, 1.442695
      %v7145 = vpow.pop %v7144
      %v7146 = vmul.f32 %v7048, 1.442695
      %v7147 = vpow.pop %v7146
      %v7148 = vmul.f32 %v7049, 1.442695
      %v7149 = vpow.pop %v7148
      %v7150 = vmul.f32 %v7050, 1.442695
      %v7151 = vpow.pop %v7150
      %v7152 = vmul.f32 %v7051, 1.442695
      %v7153 = vpow.pop %v7152
      %v7154 = vmul.f32 %v7052, 1.442695
      %v7155 = vpow.pop %v7154
      %v7156 = vmul.f32 %v7053, 1.442695
      %v7157 = vpow.pop %v7156
      %v7158 = vmul.f32 %v7054, 1.442695
      %v7159 = vpow.pop %v7158
      %v7160 = vmul.f32 %v7055, 1.442695
      %v7161 = vpow.pop %v7160
      %v7162 = vmul.f32 %v7056, 1.442695
      %v7163 = vpow.pop %v7162
      %v7164 = vmul.f32 %v7057, 1.442695
      %v7165 = vpow.pop %v7164
      %v7166 = vmul.f32 %v7058, 1.442695
      %v7167 = vpow.pop %v7166
      %v7168 = vmul.f32 %v7059, 1.442695
      %v7169 = vpow.pop %v7168
      %v7170 = vmul.f32 %v7060, 1.442695
      %v7171 = vpow.pop %v7170
      %v7172 = vmul.f32 %v7061, 1.442695
      %v7173 = vpow.pop %v7172
      %v7174 = vmul.f32 %v7062, 1.442695
      %v7175 = vpow.pop %v7174
      %v7176 = vmul.f32 %v7063, 1.442695
      %v7177 = vpow.pop %v7176
      %v7178 = vmul.f32 %v7064, 1.442695
      %v7179 = vpow.pop %v7178
      %v7180 = vmul.f32 %v7065, 1.442695
      %v7181 = vpow.pop %v7180
      %v7182 = vmul.f32 %v7066, 1.442695
      %v7183 = vpow.pop %v7182
      %v7184 = vmul.f32 %v7067, 1.442695
      %v7185 = vpow.pop %v7184
      %v7186 = vmul.f32 %v7068, 1.442695
      %v7187 = vpow.pop %v7186
      %v7188 = vmul.f32 %v7069, 1.442695
      %v7189 = vpow.pop %v7188
      %v7190 = vmul.f32 %v7070, 1.442695
      %v7191 = vpow.pop %v7190
      %v7192 = vmul.f32 %v7071, 1.442695
      %v7193 = vpow.pop %v7192
      %v7194 = vmul.f32 %v7072, 1.442695
      %v7195 = vpow.pop %v7194
      %v7196 = vmul.f32 %v7073, 1.442695
      %v7197 = vpow.pop %v7196
      %v7198 = vmul.f32 %v7074, 1.442695
      %v7199 = vpow.pop %v7198
      %v7200 = vmul.f32 %v7075, 1.442695
      %v7201 = vpow.pop %v7200
      %v7202 = vmul.f32 %v7076, 1.442695
      %v7203 = vpow.pop %v7202
      %v7204 = vmul.f32 %v7077, 1.442695
      %v7205 = vpow.pop %v7204
      %v7206 = vadd.f32 %v7079, %v7081
      %7207 = vadd.xlane.f32.xlu0 %v7206
      %v7208 = vpop.xlane.xlu0 %7207
      %v7209 = vadd.f32 %v7083, %v7085
      %7210 = vadd.xlane.f32.xlu0 %v7209
      %v7211 = vpop.xlane.xlu0 %7210
      %v7212 = vadd.f32 %v7087, %v7089
      %7213 = vadd.xlane.f32.xlu0 %v7212
      %v7214 = vpop.xlane.xlu0 %7213
      %v7215 = vadd.f32 %v7091, %v7093
      %7216 = vadd.xlane.f32.xlu0 %v7215
      %v7217 = vpop.xlane.xlu0 %7216
      %v7218 = vadd.f32 %v7095, %v7097
      %7219 = vadd.xlane.f32.xlu0 %v7218
      %v7220 = vpop.xlane.xlu0 %7219
      %v7221 = vadd.f32 %v7099, %v7101
      %7222 = vadd.xlane.f32.xlu0 %v7221
      %v7223 = vpop.xlane.xlu0 %7222
      %v7224 = vadd.f32 %v7103, %v7105
      %7225 = vadd.xlane.f32.xlu0 %v7224
      %v7226 = vpop.xlane.xlu0 %7225
      %v7227 = vadd.f32 %v7107, %v7109
      %7228 = vadd.xlane.f32.xlu0 %v7227
      %v7229 = vpop.xlane.xlu0 %7228
      %v7230 = vadd.f32 %v7111, %v7113
      %7231 = vadd.xlane.f32.xlu0 %v7230
      %v7232 = vpop.xlane.xlu0 %7231
      %v7233 = vadd.f32 %v7115, %v7117
      %7234 = vadd.xlane.f32.xlu0 %v7233
      %v7235 = vpop.xlane.xlu0 %7234
      %v7236 = vadd.f32 %v7119, %v7121
      %7237 = vadd.xlane.f32.xlu0 %v7236
      %v7238 = vpop.xlane.xlu0 %7237
      %v7239 = vadd.f32 %v7123, %v7125
      %7240 = vadd.xlane.f32.xlu0 %v7239
      %v7241 = vpop.xlane.xlu0 %7240
      %v7242 = vadd.f32 %v7127, %v7129
      %7243 = vadd.xlane.f32.xlu0 %v7242
      %v7244 = vpop.xlane.xlu0 %7243
      %v7245 = vadd.f32 %v7131, %v7133
      %7246 = vadd.xlane.f32.xlu0 %v7245
      %v7247 = vpop.xlane.xlu0 %7246
      %v7248 = vadd.f32 %v7135, %v7137
      %7249 = vadd.xlane.f32.xlu0 %v7248
      %v7250 = vpop.xlane.xlu0 %7249
      %v7251 = vadd.f32 %v7139, %v7141
      %7252 = vadd.xlane.f32.xlu0 %v7251
      %v7253 = vpop.xlane.xlu0 %7252
      %v7254 = vadd.f32 %v7143, %v7145
      %7255 = vadd.xlane.f32.xlu0 %v7254
      %v7256 = vpop.xlane.xlu0 %7255
      %v7257 = vadd.f32 %v7147, %v7149
      %7258 = vadd.xlane.f32.xlu0 %v7257
      %v7259 = vpop.xlane.xlu0 %7258
      %v7260 = vadd.f32 %v7151, %v7153
      %7261 = vadd.xlane.f32.xlu0 %v7260
      %v7262 = vpop.xlane.xlu0 %7261
      %v7263 = vadd.f32 %v7155, %v7157
      %7264 = vadd.xlane.f32.xlu0 %v7263
      %v7265 = vpop.xlane.xlu0 %7264
      %v7266 = vadd.f32 %v7159, %v7161
      %7267 = vadd.xlane.f32.xlu0 %v7266
      %v7268 = vpop.xlane.xlu0 %7267
      %v7269 = vadd.f32 %v7163, %v7165
      %7270 = vadd.xlane.f32.xlu0 %v7269
      %v7271 = vpop.xlane.xlu0 %7270
      %v7272 = vadd.f32 %v7167, %v7169
      %7273 = vadd.xlane.f32.xlu0 %v7272
      %v7274 = vpop.xlane.xlu0 %7273
      %v7275 = vadd.f32 %v7171, %v7173
      %7276 = vadd.xlane.f32.xlu0 %v7275
      %v7277 = vpop.xlane.xlu0 %7276
      %v7278 = vadd.f32 %v7175, %v7177
      %7279 = vadd.xlane.f32.xlu0 %v7278
      %v7280 = vpop.xlane.xlu0 %7279
      %v7281 = vadd.f32 %v7179, %v7181
      %7282 = vadd.xlane.f32.xlu0 %v7281
      %v7283 = vpop.xlane.xlu0 %7282
      %v7284 = vadd.f32 %v7183, %v7185
      %7285 = vadd.xlane.f32.xlu0 %v7284
      %v7286 = vpop.xlane.xlu0 %7285
      %v7287 = vadd.f32 %v7187, %v7189
      %7288 = vadd.xlane.f32.xlu0 %v7287
      %v7289 = vpop.xlane.xlu0 %7288
      %v7290 = vadd.f32 %v7191, %v7193
      %7291 = vadd.xlane.f32.xlu0 %v7290
      %v7292 = vpop.xlane.xlu0 %7291
      %v7293 = vadd.f32 %v7195, %v7197
      %7294 = vadd.xlane.f32.xlu0 %v7293
      %v7295 = vpop.xlane.xlu0 %7294
      %v7296 = vadd.f32 %v7199, %v7201
      %7297 = vadd.xlane.f32.xlu0 %v7296
      %v7298 = vpop.xlane.xlu0 %7297
      %v7299 = vadd.f32 %v7203, %v7205
      %7300 = vadd.xlane.f32.xlu0 %v7299
      %v7301 = vpop.xlane.xlu0 %7300
      %v7302 = vpack.c.bf16 %v7083, %v7079
      %v7303 = vpack.c.bf16 %v7085, %v7081
      %v7304 = vpack.c.bf16 %v7091, %v7087
      %v7305 = vpack.c.bf16 %v7093, %v7089
      %v7306 = vpack.c.bf16 %v7099, %v7095
      %v7307 = vpack.c.bf16 %v7101, %v7097
      %v7308 = vpack.c.bf16 %v7107, %v7103
      %v7309 = vpack.c.bf16 %v7109, %v7105
      %v7310 = vpack.c.bf16 %v7115, %v7111
      %v7311 = vpack.c.bf16 %v7117, %v7113
      %v7312 = vpack.c.bf16 %v7123, %v7119
      %v7313 = vpack.c.bf16 %v7125, %v7121
      %v7314 = vpack.c.bf16 %v7131, %v7127
      %v7315 = vpack.c.bf16 %v7133, %v7129
      %v7316 = vpack.c.bf16 %v7139, %v7135
      %v7317 = vpack.c.bf16 %v7141, %v7137
      %v7318 = vpack.c.bf16 %v7147, %v7143
      %v7319 = vpack.c.bf16 %v7149, %v7145
      %v7320 = vpack.c.bf16 %v7155, %v7151
      %v7321 = vpack.c.bf16 %v7157, %v7153
      %v7322 = vpack.c.bf16 %v7163, %v7159
      %v7323 = vpack.c.bf16 %v7165, %v7161
      %v7324 = vpack.c.bf16 %v7171, %v7167
      %v7325 = vpack.c.bf16 %v7173, %v7169
      %v7326 = vpack.c.bf16 %v7179, %v7175
      %v7327 = vpack.c.bf16 %v7181, %v7177
      %v7328 = vpack.c.bf16 %v7187, %v7183
      %v7329 = vpack.c.bf16 %v7189, %v7185
      %v7330 = vpack.c.bf16 %v7195, %v7191
      %v7331 = vpack.c.bf16 %v7197, %v7193
      %v7332 = vpack.c.bf16 %v7203, %v7199
      %v7333 = vpack.c.bf16 %v7205, %v7201
      %7334 = vrot.lane.b32.xlu0 %v1292, 48
      %v7335 = vpop.permute.xlu0 %7334
      %7336 = vrot.lane.b32.xlu0 %v1295, 48
      %v7337 = vpop.permute.xlu0 %7336
      %7338 = vrot.lane.b32.xlu0 %v1298, 48
      %v7339 = vpop.permute.xlu0 %7338
      %7340 = vrot.lane.b32.xlu0 %v1301, 48
      %v7341 = vpop.permute.xlu0 %7340
      %7342 = vrot.lane.b32.xlu0 %v1304, 48
      %v7343 = vpop.permute.xlu0 %7342
      %7344 = vrot.lane.b32.xlu0 %v1307, 48
      %v7345 = vpop.permute.xlu0 %7344
      %7346 = vrot.lane.b32.xlu0 %v1310, 48
      %v7347 = vpop.permute.xlu0 %7346
      %7348 = vrot.lane.b32.xlu0 %v1313, 48
      %v7349 = vpop.permute.xlu0 %7348
      %7350 = vrot.lane.b32.xlu0 %v1316, 48
      %v7351 = vpop.permute.xlu0 %7350
      %7352 = vrot.lane.b32.xlu0 %v1319, 48
      %v7353 = vpop.permute.xlu0 %7352
      %7354 = vrot.lane.b32.xlu0 %v1322, 48
      %v7355 = vpop.permute.xlu0 %7354
      %7356 = vrot.lane.b32.xlu0 %v1325, 48
      %v7357 = vpop.permute.xlu0 %7356
      %7358 = vrot.lane.b32.xlu0 %v1328, 48
      %v7359 = vpop.permute.xlu0 %7358
      %7360 = vrot.lane.b32.xlu0 %v1331, 48
      %v7361 = vpop.permute.xlu0 %7360
      %7362 = vrot.lane.b32.xlu0 %v1334, 48
      %v7363 = vpop.permute.xlu0 %7362
      %7364 = vrot.lane.b32.xlu0 %v1337, 48
      %v7365 = vpop.permute.xlu0 %7364
      %7382 = vmatprep.subr.bf16.mxu0 0
      %7383 = vmatpush1.bf16.msra.mxu0 %v7335
      %7384 = vmatprep.subr.bf16.mxu0 0
      %7385 = vmatpush1.bf16.msra.mxu0 %v7337
      %7386 = vmatprep.subr.bf16.mxu0 0
      %7387 = vmatpush1.bf16.msra.mxu0 %v7339
      %7388 = vmatprep.subr.bf16.mxu0 0
      %7389 = vmatpush1.bf16.msra.mxu0 %v7341
      %7390 = vmatprep.subr.bf16.mxu0 0
      %7391 = vmatpush1.bf16.msra.mxu0 %v7343
      %7392 = vmatprep.subr.bf16.mxu0 0
      %7393 = vmatpush1.bf16.msra.mxu0 %v7345
      %7394 = vmatprep.subr.bf16.mxu0 0
      %7395 = vmatpush1.bf16.msra.mxu0 %v7347
      %7396 = vmatprep.subr.bf16.mxu0 0
      %7397 = vmatpush1.bf16.msra.mxu0 %v7349
      %7398 = vmatprep.subr.bf16.mxu0 0
      %7399 = vmatpush1.bf16.msra.mxu0 %v7351
      %7400 = vmatprep.subr.bf16.mxu0 0
      %7401 = vmatpush1.bf16.msra.mxu0 %v7353
      %7402 = vmatprep.subr.bf16.mxu0 0
      %7403 = vmatpush1.bf16.msra.mxu0 %v7355
      %7404 = vmatprep.subr.bf16.mxu0 0
      %7405 = vmatpush1.bf16.msra.mxu0 %v7357
      %7406 = vmatprep.subr.bf16.mxu0 0
      %7407 = vmatpush1.bf16.msra.mxu0 %v7359
      %7408 = vmatprep.subr.bf16.mxu0 0
      %7409 = vmatpush1.bf16.msra.mxu0 %v7361
      %7410 = vmatprep.subr.bf16.mxu0 0
      %7411 = vmatpush1.bf16.msra.mxu0 %v7363
      %7412 = vmatprep.subr.bf16.mxu0 0
      %7413 = vmatpush1.bf16.msra.mxu0 %v7365
      %7414 = vmatprep.mubr.bf16.mxu0 %v7303
      %7415 = vmatmul.mubr.bf16.gmra.mrb[0].mxu0 %v7302
      %v7416 = vpop.f32.mrb[0].mxu0
      %v7417 = vadd.f32 0.0, %v7416
      %v7418 = vpop.f32.mrb[0].mxu0
      %v7419 = vpop.f32.mrb[0].mxu0
      %v7420 = vadd.f32 0.0, %v7419
      %v7421 = vpop.f32.mrb[0].mxu0
      %7422 = vmatprep.mubr.bf16.mxu0 %v7305
      %7423 = vmatmul.mubr.bf16.gmra.mrb[0].mxu0 %v7304
      %v7424 = vpop.f32.mrb[0].mxu0
      %v7425 = vadd.f32 0.0, %v7424
      %v7426 = vpop.f32.mrb[0].mxu0
      %v7427 = vpop.f32.mrb[0].mxu0
      %v7428 = vadd.f32 0.0, %v7427
      %v7429 = vpop.f32.mrb[0].mxu0
      %7430 = vmatprep.mubr.bf16.mxu0 %v7307
      %7431 = vmatmul.mubr.bf16.gmra.mrb[0].mxu0 %v7306
      %v7432 = vpop.f32.mrb[0].mxu0
      %v7433 = vadd.f32 0.0, %v7432
      %v7434 = vpop.f32.mrb[0].mxu0
      %v7435 = vpop.f32.mrb[0].mxu0
      %v7436 = vadd.f32 0.0, %v7435
      %v7437 = vpop.f32.mrb[0].mxu0
      %7438 = vmatprep.mubr.bf16.mxu0 %v7309
      %7439 = vmatmul.mubr.bf16.gmra.mrb[0].mxu0 %v7308
      %v7440 = vpop.f32.mrb[0].mxu0
      %v7441 = vadd.f32 0.0, %v7440
      %v7442 = vpop.f32.mrb[0].mxu0
      %v7443 = vpop.f32.mrb[0].mxu0
      %v7444 = vadd.f32 0.0, %v7443
      %v7445 = vpop.f32.mrb[0].mxu0
      %7446 = vmatprep.mubr.bf16.mxu0 %v7311
      %7447 = vmatmul.mubr.bf16.gmra.mrb[0].mxu0 %v7310
      %v7448 = vpop.f32.mrb[0].mxu0
      %v7449 = vadd.f32 0.0, %v7448
      %v7450 = vpop.f32.mrb[0].mxu0
      %v7451 = vpop.f32.mrb[0].mxu0
      %v7452 = vadd.f32 0.0, %v7451
      %v7453 = vpop.f32.mrb[0].mxu0
      %7454 = vmatprep.mubr.bf16.mxu0 %v7313
      %7455 = vmatmul.mubr.bf16.gmra.mrb[0].mxu0 %v7312
      %v7456 = vpop.f32.mrb[0].mxu0
      %v7457 = vadd.f32 0.0, %v7456
      %v7458 = vpop.f32.mrb[0].mxu0
      %v7459 = vpop.f32.mrb[0].mxu0
      %v7460 = vadd.f32 0.0, %v7459
      %v7461 = vpop.f32.mrb[0].mxu0
      %7462 = vmatprep.mubr.bf16.mxu0 %v7315
      %7463 = vmatmul.mubr.bf16.gmra.mrb[0].mxu0 %v7314
      %v7464 = vpop.f32.mrb[0].mxu0
      %v7465 = vadd.f32 0.0, %v7464
      %v7466 = vpop.f32.mrb[0].mxu0
      %v7467 = vpop.f32.mrb[0].mxu0
      %v7468 = vadd.f32 0.0, %v7467
      %v7469 = vpop.f32.mrb[0].mxu0
      %7470 = vmatprep.mubr.bf16.mxu0 %v7317
      %7471 = vmatmul.mubr.bf16.gmra.mrb[0].mxu0 %v7316
      %v7472 = vpop.f32.mrb[0].mxu0
      %v7473 = vadd.f32 0.0, %v7472
      %v7474 = vpop.f32.mrb[0].mxu0
      %v7475 = vpop.f32.mrb[0].mxu0
      %v7476 = vadd.f32 0.0, %v7475
      %v7477 = vpop.f32.mrb[0].mxu0
      %7478 = vmatprep.mubr.bf16.mxu0 %v7319
      %7479 = vmatmul.mubr.bf16.gmra.mrb[0].mxu0 %v7318
      %v7480 = vpop.f32.mrb[0].mxu0
      %v7481 = vadd.f32 0.0, %v7480
      %v7482 = vpop.f32.mrb[0].mxu0
      %v7483 = vpop.f32.mrb[0].mxu0
      %v7484 = vadd.f32 0.0, %v7483
      %v7485 = vpop.f32.mrb[0].mxu0
      %7486 = vmatprep.mubr.bf16.mxu0 %v7321
      %7487 = vmatmul.mubr.bf16.gmra.mrb[0].mxu0 %v7320
      %v7488 = vpop.f32.mrb[0].mxu0
      %v7489 = vadd.f32 0.0, %v7488
      %v7490 = vpop.f32.mrb[0].mxu0
      %v7491 = vpop.f32.mrb[0].mxu0
      %v7492 = vadd.f32 0.0, %v7491
      %v7493 = vpop.f32.mrb[0].mxu0
      %7494 = vmatprep.mubr.bf16.mxu0 %v7323
      %7495 = vmatmul.mubr.bf16.gmra.mrb[0].mxu0 %v7322
      %v7496 = vpop.f32.mrb[0].mxu0
      %v7497 = vadd.f32 0.0, %v7496
      %v7498 = vpop.f32.mrb[0].mxu0
      %v7499 = vpop.f32.mrb[0].mxu0
      %v7500 = vadd.f32 0.0, %v7499
      %v7501 = vpop.f32.mrb[0].mxu0
      %7502 = vmatprep.mubr.bf16.mxu0 %v7325
      %7503 = vmatmul.mubr.bf16.gmra.mrb[0].mxu0 %v7324
      %v7504 = vpop.f32.mrb[0].mxu0
      %v7505 = vadd.f32 0.0, %v7504
      %v7506 = vpop.f32.mrb[0].mxu0
      %v7507 = vpop.f32.mrb[0].mxu0
      %v7508 = vadd.f32 0.0, %v7507
      %v7509 = vpop.f32.mrb[0].mxu0
      %7510 = vmatprep.mubr.bf16.mxu0 %v7327
      %7511 = vmatmul.mubr.bf16.gmra.mrb[0].mxu0 %v7326
      %v7512 = vpop.f32.mrb[0].mxu0
      %v7513 = vadd.f32 0.0, %v7512
      %v7514 = vpop.f32.mrb[0].mxu0
      %v7515 = vpop.f32.mrb[0].mxu0
      %v7516 = vadd.f32 0.0, %v7515
      %v7517 = vpop.f32.mrb[0].mxu0
      %7518 = vmatprep.mubr.bf16.mxu0 %v7329
      %7519 = vmatmul.mubr.bf16.gmra.mrb[0].mxu0 %v7328
      %v7520 = vpop.f32.mrb[0].mxu0
      %v7521 = vadd.f32 0.0, %v7520
      %v7522 = vpop.f32.mrb[0].mxu0
      %v7523 = vpop.f32.mrb[0].mxu0
      %v7524 = vadd.f32 0.0, %v7523
      %v7525 = vpop.f32.mrb[0].mxu0
      %7526 = vmatprep.mubr.bf16.mxu0 %v7331
      %7527 = vmatmul.mubr.bf16.gmra.mrb[0].mxu0 %v7330
      %v7528 = vpop.f32.mrb[0].mxu0
      %v7529 = vadd.f32 0.0, %v7528
      %v7530 = vpop.f32.mrb[0].mxu0
      %v7531 = vpop.f32.mrb[0].mxu0
      %v7532 = vadd.f32 0.0, %v7531
      %v7533 = vpop.f32.mrb[0].mxu0
      %7534 = vmatprep.mubr.bf16.mxu0 %v7333
      %7535 = vmatmul.mubr.bf16.gmra.mrb[0].mxu0 %v7332
      %v7536 = vpop.f32.mrb[0].mxu0
      %v7537 = vadd.f32 0.0, %v7536
      %v7538 = vpop.f32.mrb[0].mxu0
      %v7539 = vpop.f32.mrb[0].mxu0
      %v7540 = vadd.f32 0.0, %v7539
      %v7541 = vpop.f32.mrb[0].mxu0
      %7542 = vdwg.mxu0
      %v7543 = vrcp.pop %v7208
      %v7544 = vrcp.pop %v7211
      %v7545 = vrcp.pop %v7214
      %v7546 = vrcp.pop %v7217
      %v7547 = vrcp.pop %v7220
      %v7548 = vrcp.pop %v7223
      %v7549 = vrcp.pop %v7226
      %v7550 = vrcp.pop %v7229
      %v7551 = vrcp.pop %v7232
      %v7552 = vrcp.pop %v7235
      %v7553 = vrcp.pop %v7238
      %v7554 = vrcp.pop %v7241
      %v7555 = vrcp.pop %v7244
      %v7556 = vrcp.pop %v7247
      %v7557 = vrcp.pop %v7250
      %v7558 = vrcp.pop %v7253
      %v7559 = vrcp.pop %v7256
      %v7560 = vrcp.pop %v7259
      %v7561 = vrcp.pop %v7262
      %v7562 = vrcp.pop %v7265
      %v7563 = vrcp.pop %v7268
      %v7564 = vrcp.pop %v7271
      %v7565 = vrcp.pop %v7274
      %v7566 = vrcp.pop %v7277
      %v7567 = vrcp.pop %v7280
      %v7568 = vrcp.pop %v7283
      %v7569 = vrcp.pop %v7286
      %v7570 = vrcp.pop %v7289
      %v7571 = vrcp.pop %v7292
      %v7572 = vrcp.pop %v7295
      %v7573 = vrcp.pop %v7298
      %v7574 = vrcp.pop %v7301
      %v7575 = vmul.f32 %v7417, %v7543
      %v7576 = vmul.f32 %v7420, %v7544
      %v7577 = vmul.f32 %v7425, %v7545
      %v7578 = vmul.f32 %v7428, %v7546
      %v7579 = vmul.f32 %v7433, %v7547
      %v7580 = vmul.f32 %v7436, %v7548
      %v7581 = vmul.f32 %v7441, %v7549
      %v7582 = vmul.f32 %v7444, %v7550
      %v7583 = vmul.f32 %v7449, %v7551
      %v7584 = vmul.f32 %v7452, %v7552
      %v7585 = vmul.f32 %v7457, %v7553
      %v7586 = vmul.f32 %v7460, %v7554
      %v7587 = vmul.f32 %v7465, %v7555
      %v7588 = vmul.f32 %v7468, %v7556
      %v7589 = vmul.f32 %v7473, %v7557
      %v7590 = vmul.f32 %v7476, %v7558
      %v7591 = vmul.f32 %v7481, %v7559
      %v7592 = vmul.f32 %v7484, %v7560
      %v7593 = vmul.f32 %v7489, %v7561
      %v7594 = vmul.f32 %v7492, %v7562
      %v7595 = vmul.f32 %v7497, %v7563
      %v7596 = vmul.f32 %v7500, %v7564
      %v7597 = vmul.f32 %v7505, %v7565
      %v7598 = vmul.f32 %v7508, %v7566
      %v7599 = vmul.f32 %v7513, %v7567
      %v7600 = vmul.f32 %v7516, %v7568
      %v7601 = vmul.f32 %v7521, %v7569
      %v7602 = vmul.f32 %v7524, %v7570
      %v7603 = vmul.f32 %v7529, %v7571
      %v7604 = vmul.f32 %v7532, %v7572
      %v7605 = vmul.f32 %v7537, %v7573
      %v7606 = vmul.f32 %v7540, %v7574
      %v7607 = vpack.c.bf16 %v7576, %v7575
      %v7608 = vpack.c.bf16 %v7578, %v7577
      %v7609 = vpack.c.bf16 %v7580, %v7579
      %v7610 = vpack.c.bf16 %v7582, %v7581
      %v7611 = vpack.c.bf16 %v7584, %v7583
      %v7612 = vpack.c.bf16 %v7586, %v7585
      %v7613 = vpack.c.bf16 %v7588, %v7587
      %v7614 = vpack.c.bf16 %v7590, %v7589
      %v7615 = vpack.c.bf16 %v7592, %v7591
      %v7616 = vpack.c.bf16 %v7594, %v7593
      %v7617 = vpack.c.bf16 %v7596, %v7595
      %v7618 = vpack.c.bf16 %v7598, %v7597
      %v7619 = vpack.c.bf16 %v7600, %v7599
      %v7620 = vpack.c.bf16 %v7602, %v7601
      %v7621 = vpack.c.bf16 %v7604, %v7603
      %v7622 = vpack.c.bf16 %v7606, %v7605
      %7623 = vrot.lane.b32.xlu0 %v1290, 32
      %v7624 = vpop.permute.xlu0 %7623
      %7625 = vrot.lane.b32.xlu0 %v1293, 32
      %v7626 = vpop.permute.xlu0 %7625
      %7627 = vrot.lane.b32.xlu0 %v1296, 32
      %v7628 = vpop.permute.xlu0 %7627
      %7629 = vrot.lane.b32.xlu0 %v1299, 32
      %v7630 = vpop.permute.xlu0 %7629
      %7631 = vrot.lane.b32.xlu0 %v1302, 32
      %v7632 = vpop.permute.xlu0 %7631
      %7633 = vrot.lane.b32.xlu0 %v1305, 32
      %v7634 = vpop.permute.xlu0 %7633
      %7635 = vrot.lane.b32.xlu0 %v1308, 32
      %v7636 = vpop.permute.xlu0 %7635
      %7637 = vrot.lane.b32.xlu0 %v1311, 32
      %v7638 = vpop.permute.xlu0 %7637
      %7639 = vrot.lane.b32.xlu0 %v1314, 32
      %v7640 = vpop.permute.xlu0 %7639
      %7641 = vrot.lane.b32.xlu0 %v1317, 32
      %v7642 = vpop.permute.xlu0 %7641
      %7643 = vrot.lane.b32.xlu0 %v1320, 32
      %v7644 = vpop.permute.xlu0 %7643
      %7645 = vrot.lane.b32.xlu0 %v1323, 32
      %v7646 = vpop.permute.xlu0 %7645
      %7647 = vrot.lane.b32.xlu0 %v1326, 32
      %v7648 = vpop.permute.xlu0 %7647
      %7649 = vrot.lane.b32.xlu0 %v1329, 32
      %v7650 = vpop.permute.xlu0 %7649
      %7651 = vrot.lane.b32.xlu0 %v1332, 32
      %v7652 = vpop.permute.xlu0 %7651
      %7653 = vrot.lane.b32.xlu0 %v1335, 32
      %v7654 = vpop.permute.xlu0 %7653
      %7655 = vrot.lane.b32.xlu0 %v1291, 32
      %v7656 = vpop.permute.xlu0 %7655
      %7657 = vrot.lane.b32.xlu0 %v1294, 32
      %v7658 = vpop.permute.xlu0 %7657
      %7659 = vrot.lane.b32.xlu0 %v1297, 32
      %v7660 = vpop.permute.xlu0 %7659
      %7661 = vrot.lane.b32.xlu0 %v1300, 32
      %v7662 = vpop.permute.xlu0 %7661
      %7663 = vrot.lane.b32.xlu0 %v1303, 32
      %v7664 = vpop.permute.xlu0 %7663
      %7665 = vrot.lane.b32.xlu0 %v1306, 32
      %v7666 = vpop.permute.xlu0 %7665
      %7667 = vrot.lane.b32.xlu0 %v1309, 32
      %v7668 = vpop.permute.xlu0 %7667
      %7669 = vrot.lane.b32.xlu0 %v1312, 32
      %v7670 = vpop.permute.xlu0 %7669
      %7671 = vrot.lane.b32.xlu0 %v1315, 32
      %v7672 = vpop.permute.xlu0 %7671
      %7673 = vrot.lane.b32.xlu0 %v1318, 32
      %v7674 = vpop.permute.xlu0 %7673
      %7675 = vrot.lane.b32.xlu0 %v1321, 32
      %v7676 = vpop.permute.xlu0 %7675
      %7677 = vrot.lane.b32.xlu0 %v1324, 32
      %v7678 = vpop.permute.xlu0 %7677
      %7679 = vrot.lane.b32.xlu0 %v1327, 32
      %v7680 = vpop.permute.xlu0 %7679
      %7681 = vrot.lane.b32.xlu0 %v1330, 32
      %v7682 = vpop.permute.xlu0 %7681
      %7683 = vrot.lane.b32.xlu0 %v1333, 32
      %v7684 = vpop.permute.xlu0 %7683
      %7685 = vrot.lane.b32.xlu0 %v1336, 32
      %v7686 = vpop.permute.xlu0 %7685
      %v7688 = vsel %vm1338, %v7624, 0
      %v7691 = vsel %vm1338, %v7626, 0
      %v7694 = vsel %vm1338, %v7628, 0
      %v7697 = vsel %vm1338, %v7630, 0
      %v7700 = vsel %vm1338, %v7632, 0
      %v7703 = vsel %vm1338, %v7634, 0
      %v7706 = vsel %vm1338, %v7636, 0
      %v7709 = vsel %vm1338, %v7638, 0
      %v7712 = vsel %vm1338, %v7640, 0
      %v7715 = vsel %vm1338, %v7642, 0
      %v7718 = vsel %vm1338, %v7644, 0
      %v7721 = vsel %vm1338, %v7646, 0
      %v7724 = vsel %vm1338, %v7648, 0
      %v7727 = vsel %vm1338, %v7650, 0
      %v7730 = vsel %vm1338, %v7652, 0
      %v7733 = vsel %vm1338, %v7654, 0
      %v7736 = vsel %vm1338, %v7656, 0
      %v7739 = vsel %vm1338, %v7658, 0
      %v7742 = vsel %vm1338, %v7660, 0
      %v7745 = vsel %vm1338, %v7662, 0
      %v7748 = vsel %vm1338, %v7664, 0
      %v7751 = vsel %vm1338, %v7666, 0
      %v7754 = vsel %vm1338, %v7668, 0
      %v7757 = vsel %vm1338, %v7670, 0
      %v7760 = vsel %vm1338, %v7672, 0
      %v7763 = vsel %vm1338, %v7674, 0
      %v7766 = vsel %vm1338, %v7676, 0
      %v7769 = vsel %vm1338, %v7678, 0
      %v7772 = vsel %vm1338, %v7680, 0
      %v7775 = vsel %vm1338, %v7682, 0
      %v7778 = vsel %vm1338, %v7684, 0
      %v7781 = vsel %vm1338, %v7686, 0
      %7783 = vmatprep.subr.bf16.mxu0 0
      %7784 = vmatpush1.bf16.xpose.msra.mxu0 %v7736
      %7785 = vmatprep.subr.bf16.mxu0 0
      %7786 = vmatpush1.bf16.xpose.msra.mxu0 %v7739
      %7787 = vmatprep.subr.bf16.mxu0 0
      %7788 = vmatpush1.bf16.xpose.msra.mxu0 %v7742
      %7789 = vmatprep.subr.bf16.mxu0 0
      %7790 = vmatpush1.bf16.xpose.msra.mxu0 %v7745
      %7791 = vmatprep.subr.bf16.mxu0 0
      %7792 = vmatpush1.bf16.xpose.msra.mxu0 %v7748
      %7793 = vmatprep.subr.bf16.mxu0 0
      %7794 = vmatpush1.bf16.xpose.msra.mxu0 %v7751
      %7795 = vmatprep.subr.bf16.mxu0 0
      %7796 = vmatpush1.bf16.xpose.msra.mxu0 %v7754
      %7797 = vmatprep.subr.bf16.mxu0 0
      %7798 = vmatpush1.bf16.xpose.msra.mxu0 %v7757
      %7799 = vmatprep.subr.bf16.mxu0 0
      %7800 = vmatpush1.bf16.xpose.msra.mxu0 %v7760
      %7801 = vmatprep.subr.bf16.mxu0 0
      %7802 = vmatpush1.bf16.xpose.msra.mxu0 %v7763
      %7803 = vmatprep.subr.bf16.mxu0 0
      %7804 = vmatpush1.bf16.xpose.msra.mxu0 %v7766
      %7805 = vmatprep.subr.bf16.mxu0 0
      %7806 = vmatpush1.bf16.xpose.msra.mxu0 %v7769
      %7807 = vmatprep.subr.bf16.mxu0 0
      %7808 = vmatpush1.bf16.xpose.msra.mxu0 %v7772
      %7809 = vmatprep.subr.bf16.mxu0 0
      %7810 = vmatpush1.bf16.xpose.msra.mxu0 %v7775
      %7811 = vmatprep.subr.bf16.mxu0 0
      %7812 = vmatpush1.bf16.xpose.msra.mxu0 %v7778
      %7813 = vmatprep.subr.bf16.mxu0 0
      %7814 = vmatpush1.bf16.xpose.msra.mxu0 %v7781
      %7815 = vmatprep.mubr.bf16.mxu0 0
      %7816 = vmatmul.mubr.bf16.gmra.mrb[0].mxu0 %v7688
      %v7817 = vpop.f32.mrb[0].mxu0
      %v7818 = vadd.f32 0.0, %v7817
      %v7819 = vpop.f32.mrb[0].mxu0
      %v7820 = vadd.f32 0.0, %v7819
      %v7821 = vpop.f32.mrb[0].mxu0
      %v7822 = vadd.f32 0.0, %v7821
      %v7823 = vpop.f32.mrb[0].mxu0
      %v7824 = vadd.f32 0.0, %v7823
      %7825 = vmatprep.mubr.bf16.mxu0 0
      %7826 = vmatmul.mubr.bf16.gmra.mrb[0].mxu0 %v7691
      %v7827 = vpop.f32.mrb[0].mxu0
      %v7828 = vadd.f32 0.0, %v7827
      %v7829 = vpop.f32.mrb[0].mxu0
      %v7830 = vadd.f32 0.0, %v7829
      %v7831 = vpop.f32.mrb[0].mxu0
      %v7832 = vadd.f32 0.0, %v7831
      %v7833 = vpop.f32.mrb[0].mxu0
      %v7834 = vadd.f32 0.0, %v7833
      %7835 = vmatprep.mubr.bf16.mxu0 0
      %7836 = vmatmul.mubr.bf16.gmra.mrb[0].mxu0 %v7694
      %v7837 = vpop.f32.mrb[0].mxu0
      %v7838 = vadd.f32 0.0, %v7837
      %v7839 = vpop.f32.mrb[0].mxu0
      %v7840 = vadd.f32 0.0, %v7839
      %v7841 = vpop.f32.mrb[0].mxu0
      %v7842 = vadd.f32 0.0, %v7841
      %v7843 = vpop.f32.mrb[0].mxu0
      %v7844 = vadd.f32 0.0, %v7843
      %7845 = vmatprep.mubr.bf16.mxu0 0
      %7846 = vmatmul.mubr.bf16.gmra.mrb[0].mxu0 %v7697
      %v7847 = vpop.f32.mrb[0].mxu0
      %v7848 = vadd.f32 0.0, %v7847
      %v7849 = vpop.f32.mrb[0].mxu0
      %v7850 = vadd.f32 0.0, %v7849
      %v7851 = vpop.f32.mrb[0].mxu0
      %v7852 = vadd.f32 0.0, %v7851
      %v7853 = vpop.f32.mrb[0].mxu0
      %v7854 = vadd.f32 0.0, %v7853
      %7855 = vmatprep.mubr.bf16.mxu0 0
      %7856 = vmatmul.mubr.bf16.gmra.mrb[0].mxu0 %v7700
      %v7857 = vpop.f32.mrb[0].mxu0
      %v7858 = vadd.f32 0.0, %v7857
      %v7859 = vpop.f32.mrb[0].mxu0
      %v7860 = vadd.f32 0.0, %v7859
      %v7861 = vpop.f32.mrb[0].mxu0
      %v7862 = vadd.f32 0.0, %v7861
      %v7863 = vpop.f32.mrb[0].mxu0
      %v7864 = vadd.f32 0.0, %v7863
      %7865 = vmatprep.mubr.bf16.mxu0 0
      %7866 = vmatmul.mubr.bf16.gmra.mrb[0].mxu0 %v7703
      %v7867 = vpop.f32.mrb[0].mxu0
      %v7868 = vadd.f32 0.0, %v7867
      %v7869 = vpop.f32.mrb[0].mxu0
      %v7870 = vadd.f32 0.0, %v7869
      %v7871 = vpop.f32.mrb[0].mxu0
      %v7872 = vadd.f32 0.0, %v7871
      %v7873 = vpop.f32.mrb[0].mxu0
      %v7874 = vadd.f32 0.0, %v7873
      %7875 = vmatprep.mubr.bf16.mxu0 0
      %7876 = vmatmul.mubr.bf16.gmra.mrb[0].mxu0 %v7706
      %v7877 = vpop.f32.mrb[0].mxu0
      %v7878 = vadd.f32 0.0, %v7877
      %v7879 = vpop.f32.mrb[0].mxu0
      %v7880 = vadd.f32 0.0, %v7879
      %v7881 = vpop.f32.mrb[0].mxu0
      %v7882 = vadd.f32 0.0, %v7881
      %v7883 = vpop.f32.mrb[0].mxu0
      %v7884 = vadd.f32 0.0, %v7883
      %7885 = vmatprep.mubr.bf16.mxu0 0
      %7886 = vmatmul.mubr.bf16.gmra.mrb[0].mxu0 %v7709
      %v7887 = vpop.f32.mrb[0].mxu0
      %v7888 = vadd.f32 0.0, %v7887
      %v7889 = vpop.f32.mrb[0].mxu0
      %v7890 = vadd.f32 0.0, %v7889
      %v7891 = vpop.f32.mrb[0].mxu0
      %v7892 = vadd.f32 0.0, %v7891
      %v7893 = vpop.f32.mrb[0].mxu0
      %v7894 = vadd.f32 0.0, %v7893
      %7895 = vmatprep.mubr.bf16.mxu0 0
      %7896 = vmatmul.mubr.bf16.gmra.mrb[0].mxu0 %v7712
      %v7897 = vpop.f32.mrb[0].mxu0
      %v7898 = vadd.f32 0.0, %v7897
      %v7899 = vpop.f32.mrb[0].mxu0
      %v7900 = vadd.f32 0.0, %v7899
      %v7901 = vpop.f32.mrb[0].mxu0
      %v7902 = vadd.f32 0.0, %v7901
      %v7903 = vpop.f32.mrb[0].mxu0
      %v7904 = vadd.f32 0.0, %v7903
      %7905 = vmatprep.mubr.bf16.mxu0 0
      %7906 = vmatmul.mubr.bf16.gmra.mrb[0].mxu0 %v7715
      %v7907 = vpop.f32.mrb[0].mxu0
      %v7908 = vadd.f32 0.0, %v7907
      %v7909 = vpop.f32.mrb[0].mxu0
      %v7910 = vadd.f32 0.0, %v7909
      %v7911 = vpop.f32.mrb[0].mxu0
      %v7912 = vadd.f32 0.0, %v7911
      %v7913 = vpop.f32.mrb[0].mxu0
      %v7914 = vadd.f32 0.0, %v7913
      %7915 = vmatprep.mubr.bf16.mxu0 0
      %7916 = vmatmul.mubr.bf16.gmra.mrb[0].mxu0 %v7718
      %v7917 = vpop.f32.mrb[0].mxu0
      %v7918 = vadd.f32 0.0, %v7917
      %v7919 = vpop.f32.mrb[0].mxu0
      %v7920 = vadd.f32 0.0, %v7919
      %v7921 = vpop.f32.mrb[0].mxu0
      %v7922 = vadd.f32 0.0, %v7921
      %v7923 = vpop.f32.mrb[0].mxu0
      %v7924 = vadd.f32 0.0, %v7923
      %7925 = vmatprep.mubr.bf16.mxu0 0
      %7926 = vmatmul.mubr.bf16.gmra.mrb[0].mxu0 %v7721
      %v7927 = vpop.f32.mrb[0].mxu0
      %v7928 = vadd.f32 0.0, %v7927
      %v7929 = vpop.f32.mrb[0].mxu0
      %v7930 = vadd.f32 0.0, %v7929
      %v7931 = vpop.f32.mrb[0].mxu0
      %v7932 = vadd.f32 0.0, %v7931
      %v7933 = vpop.f32.mrb[0].mxu0
      %v7934 = vadd.f32 0.0, %v7933
      %7935 = vmatprep.mubr.bf16.mxu0 0
      %7936 = vmatmul.mubr.bf16.gmra.mrb[0].mxu0 %v7724
      %v7937 = vpop.f32.mrb[0].mxu0
      %v7938 = vadd.f32 0.0, %v7937
      %v7939 = vpop.f32.mrb[0].mxu0
      %v7940 = vadd.f32 0.0, %v7939
      %v7941 = vpop.f32.mrb[0].mxu0
      %v7942 = vadd.f32 0.0, %v7941
      %v7943 = vpop.f32.mrb[0].mxu0
      %v7944 = vadd.f32 0.0, %v7943
      %7945 = vmatprep.mubr.bf16.mxu0 0
      %7946 = vmatmul.mubr.bf16.gmra.mrb[0].mxu0 %v7727
      %v7947 = vpop.f32.mrb[0].mxu0
      %v7948 = vadd.f32 0.0, %v7947
      %v7949 = vpop.f32.mrb[0].mxu0
      %v7950 = vadd.f32 0.0, %v7949
      %v7951 = vpop.f32.mrb[0].mxu0
      %v7952 = vadd.f32 0.0, %v7951
      %v7953 = vpop.f32.mrb[0].mxu0
      %v7954 = vadd.f32 0.0, %v7953
      %7955 = vmatprep.mubr.bf16.mxu0 0
      %7956 = vmatmul.mubr.bf16.gmra.mrb[0].mxu0 %v7730
      %v7957 = vpop.f32.mrb[0].mxu0
      %v7958 = vadd.f32 0.0, %v7957
      %v7959 = vpop.f32.mrb[0].mxu0
      %v7960 = vadd.f32 0.0, %v7959
      %v7961 = vpop.f32.mrb[0].mxu0
      %v7962 = vadd.f32 0.0, %v7961
      %v7963 = vpop.f32.mrb[0].mxu0
      %v7964 = vadd.f32 0.0, %v7963
      %7965 = vmatprep.mubr.bf16.mxu0 0
      %7966 = vmatmul.mubr.bf16.gmra.mrb[0].mxu0 %v7733
      %v7967 = vpop.f32.mrb[0].mxu0
      %v7968 = vadd.f32 0.0, %v7967
      %v7969 = vpop.f32.mrb[0].mxu0
      %v7970 = vadd.f32 0.0, %v7969
      %v7971 = vpop.f32.mrb[0].mxu0
      %v7972 = vadd.f32 0.0, %v7971
      %v7973 = vpop.f32.mrb[0].mxu0
      %v7974 = vadd.f32 0.0, %v7973
      %7975 = vdwg.mxu0
      %v7976 = vmax.f32 %v7818, %v7820
      %7977 = vmax.xlane.f32.xlu0 %v7976
      %v7978 = vpop.xlane.xlu0 %7977
      %v7979 = vmax.f32 %v7822, %v7824
      %7980 = vmax.xlane.f32.xlu0 %v7979
      %v7981 = vpop.xlane.xlu0 %7980
      %v7982 = vmax.f32 %v7828, %v7830
      %7983 = vmax.xlane.f32.xlu0 %v7982
      %v7984 = vpop.xlane.xlu0 %7983
      %v7985 = vmax.f32 %v7832, %v7834
      %7986 = vmax.xlane.f32.xlu0 %v7985
      %v7987 = vpop.xlane.xlu0 %7986
      %v7988 = vmax.f32 %v7838, %v7840
      %7989 = vmax.xlane.f32.xlu0 %v7988
      %v7990 = vpop.xlane.xlu0 %7989
      %v7991 = vmax.f32 %v7842, %v7844
      %7992 = vmax.xlane.f32.xlu0 %v7991
      %v7993 = vpop.xlane.xlu0 %7992
      %v7994 = vmax.f32 %v7848, %v7850
      %7995 = vmax.xlane.f32.xlu0 %v7994
      %v7996 = vpop.xlane.xlu0 %7995
      %v7997 = vmax.f32 %v7852, %v7854
      %7998 = vmax.xlane.f32.xlu0 %v7997
      %v7999 = vpop.xlane.xlu0 %7998
      %v8000 = vmax.f32 %v7858, %v7860
      %8001 = vmax.xlane.f32.xlu0 %v8000
      %v8002 = vpop.xlane.xlu0 %8001
      %v8003 = vmax.f32 %v7862, %v7864
      %8004 = vmax.xlane.f32.xlu0 %v8003
      %v8005 = vpop.xlane.xlu0 %8004
      %v8006 = vmax.f32 %v7868, %v7870
      %8007 = vmax.xlane.f32.xlu0 %v8006
      %v8008 = vpop.xlane.xlu0 %8007
      %v8009 = vmax.f32 %v7872, %v7874
      %8010 = vmax.xlane.f32.xlu0 %v8009
      %v8011 = vpop.xlane.xlu0 %8010
      %v8012 = vmax.f32 %v7878, %v7880
      %8013 = vmax.xlane.f32.xlu0 %v8012
      %v8014 = vpop.xlane.xlu0 %8013
      %v8015 = vmax.f32 %v7882, %v7884
      %8016 = vmax.xlane.f32.xlu0 %v8015
      %v8017 = vpop.xlane.xlu0 %8016
      %v8018 = vmax.f32 %v7888, %v7890
      %8019 = vmax.xlane.f32.xlu0 %v8018
      %v8020 = vpop.xlane.xlu0 %8019
      %v8021 = vmax.f32 %v7892, %v7894
      %8022 = vmax.xlane.f32.xlu0 %v8021
      %v8023 = vpop.xlane.xlu0 %8022
      %v8024 = vmax.f32 %v7898, %v7900
      %8025 = vmax.xlane.f32.xlu0 %v8024
      %v8026 = vpop.xlane.xlu0 %8025
      %v8027 = vmax.f32 %v7902, %v7904
      %8028 = vmax.xlane.f32.xlu0 %v8027
      %v8029 = vpop.xlane.xlu0 %8028
      %v8030 = vmax.f32 %v7908, %v7910
      %8031 = vmax.xlane.f32.xlu0 %v8030
      %v8032 = vpop.xlane.xlu0 %8031
      %v8033 = vmax.f32 %v7912, %v7914
      %8034 = vmax.xlane.f32.xlu0 %v8033
      %v8035 = vpop.xlane.xlu0 %8034
      %v8036 = vmax.f32 %v7918, %v7920
      %8037 = vmax.xlane.f32.xlu0 %v8036
      %v8038 = vpop.xlane.xlu0 %8037
      %v8039 = vmax.f32 %v7922, %v7924
      %8040 = vmax.xlane.f32.xlu0 %v8039
      %v8041 = vpop.xlane.xlu0 %8040
      %v8042 = vmax.f32 %v7928, %v7930
      %8043 = vmax.xlane.f32.xlu0 %v8042
      %v8044 = vpop.xlane.xlu0 %8043
      %v8045 = vmax.f32 %v7932, %v7934
      %8046 = vmax.xlane.f32.xlu0 %v8045
      %v8047 = vpop.xlane.xlu0 %8046
      %v8048 = vmax.f32 %v7938, %v7940
      %8049 = vmax.xlane.f32.xlu0 %v8048
      %v8050 = vpop.xlane.xlu0 %8049
      %v8051 = vmax.f32 %v7942, %v7944
      %8052 = vmax.xlane.f32.xlu0 %v8051
      %v8053 = vpop.xlane.xlu0 %8052
      %v8054 = vmax.f32 %v7948, %v7950
      %8055 = vmax.xlane.f32.xlu0 %v8054
      %v8056 = vpop.xlane.xlu0 %8055
      %v8057 = vmax.f32 %v7952, %v7954
      %8058 = vmax.xlane.f32.xlu0 %v8057
      %v8059 = vpop.xlane.xlu0 %8058
      %v8060 = vmax.f32 %v7958, %v7960
      %8061 = vmax.xlane.f32.xlu0 %v8060
      %v8062 = vpop.xlane.xlu0 %8061
      %v8063 = vmax.f32 %v7962, %v7964
      %8064 = vmax.xlane.f32.xlu0 %v8063
      %v8065 = vpop.xlane.xlu0 %8064
      %v8066 = vmax.f32 %v7968, %v7970
      %8067 = vmax.xlane.f32.xlu0 %v8066
      %v8068 = vpop.xlane.xlu0 %8067
      %v8069 = vmax.f32 %v7972, %v7974
      %8070 = vmax.xlane.f32.xlu0 %v8069
      %v8071 = vpop.xlane.xlu0 %8070
      %v8072 = vsub.f32 %v7818, %v7978
      %v8073 = vsub.f32 %v7820, %v7978
      %v8074 = vsub.f32 %v7822, %v7981
      %v8075 = vsub.f32 %v7824, %v7981
      %v8076 = vsub.f32 %v7828, %v7984
      %v8077 = vsub.f32 %v7830, %v7984
      %v8078 = vsub.f32 %v7832, %v7987
      %v8079 = vsub.f32 %v7834, %v7987
      %v8080 = vsub.f32 %v7838, %v7990
      %v8081 = vsub.f32 %v7840, %v7990
      %v8082 = vsub.f32 %v7842, %v7993
      %v8083 = vsub.f32 %v7844, %v7993
      %v8084 = vsub.f32 %v7848, %v7996
      %v8085 = vsub.f32 %v7850, %v7996
      %v8086 = vsub.f32 %v7852, %v7999
      %v8087 = vsub.f32 %v7854, %v7999
      %v8088 = vsub.f32 %v7858, %v8002
      %v8089 = vsub.f32 %v7860, %v8002
      %v8090 = vsub.f32 %v7862, %v8005
      %v8091 = vsub.f32 %v7864, %v8005
      %v8092 = vsub.f32 %v7868, %v8008
      %v8093 = vsub.f32 %v7870, %v8008
      %v8094 = vsub.f32 %v7872, %v8011
      %v8095 = vsub.f32 %v7874, %v8011
      %v8096 = vsub.f32 %v7878, %v8014
      %v8097 = vsub.f32 %v7880, %v8014
      %v8098 = vsub.f32 %v7882, %v8017
      %v8099 = vsub.f32 %v7884, %v8017
      %v8100 = vsub.f32 %v7888, %v8020
      %v8101 = vsub.f32 %v7890, %v8020
      %v8102 = vsub.f32 %v7892, %v8023
      %v8103 = vsub.f32 %v7894, %v8023
      %v8104 = vsub.f32 %v7898, %v8026
      %v8105 = vsub.f32 %v7900, %v8026
      %v8106 = vsub.f32 %v7902, %v8029
      %v8107 = vsub.f32 %v7904, %v8029
      %v8108 = vsub.f32 %v7908, %v8032
      %v8109 = vsub.f32 %v7910, %v8032
      %v8110 = vsub.f32 %v7912, %v8035
      %v8111 = vsub.f32 %v7914, %v8035
      %v8112 = vsub.f32 %v7918, %v8038
      %v8113 = vsub.f32 %v7920, %v8038
      %v8114 = vsub.f32 %v7922, %v8041
      %v8115 = vsub.f32 %v7924, %v8041
      %v8116 = vsub.f32 %v7928, %v8044
      %v8117 = vsub.f32 %v7930, %v8044
      %v8118 = vsub.f32 %v7932, %v8047
      %v8119 = vsub.f32 %v7934, %v8047
      %v8120 = vsub.f32 %v7938, %v8050
      %v8121 = vsub.f32 %v7940, %v8050
      %v8122 = vsub.f32 %v7942, %v8053
      %v8123 = vsub.f32 %v7944, %v8053
      %v8124 = vsub.f32 %v7948, %v8056
      %v8125 = vsub.f32 %v7950, %v8056
      %v8126 = vsub.f32 %v7952, %v8059
      %v8127 = vsub.f32 %v7954, %v8059
      %v8128 = vsub.f32 %v7958, %v8062
      %v8129 = vsub.f32 %v7960, %v8062
      %v8130 = vsub.f32 %v7962, %v8065
      %v8131 = vsub.f32 %v7964, %v8065
      %v8132 = vsub.f32 %v7968, %v8068
      %v8133 = vsub.f32 %v7970, %v8068
      %v8134 = vsub.f32 %v7972, %v8071
      %v8135 = vsub.f32 %v7974, %v8071
      %v8136 = vmul.f32 %v8072, 1.442695
      %v8137 = vpow.pop %v8136
      %v8138 = vmul.f32 %v8073, 1.442695
      %v8139 = vpow.pop %v8138
      %v8140 = vmul.f32 %v8074, 1.442695
      %v8141 = vpow.pop %v8140
      %v8142 = vmul.f32 %v8075, 1.442695
      %v8143 = vpow.pop %v8142
      %v8144 = vmul.f32 %v8076, 1.442695
      %v8145 = vpow.pop %v8144
      %v8146 = vmul.f32 %v8077, 1.442695
      %v8147 = vpow.pop %v8146
      %v8148 = vmul.f32 %v8078, 1.442695
      %v8149 = vpow.pop %v8148
      %v8150 = vmul.f32 %v8079, 1.442695
      %v8151 = vpow.pop %v8150
      %v8152 = vmul.f32 %v8080, 1.442695
      %v8153 = vpow.pop %v8152
      %v8154 = vmul.f32 %v8081, 1.442695
      %v8155 = vpow.pop %v8154
      %v8156 = vmul.f32 %v8082, 1.442695
      %v8157 = vpow.pop %v8156
      %v8158 = vmul.f32 %v8083, 1.442695
      %v8159 = vpow.pop %v8158
      %v8160 = vmul.f32 %v8084, 1.442695
      %v8161 = vpow.pop %v8160
      %v8162 = vmul.f32 %v8085, 1.442695
      %v8163 = vpow.pop %v8162
      %v8164 = vmul.f32 %v8086, 1.442695
      %v8165 = vpow.pop %v8164
      %v8166 = vmul.f32 %v8087, 1.442695
      %v8167 = vpow.pop %v8166
      %v8168 = vmul.f32 %v8088, 1.442695
      %v8169 = vpow.pop %v8168
      %v8170 = vmul.f32 %v8089, 1.442695
      %v8171 = vpow.pop %v8170
      %v8172 = vmul.f32 %v8090, 1.442695
      %v8173 = vpow.pop %v8172
      %v8174 = vmul.f32 %v8091, 1.442695
      %v8175 = vpow.pop %v8174
      %v8176 = vmul.f32 %v8092, 1.442695
      %v8177 = vpow.pop %v8176
      %v8178 = vmul.f32 %v8093, 1.442695
      %v8179 = vpow.pop %v8178
      %v8180 = vmul.f32 %v8094, 1.442695
      %v8181 = vpow.pop %v8180
      %v8182 = vmul.f32 %v8095, 1.442695
      %v8183 = vpow.pop %v8182
      %v8184 = vmul.f32 %v8096, 1.442695
      %v8185 = vpow.pop %v8184
      %v8186 = vmul.f32 %v8097, 1.442695
      %v8187 = vpow.pop %v8186
      %v8188 = vmul.f32 %v8098, 1.442695
      %v8189 = vpow.pop %v8188
      %v8190 = vmul.f32 %v8099, 1.442695
      %v8191 = vpow.pop %v8190
      %v8192 = vmul.f32 %v8100, 1.442695
      %v8193 = vpow.pop %v8192
      %v8194 = vmul.f32 %v8101, 1.442695
      %v8195 = vpow.pop %v8194
      %v8196 = vmul.f32 %v8102, 1.442695
      %v8197 = vpow.pop %v8196
      %v8198 = vmul.f32 %v8103, 1.442695
      %v8199 = vpow.pop %v8198
      %v8200 = vmul.f32 %v8104, 1.442695
      %v8201 = vpow.pop %v8200
      %v8202 = vmul.f32 %v8105, 1.442695
      %v8203 = vpow.pop %v8202
      %v8204 = vmul.f32 %v8106, 1.442695
      %v8205 = vpow.pop %v8204
      %v8206 = vmul.f32 %v8107, 1.442695
      %v8207 = vpow.pop %v8206
      %v8208 = vmul.f32 %v8108, 1.442695
      %v8209 = vpow.pop %v8208
      %v8210 = vmul.f32 %v8109, 1.442695
      %v8211 = vpow.pop %v8210
      %v8212 = vmul.f32 %v8110, 1.442695
      %v8213 = vpow.pop %v8212
      %v8214 = vmul.f32 %v8111, 1.442695
      %v8215 = vpow.pop %v8214
      %v8216 = vmul.f32 %v8112, 1.442695
      %v8217 = vpow.pop %v8216
      %v8218 = vmul.f32 %v8113, 1.442695
      %v8219 = vpow.pop %v8218
      %v8220 = vmul.f32 %v8114, 1.442695
      %v8221 = vpow.pop %v8220
      %v8222 = vmul.f32 %v8115, 1.442695
      %v8223 = vpow.pop %v8222
      %v8224 = vmul.f32 %v8116, 1.442695
      %v8225 = vpow.pop %v8224
      %v8226 = vmul.f32 %v8117, 1.442695
      %v8227 = vpow.pop %v8226
      %v8228 = vmul.f32 %v8118, 1.442695
      %v8229 = vpow.pop %v8228
      %v8230 = vmul.f32 %v8119, 1.442695
      %v8231 = vpow.pop %v8230
      %v8232 = vmul.f32 %v8120, 1.442695
      %v8233 = vpow.pop %v8232
      %v8234 = vmul.f32 %v8121, 1.442695
      %v8235 = vpow.pop %v8234
      %v8236 = vmul.f32 %v8122, 1.442695
      %v8237 = vpow.pop %v8236
      %v8238 = vmul.f32 %v8123, 1.442695
      %v8239 = vpow.pop %v8238
      %v8240 = vmul.f32 %v8124, 1.442695
      %v8241 = vpow.pop %v8240
      %v8242 = vmul.f32 %v8125, 1.442695
      %v8243 = vpow.pop %v8242
      %v8244 = vmul.f32 %v8126, 1.442695
      %v8245 = vpow.pop %v8244
      %v8246 = vmul.f32 %v8127, 1.442695
      %v8247 = vpow.pop %v8246
      %v8248 = vmul.f32 %v8128, 1.442695
      %v8249 = vpow.pop %v8248
      %v8250 = vmul.f32 %v8129, 1.442695
      %v8251 = vpow.pop %v8250
      %v8252 = vmul.f32 %v8130, 1.442695
      %v8253 = vpow.pop %v8252
      %v8254 = vmul.f32 %v8131, 1.442695
      %v8255 = vpow.pop %v8254
      %v8256 = vmul.f32 %v8132, 1.442695
      %v8257 = vpow.pop %v8256
      %v8258 = vmul.f32 %v8133, 1.442695
      %v8259 = vpow.pop %v8258
      %v8260 = vmul.f32 %v8134, 1.442695
      %v8261 = vpow.pop %v8260
      %v8262 = vmul.f32 %v8135, 1.442695
      %v8263 = vpow.pop %v8262
      %v8264 = vadd.f32 %v8137, %v8139
      %8265 = vadd.xlane.f32.xlu0 %v8264
      %v8266 = vpop.xlane.xlu0 %8265
      %v8267 = vadd.f32 %v8141, %v8143
      %8268 = vadd.xlane.f32.xlu0 %v8267
      %v8269 = vpop.xlane.xlu0 %8268
      %v8270 = vadd.f32 %v8145, %v8147
      %8271 = vadd.xlane.f32.xlu0 %v8270
      %v8272 = vpop.xlane.xlu0 %8271
      %v8273 = vadd.f32 %v8149, %v8151
      %8274 = vadd.xlane.f32.xlu0 %v8273
      %v8275 = vpop.xlane.xlu0 %8274
      %v8276 = vadd.f32 %v8153, %v8155
      %8277 = vadd.xlane.f32.xlu0 %v8276
      %v8278 = vpop.xlane.xlu0 %8277
      %v8279 = vadd.f32 %v8157, %v8159
      %8280 = vadd.xlane.f32.xlu0 %v8279
      %v8281 = vpop.xlane.xlu0 %8280
      %v8282 = vadd.f32 %v8161, %v8163
      %8283 = vadd.xlane.f32.xlu0 %v8282
      %v8284 = vpop.xlane.xlu0 %8283
      %v8285 = vadd.f32 %v8165, %v8167
      %8286 = vadd.xlane.f32.xlu0 %v8285
      %v8287 = vpop.xlane.xlu0 %8286
      %v8288 = vadd.f32 %v8169, %v8171
      %8289 = vadd.xlane.f32.xlu0 %v8288
      %v8290 = vpop.xlane.xlu0 %8289
      %v8291 = vadd.f32 %v8173, %v8175
      %8292 = vadd.xlane.f32.xlu0 %v8291
      %v8293 = vpop.xlane.xlu0 %8292
      %v8294 = vadd.f32 %v8177, %v8179
      %8295 = vadd.xlane.f32.xlu0 %v8294
      %v8296 = vpop.xlane.xlu0 %8295
      %v8297 = vadd.f32 %v8181, %v8183
      %8298 = vadd.xlane.f32.xlu0 %v8297
      %v8299 = vpop.xlane.xlu0 %8298
      %v8300 = vadd.f32 %v8185, %v8187
      %8301 = vadd.xlane.f32.xlu0 %v8300
      %v8302 = vpop.xlane.xlu0 %8301
      %v8303 = vadd.f32 %v8189, %v8191
      %8304 = vadd.xlane.f32.xlu0 %v8303
      %v8305 = vpop.xlane.xlu0 %8304
      %v8306 = vadd.f32 %v8193, %v8195
      %8307 = vadd.xlane.f32.xlu0 %v8306
      %v8308 = vpop.xlane.xlu0 %8307
      %v8309 = vadd.f32 %v8197, %v8199
      %8310 = vadd.xlane.f32.xlu0 %v8309
      %v8311 = vpop.xlane.xlu0 %8310
      %v8312 = vadd.f32 %v8201, %v8203
      %8313 = vadd.xlane.f32.xlu0 %v8312
      %v8314 = vpop.xlane.xlu0 %8313
      %v8315 = vadd.f32 %v8205, %v8207
      %8316 = vadd.xlane.f32.xlu0 %v8315
      %v8317 = vpop.xlane.xlu0 %8316
      %v8318 = vadd.f32 %v8209, %v8211
      %8319 = vadd.xlane.f32.xlu0 %v8318
      %v8320 = vpop.xlane.xlu0 %8319
      %v8321 = vadd.f32 %v8213, %v8215
      %8322 = vadd.xlane.f32.xlu0 %v8321
      %v8323 = vpop.xlane.xlu0 %8322
      %v8324 = vadd.f32 %v8217, %v8219
      %8325 = vadd.xlane.f32.xlu0 %v8324
      %v8326 = vpop.xlane.xlu0 %8325
      %v8327 = vadd.f32 %v8221, %v8223
      %8328 = vadd.xlane.f32.xlu0 %v8327
      %v8329 = vpop.xlane.xlu0 %8328
      %v8330 = vadd.f32 %v8225, %v8227
      %8331 = vadd.xlane.f32.xlu0 %v8330
      %v8332 = vpop.xlane.xlu0 %8331
      %v8333 = vadd.f32 %v8229, %v8231
      %8334 = vadd.xlane.f32.xlu0 %v8333
      %v8335 = vpop.xlane.xlu0 %8334
      %v8336 = vadd.f32 %v8233, %v8235
      %8337 = vadd.xlane.f32.xlu0 %v8336
      %v8338 = vpop.xlane.xlu0 %8337
      %v8339 = vadd.f32 %v8237, %v8239
      %8340 = vadd.xlane.f32.xlu0 %v8339
      %v8341 = vpop.xlane.xlu0 %8340
      %v8342 = vadd.f32 %v8241, %v8243
      %8343 = vadd.xlane.f32.xlu0 %v8342
      %v8344 = vpop.xlane.xlu0 %8343
      %v8345 = vadd.f32 %v8245, %v8247
      %8346 = vadd.xlane.f32.xlu0 %v8345
      %v8347 = vpop.xlane.xlu0 %8346
      %v8348 = vadd.f32 %v8249, %v8251
      %8349 = vadd.xlane.f32.xlu0 %v8348
      %v8350 = vpop.xlane.xlu0 %8349
      %v8351 = vadd.f32 %v8253, %v8255
      %8352 = vadd.xlane.f32.xlu0 %v8351
      %v8353 = vpop.xlane.xlu0 %8352
      %v8354 = vadd.f32 %v8257, %v8259
      %8355 = vadd.xlane.f32.xlu0 %v8354
      %v8356 = vpop.xlane.xlu0 %8355
      %v8357 = vadd.f32 %v8261, %v8263
      %8358 = vadd.xlane.f32.xlu0 %v8357
      %v8359 = vpop.xlane.xlu0 %8358
      %v8360 = vpack.c.bf16 %v8141, %v8137
      %v8361 = vpack.c.bf16 %v8143, %v8139
      %v8362 = vpack.c.bf16 %v8149, %v8145
      %v8363 = vpack.c.bf16 %v8151, %v8147
      %v8364 = vpack.c.bf16 %v8157, %v8153
      %v8365 = vpack.c.bf16 %v8159, %v8155
      %v8366 = vpack.c.bf16 %v8165, %v8161
      %v8367 = vpack.c.bf16 %v8167, %v8163
      %v8368 = vpack.c.bf16 %v8173, %v8169
      %v8369 = vpack.c.bf16 %v8175, %v8171
      %v8370 = vpack.c.bf16 %v8181, %v8177
      %v8371 = vpack.c.bf16 %v8183, %v8179
      %v8372 = vpack.c.bf16 %v8189, %v8185
      %v8373 = vpack.c.bf16 %v8191, %v8187
      %v8374 = vpack.c.bf16 %v8197, %v8193
      %v8375 = vpack.c.bf16 %v8199, %v8195
      %v8376 = vpack.c.bf16 %v8205, %v8201
      %v8377 = vpack.c.bf16 %v8207, %v8203
      %v8378 = vpack.c.bf16 %v8213, %v8209
      %v8379 = vpack.c.bf16 %v8215, %v8211
      %v8380 = vpack.c.bf16 %v8221, %v8217
      %v8381 = vpack.c.bf16 %v8223, %v8219
      %v8382 = vpack.c.bf16 %v8229, %v8225
      %v8383 = vpack.c.bf16 %v8231, %v8227
      %v8384 = vpack.c.bf16 %v8237, %v8233
      %v8385 = vpack.c.bf16 %v8239, %v8235
      %v8386 = vpack.c.bf16 %v8245, %v8241
      %v8387 = vpack.c.bf16 %v8247, %v8243
      %v8388 = vpack.c.bf16 %v8253, %v8249
      %v8389 = vpack.c.bf16 %v8255, %v8251
      %v8390 = vpack.c.bf16 %v8261, %v8257
      %v8391 = vpack.c.bf16 %v8263, %v8259
      %8392 = vrot.lane.b32.xlu0 %v1292, 32
      %v8393 = vpop.permute.xlu0 %8392
      %8394 = vrot.lane.b32.xlu0 %v1295, 32
      %v8395 = vpop.permute.xlu0 %8394
      %8396 = vrot.lane.b32.xlu0 %v1298, 32
      %v8397 = vpop.permute.xlu0 %8396
      %8398 = vrot.lane.b32.xlu0 %v1301, 32
      %v8399 = vpop.permute.xlu0 %8398
      %8400 = vrot.lane.b32.xlu0 %v1304, 32
      %v8401 = vpop.permute.xlu0 %8400
      %8402 = vrot.lane.b32.xlu0 %v1307, 32
      %v8403 = vpop.permute.xlu0 %8402
      %8404 = vrot.lane.b32.xlu0 %v1310, 32
      %v8405 = vpop.permute.xlu0 %8404
      %8406 = vrot.lane.b32.xlu0 %v1313, 32
      %v8407 = vpop.permute.xlu0 %8406
      %8408 = vrot.lane.b32.xlu0 %v1316, 32
      %v8409 = vpop.permute.xlu0 %8408
      %8410 = vrot.lane.b32.xlu0 %v1319, 32
      %v8411 = vpop.permute.xlu0 %8410
      %8412 = vrot.lane.b32.xlu0 %v1322, 32
      %v8413 = vpop.permute.xlu0 %8412
      %8414 = vrot.lane.b32.xlu0 %v1325, 32
      %v8415 = vpop.permute.xlu0 %8414
      %8416 = vrot.lane.b32.xlu0 %v1328, 32
      %v8417 = vpop.permute.xlu0 %8416
      %8418 = vrot.lane.b32.xlu0 %v1331, 32
      %v8419 = vpop.permute.xlu0 %8418
      %8420 = vrot.lane.b32.xlu0 %v1334, 32
      %v8421 = vpop.permute.xlu0 %8420
      %8422 = vrot.lane.b32.xlu0 %v1337, 32
      %v8423 = vpop.permute.xlu0 %8422
      %8440 = vmatprep.subr.bf16.mxu0 0
      %8441 = vmatpush1.bf16.msra.mxu0 %v8393
      %8442 = vmatprep.subr.bf16.mxu0 0
      %8443 = vmatpush1.bf16.msra.mxu0 %v8395
      %8444 = vmatprep.subr.bf16.mxu0 0
      %8445 = vmatpush1.bf16.msra.mxu0 %v8397
      %8446 = vmatprep.subr.bf16.mxu0 0
      %8447 = vmatpush1.bf16.msra.mxu0 %v8399
      %8448 = vmatprep.subr.bf16.mxu0 0
      %8449 = vmatpush1.bf16.msra.mxu0 %v8401
      %8450 = vmatprep.subr.bf16.mxu0 0
      %8451 = vmatpush1.bf16.msra.mxu0 %v8403
      %8452 = vmatprep.subr.bf16.mxu0 0
      %8453 = vmatpush1.bf16.msra.mxu0 %v8405
      %8454 = vmatprep.subr.bf16.mxu0 0
      %8455 = vmatpush1.bf16.msra.mxu0 %v8407
      %8456 = vmatprep.subr.bf16.mxu0 0
      %8457 = vmatpush1.bf16.msra.mxu0 %v8409
      %8458 = vmatprep.subr.bf16.mxu0 0
      %8459 = vmatpush1.bf16.msra.mxu0 %v8411
      %8460 = vmatprep.subr.bf16.mxu0 0
      %8461 = vmatpush1.bf16.msra.mxu0 %v8413
      %8462 = vmatprep.subr.bf16.mxu0 0
      %8463 = vmatpush1.bf16.msra.mxu0 %v8415
      %8464 = vmatprep.subr.bf16.mxu0 0
      %8465 = vmatpush1.bf16.msra.mxu0 %v8417
      %8466 = vmatprep.subr.bf16.mxu0 0
      %8467 = vmatpush1.bf16.msra.mxu0 %v8419
      %8468 = vmatprep.subr.bf16.mxu0 0
      %8469 = vmatpush1.bf16.msra.mxu0 %v8421
      %8470 = vmatprep.subr.bf16.mxu0 0
      %8471 = vmatpush1.bf16.msra.mxu0 %v8423
      %8472 = vmatprep.mubr.bf16.mxu0 %v8361
      %8473 = vmatmul.mubr.bf16.gmra.mrb[0].mxu0 %v8360
      %v8474 = vpop.f32.mrb[0].mxu0
      %v8475 = vadd.f32 0.0, %v8474
      %v8476 = vpop.f32.mrb[0].mxu0
      %v8477 = vpop.f32.mrb[0].mxu0
      %v8478 = vadd.f32 0.0, %v8477
      %v8479 = vpop.f32.mrb[0].mxu0
      %8480 = vmatprep.mubr.bf16.mxu0 %v8363
      %8481 = vmatmul.mubr.bf16.gmra.mrb[0].mxu0 %v8362
      %v8482 = vpop.f32.mrb[0].mxu0
      %v8483 = vadd.f32 0.0, %v8482
      %v8484 = vpop.f32.mrb[0].mxu0
      %v8485 = vpop.f32.mrb[0].mxu0
      %v8486 = vadd.f32 0.0, %v8485
      %v8487 = vpop.f32.mrb[0].mxu0
      %8488 = vmatprep.mubr.bf16.mxu0 %v8365
      %8489 = vmatmul.mubr.bf16.gmra.mrb[0].mxu0 %v8364
      %v8490 = vpop.f32.mrb[0].mxu0
      %v8491 = vadd.f32 0.0, %v8490
      %v8492 = vpop.f32.mrb[0].mxu0
      %v8493 = vpop.f32.mrb[0].mxu0
      %v8494 = vadd.f32 0.0, %v8493
      %v8495 = vpop.f32.mrb[0].mxu0
      %8496 = vmatprep.mubr.bf16.mxu0 %v8367
      %8497 = vmatmul.mubr.bf16.gmra.mrb[0].mxu0 %v8366
      %v8498 = vpop.f32.mrb[0].mxu0
      %v8499 = vadd.f32 0.0, %v8498
      %v8500 = vpop.f32.mrb[0].mxu0
      %v8501 = vpop.f32.mrb[0].mxu0
      %v8502 = vadd.f32 0.0, %v8501
      %v8503 = vpop.f32.mrb[0].mxu0
      %8504 = vmatprep.mubr.bf16.mxu0 %v8369
      %8505 = vmatmul.mubr.bf16.gmra.mrb[0].mxu0 %v8368
      %v8506 = vpop.f32.mrb[0].mxu0
      %v8507 = vadd.f32 0.0, %v8506
      %v8508 = vpop.f32.mrb[0].mxu0
      %v8509 = vpop.f32.mrb[0].mxu0
      %v8510 = vadd.f32 0.0, %v8509
      %v8511 = vpop.f32.mrb[0].mxu0
      %8512 = vmatprep.mubr.bf16.mxu0 %v8371
      %8513 = vmatmul.mubr.bf16.gmra.mrb[0].mxu0 %v8370
      %v8514 = vpop.f32.mrb[0].mxu0
      %v8515 = vadd.f32 0.0, %v8514
      %v8516 = vpop.f32.mrb[0].mxu0
      %v8517 = vpop.f32.mrb[0].mxu0
      %v8518 = vadd.f32 0.0, %v8517
      %v8519 = vpop.f32.mrb[0].mxu0
      %8520 = vmatprep.mubr.bf16.mxu0 %v8373
      %8521 = vmatmul.mubr.bf16.gmra.mrb[0].mxu0 %v8372
      %v8522 = vpop.f32.mrb[0].mxu0
      %v8523 = vadd.f32 0.0, %v8522
      %v8524 = vpop.f32.mrb[0].mxu0
      %v8525 = vpop.f32.mrb[0].mxu0
      %v8526 = vadd.f32 0.0, %v8525
      %v8527 = vpop.f32.mrb[0].mxu0
      %8528 = vmatprep.mubr.bf16.mxu0 %v8375
      %8529 = vmatmul.mubr.bf16.gmra.mrb[0].mxu0 %v8374
      %v8530 = vpop.f32.mrb[0].mxu0
      %v8531 = vadd.f32 0.0, %v8530
      %v8532 = vpop.f32.mrb[0].mxu0
      %v8533 = vpop.f32.mrb[0].mxu0
      %v8534 = vadd.f32 0.0, %v8533
      %v8535 = vpop.f32.mrb[0].mxu0
      %8536 = vmatprep.mubr.bf16.mxu0 %v8377
      %8537 = vmatmul.mubr.bf16.gmra.mrb[0].mxu0 %v8376
      %v8538 = vpop.f32.mrb[0].mxu0
      %v8539 = vadd.f32 0.0, %v8538
      %v8540 = vpop.f32.mrb[0].mxu0
      %v8541 = vpop.f32.mrb[0].mxu0
      %v8542 = vadd.f32 0.0, %v8541
      %v8543 = vpop.f32.mrb[0].mxu0
      %8544 = vmatprep.mubr.bf16.mxu0 %v8379
      %8545 = vmatmul.mubr.bf16.gmra.mrb[0].mxu0 %v8378
      %v8546 = vpop.f32.mrb[0].mxu0
      %v8547 = vadd.f32 0.0, %v8546
      %v8548 = vpop.f32.mrb[0].mxu0
      %v8549 = vpop.f32.mrb[0].mxu0
      %v8550 = vadd.f32 0.0, %v8549
      %v8551 = vpop.f32.mrb[0].mxu0
      %8552 = vmatprep.mubr.bf16.mxu0 %v8381
      %8553 = vmatmul.mubr.bf16.gmra.mrb[0].mxu0 %v8380
      %v8554 = vpop.f32.mrb[0].mxu0
      %v8555 = vadd.f32 0.0, %v8554
      %v8556 = vpop.f32.mrb[0].mxu0
      %v8557 = vpop.f32.mrb[0].mxu0
      %v8558 = vadd.f32 0.0, %v8557
      %v8559 = vpop.f32.mrb[0].mxu0
      %8560 = vmatprep.mubr.bf16.mxu0 %v8383
      %8561 = vmatmul.mubr.bf16.gmra.mrb[0].mxu0 %v8382
      %v8562 = vpop.f32.mrb[0].mxu0
      %v8563 = vadd.f32 0.0, %v8562
      %v8564 = vpop.f32.mrb[0].mxu0
      %v8565 = vpop.f32.mrb[0].mxu0
      %v8566 = vadd.f32 0.0, %v8565
      %v8567 = vpop.f32.mrb[0].mxu0
      %8568 = vmatprep.mubr.bf16.mxu0 %v8385
      %8569 = vmatmul.mubr.bf16.gmra.mrb[0].mxu0 %v8384
      %v8570 = vpop.f32.mrb[0].mxu0
      %v8571 = vadd.f32 0.0, %v8570
      %v8572 = vpop.f32.mrb[0].mxu0
      %v8573 = vpop.f32.mrb[0].mxu0
      %v8574 = vadd.f32 0.0, %v8573
      %v8575 = vpop.f32.mrb[0].mxu0
      %8576 = vmatprep.mubr.bf16.mxu0 %v8387
      %8577 = vmatmul.mubr.bf16.gmra.mrb[0].mxu0 %v8386
      %v8578 = vpop.f32.mrb[0].mxu0
      %v8579 = vadd.f32 0.0, %v8578
      %v8580 = vpop.f32.mrb[0].mxu0
      %v8581 = vpop.f32.mrb[0].mxu0
      %v8582 = vadd.f32 0.0, %v8581
      %v8583 = vpop.f32.mrb[0].mxu0
      %8584 = vmatprep.mubr.bf16.mxu0 %v8389
      %8585 = vmatmul.mubr.bf16.gmra.mrb[0].mxu0 %v8388
      %v8586 = vpop.f32.mrb[0].mxu0
      %v8587 = vadd.f32 0.0, %v8586
      %v8588 = vpop.f32.mrb[0].mxu0
      %v8589 = vpop.f32.mrb[0].mxu0
      %v8590 = vadd.f32 0.0, %v8589
      %v8591 = vpop.f32.mrb[0].mxu0
      %8592 = vmatprep.mubr.bf16.mxu0 %v8391
      %8593 = vmatmul.mubr.bf16.gmra.mrb[0].mxu0 %v8390
      %v8594 = vpop.f32.mrb[0].mxu0
      %v8595 = vadd.f32 0.0, %v8594
      %v8596 = vpop.f32.mrb[0].mxu0
      %v8597 = vpop.f32.mrb[0].mxu0
      %v8598 = vadd.f32 0.0, %v8597
      %v8599 = vpop.f32.mrb[0].mxu0
      %8600 = vdwg.mxu0
      %v8601 = vrcp.pop %v8266
      %v8602 = vrcp.pop %v8269
      %v8603 = vrcp.pop %v8272
      %v8604 = vrcp.pop %v8275
      %v8605 = vrcp.pop %v8278
      %v8606 = vrcp.pop %v8281
      %v8607 = vrcp.pop %v8284
      %v8608 = vrcp.pop %v8287
      %v8609 = vrcp.pop %v8290
      %v8610 = vrcp.pop %v8293
      %v8611 = vrcp.pop %v8296
      %v8612 = vrcp.pop %v8299
      %v8613 = vrcp.pop %v8302
      %v8614 = vrcp.pop %v8305
      %v8615 = vrcp.pop %v8308
      %v8616 = vrcp.pop %v8311
      %v8617 = vrcp.pop %v8314
      %v8618 = vrcp.pop %v8317
      %v8619 = vrcp.pop %v8320
      %v8620 = vrcp.pop %v8323
      %v8621 = vrcp.pop %v8326
      %v8622 = vrcp.pop %v8329
      %v8623 = vrcp.pop %v8332
      %v8624 = vrcp.pop %v8335
      %v8625 = vrcp.pop %v8338
      %v8626 = vrcp.pop %v8341
      %v8627 = vrcp.pop %v8344
      %v8628 = vrcp.pop %v8347
      %v8629 = vrcp.pop %v8350
      %v8630 = vrcp.pop %v8353
      %v8631 = vrcp.pop %v8356
      %v8632 = vrcp.pop %v8359
      %v8633 = vmul.f32 %v8475, %v8601
      %v8634 = vmul.f32 %v8478, %v8602
      %v8635 = vmul.f32 %v8483, %v8603
      %v8636 = vmul.f32 %v8486, %v8604
      %v8637 = vmul.f32 %v8491, %v8605
      %v8638 = vmul.f32 %v8494, %v8606
      %v8639 = vmul.f32 %v8499, %v8607
      %v8640 = vmul.f32 %v8502, %v8608
      %v8641 = vmul.f32 %v8507, %v8609
      %v8642 = vmul.f32 %v8510, %v8610
      %v8643 = vmul.f32 %v8515, %v8611
      %v8644 = vmul.f32 %v8518, %v8612
      %v8645 = vmul.f32 %v8523, %v8613
      %v8646 = vmul.f32 %v8526, %v8614
      %v8647 = vmul.f32 %v8531, %v8615
      %v8648 = vmul.f32 %v8534, %v8616
      %v8649 = vmul.f32 %v8539, %v8617
      %v8650 = vmul.f32 %v8542, %v8618
      %v8651 = vmul.f32 %v8547, %v8619
      %v8652 = vmul.f32 %v8550, %v8620
      %v8653 = vmul.f32 %v8555, %v8621
      %v8654 = vmul.f32 %v8558, %v8622
      %v8655 = vmul.f32 %v8563, %v8623
      %v8656 = vmul.f32 %v8566, %v8624
      %v8657 = vmul.f32 %v8571, %v8625
      %v8658 = vmul.f32 %v8574, %v8626
      %v8659 = vmul.f32 %v8579, %v8627
      %v8660 = vmul.f32 %v8582, %v8628
      %v8661 = vmul.f32 %v8587, %v8629
      %v8662 = vmul.f32 %v8590, %v8630
      %v8663 = vmul.f32 %v8595, %v8631
      %v8664 = vmul.f32 %v8598, %v8632
      %v8665 = vpack.c.bf16 %v8634, %v8633
      %v8666 = vpack.c.bf16 %v8636, %v8635
      %v8667 = vpack.c.bf16 %v8638, %v8637
      %v8668 = vpack.c.bf16 %v8640, %v8639
      %v8669 = vpack.c.bf16 %v8642, %v8641
      %v8670 = vpack.c.bf16 %v8644, %v8643
      %v8671 = vpack.c.bf16 %v8646, %v8645
      %v8672 = vpack.c.bf16 %v8648, %v8647
      %v8673 = vpack.c.bf16 %v8650, %v8649
      %v8674 = vpack.c.bf16 %v8652, %v8651
      %v8675 = vpack.c.bf16 %v8654, %v8653
      %v8676 = vpack.c.bf16 %v8656, %v8655
      %v8677 = vpack.c.bf16 %v8658, %v8657
      %v8678 = vpack.c.bf16 %v8660, %v8659
      %v8679 = vpack.c.bf16 %v8662, %v8661
      %v8680 = vpack.c.bf16 %v8664, %v8663
      %8681 = vrot.lane.b32.xlu0 %v1290, 16
      %v8682 = vpop.permute.xlu0 %8681
      %8683 = vrot.lane.b32.xlu0 %v1293, 16
      %v8684 = vpop.permute.xlu0 %8683
      %8685 = vrot.lane.b32.xlu0 %v1296, 16
      %v8686 = vpop.permute.xlu0 %8685
      %8687 = vrot.lane.b32.xlu0 %v1299, 16
      %v8688 = vpop.permute.xlu0 %8687
      %8689 = vrot.lane.b32.xlu0 %v1302, 16
      %v8690 = vpop.permute.xlu0 %8689
      %8691 = vrot.lane.b32.xlu0 %v1305, 16
      %v8692 = vpop.permute.xlu0 %8691
      %8693 = vrot.lane.b32.xlu0 %v1308, 16
      %v8694 = vpop.permute.xlu0 %8693
      %8695 = vrot.lane.b32.xlu0 %v1311, 16
      %v8696 = vpop.permute.xlu0 %8695
      %8697 = vrot.lane.b32.xlu0 %v1314, 16
      %v8698 = vpop.permute.xlu0 %8697
      %8699 = vrot.lane.b32.xlu0 %v1317, 16
      %v8700 = vpop.permute.xlu0 %8699
      %8701 = vrot.lane.b32.xlu0 %v1320, 16
      %v8702 = vpop.permute.xlu0 %8701
      %8703 = vrot.lane.b32.xlu0 %v1323, 16
      %v8704 = vpop.permute.xlu0 %8703
      %8705 = vrot.lane.b32.xlu0 %v1326, 16
      %v8706 = vpop.permute.xlu0 %8705
      %8707 = vrot.lane.b32.xlu0 %v1329, 16
      %v8708 = vpop.permute.xlu0 %8707
      %8709 = vrot.lane.b32.xlu0 %v1332, 16
      %v8710 = vpop.permute.xlu0 %8709
      %8711 = vrot.lane.b32.xlu0 %v1335, 16
      %v8712 = vpop.permute.xlu0 %8711
      %8713 = vrot.lane.b32.xlu0 %v1291, 16
      %v8714 = vpop.permute.xlu0 %8713
      %8715 = vrot.lane.b32.xlu0 %v1294, 16
      %v8716 = vpop.permute.xlu0 %8715
      %8717 = vrot.lane.b32.xlu0 %v1297, 16
      %v8718 = vpop.permute.xlu0 %8717
      %8719 = vrot.lane.b32.xlu0 %v1300, 16
      %v8720 = vpop.permute.xlu0 %8719
      %8721 = vrot.lane.b32.xlu0 %v1303, 16
      %v8722 = vpop.permute.xlu0 %8721
      %8723 = vrot.lane.b32.xlu0 %v1306, 16
      %v8724 = vpop.permute.xlu0 %8723
      %8725 = vrot.lane.b32.xlu0 %v1309, 16
      %v8726 = vpop.permute.xlu0 %8725
      %8727 = vrot.lane.b32.xlu0 %v1312, 16
      %v8728 = vpop.permute.xlu0 %8727
      %8729 = vrot.lane.b32.xlu0 %v1315, 16
      %v8730 = vpop.permute.xlu0 %8729
      %8731 = vrot.lane.b32.xlu0 %v1318, 16
      %v8732 = vpop.permute.xlu0 %8731
      %8733 = vrot.lane.b32.xlu0 %v1321, 16
      %v8734 = vpop.permute.xlu0 %8733
      %8735 = vrot.lane.b32.xlu0 %v1324, 16
      %v8736 = vpop.permute.xlu0 %8735
      %8737 = vrot.lane.b32.xlu0 %v1327, 16
      %v8738 = vpop.permute.xlu0 %8737
      %8739 = vrot.lane.b32.xlu0 %v1330, 16
      %v8740 = vpop.permute.xlu0 %8739
      %8741 = vrot.lane.b32.xlu0 %v1333, 16
      %v8742 = vpop.permute.xlu0 %8741
      %8743 = vrot.lane.b32.xlu0 %v1336, 16
      %v8744 = vpop.permute.xlu0 %8743
      %v8746 = vsel %vm1338, %v8682, 0
      %v8749 = vsel %vm1338, %v8684, 0
      %v8752 = vsel %vm1338, %v8686, 0
      %v8755 = vsel %vm1338, %v8688, 0
      %v8758 = vsel %vm1338, %v8690, 0
      %v8761 = vsel %vm1338, %v8692, 0
      %v8764 = vsel %vm1338, %v8694, 0
      %v8767 = vsel %vm1338, %v8696, 0
      %v8770 = vsel %vm1338, %v8698, 0
      %v8773 = vsel %vm1338, %v8700, 0
      %v8776 = vsel %vm1338, %v8702, 0
      %v8779 = vsel %vm1338, %v8704, 0
      %v8782 = vsel %vm1338, %v8706, 0
      %v8785 = vsel %vm1338, %v8708, 0
      %v8788 = vsel %vm1338, %v8710, 0
      %v8791 = vsel %vm1338, %v8712, 0
      %v8794 = vsel %vm1338, %v8714, 0
      %v8797 = vsel %vm1338, %v8716, 0
      %v8800 = vsel %vm1338, %v8718, 0
      %v8803 = vsel %vm1338, %v8720, 0
      %v8806 = vsel %vm1338, %v8722, 0
      %v8809 = vsel %vm1338, %v8724, 0
      %v8812 = vsel %vm1338, %v8726, 0
      %v8815 = vsel %vm1338, %v8728, 0
      %v8818 = vsel %vm1338, %v8730, 0
      %v8821 = vsel %vm1338, %v8732, 0
      %v8824 = vsel %vm1338, %v8734, 0
      %v8827 = vsel %vm1338, %v8736, 0
      %v8830 = vsel %vm1338, %v8738, 0
      %v8833 = vsel %vm1338, %v8740, 0
      %v8836 = vsel %vm1338, %v8742, 0
      %v8839 = vsel %vm1338, %v8744, 0
      %8841 = vmatprep.subr.bf16.mxu0 0
      %8842 = vmatpush1.bf16.xpose.msra.mxu0 %v8794
      %8843 = vmatprep.subr.bf16.mxu0 0
      %8844 = vmatpush1.bf16.xpose.msra.mxu0 %v8797
      %8845 = vmatprep.subr.bf16.mxu0 0
      %8846 = vmatpush1.bf16.xpose.msra.mxu0 %v8800
      %8847 = vmatprep.subr.bf16.mxu0 0
      %8848 = vmatpush1.bf16.xpose.msra.mxu0 %v8803
      %8849 = vmatprep.subr.bf16.mxu0 0
      %8850 = vmatpush1.bf16.xpose.msra.mxu0 %v8806
      %8851 = vmatprep.subr.bf16.mxu0 0
      %8852 = vmatpush1.bf16.xpose.msra.mxu0 %v8809
      %8853 = vmatprep.subr.bf16.mxu0 0
      %8854 = vmatpush1.bf16.xpose.msra.mxu0 %v8812
      %8855 = vmatprep.subr.bf16.mxu0 0
      %8856 = vmatpush1.bf16.xpose.msra.mxu0 %v8815
      %8857 = vmatprep.subr.bf16.mxu0 0
      %8858 = vmatpush1.bf16.xpose.msra.mxu0 %v8818
      %8859 = vmatprep.subr.bf16.mxu0 0
      %8860 = vmatpush1.bf16.xpose.msra.mxu0 %v8821
      %8861 = vmatprep.subr.bf16.mxu0 0
      %8862 = vmatpush1.bf16.xpose.msra.mxu0 %v8824
      %8863 = vmatprep.subr.bf16.mxu0 0
      %8864 = vmatpush1.bf16.xpose.msra.mxu0 %v8827
      %8865 = vmatprep.subr.bf16.mxu0 0
      %8866 = vmatpush1.bf16.xpose.msra.mxu0 %v8830
      %8867 = vmatprep.subr.bf16.mxu0 0
      %8868 = vmatpush1.bf16.xpose.msra.mxu0 %v8833
      %8869 = vmatprep.subr.bf16.mxu0 0
      %8870 = vmatpush1.bf16.xpose.msra.mxu0 %v8836
      %8871 = vmatprep.subr.bf16.mxu0 0
      %8872 = vmatpush1.bf16.xpose.msra.mxu0 %v8839
      %8873 = vmatprep.mubr.bf16.mxu0 0
      %8874 = vmatmul.mubr.bf16.gmra.mrb[0].mxu0 %v8746
      %v8875 = vpop.f32.mrb[0].mxu0
      %v8876 = vadd.f32 0.0, %v8875
      %v8877 = vpop.f32.mrb[0].mxu0
      %v8878 = vadd.f32 0.0, %v8877
      %v8879 = vpop.f32.mrb[0].mxu0
      %v8880 = vadd.f32 0.0, %v8879
      %v8881 = vpop.f32.mrb[0].mxu0
      %v8882 = vadd.f32 0.0, %v8881
      %8883 = vmatprep.mubr.bf16.mxu0 0
      %8884 = vmatmul.mubr.bf16.gmra.mrb[0].mxu0 %v8749
      %v8885 = vpop.f32.mrb[0].mxu0
      %v8886 = vadd.f32 0.0, %v8885
      %v8887 = vpop.f32.mrb[0].mxu0
      %v8888 = vadd.f32 0.0, %v8887
      %v8889 = vpop.f32.mrb[0].mxu0
      %v8890 = vadd.f32 0.0, %v8889
      %v8891 = vpop.f32.mrb[0].mxu0
      %v8892 = vadd.f32 0.0, %v8891
      %8893 = vmatprep.mubr.bf16.mxu0 0
      %8894 = vmatmul.mubr.bf16.gmra.mrb[0].mxu0 %v8752
      %v8895 = vpop.f32.mrb[0].mxu0
      %v8896 = vadd.f32 0.0, %v8895
      %v8897 = vpop.f32.mrb[0].mxu0
      %v8898 = vadd.f32 0.0, %v8897
      %v8899 = vpop.f32.mrb[0].mxu0
      %v8900 = vadd.f32 0.0, %v8899
      %v8901 = vpop.f32.mrb[0].mxu0
      %v8902 = vadd.f32 0.0, %v8901
      %8903 = vmatprep.mubr.bf16.mxu0 0
      %8904 = vmatmul.mubr.bf16.gmra.mrb[0].mxu0 %v8755
      %v8905 = vpop.f32.mrb[0].mxu0
      %v8906 = vadd.f32 0.0, %v8905
      %v8907 = vpop.f32.mrb[0].mxu0
      %v8908 = vadd.f32 0.0, %v8907
      %v8909 = vpop.f32.mrb[0].mxu0
      %v8910 = vadd.f32 0.0, %v8909
      %v8911 = vpop.f32.mrb[0].mxu0
      %v8912 = vadd.f32 0.0, %v8911
      %8913 = vmatprep.mubr.bf16.mxu0 0
      %8914 = vmatmul.mubr.bf16.gmra.mrb[0].mxu0 %v8758
      %v8915 = vpop.f32.mrb[0].mxu0
      %v8916 = vadd.f32 0.0, %v8915
      %v8917 = vpop.f32.mrb[0].mxu0
      %v8918 = vadd.f32 0.0, %v8917
      %v8919 = vpop.f32.mrb[0].mxu0
      %v8920 = vadd.f32 0.0, %v8919
      %v8921 = vpop.f32.mrb[0].mxu0
      %v8922 = vadd.f32 0.0, %v8921
      %8923 = vmatprep.mubr.bf16.mxu0 0
      %8924 = vmatmul.mubr.bf16.gmra.mrb[0].mxu0 %v8761
      %v8925 = vpop.f32.mrb[0].mxu0
      %v8926 = vadd.f32 0.0, %v8925
      %v8927 = vpop.f32.mrb[0].mxu0
      %v8928 = vadd.f32 0.0, %v8927
      %v8929 = vpop.f32.mrb[0].mxu0
      %v8930 = vadd.f32 0.0, %v8929
      %v8931 = vpop.f32.mrb[0].mxu0
      %v8932 = vadd.f32 0.0, %v8931
      %8933 = vmatprep.mubr.bf16.mxu0 0
      %8934 = vmatmul.mubr.bf16.gmra.mrb[0].mxu0 %v8764
      %v8935 = vpop.f32.mrb[0].mxu0
      %v8936 = vadd.f32 0.0, %v8935
      %v8937 = vpop.f32.mrb[0].mxu0
      %v8938 = vadd.f32 0.0, %v8937
      %v8939 = vpop.f32.mrb[0].mxu0
      %v8940 = vadd.f32 0.0, %v8939
      %v8941 = vpop.f32.mrb[0].mxu0
      %v8942 = vadd.f32 0.0, %v8941
      %8943 = vmatprep.mubr.bf16.mxu0 0
      %8944 = vmatmul.mubr.bf16.gmra.mrb[0].mxu0 %v8767
      %v8945 = vpop.f32.mrb[0].mxu0
      %v8946 = vadd.f32 0.0, %v8945
      %v8947 = vpop.f32.mrb[0].mxu0
      %v8948 = vadd.f32 0.0, %v8947
      %v8949 = vpop.f32.mrb[0].mxu0
      %v8950 = vadd.f32 0.0, %v8949
      %v8951 = vpop.f32.mrb[0].mxu0
      %v8952 = vadd.f32 0.0, %v8951
      %8953 = vmatprep.mubr.bf16.mxu0 0
      %8954 = vmatmul.mubr.bf16.gmra.mrb[0].mxu0 %v8770
      %v8955 = vpop.f32.mrb[0].mxu0
      %v8956 = vadd.f32 0.0, %v8955
      %v8957 = vpop.f32.mrb[0].mxu0
      %v8958 = vadd.f32 0.0, %v8957
      %v8959 = vpop.f32.mrb[0].mxu0
      %v8960 = vadd.f32 0.0, %v8959
      %v8961 = vpop.f32.mrb[0].mxu0
      %v8962 = vadd.f32 0.0, %v8961
      %8963 = vmatprep.mubr.bf16.mxu0 0
      %8964 = vmatmul.mubr.bf16.gmra.mrb[0].mxu0 %v8773
      %v8965 = vpop.f32.mrb[0].mxu0
      %v8966 = vadd.f32 0.0, %v8965
      %v8967 = vpop.f32.mrb[0].mxu0
      %v8968 = vadd.f32 0.0, %v8967
      %v8969 = vpop.f32.mrb[0].mxu0
      %v8970 = vadd.f32 0.0, %v8969
      %v8971 = vpop.f32.mrb[0].mxu0
      %v8972 = vadd.f32 0.0, %v8971
      %8973 = vmatprep.mubr.bf16.mxu0 0
      %8974 = vmatmul.mubr.bf16.gmra.mrb[0].mxu0 %v8776
      %v8975 = vpop.f32.mrb[0].mxu0
      %v8976 = vadd.f32 0.0, %v8975
      %v8977 = vpop.f32.mrb[0].mxu0
      %v8978 = vadd.f32 0.0, %v8977
      %v8979 = vpop.f32.mrb[0].mxu0
      %v8980 = vadd.f32 0.0, %v8979
      %v8981 = vpop.f32.mrb[0].mxu0
      %v8982 = vadd.f32 0.0, %v8981
      %8983 = vmatprep.mubr.bf16.mxu0 0
      %8984 = vmatmul.mubr.bf16.gmra.mrb[0].mxu0 %v8779
      %v8985 = vpop.f32.mrb[0].mxu0
      %v8986 = vadd.f32 0.0, %v8985
      %v8987 = vpop.f32.mrb[0].mxu0
      %v8988 = vadd.f32 0.0, %v8987
      %v8989 = vpop.f32.mrb[0].mxu0
      %v8990 = vadd.f32 0.0, %v8989
      %v8991 = vpop.f32.mrb[0].mxu0
      %v8992 = vadd.f32 0.0, %v8991
      %8993 = vmatprep.mubr.bf16.mxu0 0
      %8994 = vmatmul.mubr.bf16.gmra.mrb[0].mxu0 %v8782
      %v8995 = vpop.f32.mrb[0].mxu0
      %v8996 = vadd.f32 0.0, %v8995
      %v8997 = vpop.f32.mrb[0].mxu0
      %v8998 = vadd.f32 0.0, %v8997
      %v8999 = vpop.f32.mrb[0].mxu0
      %v9000 = vadd.f32 0.0, %v8999
      %v9001 = vpop.f32.mrb[0].mxu0
      %v9002 = vadd.f32 0.0, %v9001
      %9003 = vmatprep.mubr.bf16.mxu0 0
      %9004 = vmatmul.mubr.bf16.gmra.mrb[0].mxu0 %v8785
      %v9005 = vpop.f32.mrb[0].mxu0
      %v9006 = vadd.f32 0.0, %v9005
      %v9007 = vpop.f32.mrb[0].mxu0
      %v9008 = vadd.f32 0.0, %v9007
      %v9009 = vpop.f32.mrb[0].mxu0
      %v9010 = vadd.f32 0.0, %v9009
      %v9011 = vpop.f32.mrb[0].mxu0
      %v9012 = vadd.f32 0.0, %v9011
      %9013 = vmatprep.mubr.bf16.mxu0 0
      %9014 = vmatmul.mubr.bf16.gmra.mrb[0].mxu0 %v8788
      %v9015 = vpop.f32.mrb[0].mxu0
      %v9016 = vadd.f32 0.0, %v9015
      %v9017 = vpop.f32.mrb[0].mxu0
      %v9018 = vadd.f32 0.0, %v9017
      %v9019 = vpop.f32.mrb[0].mxu0
      %v9020 = vadd.f32 0.0, %v9019
      %v9021 = vpop.f32.mrb[0].mxu0
      %v9022 = vadd.f32 0.0, %v9021
      %9023 = vmatprep.mubr.bf16.mxu0 0
      %9024 = vmatmul.mubr.bf16.gmra.mrb[0].mxu0 %v8791
      %v9025 = vpop.f32.mrb[0].mxu0
      %v9026 = vadd.f32 0.0, %v9025
      %v9027 = vpop.f32.mrb[0].mxu0
      %v9028 = vadd.f32 0.0, %v9027
      %v9029 = vpop.f32.mrb[0].mxu0
      %v9030 = vadd.f32 0.0, %v9029
      %v9031 = vpop.f32.mrb[0].mxu0
      %v9032 = vadd.f32 0.0, %v9031
      %9033 = vdwg.mxu0
      %v9034 = vmax.f32 %v8876, %v8878
      %9035 = vmax.xlane.f32.xlu0 %v9034
      %v9036 = vpop.xlane.xlu0 %9035
      %v9037 = vmax.f32 %v8880, %v8882
      %9038 = vmax.xlane.f32.xlu0 %v9037
      %v9039 = vpop.xlane.xlu0 %9038
      %v9040 = vmax.f32 %v8886, %v8888
      %9041 = vmax.xlane.f32.xlu0 %v9040
      %v9042 = vpop.xlane.xlu0 %9041
      %v9043 = vmax.f32 %v8890, %v8892
      %9044 = vmax.xlane.f32.xlu0 %v9043
      %v9045 = vpop.xlane.xlu0 %9044
      %v9046 = vmax.f32 %v8896, %v8898
      %9047 = vmax.xlane.f32.xlu0 %v9046
      %v9048 = vpop.xlane.xlu0 %9047
      %v9049 = vmax.f32 %v8900, %v8902
      %9050 = vmax.xlane.f32.xlu0 %v9049
      %v9051 = vpop.xlane.xlu0 %9050
      %v9052 = vmax.f32 %v8906, %v8908
      %9053 = vmax.xlane.f32.xlu0 %v9052
      %v9054 = vpop.xlane.xlu0 %9053
      %v9055 = vmax.f32 %v8910, %v8912
      %9056 = vmax.xlane.f32.xlu0 %v9055
      %v9057 = vpop.xlane.xlu0 %9056
      %v9058 = vmax.f32 %v8916, %v8918
      %9059 = vmax.xlane.f32.xlu0 %v9058
      %v9060 = vpop.xlane.xlu0 %9059
      %v9061 = vmax.f32 %v8920, %v8922
      %9062 = vmax.xlane.f32.xlu0 %v9061
      %v9063 = vpop.xlane.xlu0 %9062
      %v9064 = vmax.f32 %v8926, %v8928
      %9065 = vmax.xlane.f32.xlu0 %v9064
      %v9066 = vpop.xlane.xlu0 %9065
      %v9067 = vmax.f32 %v8930, %v8932
      %9068 = vmax.xlane.f32.xlu0 %v9067
      %v9069 = vpop.xlane.xlu0 %9068
      %v9070 = vmax.f32 %v8936, %v8938
      %9071 = vmax.xlane.f32.xlu0 %v9070
      %v9072 = vpop.xlane.xlu0 %9071
      %v9073 = vmax.f32 %v8940, %v8942
      %9074 = vmax.xlane.f32.xlu0 %v9073
      %v9075 = vpop.xlane.xlu0 %9074
      %v9076 = vmax.f32 %v8946, %v8948
      %9077 = vmax.xlane.f32.xlu0 %v9076
      %v9078 = vpop.xlane.xlu0 %9077
      %v9079 = vmax.f32 %v8950, %v8952
      %9080 = vmax.xlane.f32.xlu0 %v9079
      %v9081 = vpop.xlane.xlu0 %9080
      %v9082 = vmax.f32 %v8956, %v8958
      %9083 = vmax.xlane.f32.xlu0 %v9082
      %v9084 = vpop.xlane.xlu0 %9083
      %v9085 = vmax.f32 %v8960, %v8962
      %9086 = vmax.xlane.f32.xlu0 %v9085
      %v9087 = vpop.xlane.xlu0 %9086
      %v9088 = vmax.f32 %v8966, %v8968
      %9089 = vmax.xlane.f32.xlu0 %v9088
      %v9090 = vpop.xlane.xlu0 %9089
      %v9091 = vmax.f32 %v8970, %v8972
      %9092 = vmax.xlane.f32.xlu0 %v9091
      %v9093 = vpop.xlane.xlu0 %9092
      %v9094 = vmax.f32 %v8976, %v8978
      %9095 = vmax.xlane.f32.xlu0 %v9094
      %v9096 = vpop.xlane.xlu0 %9095
      %v9097 = vmax.f32 %v8980, %v8982
      %9098 = vmax.xlane.f32.xlu0 %v9097
      %v9099 = vpop.xlane.xlu0 %9098
      %v9100 = vmax.f32 %v8986, %v8988
      %9101 = vmax.xlane.f32.xlu0 %v9100
      %v9102 = vpop.xlane.xlu0 %9101
      %v9103 = vmax.f32 %v8990, %v8992
      %9104 = vmax.xlane.f32.xlu0 %v9103
      %v9105 = vpop.xlane.xlu0 %9104
      %v9106 = vmax.f32 %v8996, %v8998
      %9107 = vmax.xlane.f32.xlu0 %v9106
      %v9108 = vpop.xlane.xlu0 %9107
      %v9109 = vmax.f32 %v9000, %v9002
      %9110 = vmax.xlane.f32.xlu0 %v9109
      %v9111 = vpop.xlane.xlu0 %9110
      %v9112 = vmax.f32 %v9006, %v9008
      %9113 = vmax.xlane.f32.xlu0 %v9112
      %v9114 = vpop.xlane.xlu0 %9113
      %v9115 = vmax.f32 %v9010, %v9012
      %9116 = vmax.xlane.f32.xlu0 %v9115
      %v9117 = vpop.xlane.xlu0 %9116
      %v9118 = vmax.f32 %v9016, %v9018
      %9119 = vmax.xlane.f32.xlu0 %v9118
      %v9120 = vpop.xlane.xlu0 %9119
      %v9121 = vmax.f32 %v9020, %v9022
      %9122 = vmax.xlane.f32.xlu0 %v9121
      %v9123 = vpop.xlane.xlu0 %9122
      %v9124 = vmax.f32 %v9026, %v9028
      %9125 = vmax.xlane.f32.xlu0 %v9124
      %v9126 = vpop.xlane.xlu0 %9125
      %v9127 = vmax.f32 %v9030, %v9032
      %9128 = vmax.xlane.f32.xlu0 %v9127
      %v9129 = vpop.xlane.xlu0 %9128
      %v9130 = vsub.f32 %v8876, %v9036
      %v9131 = vsub.f32 %v8878, %v9036
      %v9132 = vsub.f32 %v8880, %v9039
      %v9133 = vsub.f32 %v8882, %v9039
      %v9134 = vsub.f32 %v8886, %v9042
      %v9135 = vsub.f32 %v8888, %v9042
      %v9136 = vsub.f32 %v8890, %v9045
      %v9137 = vsub.f32 %v8892, %v9045
      %v9138 = vsub.f32 %v8896, %v9048
      %v9139 = vsub.f32 %v8898, %v9048
      %v9140 = vsub.f32 %v8900, %v9051
      %v9141 = vsub.f32 %v8902, %v9051
      %v9142 = vsub.f32 %v8906, %v9054
      %v9143 = vsub.f32 %v8908, %v9054
      %v9144 = vsub.f32 %v8910, %v9057
      %v9145 = vsub.f32 %v8912, %v9057
      %v9146 = vsub.f32 %v8916, %v9060
      %v9147 = vsub.f32 %v8918, %v9060
      %v9148 = vsub.f32 %v8920, %v9063
      %v9149 = vsub.f32 %v8922, %v9063
      %v9150 = vsub.f32 %v8926, %v9066
      %v9151 = vsub.f32 %v8928, %v9066
      %v9152 = vsub.f32 %v8930, %v9069
      %v9153 = vsub.f32 %v8932, %v9069
      %v9154 = vsub.f32 %v8936, %v9072
      %v9155 = vsub.f32 %v8938, %v9072
      %v9156 = vsub.f32 %v8940, %v9075
      %v9157 = vsub.f32 %v8942, %v9075
      %v9158 = vsub.f32 %v8946, %v9078
      %v9159 = vsub.f32 %v8948, %v9078
      %v9160 = vsub.f32 %v8950, %v9081
      %v9161 = vsub.f32 %v8952, %v9081
      %v9162 = vsub.f32 %v8956, %v9084
      %v9163 = vsub.f32 %v8958, %v9084
      %v9164 = vsub.f32 %v8960, %v9087
      %v9165 = vsub.f32 %v8962, %v9087
      %v9166 = vsub.f32 %v8966, %v9090
      %v9167 = vsub.f32 %v8968, %v9090
      %v9168 = vsub.f32 %v8970, %v9093
      %v9169 = vsub.f32 %v8972, %v9093
      %v9170 = vsub.f32 %v8976, %v9096
      %v9171 = vsub.f32 %v8978, %v9096
      %v9172 = vsub.f32 %v8980, %v9099
      %v9173 = vsub.f32 %v8982, %v9099
      %v9174 = vsub.f32 %v8986, %v9102
      %v9175 = vsub.f32 %v8988, %v9102
      %v9176 = vsub.f32 %v8990, %v9105
      %v9177 = vsub.f32 %v8992, %v9105
      %v9178 = vsub.f32 %v8996, %v9108
      %v9179 = vsub.f32 %v8998, %v9108
      %v9180 = vsub.f32 %v9000, %v9111
      %v9181 = vsub.f32 %v9002, %v9111
      %v9182 = vsub.f32 %v9006, %v9114
      %v9183 = vsub.f32 %v9008, %v9114
      %v9184 = vsub.f32 %v9010, %v9117
      %v9185 = vsub.f32 %v9012, %v9117
      %v9186 = vsub.f32 %v9016, %v9120
      %v9187 = vsub.f32 %v9018, %v9120
      %v9188 = vsub.f32 %v9020, %v9123
      %v9189 = vsub.f32 %v9022, %v9123
      %v9190 = vsub.f32 %v9026, %v9126
      %v9191 = vsub.f32 %v9028, %v9126
      %v9192 = vsub.f32 %v9030, %v9129
      %v9193 = vsub.f32 %v9032, %v9129
      %v9194 = vmul.f32 %v9130, 1.442695
      %v9195 = vpow.pop %v9194
      %v9196 = vmul.f32 %v9131, 1.442695
      %v9197 = vpow.pop %v9196
      %v9198 = vmul.f32 %v9132, 1.442695
      %v9199 = vpow.pop %v9198
      %v9200 = vmul.f32 %v9133, 1.442695
      %v9201 = vpow.pop %v9200
      %v9202 = vmul.f32 %v9134, 1.442695
      %v9203 = vpow.pop %v9202
      %v9204 = vmul.f32 %v9135, 1.442695
      %v9205 = vpow.pop %v9204
      %v9206 = vmul.f32 %v9136, 1.442695
      %v9207 = vpow.pop %v9206
      %v9208 = vmul.f32 %v9137, 1.442695
      %v9209 = vpow.pop %v9208
      %v9210 = vmul.f32 %v9138, 1.442695
      %v9211 = vpow.pop %v9210
      %v9212 = vmul.f32 %v9139, 1.442695
      %v9213 = vpow.pop %v9212
      %v9214 = vmul.f32 %v9140, 1.442695
      %v9215 = vpow.pop %v9214
      %v9216 = vmul.f32 %v9141, 1.442695
      %v9217 = vpow.pop %v9216
      %v9218 = vmul.f32 %v9142, 1.442695
      %v9219 = vpow.pop %v9218
      %v9220 = vmul.f32 %v9143, 1.442695
      %v9221 = vpow.pop %v9220
      %v9222 = vmul.f32 %v9144, 1.442695
      %v9223 = vpow.pop %v9222
      %v9224 = vmul.f32 %v9145, 1.442695
      %v9225 = vpow.pop %v9224
      %v9226 = vmul.f32 %v9146, 1.442695
      %v9227 = vpow.pop %v9226
      %v9228 = vmul.f32 %v9147, 1.442695
      %v9229 = vpow.pop %v9228
      %v9230 = vmul.f32 %v9148, 1.442695
      %v9231 = vpow.pop %v9230
      %v9232 = vmul.f32 %v9149, 1.442695
      %v9233 = vpow.pop %v9232
      %v9234 = vmul.f32 %v9150, 1.442695
      %v9235 = vpow.pop %v9234
      %v9236 = vmul.f32 %v9151, 1.442695
      %v9237 = vpow.pop %v9236
      %v9238 = vmul.f32 %v9152, 1.442695
      %v9239 = vpow.pop %v9238
      %v9240 = vmul.f32 %v9153, 1.442695
      %v9241 = vpow.pop %v9240
      %v9242 = vmul.f32 %v9154, 1.442695
      %v9243 = vpow.pop %v9242
      %v9244 = vmul.f32 %v9155, 1.442695
      %v9245 = vpow.pop %v9244
      %v9246 = vmul.f32 %v9156, 1.442695
      %v9247 = vpow.pop %v9246
      %v9248 = vmul.f32 %v9157, 1.442695
      %v9249 = vpow.pop %v9248
      %v9250 = vmul.f32 %v9158, 1.442695
      %v9251 = vpow.pop %v9250
      %v9252 = vmul.f32 %v9159, 1.442695
      %v9253 = vpow.pop %v9252
      %v9254 = vmul.f32 %v9160, 1.442695
      %v9255 = vpow.pop %v9254
      %v9256 = vmul.f32 %v9161, 1.442695
      %v9257 = vpow.pop %v9256
      %v9258 = vmul.f32 %v9162, 1.442695
      %v9259 = vpow.pop %v9258
      %v9260 = vmul.f32 %v9163, 1.442695
      %v9261 = vpow.pop %v9260
      %v9262 = vmul.f32 %v9164, 1.442695
      %v9263 = vpow.pop %v9262
      %v9264 = vmul.f32 %v9165, 1.442695
      %v9265 = vpow.pop %v9264
      %v9266 = vmul.f32 %v9166, 1.442695
      %v9267 = vpow.pop %v9266
      %v9268 = vmul.f32 %v9167, 1.442695
      %v9269 = vpow.pop %v9268
      %v9270 = vmul.f32 %v9168, 1.442695
      %v9271 = vpow.pop %v9270
      %v9272 = vmul.f32 %v9169, 1.442695
      %v9273 = vpow.pop %v9272
      %v9274 = vmul.f32 %v9170, 1.442695
      %v9275 = vpow.pop %v9274
      %v9276 = vmul.f32 %v9171, 1.442695
      %v9277 = vpow.pop %v9276
      %v9278 = vmul.f32 %v9172, 1.442695
      %v9279 = vpow.pop %v9278
      %v9280 = vmul.f32 %v9173, 1.442695
      %v9281 = vpow.pop %v9280
      %v9282 = vmul.f32 %v9174, 1.442695
      %v9283 = vpow.pop %v9282
      %v9284 = vmul.f32 %v9175, 1.442695
      %v9285 = vpow.pop %v9284
      %v9286 = vmul.f32 %v9176, 1.442695
      %v9287 = vpow.pop %v9286
      %v9288 = vmul.f32 %v9177, 1.442695
      %v9289 = vpow.pop %v9288
      %v9290 = vmul.f32 %v9178, 1.442695
      %v9291 = vpow.pop %v9290
      %v9292 = vmul.f32 %v9179, 1.442695
      %v9293 = vpow.pop %v9292
      %v9294 = vmul.f32 %v9180, 1.442695
      %v9295 = vpow.pop %v9294
      %v9296 = vmul.f32 %v9181, 1.442695
      %v9297 = vpow.pop %v9296
      %v9298 = vmul.f32 %v9182, 1.442695
      %v9299 = vpow.pop %v9298
      %v9300 = vmul.f32 %v9183, 1.442695
      %v9301 = vpow.pop %v9300
      %v9302 = vmul.f32 %v9184, 1.442695
      %v9303 = vpow.pop %v9302
      %v9304 = vmul.f32 %v9185, 1.442695
      %v9305 = vpow.pop %v9304
      %v9306 = vmul.f32 %v9186, 1.442695
      %v9307 = vpow.pop %v9306
      %v9308 = vmul.f32 %v9187, 1.442695
      %v9309 = vpow.pop %v9308
      %v9310 = vmul.f32 %v9188, 1.442695
      %v9311 = vpow.pop %v9310
      %v9312 = vmul.f32 %v9189, 1.442695
      %v9313 = vpow.pop %v9312
      %v9314 = vmul.f32 %v9190, 1.442695
      %v9315 = vpow.pop %v9314
      %v9316 = vmul.f32 %v9191, 1.442695
      %v9317 = vpow.pop %v9316
      %v9318 = vmul.f32 %v9192, 1.442695
      %v9319 = vpow.pop %v9318
      %v9320 = vmul.f32 %v9193, 1.442695
      %v9321 = vpow.pop %v9320
      %v9322 = vadd.f32 %v9195, %v9197
      %9323 = vadd.xlane.f32.xlu0 %v9322
      %v9324 = vpop.xlane.xlu0 %9323
      %v9325 = vadd.f32 %v9199, %v9201
      %9326 = vadd.xlane.f32.xlu0 %v9325
      %v9327 = vpop.xlane.xlu0 %9326
      %v9328 = vadd.f32 %v9203, %v9205
      %9329 = vadd.xlane.f32.xlu0 %v9328
      %v9330 = vpop.xlane.xlu0 %9329
      %v9331 = vadd.f32 %v9207, %v9209
      %9332 = vadd.xlane.f32.xlu0 %v9331
      %v9333 = vpop.xlane.xlu0 %9332
      %v9334 = vadd.f32 %v9211, %v9213
      %9335 = vadd.xlane.f32.xlu0 %v9334
      %v9336 = vpop.xlane.xlu0 %9335
      %v9337 = vadd.f32 %v9215, %v9217
      %9338 = vadd.xlane.f32.xlu0 %v9337
      %v9339 = vpop.xlane.xlu0 %9338
      %v9340 = vadd.f32 %v9219, %v9221
      %9341 = vadd.xlane.f32.xlu0 %v9340
      %v9342 = vpop.xlane.xlu0 %9341
      %v9343 = vadd.f32 %v9223, %v9225
      %9344 = vadd.xlane.f32.xlu0 %v9343
      %v9345 = vpop.xlane.xlu0 %9344
      %v9346 = vadd.f32 %v9227, %v9229
      %9347 = vadd.xlane.f32.xlu0 %v9346
      %v9348 = vpop.xlane.xlu0 %9347
      %v9349 = vadd.f32 %v9231, %v9233
      %9350 = vadd.xlane.f32.xlu0 %v9349
      %v9351 = vpop.xlane.xlu0 %9350
      %v9352 = vadd.f32 %v9235, %v9237
      %9353 = vadd.xlane.f32.xlu0 %v9352
      %v9354 = vpop.xlane.xlu0 %9353
      %v9355 = vadd.f32 %v9239, %v9241
      %9356 = vadd.xlane.f32.xlu0 %v9355
      %v9357 = vpop.xlane.xlu0 %9356
      %v9358 = vadd.f32 %v9243, %v9245
      %9359 = vadd.xlane.f32.xlu0 %v9358
      %v9360 = vpop.xlane.xlu0 %9359
      %v9361 = vadd.f32 %v9247, %v9249
      %9362 = vadd.xlane.f32.xlu0 %v9361
      %v9363 = vpop.xlane.xlu0 %9362
      %v9364 = vadd.f32 %v9251, %v9253
      %9365 = vadd.xlane.f32.xlu0 %v9364
      %v9366 = vpop.xlane.xlu0 %9365
      %v9367 = vadd.f32 %v9255, %v9257
      %9368 = vadd.xlane.f32.xlu0 %v9367
      %v9369 = vpop.xlane.xlu0 %9368
      %v9370 = vadd.f32 %v9259, %v9261
      %9371 = vadd.xlane.f32.xlu0 %v9370
      %v9372 = vpop.xlane.xlu0 %9371
      %v9373 = vadd.f32 %v9263, %v9265
      %9374 = vadd.xlane.f32.xlu0 %v9373
      %v9375 = vpop.xlane.xlu0 %9374
      %v9376 = vadd.f32 %v9267, %v9269
      %9377 = vadd.xlane.f32.xlu0 %v9376
      %v9378 = vpop.xlane.xlu0 %9377
      %v9379 = vadd.f32 %v9271, %v9273
      %9380 = vadd.xlane.f32.xlu0 %v9379
      %v9381 = vpop.xlane.xlu0 %9380
      %v9382 = vadd.f32 %v9275, %v9277
      %9383 = vadd.xlane.f32.xlu0 %v9382
      %v9384 = vpop.xlane.xlu0 %9383
      %v9385 = vadd.f32 %v9279, %v9281
      %9386 = vadd.xlane.f32.xlu0 %v9385
      %v9387 = vpop.xlane.xlu0 %9386
      %v9388 = vadd.f32 %v9283, %v9285
      %9389 = vadd.xlane.f32.xlu0 %v9388
      %v9390 = vpop.xlane.xlu0 %9389
      %v9391 = vadd.f32 %v9287, %v9289
      %9392 = vadd.xlane.f32.xlu0 %v9391
      %v9393 = vpop.xlane.xlu0 %9392
      %v9394 = vadd.f32 %v9291, %v9293
      %9395 = vadd.xlane.f32.xlu0 %v9394
      %v9396 = vpop.xlane.xlu0 %9395
      %v9397 = vadd.f32 %v9295, %v9297
      %9398 = vadd.xlane.f32.xlu0 %v9397
      %v9399 = vpop.xlane.xlu0 %9398
      %v9400 = vadd.f32 %v9299, %v9301
      %9401 = vadd.xlane.f32.xlu0 %v9400
      %v9402 = vpop.xlane.xlu0 %9401
      %v9403 = vadd.f32 %v9303, %v9305
      %9404 = vadd.xlane.f32.xlu0 %v9403
      %v9405 = vpop.xlane.xlu0 %9404
      %v9406 = vadd.f32 %v9307, %v9309
      %9407 = vadd.xlane.f32.xlu0 %v9406
      %v9408 = vpop.xlane.xlu0 %9407
      %v9409 = vadd.f32 %v9311, %v9313
      %9410 = vadd.xlane.f32.xlu0 %v9409
      %v9411 = vpop.xlane.xlu0 %9410
      %v9412 = vadd.f32 %v9315, %v9317
      %9413 = vadd.xlane.f32.xlu0 %v9412
      %v9414 = vpop.xlane.xlu0 %9413
      %v9415 = vadd.f32 %v9319, %v9321
      %9416 = vadd.xlane.f32.xlu0 %v9415
      %v9417 = vpop.xlane.xlu0 %9416
      %v9418 = vpack.c.bf16 %v9199, %v9195
      %v9419 = vpack.c.bf16 %v9201, %v9197
      %v9420 = vpack.c.bf16 %v9207, %v9203
      %v9421 = vpack.c.bf16 %v9209, %v9205
      %v9422 = vpack.c.bf16 %v9215, %v9211
      %v9423 = vpack.c.bf16 %v9217, %v9213
      %v9424 = vpack.c.bf16 %v9223, %v9219
      %v9425 = vpack.c.bf16 %v9225, %v9221
      %v9426 = vpack.c.bf16 %v9231, %v9227
      %v9427 = vpack.c.bf16 %v9233, %v9229
      %v9428 = vpack.c.bf16 %v9239, %v9235
      %v9429 = vpack.c.bf16 %v9241, %v9237
      %v9430 = vpack.c.bf16 %v9247, %v9243
      %v9431 = vpack.c.bf16 %v9249, %v9245
      %v9432 = vpack.c.bf16 %v9255, %v9251
      %v9433 = vpack.c.bf16 %v9257, %v9253
      %v9434 = vpack.c.bf16 %v9263, %v9259
      %v9435 = vpack.c.bf16 %v9265, %v9261
      %v9436 = vpack.c.bf16 %v9271, %v9267
      %v9437 = vpack.c.bf16 %v9273, %v9269
      %v9438 = vpack.c.bf16 %v9279, %v9275
      %v9439 = vpack.c.bf16 %v9281, %v9277
      %v9440 = vpack.c.bf16 %v9287, %v9283
      %v9441 = vpack.c.bf16 %v9289, %v9285
      %v9442 = vpack.c.bf16 %v9295, %v9291
      %v9443 = vpack.c.bf16 %v9297, %v9293
      %v9444 = vpack.c.bf16 %v9303, %v9299
      %v9445 = vpack.c.bf16 %v9305, %v9301
      %v9446 = vpack.c.bf16 %v9311, %v9307
      %v9447 = vpack.c.bf16 %v9313, %v9309
      %v9448 = vpack.c.bf16 %v9319, %v9315
      %v9449 = vpack.c.bf16 %v9321, %v9317
      %9450 = vrot.lane.b32.xlu0 %v1292, 16
      %v9451 = vpop.permute.xlu0 %9450
      %9452 = vrot.lane.b32.xlu0 %v1295, 16
      %v9453 = vpop.permute.xlu0 %9452
      %9454 = vrot.lane.b32.xlu0 %v1298, 16
      %v9455 = vpop.permute.xlu0 %9454
      %9456 = vrot.lane.b32.xlu0 %v1301, 16
      %v9457 = vpop.permute.xlu0 %9456
      %9458 = vrot.lane.b32.xlu0 %v1304, 16
      %v9459 = vpop.permute.xlu0 %9458
      %9460 = vrot.lane.b32.xlu0 %v1307, 16
      %v9461 = vpop.permute.xlu0 %9460
      %9462 = vrot.lane.b32.xlu0 %v1310, 16
      %v9463 = vpop.permute.xlu0 %9462
      %9464 = vrot.lane.b32.xlu0 %v1313, 16
      %v9465 = vpop.permute.xlu0 %9464
      %9466 = vrot.lane.b32.xlu0 %v1316, 16
      %v9467 = vpop.permute.xlu0 %9466
      %9468 = vrot.lane.b32.xlu0 %v1319, 16
      %v9469 = vpop.permute.xlu0 %9468
      %9470 = vrot.lane.b32.xlu0 %v1322, 16
      %v9471 = vpop.permute.xlu0 %9470
      %9472 = vrot.lane.b32.xlu0 %v1325, 16
      %v9473 = vpop.permute.xlu0 %9472
      %9474 = vrot.lane.b32.xlu0 %v1328, 16
      %v9475 = vpop.permute.xlu0 %9474
      %9476 = vrot.lane.b32.xlu0 %v1331, 16
      %v9477 = vpop.permute.xlu0 %9476
      %9478 = vrot.lane.b32.xlu0 %v1334, 16
      %v9479 = vpop.permute.xlu0 %9478
      %9480 = vrot.lane.b32.xlu0 %v1337, 16
      %v9481 = vpop.permute.xlu0 %9480
      %9498 = vmatprep.subr.bf16.mxu0 0
      %9499 = vmatpush1.bf16.msra.mxu0 %v9451
      %9500 = vmatprep.subr.bf16.mxu0 0
      %9501 = vmatpush1.bf16.msra.mxu0 %v9453
      %9502 = vmatprep.subr.bf16.mxu0 0
      %9503 = vmatpush1.bf16.msra.mxu0 %v9455
      %9504 = vmatprep.subr.bf16.mxu0 0
      %9505 = vmatpush1.bf16.msra.mxu0 %v9457
      %9506 = vmatprep.subr.bf16.mxu0 0
      %9507 = vmatpush1.bf16.msra.mxu0 %v9459
      %9508 = vmatprep.subr.bf16.mxu0 0
      %9509 = vmatpush1.bf16.msra.mxu0 %v9461
      %9510 = vmatprep.subr.bf16.mxu0 0
      %9511 = vmatpush1.bf16.msra.mxu0 %v9463
      %9512 = vmatprep.subr.bf16.mxu0 0
      %9513 = vmatpush1.bf16.msra.mxu0 %v9465
      %9514 = vmatprep.subr.bf16.mxu0 0
      %9515 = vmatpush1.bf16.msra.mxu0 %v9467
      %9516 = vmatprep.subr.bf16.mxu0 0
      %9517 = vmatpush1.bf16.msra.mxu0 %v9469
      %9518 = vmatprep.subr.bf16.mxu0 0
      %9519 = vmatpush1.bf16.msra.mxu0 %v9471
      %9520 = vmatprep.subr.bf16.mxu0 0
      %9521 = vmatpush1.bf16.msra.mxu0 %v9473
      %9522 = vmatprep.subr.bf16.mxu0 0
      %9523 = vmatpush1.bf16.msra.mxu0 %v9475
      %9524 = vmatprep.subr.bf16.mxu0 0
      %9525 = vmatpush1.bf16.msra.mxu0 %v9477
      %9526 = vmatprep.subr.bf16.mxu0 0
      %9527 = vmatpush1.bf16.msra.mxu0 %v9479
      %9528 = vmatprep.subr.bf16.mxu0 0
      %9529 = vmatpush1.bf16.msra.mxu0 %v9481
      %9530 = vmatprep.mubr.bf16.mxu0 %v9419
      %9531 = vmatmul.mubr.bf16.gmra.mrb[0].mxu0 %v9418
      %v9532 = vpop.f32.mrb[0].mxu0
      %v9533 = vadd.f32 0.0, %v9532
      %v9534 = vpop.f32.mrb[0].mxu0
      %v9535 = vpop.f32.mrb[0].mxu0
      %v9536 = vadd.f32 0.0, %v9535
      %v9537 = vpop.f32.mrb[0].mxu0
      %9538 = vmatprep.mubr.bf16.mxu0 %v9421
      %9539 = vmatmul.mubr.bf16.gmra.mrb[0].mxu0 %v9420
      %v9540 = vpop.f32.mrb[0].mxu0
      %v9541 = vadd.f32 0.0, %v9540
      %v9542 = vpop.f32.mrb[0].mxu0
      %v9543 = vpop.f32.mrb[0].mxu0
      %v9544 = vadd.f32 0.0, %v9543
      %v9545 = vpop.f32.mrb[0].mxu0
      %9546 = vmatprep.mubr.bf16.mxu0 %v9423
      %9547 = vmatmul.mubr.bf16.gmra.mrb[0].mxu0 %v9422
      %v9548 = vpop.f32.mrb[0].mxu0
      %v9549 = vadd.f32 0.0, %v9548
      %v9550 = vpop.f32.mrb[0].mxu0
      %v9551 = vpop.f32.mrb[0].mxu0
      %v9552 = vadd.f32 0.0, %v9551
      %v9553 = vpop.f32.mrb[0].mxu0
      %9554 = vmatprep.mubr.bf16.mxu0 %v9425
      %9555 = vmatmul.mubr.bf16.gmra.mrb[0].mxu0 %v9424
      %v9556 = vpop.f32.mrb[0].mxu0
      %v9557 = vadd.f32 0.0, %v9556
      %v9558 = vpop.f32.mrb[0].mxu0
      %v9559 = vpop.f32.mrb[0].mxu0
      %v9560 = vadd.f32 0.0, %v9559
      %v9561 = vpop.f32.mrb[0].mxu0
      %9562 = vmatprep.mubr.bf16.mxu0 %v9427
      %9563 = vmatmul.mubr.bf16.gmra.mrb[0].mxu0 %v9426
      %v9564 = vpop.f32.mrb[0].mxu0
      %v9565 = vadd.f32 0.0, %v9564
      %v9566 = vpop.f32.mrb[0].mxu0
      %v9567 = vpop.f32.mrb[0].mxu0
      %v9568 = vadd.f32 0.0, %v9567
      %v9569 = vpop.f32.mrb[0].mxu0
      %9570 = vmatprep.mubr.bf16.mxu0 %v9429
      %9571 = vmatmul.mubr.bf16.gmra.mrb[0].mxu0 %v9428
      %v9572 = vpop.f32.mrb[0].mxu0
      %v9573 = vadd.f32 0.0, %v9572
      %v9574 = vpop.f32.mrb[0].mxu0
      %v9575 = vpop.f32.mrb[0].mxu0
      %v9576 = vadd.f32 0.0, %v9575
      %v9577 = vpop.f32.mrb[0].mxu0
      %9578 = vmatprep.mubr.bf16.mxu0 %v9431
      %9579 = vmatmul.mubr.bf16.gmra.mrb[0].mxu0 %v9430
      %v9580 = vpop.f32.mrb[0].mxu0
      %v9581 = vadd.f32 0.0, %v9580
      %v9582 = vpop.f32.mrb[0].mxu0
      %v9583 = vpop.f32.mrb[0].mxu0
      %v9584 = vadd.f32 0.0, %v9583
      %v9585 = vpop.f32.mrb[0].mxu0
      %9586 = vmatprep.mubr.bf16.mxu0 %v9433
      %9587 = vmatmul.mubr.bf16.gmra.mrb[0].mxu0 %v9432
      %v9588 = vpop.f32.mrb[0].mxu0
      %v9589 = vadd.f32 0.0, %v9588
      %v9590 = vpop.f32.mrb[0].mxu0
      %v9591 = vpop.f32.mrb[0].mxu0
      %v9592 = vadd.f32 0.0, %v9591
      %v9593 = vpop.f32.mrb[0].mxu0
      %9594 = vmatprep.mubr.bf16.mxu0 %v9435
      %9595 = vmatmul.mubr.bf16.gmra.mrb[0].mxu0 %v9434
      %v9596 = vpop.f32.mrb[0].mxu0
      %v9597 = vadd.f32 0.0, %v9596
      %v9598 = vpop.f32.mrb[0].mxu0
      %v9599 = vpop.f32.mrb[0].mxu0
      %v9600 = vadd.f32 0.0, %v9599
      %v9601 = vpop.f32.mrb[0].mxu0
      %9602 = vmatprep.mubr.bf16.mxu0 %v9437
      %9603 = vmatmul.mubr.bf16.gmra.mrb[0].mxu0 %v9436
      %v9604 = vpop.f32.mrb[0].mxu0
      %v9605 = vadd.f32 0.0, %v9604
      %v9606 = vpop.f32.mrb[0].mxu0
      %v9607 = vpop.f32.mrb[0].mxu0
      %v9608 = vadd.f32 0.0, %v9607
      %v9609 = vpop.f32.mrb[0].mxu0
      %9610 = vmatprep.mubr.bf16.mxu0 %v9439
      %9611 = vmatmul.mubr.bf16.gmra.mrb[0].mxu0 %v9438
      %v9612 = vpop.f32.mrb[0].mxu0
      %v9613 = vadd.f32 0.0, %v9612
      %v9614 = vpop.f32.mrb[0].mxu0
      %v9615 = vpop.f32.mrb[0].mxu0
      %v9616 = vadd.f32 0.0, %v9615
      %v9617 = vpop.f32.mrb[0].mxu0
      %9618 = vmatprep.mubr.bf16.mxu0 %v9441
      %9619 = vmatmul.mubr.bf16.gmra.mrb[0].mxu0 %v9440
      %v9620 = vpop.f32.mrb[0].mxu0
      %v9621 = vadd.f32 0.0, %v9620
      %v9622 = vpop.f32.mrb[0].mxu0
      %v9623 = vpop.f32.mrb[0].mxu0
      %v9624 = vadd.f32 0.0, %v9623
      %v9625 = vpop.f32.mrb[0].mxu0
      %9626 = vmatprep.mubr.bf16.mxu0 %v9443
      %9627 = vmatmul.mubr.bf16.gmra.mrb[0].mxu0 %v9442
      %v9628 = vpop.f32.mrb[0].mxu0
      %v9629 = vadd.f32 0.0, %v9628
      %v9630 = vpop.f32.mrb[0].mxu0
      %v9631 = vpop.f32.mrb[0].mxu0
      %v9632 = vadd.f32 0.0, %v9631
      %v9633 = vpop.f32.mrb[0].mxu0
      %9634 = vmatprep.mubr.bf16.mxu0 %v9445
      %9635 = vmatmul.mubr.bf16.gmra.mrb[0].mxu0 %v9444
      %v9636 = vpop.f32.mrb[0].mxu0
      %v9637 = vadd.f32 0.0, %v9636
      %v9638 = vpop.f32.mrb[0].mxu0
      %v9639 = vpop.f32.mrb[0].mxu0
      %v9640 = vadd.f32 0.0, %v9639
      %v9641 = vpop.f32.mrb[0].mxu0
      %9642 = vmatprep.mubr.bf16.mxu0 %v9447
      %9643 = vmatmul.mubr.bf16.gmra.mrb[0].mxu0 %v9446
      %v9644 = vpop.f32.mrb[0].mxu0
      %v9645 = vadd.f32 0.0, %v9644
      %v9646 = vpop.f32.mrb[0].mxu0
      %v9647 = vpop.f32.mrb[0].mxu0
      %v9648 = vadd.f32 0.0, %v9647
      %v9649 = vpop.f32.mrb[0].mxu0
      %9650 = vmatprep.mubr.bf16.mxu0 %v9449
      %9651 = vmatmul.mubr.bf16.gmra.mrb[0].mxu0 %v9448
      %v9652 = vpop.f32.mrb[0].mxu0
      %v9653 = vadd.f32 0.0, %v9652
      %v9654 = vpop.f32.mrb[0].mxu0
      %v9655 = vpop.f32.mrb[0].mxu0
      %v9656 = vadd.f32 0.0, %v9655
      %v9657 = vpop.f32.mrb[0].mxu0
      %9658 = vdwg.mxu0
      %v9659 = vrcp.pop %v9324
      %v9660 = vrcp.pop %v9327
      %v9661 = vrcp.pop %v9330
      %v9662 = vrcp.pop %v9333
      %v9663 = vrcp.pop %v9336
      %v9664 = vrcp.pop %v9339
      %v9665 = vrcp.pop %v9342
      %v9666 = vrcp.pop %v9345
      %v9667 = vrcp.pop %v9348
      %v9668 = vrcp.pop %v9351
      %v9669 = vrcp.pop %v9354
      %v9670 = vrcp.pop %v9357
      %v9671 = vrcp.pop %v9360
      %v9672 = vrcp.pop %v9363
      %v9673 = vrcp.pop %v9366
      %v9674 = vrcp.pop %v9369
      %v9675 = vrcp.pop %v9372
      %v9676 = vrcp.pop %v9375
      %v9677 = vrcp.pop %v9378
      %v9678 = vrcp.pop %v9381
      %v9679 = vrcp.pop %v9384
      %v9680 = vrcp.pop %v9387
      %v9681 = vrcp.pop %v9390
      %v9682 = vrcp.pop %v9393
      %v9683 = vrcp.pop %v9396
      %v9684 = vrcp.pop %v9399
      %v9685 = vrcp.pop %v9402
      %v9686 = vrcp.pop %v9405
      %v9687 = vrcp.pop %v9408
      %v9688 = vrcp.pop %v9411
      %v9689 = vrcp.pop %v9414
      %v9690 = vrcp.pop %v9417
      %v9691 = vmul.f32 %v9533, %v9659
      %v9692 = vmul.f32 %v9536, %v9660
      %v9693 = vmul.f32 %v9541, %v9661
      %v9694 = vmul.f32 %v9544, %v9662
      %v9695 = vmul.f32 %v9549, %v9663
      %v9696 = vmul.f32 %v9552, %v9664
      %v9697 = vmul.f32 %v9557, %v9665
      %v9698 = vmul.f32 %v9560, %v9666
      %v9699 = vmul.f32 %v9565, %v9667
      %v9700 = vmul.f32 %v9568, %v9668
      %v9701 = vmul.f32 %v9573, %v9669
      %v9702 = vmul.f32 %v9576, %v9670
      %v9703 = vmul.f32 %v9581, %v9671
      %v9704 = vmul.f32 %v9584, %v9672
      %v9705 = vmul.f32 %v9589, %v9673
      %v9706 = vmul.f32 %v9592, %v9674
      %v9707 = vmul.f32 %v9597, %v9675
      %v9708 = vmul.f32 %v9600, %v9676
      %v9709 = vmul.f32 %v9605, %v9677
      %v9710 = vmul.f32 %v9608, %v9678
      %v9711 = vmul.f32 %v9613, %v9679
      %v9712 = vmul.f32 %v9616, %v9680
      %v9713 = vmul.f32 %v9621, %v9681
      %v9714 = vmul.f32 %v9624, %v9682
      %v9715 = vmul.f32 %v9629, %v9683
      %v9716 = vmul.f32 %v9632, %v9684
      %v9717 = vmul.f32 %v9637, %v9685
      %v9718 = vmul.f32 %v9640, %v9686
      %v9719 = vmul.f32 %v9645, %v9687
      %v9720 = vmul.f32 %v9648, %v9688
      %v9721 = vmul.f32 %v9653, %v9689
      %v9722 = vmul.f32 %v9656, %v9690
      %v9723 = vpack.c.bf16 %v9692, %v9691
      %v9724 = vpack.c.bf16 %v9694, %v9693
      %v9725 = vpack.c.bf16 %v9696, %v9695
      %v9726 = vpack.c.bf16 %v9698, %v9697
      %v9727 = vpack.c.bf16 %v9700, %v9699
      %v9728 = vpack.c.bf16 %v9702, %v9701
      %v9729 = vpack.c.bf16 %v9704, %v9703
      %v9730 = vpack.c.bf16 %v9706, %v9705
      %v9731 = vpack.c.bf16 %v9708, %v9707
      %v9732 = vpack.c.bf16 %v9710, %v9709
      %v9733 = vpack.c.bf16 %v9712, %v9711
      %v9734 = vpack.c.bf16 %v9714, %v9713
      %v9735 = vpack.c.bf16 %v9716, %v9715
      %v9736 = vpack.c.bf16 %v9718, %v9717
      %v9737 = vpack.c.bf16 %v9720, %v9719
      %v9738 = vpack.c.bf16 %v9722, %v9721
      %9755 = vrot.lane.b32.xlu0 %v3375, 16
      %v9756 = vpop.permute.xlu0 %9755
      %9757 = vrot.lane.b32.xlu0 %v3376, 16
      %v9758 = vpop.permute.xlu0 %9757
      %9759 = vrot.lane.b32.xlu0 %v3377, 16
      %v9760 = vpop.permute.xlu0 %9759
      %9761 = vrot.lane.b32.xlu0 %v3378, 16
      %v9762 = vpop.permute.xlu0 %9761
      %9763 = vrot.lane.b32.xlu0 %v3379, 16
      %v9764 = vpop.permute.xlu0 %9763
      %9765 = vrot.lane.b32.xlu0 %v3380, 16
      %v9766 = vpop.permute.xlu0 %9765
      %9767 = vrot.lane.b32.xlu0 %v3381, 16
      %v9768 = vpop.permute.xlu0 %9767
      %9769 = vrot.lane.b32.xlu0 %v3382, 16
      %v9770 = vpop.permute.xlu0 %9769
      %9771 = vrot.lane.b32.xlu0 %v3383, 16
      %v9772 = vpop.permute.xlu0 %9771
      %9773 = vrot.lane.b32.xlu0 %v3384, 16
      %v9774 = vpop.permute.xlu0 %9773
      %9775 = vrot.lane.b32.xlu0 %v3385, 16
      %v9776 = vpop.permute.xlu0 %9775
      %9777 = vrot.lane.b32.xlu0 %v3386, 16
      %v9778 = vpop.permute.xlu0 %9777
      %9779 = vrot.lane.b32.xlu0 %v3387, 16
      %v9780 = vpop.permute.xlu0 %9779
      %9781 = vrot.lane.b32.xlu0 %v3388, 16
      %v9782 = vpop.permute.xlu0 %9781
      %9783 = vrot.lane.b32.xlu0 %v3389, 16
      %v9784 = vpop.permute.xlu0 %9783
      %9785 = vrot.lane.b32.xlu0 %v3390, 16
      %v9786 = vpop.permute.xlu0 %9785
      %9803 = vrot.lane.b32.xlu0 %v4433, 32
      %v9804 = vpop.permute.xlu0 %9803
      %9805 = vrot.lane.b32.xlu0 %v4434, 32
      %v9806 = vpop.permute.xlu0 %9805
      %9807 = vrot.lane.b32.xlu0 %v4435, 32
      %v9808 = vpop.permute.xlu0 %9807
      %9809 = vrot.lane.b32.xlu0 %v4436, 32
      %v9810 = vpop.permute.xlu0 %9809
      %9811 = vrot.lane.b32.xlu0 %v4437, 32
      %v9812 = vpop.permute.xlu0 %9811
      %9813 = vrot.lane.b32.xlu0 %v4438, 32
      %v9814 = vpop.permute.xlu0 %9813
      %9815 = vrot.lane.b32.xlu0 %v4439, 32
      %v9816 = vpop.permute.xlu0 %9815
      %9817 = vrot.lane.b32.xlu0 %v4440, 32
      %v9818 = vpop.permute.xlu0 %9817
      %9819 = vrot.lane.b32.xlu0 %v4441, 32
      %v9820 = vpop.permute.xlu0 %9819
      %9821 = vrot.lane.b32.xlu0 %v4442, 32
      %v9822 = vpop.permute.xlu0 %9821
      %9823 = vrot.lane.b32.xlu0 %v4443, 32
      %v9824 = vpop.permute.xlu0 %9823
      %9825 = vrot.lane.b32.xlu0 %v4444, 32
      %v9826 = vpop.permute.xlu0 %9825
      %9827 = vrot.lane.b32.xlu0 %v4445, 32
      %v9828 = vpop.permute.xlu0 %9827
      %9829 = vrot.lane.b32.xlu0 %v4446, 32
      %v9830 = vpop.permute.xlu0 %9829
      %9831 = vrot.lane.b32.xlu0 %v4447, 32
      %v9832 = vpop.permute.xlu0 %9831
      %9833 = vrot.lane.b32.xlu0 %v4448, 32
      %v9834 = vpop.permute.xlu0 %9833
      %9851 = vrot.lane.b32.xlu0 %v5491, 48
      %v9852 = vpop.permute.xlu0 %9851
      %9853 = vrot.lane.b32.xlu0 %v5492, 48
      %v9854 = vpop.permute.xlu0 %9853
      %9855 = vrot.lane.b32.xlu0 %v5493, 48
      %v9856 = vpop.permute.xlu0 %9855
      %9857 = vrot.lane.b32.xlu0 %v5494, 48
      %v9858 = vpop.permute.xlu0 %9857
      %9859 = vrot.lane.b32.xlu0 %v5495, 48
      %v9860 = vpop.permute.xlu0 %9859
      %9861 = vrot.lane.b32.xlu0 %v5496, 48
      %v9862 = vpop.permute.xlu0 %9861
      %9863 = vrot.lane.b32.xlu0 %v5497, 48
      %v9864 = vpop.permute.xlu0 %9863
      %9865 = vrot.lane.b32.xlu0 %v5498, 48
      %v9866 = vpop.permute.xlu0 %9865
      %9867 = vrot.lane.b32.xlu0 %v5499, 48
      %v9868 = vpop.permute.xlu0 %9867
      %9869 = vrot.lane.b32.xlu0 %v5500, 48
      %v9870 = vpop.permute.xlu0 %9869
      %9871 = vrot.lane.b32.xlu0 %v5501, 48
      %v9872 = vpop.permute.xlu0 %9871
      %9873 = vrot.lane.b32.xlu0 %v5502, 48
      %v9874 = vpop.permute.xlu0 %9873
      %9875 = vrot.lane.b32.xlu0 %v5503, 48
      %v9876 = vpop.permute.xlu0 %9875
      %9877 = vrot.lane.b32.xlu0 %v5504, 48
      %v9878 = vpop.permute.xlu0 %9877
      %9879 = vrot.lane.b32.xlu0 %v5505, 48
      %v9880 = vpop.permute.xlu0 %9879
      %9881 = vrot.lane.b32.xlu0 %v5506, 48
      %v9882 = vpop.permute.xlu0 %9881
      %9899 = vrot.lane.b32.xlu0 %v6549, 64
      %v9900 = vpop.permute.xlu0 %9899
      %9901 = vrot.lane.b32.xlu0 %v6550, 64
      %v9902 = vpop.permute.xlu0 %9901
      %9903 = vrot.lane.b32.xlu0 %v6551, 64
      %v9904 = vpop.permute.xlu0 %9903
      %9905 = vrot.lane.b32.xlu0 %v6552, 64
      %v9906 = vpop.permute.xlu0 %9905
      %9907 = vrot.lane.b32.xlu0 %v6553, 64
      %v9908 = vpop.permute.xlu0 %9907
      %9909 = vrot.lane.b32.xlu0 %v6554, 64
      %v9910 = vpop.permute.xlu0 %9909
      %9911 = vrot.lane.b32.xlu0 %v6555, 64
      %v9912 = vpop.permute.xlu0 %9911
      %9913 = vrot.lane.b32.xlu0 %v6556, 64
      %v9914 = vpop.permute.xlu0 %9913
      %9915 = vrot.lane.b32.xlu0 %v6557, 64
      %v9916 = vpop.permute.xlu0 %9915
      %9917 = vrot.lane.b32.xlu0 %v6558, 64
      %v9918 = vpop.permute.xlu0 %9917
      %9919 = vrot.lane.b32.xlu0 %v6559, 64
      %v9920 = vpop.permute.xlu0 %9919
      %9921 = vrot.lane.b32.xlu0 %v6560, 64
      %v9922 = vpop.permute.xlu0 %9921
      %9923 = vrot.lane.b32.xlu0 %v6561, 64
      %v9924 = vpop.permute.xlu0 %9923
      %9925 = vrot.lane.b32.xlu0 %v6562, 64
      %v9926 = vpop.permute.xlu0 %9925
      %9927 = vrot.lane.b32.xlu0 %v6563, 64
      %v9928 = vpop.permute.xlu0 %9927
      %9929 = vrot.lane.b32.xlu0 %v6564, 64
      %v9930 = vpop.permute.xlu0 %9929
      %9947 = vrot.lane.b32.xlu0 %v7607, 80
      %v9948 = vpop.permute.xlu0 %9947
      %9949 = vrot.lane.b32.xlu0 %v7608, 80
      %v9950 = vpop.permute.xlu0 %9949
      %9951 = vrot.lane.b32.xlu0 %v7609, 80
      %v9952 = vpop.permute.xlu0 %9951
      %9953 = vrot.lane.b32.xlu0 %v7610, 80
      %v9954 = vpop.permute.xlu0 %9953
      %9955 = vrot.lane.b32.xlu0 %v7611, 80
      %v9956 = vpop.permute.xlu0 %9955
      %9957 = vrot.lane.b32.xlu0 %v7612, 80
      %v9958 = vpop.permute.xlu0 %9957
      %9959 = vrot.lane.b32.xlu0 %v7613, 80
      %v9960 = vpop.permute.xlu0 %9959
      %9961 = vrot.lane.b32.xlu0 %v7614, 80
      %v9962 = vpop.permute.xlu0 %9961
      %9963 = vrot.lane.b32.xlu0 %v7615, 80
      %v9964 = vpop.permute.xlu0 %9963
      %9965 = vrot.lane.b32.xlu0 %v7616, 80
      %v9966 = vpop.permute.xlu0 %9965
      %9967 = vrot.lane.b32.xlu0 %v7617, 80
      %v9968 = vpop.permute.xlu0 %9967
      %9969 = vrot.lane.b32.xlu0 %v7618, 80
      %v9970 = vpop.permute.xlu0 %9969
      %9971 = vrot.lane.b32.xlu0 %v7619, 80
      %v9972 = vpop.permute.xlu0 %9971
      %9973 = vrot.lane.b32.xlu0 %v7620, 80
      %v9974 = vpop.permute.xlu0 %9973
      %9975 = vrot.lane.b32.xlu0 %v7621, 80
      %v9976 = vpop.permute.xlu0 %9975
      %9977 = vrot.lane.b32.xlu0 %v7622, 80
      %v9978 = vpop.permute.xlu0 %9977
      %9995 = vrot.lane.b32.xlu0 %v8665, 96
      %v9996 = vpop.permute.xlu0 %9995
      %9997 = vrot.lane.b32.xlu0 %v8666, 96
      %v9998 = vpop.permute.xlu0 %9997
      %9999 = vrot.lane.b32.xlu0 %v8667, 96
      %v10000 = vpop.permute.xlu0 %9999
      %10001 = vrot.lane.b32.xlu0 %v8668, 96
      %v10002 = vpop.permute.xlu0 %10001
      %10003 = vrot.lane.b32.xlu0 %v8669, 96
      %v10004 = vpop.permute.xlu0 %10003
      %10005 = vrot.lane.b32.xlu0 %v8670, 96
      %v10006 = vpop.permute.xlu0 %10005
      %10007 = vrot.lane.b32.xlu0 %v8671, 96
      %v10008 = vpop.permute.xlu0 %10007
      %10009 = vrot.lane.b32.xlu0 %v8672, 96
      %v10010 = vpop.permute.xlu0 %10009
      %10011 = vrot.lane.b32.xlu0 %v8673, 96
      %v10012 = vpop.permute.xlu0 %10011
      %10013 = vrot.lane.b32.xlu0 %v8674, 96
      %v10014 = vpop.permute.xlu0 %10013
      %10015 = vrot.lane.b32.xlu0 %v8675, 96
      %v10016 = vpop.permute.xlu0 %10015
      %10017 = vrot.lane.b32.xlu0 %v8676, 96
      %v10018 = vpop.permute.xlu0 %10017
      %10019 = vrot.lane.b32.xlu0 %v8677, 96
      %v10020 = vpop.permute.xlu0 %10019
      %10021 = vrot.lane.b32.xlu0 %v8678, 96
      %v10022 = vpop.permute.xlu0 %10021
      %10023 = vrot.lane.b32.xlu0 %v8679, 96
      %v10024 = vpop.permute.xlu0 %10023
      %10025 = vrot.lane.b32.xlu0 %v8680, 96
      %v10026 = vpop.permute.xlu0 %10025
      %10043 = vrot.lane.b32.xlu0 %v9723, 112
      %v10044 = vpop.permute.xlu0 %10043
      %10045 = vrot.lane.b32.xlu0 %v9724, 112
      %v10046 = vpop.permute.xlu0 %10045
      %10047 = vrot.lane.b32.xlu0 %v9725, 112
      %v10048 = vpop.permute.xlu0 %10047
      %10049 = vrot.lane.b32.xlu0 %v9726, 112
      %v10050 = vpop.permute.xlu0 %10049
      %10051 = vrot.lane.b32.xlu0 %v9727, 112
      %v10052 = vpop.permute.xlu0 %10051
      %10053 = vrot.lane.b32.xlu0 %v9728, 112
      %v10054 = vpop.permute.xlu0 %10053
      %10055 = vrot.lane.b32.xlu0 %v9729, 112
      %v10056 = vpop.permute.xlu0 %10055
      %10057 = vrot.lane.b32.xlu0 %v9730, 112
      %v10058 = vpop.permute.xlu0 %10057
      %10059 = vrot.lane.b32.xlu0 %v9731, 112
      %v10060 = vpop.permute.xlu0 %10059
      %10061 = vrot.lane.b32.xlu0 %v9732, 112
      %v10062 = vpop.permute.xlu0 %10061
      %10063 = vrot.lane.b32.xlu0 %v9733, 112
      %v10064 = vpop.permute.xlu0 %10063
      %10065 = vrot.lane.b32.xlu0 %v9734, 112
      %v10066 = vpop.permute.xlu0 %10065
      %10067 = vrot.lane.b32.xlu0 %v9735, 112
      %v10068 = vpop.permute.xlu0 %10067
      %10069 = vrot.lane.b32.xlu0 %v9736, 112
      %v10070 = vpop.permute.xlu0 %10069
      %10071 = vrot.lane.b32.xlu0 %v9737, 112
      %v10072 = vpop.permute.xlu0 %10071
      %10073 = vrot.lane.b32.xlu0 %v9738, 112
      %v10074 = vpop.permute.xlu0 %10073
      %v10077 = vsel %vm1338, %v2269, %v9756
      %v10080 = vsel %vm1338, %v2270, %v9758
      %v10083 = vsel %vm1338, %v2271, %v9760
      %v10086 = vsel %vm1338, %v2272, %v9762
      %v10089 = vsel %vm1338, %v2273, %v9764
      %v10092 = vsel %vm1338, %v2274, %v9766
      %v10095 = vsel %vm1338, %v2275, %v9768
      %v10098 = vsel %vm1338, %v2276, %v9770
      %v10101 = vsel %vm1338, %v2277, %v9772
      %v10104 = vsel %vm1338, %v2278, %v9774
      %v10107 = vsel %vm1338, %v2279, %v9776
      %v10110 = vsel %vm1338, %v2280, %v9778
      %v10113 = vsel %vm1338, %v2281, %v9780
      %v10116 = vsel %vm1338, %v2282, %v9782
      %v10119 = vsel %vm1338, %v2283, %v9784
      %v10122 = vsel %vm1338, %v2284, %v9786
      %vm10123 = vcmask 261120
      %v10125 = vsel %vm10123, %v10077, %v9804
      %v10127 = vsel %vm10123, %v10080, %v9806
      %v10129 = vsel %vm10123, %v10083, %v9808
      %v10131 = vsel %vm10123, %v10086, %v9810
      %v10133 = vsel %vm10123, %v10089, %v9812
      %v10135 = vsel %vm10123, %v10092, %v9814
      %v10137 = vsel %vm10123, %v10095, %v9816
      %v10139 = vsel %vm10123, %v10098, %v9818
      %v10141 = vsel %vm10123, %v10101, %v9820
      %v10143 = vsel %vm10123, %v10104, %v9822
      %v10145 = vsel %vm10123, %v10107, %v9824
      %v10147 = vsel %vm10123, %v10110, %v9826
      %v10149 = vsel %vm10123, %v10113, %v9828
      %v10151 = vsel %vm10123, %v10116, %v9830
      %v10153 = vsel %vm10123, %v10119, %v9832
      %v10155 = vsel %vm10123, %v10122, %v9834
      %vm10156 = vcmask 392192
      %v10158 = vsel %vm10156, %v10125, %v9852
      %v10160 = vsel %vm10156, %v10127, %v9854
      %v10162 = vsel %vm10156, %v10129, %v9856
      %v10164 = vsel %vm10156, %v10131, %v9858
      %v10166 = vsel %vm10156, %v10133, %v9860
      %v10168 = vsel %vm10156, %v10135, %v9862
      %v10170 = vsel %vm10156, %v10137, %v9864
      %v10172 = vsel %vm10156, %v10139, %v9866
      %v10174 = vsel %vm10156, %v10141, %v9868
      %v10176 = vsel %vm10156, %v10143, %v9870
      %v10178 = vsel %vm10156, %v10145, %v9872
      %v10180 = vsel %vm10156, %v10147, %v9874
      %v10182 = vsel %vm10156, %v10149, %v9876
      %v10184 = vsel %vm10156, %v10151, %v9878
      %v10186 = vsel %vm10156, %v10153, %v9880
      %v10188 = vsel %vm10156, %v10155, %v9882
      %vm10189 = vcmask 523264
      %v10191 = vsel %vm10189, %v10158, %v9900
      %v10193 = vsel %vm10189, %v10160, %v9902
      %v10195 = vsel %vm10189, %v10162, %v9904
      %v10197 = vsel %vm10189, %v10164, %v9906
      %v10199 = vsel %vm10189, %v10166, %v9908
      %v10201 = vsel %vm10189, %v10168, %v9910
      %v10203 = vsel %vm10189, %v10170, %v9912
      %v10205 = vsel %vm10189, %v10172, %v9914
      %v10207 = vsel %vm10189, %v10174, %v9916
      %v10209 = vsel %vm10189, %v10176, %v9918
      %v10211 = vsel %vm10189, %v10178, %v9920
      %v10213 = vsel %vm10189, %v10180, %v9922
      %v10215 = vsel %vm10189, %v10182, %v9924
      %v10217 = vsel %vm10189, %v10184, %v9926
      %v10219 = vsel %vm10189, %v10186, %v9928
      %v10221 = vsel %vm10189, %v10188, %v9930
      %vm10222 = vcmask 654336
      %v10224 = vsel %vm10222, %v10191, %v9948
      %v10226 = vsel %vm10222, %v10193, %v9950
      %v10228 = vsel %vm10222, %v10195, %v9952
      %v10230 = vsel %vm10222, %v10197, %v9954
      %v10232 = vsel %vm10222, %v10199, %v9956
      %v10234 = vsel %vm10222, %v10201, %v9958
      %v10236 = vsel %vm10222, %v10203, %v9960
      %v10238 = vsel %vm10222, %v10205, %v9962
      %v10240 = vsel %vm10222, %v10207, %v9964
      %v10242 = vsel %vm10222, %v10209, %v9966
      %v10244 = vsel %vm10222, %v10211, %v9968
      %v10246 = vsel %vm10222, %v10213, %v9970
      %v10248 = vsel %vm10222, %v10215, %v9972
      %v10250 = vsel %vm10222, %v10217, %v9974
      %v10252 = vsel %vm10222, %v10219, %v9976
      %v10254 = vsel %vm10222, %v10221, %v9978
      %vm10255 = vcmask 785408
      %v10257 = vsel %vm10255, %v10224, %v9996
      %v10259 = vsel %vm10255, %v10226, %v9998
      %v10261 = vsel %vm10255, %v10228, %v10000
      %v10263 = vsel %vm10255, %v10230, %v10002
      %v10265 = vsel %vm10255, %v10232, %v10004
      %v10267 = vsel %vm10255, %v10234, %v10006
      %v10269 = vsel %vm10255, %v10236, %v10008
      %v10271 = vsel %vm10255, %v10238, %v10010
      %v10273 = vsel %vm10255, %v10240, %v10012
      %v10275 = vsel %vm10255, %v10242, %v10014
      %v10277 = vsel %vm10255, %v10244, %v10016
      %v10279 = vsel %vm10255, %v10246, %v10018
      %v10281 = vsel %vm10255, %v10248, %v10020
      %v10283 = vsel %vm10255, %v10250, %v10022
      %v10285 = vsel %vm10255, %v10252, %v10024
      %v10287 = vsel %vm10255, %v10254, %v10026
      %vm10288 = vcmask 916480
      %v10290 = vsel %vm10288, %v10257, %v10044
      %v10293 = vsel %vm10288, %v10259, %v10046
      %v10296 = vsel %vm10288, %v10261, %v10048
      %v10299 = vsel %vm10288, %v10263, %v10050
      %v10302 = vsel %vm10288, %v10265, %v10052
      %v10305 = vsel %vm10288, %v10267, %v10054
      %v10308 = vsel %vm10288, %v10269, %v10056
      %v10311 = vsel %vm10288, %v10271, %v10058
      %v10314 = vsel %vm10288, %v10273, %v10060
      %v10317 = vsel %vm10288, %v10275, %v10062
      %v10320 = vsel %vm10288, %v10277, %v10064
      %v10323 = vsel %vm10288, %v10279, %v10066
      %v10326 = vsel %vm10288, %v10281, %v10068
      %v10329 = vsel %vm10288, %v10283, %v10070
      %v10332 = vsel %vm10288, %v10285, %v10072
      %v10335 = vsel %vm10288, %v10287, %v10074
      %v10337 = vld [vmem:[%s5] sm:$0xf]
      %v10338 = vld [vmem:[%s5 + $0x4] sm:$0xf]
      %v10339 = vld [vmem:[%s5 + $0x8] sm:$0xf]
      %v10340 = vld [vmem:[%s5 + $0xc] sm:$0xf]
      %v10341 = vld [vmem:[%s5 + $0x10] sm:$0xf]
      %v10342 = vld [vmem:[%s5 + $0x14] sm:$0xf]
      %v10343 = vld [vmem:[%s5 + $0x18] sm:$0xf]
      %v10344 = vld [vmem:[%s5 + $0x1c] sm:$0xf]
      %v10345 = vld [vmem:[%s5 + $0x20] sm:$0xf]
      %v10346 = vld [vmem:[%s5 + $0x24] sm:$0xf]
      %v10347 = vld [vmem:[%s5 + $0x28] sm:$0xf]
      %v10348 = vld [vmem:[%s5 + $0x2c] sm:$0xf]
      %v10349 = vld [vmem:[%s5 + $0x30] sm:$0xf]
      %v10350 = vld [vmem:[%s5 + $0x34] sm:$0xf]
      %v10351 = vld [vmem:[%s5 + $0x38] sm:$0xf]
      %v10352 = vld [vmem:[%s5 + $0x3c] sm:$0xf]
      %v10353 = vld [vmem:[%s6] sm:$0x1]
      %v10355 = vlaneseq
      %v10356 = vshrl.u32 %v10355, 7
      %v10357 = vsub.s32 0, %v10356
      %v10358 = vrot.slane %v10353, %v10357
      %v10376 = vunpack.c.l.b16 %v10337
      %v10377 = vunpack.c.l.b16 %v10338
      %v10378 = vunpack.c.l.b16 %v10339
      %v10379 = vunpack.c.l.b16 %v10340
      %v10380 = vunpack.c.l.b16 %v10341
      %v10381 = vunpack.c.l.b16 %v10342
      %v10382 = vunpack.c.l.b16 %v10343
      %v10383 = vunpack.c.l.b16 %v10344
      %v10384 = vunpack.c.l.b16 %v10345
      %v10385 = vunpack.c.l.b16 %v10346
      %v10386 = vunpack.c.l.b16 %v10347
      %v10387 = vunpack.c.l.b16 %v10348
      %v10388 = vunpack.c.l.b16 %v10349
      %v10389 = vunpack.c.l.b16 %v10350
      %v10390 = vunpack.c.l.b16 %v10351
      %v10391 = vunpack.c.l.b16 %v10352
      %v10392 = vpack.c.b16 %v10377, %v10376
      %v10393 = vpack.c.b16 %v10379, %v10378
      %v10394 = vpack.c.b16 %v10381, %v10380
      %v10395 = vpack.c.b16 %v10383, %v10382
      %v10396 = vpack.c.b16 %v10385, %v10384
      %v10397 = vpack.c.b16 %v10387, %v10386
      %v10398 = vpack.c.b16 %v10389, %v10388
      %v10399 = vpack.c.b16 %v10391, %v10390
      %10408 = vmatprep.subr.bf16.mxu0 0
      %10409 = vmatpush1.bf16.msra.mxu0 %v10392
      %10410 = vmatprep.subr.bf16.mxu0 0
      %10411 = vmatpush1.bf16.msra.mxu0 %v10393
      %10412 = vmatprep.subr.bf16.mxu0 0
      %10413 = vmatpush1.bf16.msra.mxu0 %v10394
      %10414 = vmatprep.subr.bf16.mxu0 0
      %10415 = vmatpush1.bf16.msra.mxu0 %v10395
      %10416 = vmatprep.subr.bf16.mxu0 0
      %10417 = vmatpush1.bf16.msra.mxu0 %v10396
      %10418 = vmatprep.subr.bf16.mxu0 0
      %10419 = vmatpush1.bf16.msra.mxu0 %v10397
      %10420 = vmatprep.subr.bf16.mxu0 0
      %10421 = vmatpush1.bf16.msra.mxu0 %v10398
      %10422 = vmatprep.subr.bf16.mxu0 0
      %10423 = vmatpush1.bf16.msra.mxu0 %v10399
      %10424 = vmatprep.subr.bf16.mxu0 0
      %10425 = vmatpush1.bf16.msra.mxu0 0
      %10426 = vmatprep.subr.bf16.mxu0 0
      %10427 = vmatpush1.bf16.msra.mxu0 0
      %10428 = vmatprep.subr.bf16.mxu0 0
      %10429 = vmatpush1.bf16.msra.mxu0 0
      %10430 = vmatprep.subr.bf16.mxu0 0
      %10431 = vmatpush1.bf16.msra.mxu0 0
      %10432 = vmatprep.subr.bf16.mxu0 0
      %10433 = vmatpush1.bf16.msra.mxu0 0
      %10434 = vmatprep.subr.bf16.mxu0 0
      %10435 = vmatpush1.bf16.msra.mxu0 0
      %10436 = vmatprep.subr.bf16.mxu0 0
      %10437 = vmatpush1.bf16.msra.mxu0 0
      %10438 = vmatprep.subr.bf16.mxu0 0
      %10439 = vmatpush1.bf16.msra.mxu0 0
      %10440 = vmatprep.mubr.bf16.mxu0 0
      %10441 = vmatmul.mubr.bf16.gmra.mrb[0].mxu0 %v10290
      %v10442 = vpop.f32.mrb[0].mxu0
      %v10443 = vadd.f32 %v10358, %v10442
      %v10444 = vpop.f32.mrb[0].mxu0
      %v10445 = vpop.f32.mrb[0].mxu0
      %v10446 = vadd.f32 %v10358, %v10445
      %v10447 = vpop.f32.mrb[0].mxu0
      %10448 = vmatprep.mubr.bf16.mxu0 0
      %10449 = vmatmul.mubr.bf16.gmra.mrb[0].mxu0 %v10293
      %v10450 = vpop.f32.mrb[0].mxu0
      %v10451 = vadd.f32 %v10358, %v10450
      %v10452 = vpop.f32.mrb[0].mxu0
      %v10453 = vpop.f32.mrb[0].mxu0
      %v10454 = vadd.f32 %v10358, %v10453
      %v10455 = vpop.f32.mrb[0].mxu0
      %10456 = vmatprep.mubr.bf16.mxu0 0
      %10457 = vmatmul.mubr.bf16.gmra.mrb[0].mxu0 %v10296
      %v10458 = vpop.f32.mrb[0].mxu0
      %v10459 = vadd.f32 %v10358, %v10458
      %v10460 = vpop.f32.mrb[0].mxu0
      %v10461 = vpop.f32.mrb[0].mxu0
      %v10462 = vadd.f32 %v10358, %v10461
      %v10463 = vpop.f32.mrb[0].mxu0
      %10464 = vmatprep.mubr.bf16.mxu0 0
      %10465 = vmatmul.mubr.bf16.gmra.mrb[0].mxu0 %v10299
      %v10466 = vpop.f32.mrb[0].mxu0
      %v10467 = vadd.f32 %v10358, %v10466
      %v10468 = vpop.f32.mrb[0].mxu0
      %v10469 = vpop.f32.mrb[0].mxu0
      %v10470 = vadd.f32 %v10358, %v10469
      %v10471 = vpop.f32.mrb[0].mxu0
      %10472 = vmatprep.mubr.bf16.mxu0 0
      %10473 = vmatmul.mubr.bf16.gmra.mrb[0].mxu0 %v10302
      %v10474 = vpop.f32.mrb[0].mxu0
      %v10475 = vadd.f32 %v10358, %v10474
      %v10476 = vpop.f32.mrb[0].mxu0
      %v10477 = vpop.f32.mrb[0].mxu0
      %v10478 = vadd.f32 %v10358, %v10477
      %v10479 = vpop.f32.mrb[0].mxu0
      %10480 = vmatprep.mubr.bf16.mxu0 0
      %10481 = vmatmul.mubr.bf16.gmra.mrb[0].mxu0 %v10305
      %v10482 = vpop.f32.mrb[0].mxu0
      %v10483 = vadd.f32 %v10358, %v10482
      %v10484 = vpop.f32.mrb[0].mxu0
      %v10485 = vpop.f32.mrb[0].mxu0
      %v10486 = vadd.f32 %v10358, %v10485
      %v10487 = vpop.f32.mrb[0].mxu0
      %10488 = vmatprep.mubr.bf16.mxu0 0
      %10489 = vmatmul.mubr.bf16.gmra.mrb[0].mxu0 %v10308
      %v10490 = vpop.f32.mrb[0].mxu0
      %v10491 = vadd.f32 %v10358, %v10490
      %v10492 = vpop.f32.mrb[0].mxu0
      %v10493 = vpop.f32.mrb[0].mxu0
      %v10494 = vadd.f32 %v10358, %v10493
      %v10495 = vpop.f32.mrb[0].mxu0
      %10496 = vmatprep.mubr.bf16.mxu0 0
      %10497 = vmatmul.mubr.bf16.gmra.mrb[0].mxu0 %v10311
      %v10498 = vpop.f32.mrb[0].mxu0
      %v10499 = vadd.f32 %v10358, %v10498
      %v10500 = vpop.f32.mrb[0].mxu0
      %v10501 = vpop.f32.mrb[0].mxu0
      %v10502 = vadd.f32 %v10358, %v10501
      %v10503 = vpop.f32.mrb[0].mxu0
      %10504 = vmatprep.mubr.bf16.mxu0 0
      %10505 = vmatmul.mubr.bf16.gmra.mrb[0].mxu0 %v10314
      %v10506 = vpop.f32.mrb[0].mxu0
      %v10507 = vadd.f32 %v10358, %v10506
      %v10508 = vpop.f32.mrb[0].mxu0
      %v10509 = vpop.f32.mrb[0].mxu0
      %v10510 = vadd.f32 %v10358, %v10509
      %v10511 = vpop.f32.mrb[0].mxu0
      %10512 = vmatprep.mubr.bf16.mxu0 0
      %10513 = vmatmul.mubr.bf16.gmra.mrb[0].mxu0 %v10317
      %v10514 = vpop.f32.mrb[0].mxu0
      %v10515 = vadd.f32 %v10358, %v10514
      %v10516 = vpop.f32.mrb[0].mxu0
      %v10517 = vpop.f32.mrb[0].mxu0
      %v10518 = vadd.f32 %v10358, %v10517
      %v10519 = vpop.f32.mrb[0].mxu0
      %10520 = vmatprep.mubr.bf16.mxu0 0
      %10521 = vmatmul.mubr.bf16.gmra.mrb[0].mxu0 %v10320
      %v10522 = vpop.f32.mrb[0].mxu0
      %v10523 = vadd.f32 %v10358, %v10522
      %v10524 = vpop.f32.mrb[0].mxu0
      %v10525 = vpop.f32.mrb[0].mxu0
      %v10526 = vadd.f32 %v10358, %v10525
      %v10527 = vpop.f32.mrb[0].mxu0
      %10528 = vmatprep.mubr.bf16.mxu0 0
      %10529 = vmatmul.mubr.bf16.gmra.mrb[0].mxu0 %v10323
      %v10530 = vpop.f32.mrb[0].mxu0
      %v10531 = vadd.f32 %v10358, %v10530
      %v10532 = vpop.f32.mrb[0].mxu0
      %v10533 = vpop.f32.mrb[0].mxu0
      %v10534 = vadd.f32 %v10358, %v10533
      %v10535 = vpop.f32.mrb[0].mxu0
      %10536 = vmatprep.mubr.bf16.mxu0 0
      %10537 = vmatmul.mubr.bf16.gmra.mrb[0].mxu0 %v10326
      %v10538 = vpop.f32.mrb[0].mxu0
      %v10539 = vadd.f32 %v10358, %v10538
      %v10540 = vpop.f32.mrb[0].mxu0
      %v10541 = vpop.f32.mrb[0].mxu0
      %v10542 = vadd.f32 %v10358, %v10541
      %v10543 = vpop.f32.mrb[0].mxu0
      %10544 = vmatprep.mubr.bf16.mxu0 0
      %10545 = vmatmul.mubr.bf16.gmra.mrb[0].mxu0 %v10329
      %v10546 = vpop.f32.mrb[0].mxu0
      %v10547 = vadd.f32 %v10358, %v10546
      %v10548 = vpop.f32.mrb[0].mxu0
      %v10549 = vpop.f32.mrb[0].mxu0
      %v10550 = vadd.f32 %v10358, %v10549
      %v10551 = vpop.f32.mrb[0].mxu0
      %10552 = vmatprep.mubr.bf16.mxu0 0
      %10553 = vmatmul.mubr.bf16.gmra.mrb[0].mxu0 %v10332
      %v10554 = vpop.f32.mrb[0].mxu0
      %v10555 = vadd.f32 %v10358, %v10554
      %v10556 = vpop.f32.mrb[0].mxu0
      %v10557 = vpop.f32.mrb[0].mxu0
      %v10558 = vadd.f32 %v10358, %v10557
      %v10559 = vpop.f32.mrb[0].mxu0
      %10560 = vmatprep.mubr.bf16.mxu0 0
      %10561 = vmatmul.mubr.bf16.gmra.mrb[0].mxu0 %v10335
      %v10562 = vpop.f32.mrb[0].mxu0
      %v10563 = vadd.f32 %v10358, %v10562
      %v10564 = vpop.f32.mrb[0].mxu0
      %v10565 = vpop.f32.mrb[0].mxu0
      %v10566 = vadd.f32 %v10358, %v10565
      %v10567 = vpop.f32.mrb[0].mxu0
      %10568 = vdwg.mxu0
      %v10569 = vadd.f32 %v280, %v10443
      %v10570 = vadd.f32 %v281, %v10446
      %v10571 = vadd.f32 %v282, %v10451
      %v10572 = vadd.f32 %v283, %v10454
      %v10573 = vadd.f32 %v284, %v10459
      %v10574 = vadd.f32 %v285, %v10462
      %v10575 = vadd.f32 %v286, %v10467
      %v10576 = vadd.f32 %v287, %v10470
      %v10577 = vadd.f32 %v288, %v10475
      %v10578 = vadd.f32 %v289, %v10478
      %v10579 = vadd.f32 %v290, %v10483
      %v10580 = vadd.f32 %v291, %v10486
      %v10581 = vadd.f32 %v292, %v10491
      %v10582 = vadd.f32 %v293, %v10494
      %v10583 = vadd.f32 %v294, %v10499
      %v10584 = vadd.f32 %v295, %v10502
      %v10585 = vadd.f32 %v296, %v10507
      %v10586 = vadd.f32 %v297, %v10510
      %v10587 = vadd.f32 %v298, %v10515
      %v10588 = vadd.f32 %v299, %v10518
      %v10589 = vadd.f32 %v300, %v10523
      %v10590 = vadd.f32 %v301, %v10526
      %v10591 = vadd.f32 %v302, %v10531
      %v10592 = vadd.f32 %v303, %v10534
      %v10593 = vadd.f32 %v304, %v10539
      %v10594 = vadd.f32 %v305, %v10542
      %v10595 = vadd.f32 %v306, %v10547
      %v10596 = vadd.f32 %v307, %v10550
      %v10597 = vadd.f32 %v308, %v10555
      %v10598 = vadd.f32 %v309, %v10558
      %v10599 = vadd.f32 %v310, %v10563
      %v10600 = vadd.f32 %v311, %v10566
      %10601 = vst [vmem:[%s278] sm:$0xff] %v10569
      %10602 = vst [vmem:[%s278 + $0x8] sm:$0xff] %v10570
      %10603 = vst [vmem:[%s278 + $0x10] sm:$0xff] %v10571
      %10604 = vst [vmem:[%s278 + $0x18] sm:$0xff] %v10572
      %10605 = vst [vmem:[%s278 + $0x20] sm:$0xff] %v10573
      %10606 = vst [vmem:[%s278 + $0x28] sm:$0xff] %v10574
      %10607 = vst [vmem:[%s278 + $0x30] sm:$0xff] %v10575
      %10608 = vst [vmem:[%s278 + $0x38] sm:$0xff] %v10576
      %10609 = vst [vmem:[%s278 + $0x40] sm:$0xff] %v10577
      %10610 = vst [vmem:[%s278 + $0x48] sm:$0xff] %v10578
      %10611 = vst [vmem:[%s278 + $0x50] sm:$0xff] %v10579
      %10612 = vst [vmem:[%s278 + $0x58] sm:$0xff] %v10580
      %10613 = vst [vmem:[%s278 + $0x60] sm:$0xff] %v10581
      %10614 = vst [vmem:[%s278 + $0x68] sm:$0xff] %v10582
      %10615 = vst [vmem:[%s278 + $0x70] sm:$0xff] %v10583
      %10616 = vst [vmem:[%s278 + $0x78] sm:$0xff] %v10584
      %10617 = vst [vmem:[%s278 + $0x80] sm:$0xff] %v10585
      %10618 = vst [vmem:[%s278 + $0x88] sm:$0xff] %v10586
      %10619 = vst [vmem:[%s278 + $0x90] sm:$0xff] %v10587
      %10620 = vst [vmem:[%s278 + $0x98] sm:$0xff] %v10588
      %10621 = vst [vmem:[%s278 + $0xa0] sm:$0xff] %v10589
      %10622 = vst [vmem:[%s278 + $0xa8] sm:$0xff] %v10590
      %10623 = vst [vmem:[%s278 + $0xb0] sm:$0xff] %v10591
      %10624 = vst [vmem:[%s278 + $0xb8] sm:$0xff] %v10592
      %10625 = vst [vmem:[%s278 + $0xc0] sm:$0xff] %v10593
      %10626 = vst [vmem:[%s278 + $0xc8] sm:$0xff] %v10594
      %10627 = vst [vmem:[%s278 + $0xd0] sm:$0xff] %v10595
      %10628 = vst [vmem:[%s278 + $0xd8] sm:$0xff] %v10596
      %10629 = vst [vmem:[%s278 + $0xe0] sm:$0xff] %v10597
      %10630 = vst [vmem:[%s278 + $0xe8] sm:$0xff] %v10598
      %10631 = vst [vmem:[%s278 + $0xf0] sm:$0xff] %v10599
      %10632 = vst [vmem:[%s278 + $0xf8] sm:$0xff] %v10600
      %p10633 = scmp.lt.s32.totalorder %s18, 1
      %s10634 = scalar_select %p10633, %s18, 1
      %s10635 = smul.addr %s10634, 32
      %s10636 = smul.addr %s10635, 8
      %s10637 = scalar_lea.vmem %s7, %s10636
      // Predicated region
      $region49: #{self_attention_pallas.1} parent=47 // pred_check
        %p10638 = pneg %p188
      $region50: #{self_attention_pallas.1} parent=47 // pred_check_branch
        %10640 = sbr.rel (%p10638) target = $region52
      $region51: #{self_attention_pallas.1} parent=47 // pred_region
        _
      $region52: #{self_attention_pallas.1} parent=47 // pred_fallthru
        _
    $region48: #{self_attention_pallas.1} parent=5 // pred_fallthru
      _
    %p10641 = scmp.le.s32.totalorder 2, %s13
    // Predicated region
    $region53: #{self_attention_pallas.1} parent=5 // pred_check
      %p10642 = pneg %p10641
    $region54: #{self_attention_pallas.1} parent=5 // pred_check_branch
      %10644 = sbr.rel (%p10642) target = $region56
    $region55: #{self_attention_pallas.1} parent=5 // pred_region
      %s10645 = ssub.s32 %s13, 2
      // Predicated region
      $region57: #{self_attention_pallas.1} parent=55 // pred_check
        %p10646 = pneg %p194
      $region58: #{self_attention_pallas.1} parent=55 // pred_check_branch
        %10648 = sbr.rel (%p10646) target = $region60
      $region59: #{self_attention_pallas.1} parent=55 // pred_region
        %p10649 = scmp.lt.s32.totalorder %s19, 1
        %s10650 = scalar_select %p10649, %s19, 1
        %s10651 = smul.addr %s10650, 32
        %s10652 = smul.addr %s10651, 8
        %s10653 = scalar_lea.vmem %s7, %s10652
      $region60: #{self_attention_pallas.1} parent=55 // pred_fallthru
        _
    $region56: #{self_attention_pallas.1} parent=5 // pred_fallthru
      _
  $region6: #{self_attention_pallas.1} parent=0 // loop_footer
    %s17 = sadd.s32 1, %s13
  $region7: #{self_attention_pallas.1} parent=0 // loop_footer_branch
    %12 = sbr.rel target = $region3
  $region8: #{self_attention_pallas.1} parent=0 // loop_exit
    _

</llo_original>
